<compile_context>
chip_gen: v6e
topology: v6e:2x2x1
jax: 0.10.0
libtpu: 0.0.40
codegen_flags: <defaults>
</compile_context>

<pallas_src>
import functools

import jax
import jax.numpy as jnp
from jax import lax
from jax.experimental import pallas as pl
from jax.experimental.pallas import tpu as pltpu


# ---------------------------------------------------------------------------
# Fused Pallas kernel: residual conv + conv1(+ReLU) + conv2, BN folded, residual
# add, final ReLU.  One (image, row-tile) per grid step.
# ---------------------------------------------------------------------------
def _upconv2d_fused_kernel(xt_ref, w_rc_ref, sb_rc_ref, w2_ref, sb2_ref,
                           out_ref, hpad_ref, *, TH, Wup, Hup, Cp, Cout):
    t = pl.program_id(1)
    Cin = xt_ref.shape[-1]
    M1 = (TH + 2) * Wup          # rows for residual/conv1 (1-row halo each side)
    M = TH * Wup                 # rows for the final output tile

    # Upsampled input tile with 2-row / 1-col zero halo already baked in (bf16).
    xt = xt_ref[0]               # (TH+4, Wup+2, Cin)

    # ---- residual & conv1 share one im2col patch and run as ONE bf16 matmul ----
    taps = []
    for dy in range(3):
        for dx in range(3):
            taps.append(xt[dy:dy + TH + 2, dx:dx + Wup, :].reshape(M1, Cin))
    patch1 = jnp.concatenate(taps, axis=-1)                            # (M1, 9*Cin) bf16
    acc1 = jnp.dot(patch1, w_rc_ref[...],
                   preferred_element_type=jnp.float32)                 # (M1, 2*Cp) f32
    y1 = acc1 * sb_rc_ref[0:1, :] + sb_rc_ref[1:2, :]                  # folded BN (+bias)

    # residual = conv+BN only (no ReLU); keep only the TH in-tile rows, f32, in VMEM
    res = y1[Wup:(TH + 1) * Wup, :Cp]                                  # (M, Cp)

    # conv1 -> h (ReLU); rows falling outside the image act as conv2's zero padding
    h = jnp.maximum(y1[:, Cp:], 0.0).reshape(TH + 2, Wup, Cp)
    g = t * TH - 1 + lax.broadcasted_iota(jnp.int32, (TH + 2, 1), 0)   # global row of h
    h = jnp.where(((g >= 0) & (g < Hup))[:, :, None], h, 0.0)

    # stage h (bf16) in VMEM scratch with zero-padded W edges (never touches HBM)
    hpad_ref[:, 1:Wup + 1, :] = h.astype(jnp.bfloat16)
    hpad_ref[:, 0:1, :] = jnp.zeros((TH + 2, 1, Cp), jnp.bfloat16)
    hpad_ref[:, Wup + 1:Wup + 2, :] = jnp.zeros((TH + 2, 1, Cp), jnp.bfloat16)

    # ---- conv2 over h (im2col, K = 9*Cp) + residual + final ReLU ----
    taps2 = []
    for dy in range(3):
        for dx in range(3):
            taps2.append(hpad_ref[dy:dy + TH, dx:dx + Wup, :].reshape(M, Cp))
    patch2 = jnp.concatenate(taps2, axis=-1)                           # (M, 9*Cp) bf16
    acc2 = jnp.dot(patch2, w2_ref[...],
                   preferred_element_type=jnp.float32)                 # (M, Cp) f32
    y2 = acc2 * sb2_ref[0:1, :] + sb2_ref[1:2, :]

    out = jnp.maximum(y2 + res, 0.0)                                   # (M, Cp)
    # lane-dense, channel-major store: (Cout, TH*Wup) -> output is already NCHW-flat
    out_ref[0, :, :] = jnp.transpose(out[:, :Cout]).astype(out_ref.dtype)


# ---------------------------------------------------------------------------
# Wrapper-side helpers.
# ---------------------------------------------------------------------------
def _pick_row_tile(hup, target):
    target = max(1, min(int(target), hup))
    for th in range(target, 0, -1):
        if hup % th == 0:
            return th
    return hup


def _bilinear_src(coords, in_size, scale):
    """align_corners=False source indices / weights (matches F.interpolate)."""
    s = jnp.maximum((coords.astype(jnp.float32) + 0.5) / scale - 0.5, 0.0)
    i0 = jnp.minimum(jnp.floor(s).astype(jnp.int32), in_size - 1)
    i1 = jnp.minimum(i0 + 1, in_size - 1)
    f = s - i0.astype(jnp.float32)
    return i0, i1, f


def _upsample_tiles(x_nhwc, scale, TH, n_tiles):
    """Bilinear upsample + conv zero-padding + row halo, emitted per row-tile.

    Returns (N, n_tiles, TH+4, Wup+2, Cin) bf16, where tile t row j maps to
    upsampled row t*TH + j - 2 and column k maps to upsampled column k - 1;
    out-of-image positions are exactly zero (the 3x3 conv padding).
    """
    N, Hin, Win, Cin = x_nhwc.shape
    Hup, Wup = Hin * scale, Win * scale

    g_rows = (jnp.arange(n_tiles)[:, None] * TH
              + jnp.arange(TH + 4)[None, :] - 2)                        # (n_tiles, TH+4)
    r_ok = ((g_rows >= 0) & (g_rows < Hup)).astype(jnp.float32)
    r0, r1, rf = _bilinear_src(jnp.clip(g_rows, 0, Hup - 1), Hin, scale)

    g_cols = jnp.arange(Wup + 2) - 1
    c_ok = ((g_cols >= 0) & (g_cols < Wup)).astype(jnp.float32)
    c0, c1, cf = _bilinear_src(jnp.clip(g_cols, 0, Wup - 1), Win, scale)

    rows = (x_nhwc[:, r0] * (1.0 - rf)[None, :, :, None, None]
            + x_nhwc[:, r1] * rf[None, :, :, None, None])
    rows = rows * r_ok[None, :, :, None, None]                          # (N,T,TH+4,Win,Cin)
    tiles = (rows[:, :, :, c0, :] * (1.0 - cf)[None, None, None, :, None]
             + rows[:, :, :, c1, :] * cf[None, None, None, :, None])
    tiles = tiles * c_ok[None, None, None, :, None]                     # (N,T,TH+4,Wup+2,Cin)
    return tiles.astype(jnp.bfloat16)


def _prep_operands(params, Cp):
    """im2col weight layout, Cout zero-padded to Cp=128, bf16; folded BN scale/bias."""
    w_res = params["residual"]["w"]     # (3, 3, Cin, Cout) HWIO
    w_c1 = params["conv1"]["w"]
    w_c2 = params["conv2"]["w"]         # (3, 3, Cout, Cout)
    Cin, Cout = w_res.shape[2], w_res.shape[3]

    def pad_cout(w):
        return jnp.pad(w, ((0, 0), (0, 0), (0, 0), (0, Cp - Cout)))

    def pad_vec(v):
        return jnp.pad(v, (0, Cp - Cout))

    # residual + conv1 fused along the output axis -> one (9*Cin, 2*Cp) matmul
    w_rc = jnp.concatenate(
        [pad_cout(w_res).reshape(9 * Cin, Cp),
         pad_cout(w_c1).reshape(9 * Cin, Cp)], axis=1).astype(jnp.bfloat16)
    sb_rc = jnp.stack([
        jnp.concatenate([pad_vec(params["residual"]["scale"]),
                         pad_vec(params["conv1"]["scale"])]),
        jnp.concatenate([pad_vec(params["residual"]["bias"]),
                         pad_vec(params["conv1"]["bias"])]),
    ]).astype(jnp.float32)                                              # (2, 2*Cp)

    w2 = jnp.pad(w_c2, ((0, 0), (0, 0), (0, Cp - Cout), (0, Cp - Cout)))
    w2 = w2.reshape(9 * Cp, Cp).astype(jnp.bfloat16)                    # (9*Cp, Cp)
    sb2 = jnp.stack([pad_vec(params["conv2"]["scale"]),
                     pad_vec(params["conv2"]["bias"])]).astype(jnp.float32)
    return w_rc, sb_rc, w2, sb2


def upconv2d_forward(x_nchw, params, scale, *, row_tile=16):
    N, Cin, Hin, Win = x_nchw.shape
    Cout = params["conv2"]["w"].shape[-1]
    Hup, Wup = Hin * scale, Win * scale
    Cp = ((Cout + 127) // 128) * 128
    TH = _pick_row_tile(Hup, row_tile)
    n_tiles = Hup // TH
    M = TH * Wup

    x_nhwc = jnp.transpose(x_nchw, (0, 2, 3, 1)).astype(jnp.float32)
    tiles = _upsample_tiles(x_nhwc, scale, TH, n_tiles)
    tiles = tiles.reshape(N * n_tiles, TH + 4, Wup + 2, Cin)
    w_rc, sb_rc, w2, sb2 = _prep_operands(params, Cp)

    kernel = functools.partial(_upconv2d_fused_kernel,
                               TH=TH, Wup=Wup, Hup=Hup, Cp=Cp, Cout=Cout)
    out_flat = pl.pallas_call(
        kernel,
        out_shape=jax.ShapeDtypeStruct((N, Cout, Hup * Wup), jnp.float32),
        grid=(N, n_tiles),
        in_specs=[
            pl.BlockSpec((1, TH + 4, Wup + 2, Cin),
                         lambda n, t: (n * n_tiles + t, 0, 0, 0)),
            pl.BlockSpec((9 * Cin, 2 * Cp), lambda n, t: (0, 0)),
            pl.BlockSpec((2, 2 * Cp), lambda n, t: (0, 0)),
            pl.BlockSpec((9 * Cp, Cp), lambda n, t: (0, 0)),
            pl.BlockSpec((2, Cp), lambda n, t: (0, 0)),
        ],
        out_specs=pl.BlockSpec((1, Cout, M), lambda n, t: (n, 0, t)),
        scratch_shapes=[pltpu.VMEM((TH + 2, Wup + 2, Cp), jnp.bfloat16)],
        compiler_params=pltpu.CompilerParams(
            dimension_semantics=("parallel", "parallel"),
            vmem_limit_bytes=32 * 1024 * 1024,
        ),
    )(tiles, w_rc, sb_rc, w2, sb2)

    return out_flat.reshape(N, Cout, Hup, Wup)   # already NCHW


# ---------------------------------------------------------------------------
# Deterministic synthetic parameters (BN folded in eval mode).
# ---------------------------------------------------------------------------
_BN_EPS = 1e-5


def _make_conv_bn_params(key, cin, cout):
    k_w, k_b, k_g, k_be = jax.random.split(key, 4)
    w_oihw = jax.random.normal(k_w, (cout, cin, 3, 3), jnp.float32) * 0.1
    w_hwio = jnp.transpose(w_oihw, (2, 3, 1, 0))
    conv_b = jax.random.normal(k_b, (cout,), jnp.float32) * 0.1
    gamma = 1.0 + 0.1 * jax.random.normal(k_g, (cout,), jnp.float32)
    beta = 0.1 * jax.random.normal(k_be, (cout,), jnp.float32)
    run_mean = jnp.zeros((cout,), jnp.float32)
    run_var = jnp.ones((cout,), jnp.float32)
    bn_scale = gamma / jnp.sqrt(run_var + _BN_EPS)
    bn_bias = (conv_b - run_mean) * bn_scale + beta
    return {"w": w_hwio, "scale": bn_scale, "bias": bn_bias}


def make_upconv2d_params(key, in_channels, out_channels):
    k1, k2, k3 = jax.random.split(key, 3)
    return {
        "residual": _make_conv_bn_params(k1, in_channels, out_channels),
        "conv1": _make_conv_bn_params(k2, in_channels, out_channels),
        "conv2": _make_conv_bn_params(k3, out_channels, out_channels),
    }


# ---------------------------------------------------------------------------
# Pure-JAX (non-Pallas) reference, used only for a loose numerical self-check.
# ---------------------------------------------------------------------------
def _bilinear_upsample_ref(x, scale):
    if scale == 1:
        return x
    N, H, W, C = x.shape
    Ho, Wo = H * scale, W * scale
    y0, y1, fy = _bilinear_src(jnp.arange(Ho), H, scale)
    x0, x1, fx = _bilinear_src(jnp.arange(Wo), W, scale)
    rows = (x[:, y0] * (1.0 - fy)[None, :, None, None]
            + x[:, y1] * fy[None, :, None, None])
    return (rows[:, :, x0] * (1.0 - fx)[None, None, :, None]
            + rows[:, :, x1] * fx[None, None, :, None])


def _conv_bn_ref(x, p, relu):
    y = lax.conv_general_dilated(x, p["w"], (1, 1), "SAME",
                                 dimension_numbers=("NHWC", "HWIO", "NHWC"),
                                 precision=lax.Precision.HIGHEST)
    y = y * p["scale"][None, None, None, :] + p["bias"][None, None, None, :]
    return jnp.maximum(y, 0.0) if relu else y


def upconv2d_reference(x_nchw, params, scale):
    x = jnp.transpose(x_nchw, (0, 2, 3, 1)).astype(jnp.float32)
    x = _bilinear_upsample_ref(x, scale)
    res = _conv_bn_ref(x, params["residual"], False)
    h = _conv_bn_ref(x, params["conv1"], True)
    out = _conv_bn_ref(h, params["conv2"], False)
    out = jnp.maximum(out + res, 0.0)
    return jnp.transpose(out, (0, 3, 1, 2))


if __name__ == "__main__":
    key = jax.random.PRNGKey(0)
    k_x, k_p = jax.random.split(key)

    in_channels, out_channels, scale = 4, 8, 2
    x = jax.random.normal(k_x, (2, in_channels, 16, 16), jnp.float32)   # NCHW
    params = make_upconv2d_params(k_p, in_channels, out_channels)

    fwd = jax.jit(functools.partial(upconv2d_forward, scale=scale))
    out = jax.block_until_ready(fwd(x, params))

    assert out.shape == (2, out_channels, 16 * scale, 16 * scale), out.shape
    assert bool(jnp.all(jnp.isfinite(out)))

    # loose self-check vs an independent f32 reference (kernel uses bf16 operands)
    ref = jax.block_until_ready(upconv2d_reference(x, params, scale))
    err = float(jnp.max(jnp.abs(out - ref)))
    rmax = float(jnp.max(jnp.abs(ref)))
    assert err <= 0.05 * rmax + 0.05, f"max abs err {err} (ref max {rmax})"

    print("KERNEL_OK")
</pallas_src>

<mosaic_0001>
module attributes {stable_mosaic.version = 11 : i64} {
  func.func @_upconv2d_fused_kernel(%arg0: i32, %arg1: i32, %arg2: memref<1x20x34x4xbf16, #tpu.memory_space<vmem>>, %arg3: memref<36x256xbf16, #tpu.memory_space<vmem>>, %arg4: memref<2x256xf32, #tpu.memory_space<vmem>>, %arg5: memref<1152x128xbf16, #tpu.memory_space<vmem>>, %arg6: memref<2x128xf32, #tpu.memory_space<vmem>>, %arg7: memref<1x8x512xf32, #tpu.memory_space<vmem>>, %arg8: memref<18x34x128xbf16, #tpu.memory_space<vmem>>) attributes {dimension_semantics = [#tpu.dimension_semantics<parallel>, #tpu.dimension_semantics<parallel>], iteration_bounds = array<i64: 2, 2>, scalar_prefetch = 0 : i64, scratch_operands = 1 : i64, tpu.core_type = #tpu.core_type<tc>, window_params = [{transform_indices = @transform_0, window_bounds = array<i64: 1, 20, 34, 4>}, {pipeline_mode = #tpu.pipeline_mode<synchronous>, transform_indices = @transform_1, window_bounds = array<i64: 36, 256>}, {pipeline_mode = #tpu.pipeline_mode<synchronous>, transform_indices = @transform_2, window_bounds = array<i64: 2, 256>}, {pipeline_mode = #tpu.pipeline_mode<synchronous>, transform_indices = @transform_3, window_bounds = array<i64: 1152, 128>}, {pipeline_mode = #tpu.pipeline_mode<synchronous>, transform_indices = @transform_4, window_bounds = array<i64: 2, 128>}, {transform_indices = @transform_5, window_bounds = array<i64: 1, 8, 512>}]} {
    %c0 = arith.constant 0 : index
    %c0_0 = arith.constant 0 : index
    %c0_1 = arith.constant 0 : index
    %c0_2 = arith.constant 0 : index
    %0 = vector.load %arg2[%c0, %c0_0, %c0_1, %c0_2] : memref<1x20x34x4xbf16, #tpu.memory_space<vmem>>, vector<1x20x34x4xbf16>
    %1 = vector.shape_cast %0 : vector<1x20x34x4xbf16> to vector<20x34x4xbf16>
    %2 = vector.extract_strided_slice %1 {offsets = [0, 0, 0], sizes = [18, 32, 4], strides = [1, 1, 1]} : vector<20x34x4xbf16> to vector<18x32x4xbf16>
    %3 = vector.shape_cast %2 : vector<18x32x4xbf16> to vector<576x4xbf16>
    %4 = vector.extract_strided_slice %1 {offsets = [0, 1, 0], sizes = [18, 32, 4], strides = [1, 1, 1]} : vector<20x34x4xbf16> to vector<18x32x4xbf16>
    %5 = vector.shape_cast %4 : vector<18x32x4xbf16> to vector<576x4xbf16>
    %6 = vector.extract_strided_slice %1 {offsets = [0, 2, 0], sizes = [18, 32, 4], strides = [1, 1, 1]} : vector<20x34x4xbf16> to vector<18x32x4xbf16>
    %7 = vector.shape_cast %6 : vector<18x32x4xbf16> to vector<576x4xbf16>
    %8 = vector.extract_strided_slice %1 {offsets = [1, 0, 0], sizes = [18, 32, 4], strides = [1, 1, 1]} : vector<20x34x4xbf16> to vector<18x32x4xbf16>
    %9 = vector.shape_cast %8 : vector<18x32x4xbf16> to vector<576x4xbf16>
    %10 = vector.extract_strided_slice %1 {offsets = [1, 1, 0], sizes = [18, 32, 4], strides = [1, 1, 1]} : vector<20x34x4xbf16> to vector<18x32x4xbf16>
    %11 = vector.shape_cast %10 : vector<18x32x4xbf16> to vector<576x4xbf16>
    %12 = vector.extract_strided_slice %1 {offsets = [1, 2, 0], sizes = [18, 32, 4], strides = [1, 1, 1]} : vector<20x34x4xbf16> to vector<18x32x4xbf16>
    %13 = vector.shape_cast %12 : vector<18x32x4xbf16> to vector<576x4xbf16>
    %14 = vector.extract_strided_slice %1 {offsets = [2, 0, 0], sizes = [18, 32, 4], strides = [1, 1, 1]} : vector<20x34x4xbf16> to vector<18x32x4xbf16>
    %15 = vector.shape_cast %14 : vector<18x32x4xbf16> to vector<576x4xbf16>
    %16 = vector.extract_strided_slice %1 {offsets = [2, 1, 0], sizes = [18, 32, 4], strides = [1, 1, 1]} : vector<20x34x4xbf16> to vector<18x32x4xbf16>
    %17 = vector.shape_cast %16 : vector<18x32x4xbf16> to vector<576x4xbf16>
    %18 = vector.extract_strided_slice %1 {offsets = [2, 2, 0], sizes = [18, 32, 4], strides = [1, 1, 1]} : vector<20x34x4xbf16> to vector<18x32x4xbf16>
    %19 = vector.shape_cast %18 : vector<18x32x4xbf16> to vector<576x4xbf16>
    %20 = tpu.concatenate %3, %5, %7, %9, %11, %13, %15, %17, %19 in 1 : vector<576x4xbf16>, vector<576x4xbf16>, vector<576x4xbf16>, vector<576x4xbf16>, vector<576x4xbf16>, vector<576x4xbf16>, vector<576x4xbf16>, vector<576x4xbf16>, vector<576x4xbf16> -> vector<576x36xbf16>
    %c0_3 = arith.constant 0 : index
    %c0_4 = arith.constant 0 : index
    %21 = vector.load %arg3[%c0_3, %c0_4] : memref<36x256xbf16, #tpu.memory_space<vmem>>, vector<36x256xbf16>
    %cst = arith.constant dense<0.000000e+00> : vector<576x256xf32>
    %22 = tpu.matmul %20, %21, %cst {dimension_numbers = #tpu.dot_dimension_numbers<[1], [0], [0], [1], [0, 0, 1, 1], [], []>} : vector<576x36xbf16>, vector<36x256xbf16>, vector<576x256xf32> -> vector<576x256xf32>
    %c0_5 = arith.constant 0 : index
    %c0_6 = arith.constant 0 : index
    %23 = vector.load %arg4[%c0_5, %c0_6] : memref<2x256xf32, #tpu.memory_space<vmem>>, vector<1x256xf32>
    %24 = vector.broadcast %23 : vector<1x256xf32> to vector<576x256xf32>
    %25 = arith.mulf %22, %24 : vector<576x256xf32>
    %c1 = arith.constant 1 : index
    %c0_7 = arith.constant 0 : index
    %26 = vector.load %arg4[%c1, %c0_7] : memref<2x256xf32, #tpu.memory_space<vmem>>, vector<1x256xf32>
    %27 = vector.broadcast %26 : vector<1x256xf32> to vector<576x256xf32>
    %28 = arith.addf %25, %27 : vector<576x256xf32>
    %29 = vector.extract_strided_slice %28 {offsets = [32, 0], sizes = [512, 128], strides = [1, 1]} : vector<576x256xf32> to vector<512x128xf32>
    %30 = vector.extract_strided_slice %28 {offsets = [0, 128], sizes = [576, 128], strides = [1, 1]} : vector<576x256xf32> to vector<576x128xf32>
    %cst_8 = arith.constant 0.000000e+00 : f32
    %31 = vector.broadcast %cst_8 : f32 to vector<576x128xf32>
    %32 = arith.maximumf %30, %31 : vector<576x128xf32>
    %33 = vector.shape_cast %32 : vector<576x128xf32> to vector<18x32x128xf32>
    %c16_i32 = arith.constant 16 : i32
    %34 = arith.muli %arg1, %c16_i32 : i32
    %c1_i32 = arith.constant 1 : i32
    %35 = arith.subi %34, %c1_i32 : i32
    %36 = tpu.iota {dimensions = array<i32: 0>} : vector<18x1xi32>
    %37 = vector.broadcast %35 : i32 to vector<18x1xi32>
    %38 = arith.addi %37, %36 : vector<18x1xi32>
    %c0_i32 = arith.constant 0 : i32
    %39 = vector.broadcast %c0_i32 : i32 to vector<18x1xi32>
    %40 = arith.cmpi sge, %38, %39 : vector<18x1xi32>
    %c32_i32 = arith.constant 32 : i32
    %41 = vector.broadcast %c32_i32 : i32 to vector<18x1xi32>
    %42 = arith.cmpi slt, %38, %41 : vector<18x1xi32>
    %43 = arith.andi %40, %42 : vector<18x1xi1>
    %44 = vector.shape_cast %43 : vector<18x1xi1> to vector<18x1x1xi1>
    %cst_9 = arith.constant 0.000000e+00 : f32
    %45 = vector.shape_cast %44 : vector<18x1x1xi1> to vector<18x1x1xi1>
    %46 = vector.broadcast %45 : vector<18x1x1xi1> to vector<18x32x128xi1>
    %47 = vector.broadcast %cst_9 : f32 to vector<18x32x128xf32>
    %48 = arith.select %46, %33, %47 : vector<18x32x128xi1>, vector<18x32x128xf32>
    %49 = arith.truncf %48 : vector<18x32x128xf32> to vector<18x32x128xbf16>
    %c0_10 = arith.constant 0 : index
    %c1_11 = arith.constant 1 : index
    %c0_12 = arith.constant 0 : index
    %50 = vector.load %arg8[%c0_10, %c1_11, %c0_12] : memref<18x34x128xbf16, #tpu.memory_space<vmem>>, vector<18x32x128xbf16>
    tpu.vector_store %arg8[%c0_10, %c1_11, %c0_12], %49 {strides = array<i32>} : memref<18x34x128xbf16, #tpu.memory_space<vmem>>, vector<18x32x128xbf16>,
    %cst_13 = arith.constant 0.000000e+00 : bf16
    %51 = vector.broadcast %cst_13 : bf16 to vector<18x1x128xbf16>
    %c0_14 = arith.constant 0 : index
    %c0_15 = arith.constant 0 : index
    %c0_16 = arith.constant 0 : index
    %52 = vector.load %arg8[%c0_14, %c0_15, %c0_16] : memref<18x34x128xbf16, #tpu.memory_space<vmem>>, vector<18x1x128xbf16>
    tpu.vector_store %arg8[%c0_14, %c0_15, %c0_16], %51 {strides = array<i32>} : memref<18x34x128xbf16, #tpu.memory_space<vmem>>, vector<18x1x128xbf16>,
    %cst_17 = arith.constant 0.000000e+00 : bf16
    %53 = vector.broadcast %cst_17 : bf16 to vector<18x1x128xbf16>
    %c0_18 = arith.constant 0 : index
    %c33 = arith.constant 33 : index
    %c0_19 = arith.constant 0 : index
    %54 = vector.load %arg8[%c0_18, %c33, %c0_19] : memref<18x34x128xbf16, #tpu.memory_space<vmem>>, vector<18x1x128xbf16>
    tpu.vector_store %arg8[%c0_18, %c33, %c0_19], %53 {strides = array<i32>} : memref<18x34x128xbf16, #tpu.memory_space<vmem>>, vector<18x1x128xbf16>,
    %c0_20 = arith.constant 0 : index
    %c0_21 = arith.constant 0 : index
    %c0_22 = arith.constant 0 : index
    %55 = vector.load %arg8[%c0_20, %c0_21, %c0_22] : memref<18x34x128xbf16, #tpu.memory_space<vmem>>, vector<16x32x128xbf16>
    %56 = vector.shape_cast %55 : vector<16x32x128xbf16> to vector<512x128xbf16>
    %c0_23 = arith.constant 0 : index
    %c1_24 = arith.constant 1 : index
    %c0_25 = arith.constant 0 : index
    %57 = vector.load %arg8[%c0_23, %c1_24, %c0_25] : memref<18x34x128xbf16, #tpu.memory_space<vmem>>, vector<16x32x128xbf16>
    %58 = vector.shape_cast %57 : vector<16x32x128xbf16> to vector<512x128xbf16>
    %c0_26 = arith.constant 0 : index
    %c2 = arith.constant 2 : index
    %c0_27 = arith.constant 0 : index
    %59 = vector.load %arg8[%c0_26, %c2, %c0_27] : memref<18x34x128xbf16, #tpu.memory_space<vmem>>, vector<16x32x128xbf16>
    %60 = vector.shape_cast %59 : vector<16x32x128xbf16> to vector<512x128xbf16>
    %c1_28 = arith.constant 1 : index
    %c0_29 = arith.constant 0 : index
    %c0_30 = arith.constant 0 : index
    %61 = vector.load %arg8[%c1_28, %c0_29, %c0_30] : memref<18x34x128xbf16, #tpu.memory_space<vmem>>, vector<16x32x128xbf16>
    %62 = vector.shape_cast %61 : vector<16x32x128xbf16> to vector<512x128xbf16>
    %c1_31 = arith.constant 1 : index
    %c1_32 = arith.constant 1 : index
    %c0_33 = arith.constant 0 : index
    %63 = vector.load %arg8[%c1_31, %c1_32, %c0_33] : memref<18x34x128xbf16, #tpu.memory_space<vmem>>, vector<16x32x128xbf16>
    %64 = vector.shape_cast %63 : vector<16x32x128xbf16> to vector<512x128xbf16>
    %c1_34 = arith.constant 1 : index
    %c2_35 = arith.constant 2 : index
    %c0_36 = arith.constant 0 : index
    %65 = vector.load %arg8[%c1_34, %c2_35, %c0_36] : memref<18x34x128xbf16, #tpu.memory_space<vmem>>, vector<16x32x128xbf16>
    %66 = vector.shape_cast %65 : vector<16x32x128xbf16> to vector<512x128xbf16>
    %c2_37 = arith.constant 2 : index
    %c0_38 = arith.constant 0 : index
    %c0_39 = arith.constant 0 : index
    %67 = vector.load %arg8[%c2_37, %c0_38, %c0_39] : memref<18x34x128xbf16, #tpu.memory_space<vmem>>, vector<16x32x128xbf16>
    %68 = vector.shape_cast %67 : vector<16x32x128xbf16> to vector<512x128xbf16>
    %c2_40 = arith.constant 2 : index
    %c1_41 = arith.constant 1 : index
    %c0_42 = arith.constant 0 : index
    %69 = vector.load %arg8[%c2_40, %c1_41, %c0_42] : memref<18x34x128xbf16, #tpu.memory_space<vmem>>, vector<16x32x128xbf16>
    %70 = vector.shape_cast %69 : vector<16x32x128xbf16> to vector<512x128xbf16>
    %c2_43 = arith.constant 2 : index
    %c2_44 = arith.constant 2 : index
    %c0_45 = arith.constant 0 : index
    %71 = vector.load %arg8[%c2_43, %c2_44, %c0_45] : memref<18x34x128xbf16, #tpu.memory_space<vmem>>, vector<16x32x128xbf16>
    %72 = vector.shape_cast %71 : vector<16x32x128xbf16> to vector<512x128xbf16>
    %73 = tpu.concatenate %56, %58, %60, %62, %64, %66, %68, %70, %72 in 1 : vector<512x128xbf16>, vector<512x128xbf16>, vector<512x128xbf16>, vector<512x128xbf16>, vector<512x128xbf16>, vector<512x128xbf16>, vector<512x128xbf16>, vector<512x128xbf16>, vector<512x128xbf16> -> vector<512x1152xbf16>
    %c0_46 = arith.constant 0 : index
    %c0_47 = arith.constant 0 : index
    %74 = vector.load %arg5[%c0_46, %c0_47] : memref<1152x128xbf16, #tpu.memory_space<vmem>>, vector<1152x128xbf16>
    %cst_48 = arith.constant dense<0.000000e+00> : vector<512x128xf32>
    %75 = tpu.matmul %73, %74, %cst_48 {dimension_numbers = #tpu.dot_dimension_numbers<[1], [0], [0], [1], [0, 0, 1, 1], [], []>} : vector<512x1152xbf16>, vector<1152x128xbf16>, vector<512x128xf32> -> vector<512x128xf32>
    %c0_49 = arith.constant 0 : index
    %c0_50 = arith.constant 0 : index
    %76 = vector.load %arg6[%c0_49, %c0_50] : memref<2x128xf32, #tpu.memory_space<vmem>>, vector<1x128xf32>
    %77 = vector.broadcast %76 : vector<1x128xf32> to vector<512x128xf32>
    %78 = arith.mulf %75, %77 : vector<512x128xf32>
    %c1_51 = arith.constant 1 : index
    %c0_52 = arith.constant 0 : index
    %79 = vector.load %arg6[%c1_51, %c0_52] : memref<2x128xf32, #tpu.memory_space<vmem>>, vector<1x128xf32>
    %80 = vector.broadcast %79 : vector<1x128xf32> to vector<512x128xf32>
    %81 = arith.addf %78, %80 : vector<512x128xf32>
    %82 = arith.addf %81, %29 : vector<512x128xf32>
    %cst_53 = arith.constant 0.000000e+00 : f32
    %83 = vector.broadcast %cst_53 : f32 to vector<512x128xf32>
    %84 = arith.maximumf %82, %83 : vector<512x128xf32>
    %85 = vector.extract_strided_slice %84 {offsets = [0, 0], sizes = [512, 8], strides = [1, 1]} : vector<512x128xf32> to vector<512x8xf32>
    %86 = tpu.transpose %85, [1, 0] : vector<512x8xf32> -> vector<8x512xf32>
    %c0_54 = arith.constant 0 : index
    %c0_55 = arith.constant 0 : index
    %c0_56 = arith.constant 0 : index
    %87 = vector.load %arg7[%c0_54, %c0_55, %c0_56] : memref<1x8x512xf32, #tpu.memory_space<vmem>>, vector<1x8x512xf32>
    %88 = vector.shape_cast %87 : vector<1x8x512xf32> to vector<8x512xf32>
    %89 = vector.shape_cast %86 : vector<8x512xf32> to vector<1x8x512xf32>
    tpu.vector_store %arg7[%c0_54, %c0_55, %c0_56], %89 {strides = array<i32>} : memref<1x8x512xf32, #tpu.memory_space<vmem>>, vector<1x8x512xf32>,
    return
  }
  func.func @transform_0(%arg0: i32, %arg1: i32) -> (i32, i32, i32, i32) {
    %c2_i32 = arith.constant 2 : i32
    %0 = arith.muli %arg0, %c2_i32 : i32
    %1 = arith.addi %0, %arg1 : i32
    %c0_i32 = arith.constant 0 : i32
    %c0_i32_0 = arith.constant 0 : i32
    %c0_i32_1 = arith.constant 0 : i32
    %c0_i32_2 = arith.constant 0 : i32
    return %1, %c0_i32, %c0_i32_0, %c0_i32_1 : i32, i32, i32, i32
  }
  func.func @transform_1(%arg0: i32, %arg1: i32) -> (i32, i32) {
    %c0_i32 = arith.constant 0 : i32
    %c0_i32_0 = arith.constant 0 : i32
    %c0_i32_1 = arith.constant 0 : i32
    return %c0_i32, %c0_i32_0 : i32, i32
  }
  func.func @transform_2(%arg0: i32, %arg1: i32) -> (i32, i32) {
    %c0_i32 = arith.constant 0 : i32
    %c0_i32_0 = arith.constant 0 : i32
    %c0_i32_1 = arith.constant 0 : i32
    return %c0_i32, %c0_i32_0 : i32, i32
  }
  func.func @transform_3(%arg0: i32, %arg1: i32) -> (i32, i32) {
    %c0_i32 = arith.constant 0 : i32
    %c0_i32_0 = arith.constant 0 : i32
    %c0_i32_1 = arith.constant 0 : i32
    return %c0_i32, %c0_i32_0 : i32, i32
  }
  func.func @transform_4(%arg0: i32, %arg1: i32) -> (i32, i32) {
    %c0_i32 = arith.constant 0 : i32
    %c0_i32_0 = arith.constant 0 : i32
    %c0_i32_1 = arith.constant 0 : i32
    return %c0_i32, %c0_i32_0 : i32, i32
  }
  func.func @transform_5(%arg0: i32, %arg1: i32) -> (i32, i32, i32) {
    %c0_i32 = arith.constant 0 : i32
    %c0_i32_0 = arith.constant 0 : i32
    return %arg0, %c0_i32, %arg1 : i32, i32, i32
  }
}

</mosaic_0001>

<llo_original>
// kernel: upconv2d_forward.1
$region0: #{upconv2d_forward.1}
  #allocation0 [shape = 'u32[]', space=smem, size = 0x4, offset = 0x4, fixed_abs, tag = 'smem constant byte address 0x4 - core index']
  #allocation1 [shape = 'u32[144,128]{1,0:T(1,128)}', space=vmem, size = 0x12000, scoped, tag = 'internal scratch']
  #allocation2 [shape = 'bf16[18,34,128]{2,1,0:T(8,128)(2,1)}', space=vmem, size = 0x2d000, scoped, tag = 'scratch operand']
  %s0 = inlined_call_operand.vmem [shape: bf16[4,20,34,4], index: 0, kind: input, shape index: {}]
  %s1 = inlined_call_operand.vmem [shape: bf16[36,256], index: 1, kind: input, shape index: {}]
  %s2 = inlined_call_operand.vmem [shape: f32[2,256], index: 2, kind: input, shape index: {}]
  %s3 = inlined_call_operand.vmem [shape: bf16[1152,128], index: 3, kind: input, shape index: {}]
  %s4 = inlined_call_operand.vmem [shape: f32[2,128], index: 4, kind: input, shape index: {}]
  %s5 = inlined_call_operand.vmem [shape: f32[2,8,1024], index: 5, kind: output, shape index: {}]
  %s6 = sld [smem:[#allocation0]]
  $region53: #{upconv2d_forward.1} parent=0
    _
  %s8 = ssub.s32 1, %s6
  %s9 = scalar_select 0, %s8, %s6
  loop: start=0, step=1, limit=6
  $region2: #{upconv2d_forward.1} parent=0 // loop_pre_header
    _
  $region3: #{upconv2d_forward.1} parent=0 // loop_header
    %s11 = sphi 0, %s15
    %p12 = scmp.ge.s32.totalorder %s11, 6
    %s18 = sphi 0, %s30
    %s19 = sphi 0, %s26
    %s20 = sphi 0, %s18
    %s21 = sphi 0, %s19
    %s22 = sphi 0, %s20
    %s23 = sphi 0, %s21
    %s37 = sphi 0, %s39
    %s40 = sphi 0, %s37
    %s41 = sphi 0, %s40
    %s57 = sphi 0, %s41
    %s61 = sphi 0, %s61
    %s63 = sphi 0, %s61
    %s64 = sphi 0, %s63
    %s78 = sphi 0, %s64
    %s82 = sphi 0, %s82
    %s84 = sphi 0, %s82
    %s85 = sphi 0, %s84
    %s99 = sphi 0, %s85
    %s103 = sphi 0, %s103
    %s105 = sphi 0, %s103
    %s106 = sphi 0, %s105
    %s120 = sphi 0, %s106
    %s124 = sphi 0, %s124
    %s126 = sphi 0, %s124
    %s127 = sphi 0, %s126
    %s141 = sphi 0, %s127
    %s149 = sphi 0, %s151
    %s152 = sphi 0, %s149
    %s153 = sphi 0, %s152
    %s169 = sphi 0, %s153
  $region4: #{upconv2d_forward.1} parent=0 // loop_header_branch
    %14 = sbr.rel (%p12) target = $region8
  $region5: #{upconv2d_forward.1} parent=0 // loop_body
    %s16 = ssub.s32 %s11, 1
    %s17 = ssub.s32 %s11, 2
    %s24 = sadd.s32 1, %s19
    %p25 = scmp.ge.s32.totalorder %s24, 2
    %s26 = scalar_select %p25, 0, %s24
    %s27 = sadd.s32 1, %s18
    %s28 = scalar_select %p25, %s27, %s18
    %p29 = scmp.ge.s32.totalorder %s28, 2
    %s30 = scalar_select %p29, 0, %s28
    %s31 = smul.u32 %s18, 2
    %s32 = sadd.s32 %s31, %s19
    %s33 = smul.u32 %s30, 2
    %s34 = sadd.s32 %s33, %s26
    %s35 = ssub.s32 %s32, %s34
    %p36 = scmp.eq.s32.totalorder %s35, 0
    %s38 = sadd.s32 %s37, 1
    %s39 = scalar_select %p36, %s37, %s38
    %p42 = pneg %p36
    %p43 = scmp.eq.s32.totalorder %s11, 3
    %p44 = por %p42, %p43
    %p45 = scmp.ne.s32.totalorder %s37, %s40
    %p46 = scmp.eq.s32.totalorder %s11, 0
    %p47 = por %p45, %p46
    %p48 = scmp.ne.s32.totalorder %s37, %s40
    %p49 = scmp.eq.s32.totalorder %s16, 3
    %p50 = por %p48, %p49
    %p51 = scmp.ne.s32.totalorder %s40, %s41
    %p52 = scmp.eq.s32.totalorder %s16, 0
    %p53 = por %p51, %p52
    %p54 = scmp.ne.s32.totalorder %s40, %s41
    %p55 = scmp.eq.s32.totalorder %s17, 3
    %p56 = por %p54, %p55
    %p58 = scmp.ne.s32.totalorder %s41, %s57
    %p59 = scmp.eq.s32.totalorder %s17, 0
    %p60 = por %p58, %p59
    %s62 = sadd.s32 %s61, 1
    %p65 = scmp.eq.s32.totalorder %s11, 3
    %p66 = scmp.ne.s32.totalorder %s61, %s63
    %p67 = scmp.eq.s32.totalorder %s11, 0
    %p68 = por %p66, %p67
    %p69 = scmp.ne.s32.totalorder %s61, %s63
    %p70 = scmp.eq.s32.totalorder %s16, 3
    %p71 = por %p69, %p70
    %p72 = scmp.ne.s32.totalorder %s63, %s64
    %p73 = scmp.eq.s32.totalorder %s16, 0
    %p74 = por %p72, %p73
    %p75 = scmp.ne.s32.totalorder %s63, %s64
    %p76 = scmp.eq.s32.totalorder %s17, 3
    %p77 = por %p75, %p76
    %p79 = scmp.ne.s32.totalorder %s64, %s78
    %p80 = scmp.eq.s32.totalorder %s17, 0
    %p81 = por %p79, %p80
    %s83 = sadd.s32 %s82, 1
    %p86 = scmp.eq.s32.totalorder %s11, 3
    %p87 = scmp.ne.s32.totalorder %s82, %s84
    %p88 = scmp.eq.s32.totalorder %s11, 0
    %p89 = por %p87, %p88
    %p90 = scmp.ne.s32.totalorder %s82, %s84
    %p91 = scmp.eq.s32.totalorder %s16, 3
    %p92 = por %p90, %p91
    %p93 = scmp.ne.s32.totalorder %s84, %s85
    %p94 = scmp.eq.s32.totalorder %s16, 0
    %p95 = por %p93, %p94
    %p96 = scmp.ne.s32.totalorder %s84, %s85
    %p97 = scmp.eq.s32.totalorder %s17, 3
    %p98 = por %p96, %p97
    %p100 = scmp.ne.s32.totalorder %s85, %s99
    %p101 = scmp.eq.s32.totalorder %s17, 0
    %p102 = por %p100, %p101
    %s104 = sadd.s32 %s103, 1
    %p107 = scmp.eq.s32.totalorder %s11, 3
    %p108 = scmp.ne.s32.totalorder %s103, %s105
    %p109 = scmp.eq.s32.totalorder %s11, 0
    %p110 = por %p108, %p109
    %p111 = scmp.ne.s32.totalorder %s103, %s105
    %p112 = scmp.eq.s32.totalorder %s16, 3
    %p113 = por %p111, %p112
    %p114 = scmp.ne.s32.totalorder %s105, %s106
    %p115 = scmp.eq.s32.totalorder %s16, 0
    %p116 = por %p114, %p115
    %p117 = scmp.ne.s32.totalorder %s105, %s106
    %p118 = scmp.eq.s32.totalorder %s17, 3
    %p119 = por %p117, %p118
    %p121 = scmp.ne.s32.totalorder %s106, %s120
    %p122 = scmp.eq.s32.totalorder %s17, 0
    %p123 = por %p121, %p122
    %s125 = sadd.s32 %s124, 1
    %p128 = scmp.eq.s32.totalorder %s11, 3
    %p129 = scmp.ne.s32.totalorder %s124, %s126
    %p130 = scmp.eq.s32.totalorder %s11, 0
    %p131 = por %p129, %p130
    %p132 = scmp.ne.s32.totalorder %s124, %s126
    %p133 = scmp.eq.s32.totalorder %s16, 3
    %p134 = por %p132, %p133
    %p135 = scmp.ne.s32.totalorder %s126, %s127
    %p136 = scmp.eq.s32.totalorder %s16, 0
    %p137 = por %p135, %p136
    %p138 = scmp.ne.s32.totalorder %s126, %s127
    %p139 = scmp.eq.s32.totalorder %s17, 3
    %p140 = por %p138, %p139
    %p142 = scmp.ne.s32.totalorder %s127, %s141
    %p143 = scmp.eq.s32.totalorder %s17, 0
    %p144 = por %p142, %p143
    %s145 = ssub.s32 %s18, %s30
    %s146 = ssub.s32 %s19, %s26
    %s147 = sor.u32 %s145, %s146
    %p148 = scmp.eq.s32.totalorder %s147, 0
    %s150 = sadd.s32 %s149, 1
    %s151 = scalar_select %p148, %s149, %s150
    %p154 = pneg %p148
    %p155 = scmp.eq.s32.totalorder %s11, 3
    %p156 = por %p154, %p155
    %p157 = scmp.ne.s32.totalorder %s149, %s152
    %p158 = scmp.eq.s32.totalorder %s11, 0
    %p159 = por %p157, %p158
    %p160 = scmp.ne.s32.totalorder %s149, %s152
    %p161 = scmp.eq.s32.totalorder %s16, 3
    %p162 = por %p160, %p161
    %p163 = scmp.ne.s32.totalorder %s152, %s153
    %p164 = scmp.eq.s32.totalorder %s16, 0
    %p165 = por %p163, %p164
    %p166 = scmp.ne.s32.totalorder %s152, %s153
    %p167 = scmp.eq.s32.totalorder %s17, 3
    %p168 = por %p166, %p167
    %p170 = scmp.ne.s32.totalorder %s153, %s169
    %p171 = scmp.eq.s32.totalorder %s17, 0
    %p172 = por %p170, %p171
    %p173 = scmp.le.s32.totalorder 1, %s11
    %p174 = scmp.lt.s32.totalorder %s11, 5
    %p175 = pnand %p173, %p174
    %p176 = pneg %p175
    // Predicated region
    $region9: #{upconv2d_forward.1} parent=5 // pred_check
      _
    $region10: #{upconv2d_forward.1} parent=5 // pred_check_branch
      %178 = sbr.rel (%p175) target = $region12
    $region11: #{upconv2d_forward.1} parent=5 // pred_region
      %s179 = ssub.s32 %s11, 1
      // Predicated region
      $region13: #{upconv2d_forward.1} parent=11 // pred_check
        %p180 = pneg %p74
      $region14: #{upconv2d_forward.1} parent=11 // pred_check_branch
        %182 = sbr.rel (%p180) target = $region16
      $region15: #{upconv2d_forward.1} parent=11 // pred_region
        _
      $region16: #{upconv2d_forward.1} parent=11 // pred_fallthru
        _
      // Predicated region
      $region17: #{upconv2d_forward.1} parent=11 // pred_check
        %p183 = pneg %p95
      $region18: #{upconv2d_forward.1} parent=11 // pred_check_branch
        %185 = sbr.rel (%p183) target = $region20
      $region19: #{upconv2d_forward.1} parent=11 // pred_region
        _
      $region20: #{upconv2d_forward.1} parent=11 // pred_fallthru
        _
      // Predicated region
      $region21: #{upconv2d_forward.1} parent=11 // pred_check
        %p186 = pneg %p116
      $region22: #{upconv2d_forward.1} parent=11 // pred_check_branch
        %188 = sbr.rel (%p186) target = $region24
      $region23: #{upconv2d_forward.1} parent=11 // pred_region
        _
      $region24: #{upconv2d_forward.1} parent=11 // pred_fallthru
        _
      // Predicated region
      $region25: #{upconv2d_forward.1} parent=11 // pred_check
        %p189 = pneg %p137
      $region26: #{upconv2d_forward.1} parent=11 // pred_check_branch
        %191 = sbr.rel (%p189) target = $region28
      $region27: #{upconv2d_forward.1} parent=11 // pred_region
        _
      $region28: #{upconv2d_forward.1} parent=11 // pred_fallthru
        _
    $region12: #{upconv2d_forward.1} parent=5 // pred_fallthru
      _
    %p192 = scmp.lt.s32.totalorder %s11, 4
    // Predicated region
    $region29: #{upconv2d_forward.1} parent=5 // pred_check
      %p193 = pneg %p192
    $region30: #{upconv2d_forward.1} parent=5 // pred_check_branch
      %195 = sbr.rel (%p193) target = $region32
    $region31: #{upconv2d_forward.1} parent=5 // pred_region
      // Predicated region
      $region33: #{upconv2d_forward.1} parent=31 // pred_check
        %p196 = pneg %p47
      $region34: #{upconv2d_forward.1} parent=31 // pred_check_branch
        %198 = sbr.rel (%p196) target = $region36
      $region35: #{upconv2d_forward.1} parent=31 // pred_region
        %s199 = smul.u32 %s18, 2
        %s200 = sadd.s32 %s199, %s19
        %p201 = scmp.lt.s32.totalorder %s200, 3
        %s202 = scalar_select %p201, %s200, 3
        %s203 = smul.addr %s202, 100
        %s204 = smul.addr %s203, 4
        %s205 = scalar_lea.vmem %s0, %s204
        %s206 = smul.u32 %s18, 2
        %s207 = sadd.s32 %s206, %s19
      $region36: #{upconv2d_forward.1} parent=31 // pred_fallthru
        _
    $region32: #{upconv2d_forward.1} parent=5 // pred_fallthru
      _
    %p208 = scmp.le.s32.totalorder 1, %s11
    %p209 = scmp.lt.s32.totalorder %s11, 5
    %p210 = pnand %p208, %p209
    %p211 = pneg %p210
    // Predicated region
    $region37: #{upconv2d_forward.1} parent=5 // pred_check
      _
    $region38: #{upconv2d_forward.1} parent=5 // pred_check_branch
      %213 = sbr.rel (%p210) target = $region40
    $region39: #{upconv2d_forward.1} parent=5 // pred_region
      %s214 = ssub.s32 %s11, 1
      %s215 = smul.u32 %s20, 2
      %s216 = sadd.s32 %s215, %s21
      %p217 = scmp.lt.s32.totalorder %s216, 3
      %s218 = scalar_select %p217, %s216, 3
      %s219 = smul.addr %s218, 100
      %s220 = smul.addr %s219, 4
      %s221 = scalar_lea.vmem %s0, %s220
      %p222 = pneg %p53
      %p223 = pneg %p50
      %p224 = pneg %p74
      %p225 = pneg %p71
      %p226 = pneg %p95
      %p227 = pneg %p92
      %p228 = pneg %p116
      %p229 = pneg %p113
      %p230 = pneg %p137
      %p231 = pneg %p134
      %p232 = pneg %p165
      %p233 = pneg %p162
      %s234 = smul.u32 4, %s21
      %p235 = scmp.lt.s32.totalorder %s20, 1
      %s236 = scalar_select %p235, %s20, 1
      %p237 = scmp.lt.s32.totalorder %s234, 7
      %s238 = scalar_select %p237, %s234, 7
      %s239 = smul.addr %s236, 8
      %s240 = sadd.s32 %s238, %s239
      %s241 = smul.addr %s240, 8
      %s242 = scalar_lea.vmem %s5, %s241
      %s243 = smul.u32 %s20, 2
      %s244 = sadd.s32 %s243, %s21
      %p245 = scmp.lt.s32.totalorder %s244, 3
      %s246 = scalar_select %p245, %s244, 3
      %s247 = smul.addr %s246, 100
      %s248 = smul.addr %s247, 4
      %s249 = scalar_lea.vmem %s0, %s248
      %s250 = smul.u32 %s20, 2
      %s251 = sadd.s32 %s250, %s21
      %s252 = smul.u32 4, %s21
      %p253 = scmp.lt.s32.totalorder %s20, 1
      %s254 = scalar_select %p253, %s20, 1
      %p255 = scmp.lt.s32.totalorder %s252, 7
      %s256 = scalar_select %p255, %s252, 7
      %s257 = smul.addr %s254, 8
      %s258 = sadd.s32 %s256, %s257
      %s259 = smul.addr %s258, 8
      %s260 = scalar_lea.vmem %s5, %s259
      %s261 = smul.u32 4, %s21
      %v263 = vld [vmem:[%s249] sm:$0xf]
      %v264 = vld [vmem:[%s249 + $0x4] sm:$0xf]
      %v265 = vld [vmem:[%s249 + $0x8] sm:$0xf]
      %v266 = vld [vmem:[%s249 + $0xc] sm:$0xf]
      %v267 = vld [vmem:[%s249 + $0x10] sm:$0x1]
      %v268 = vld [vmem:[%s249 + $0x14] sm:$0xf]
      %v269 = vld [vmem:[%s249 + $0x18] sm:$0xf]
      %v270 = vld [vmem:[%s249 + $0x1c] sm:$0xf]
      %v271 = vld [vmem:[%s249 + $0x20] sm:$0xf]
      %v272 = vld [vmem:[%s249 + $0x24] sm:$0x1]
      %v273 = vld [vmem:[%s249 + $0x28] sm:$0xf]
      %v274 = vld [vmem:[%s249 + $0x2c] sm:$0xf]
      %v275 = vld [vmem:[%s249 + $0x30] sm:$0xf]
      %v276 = vld [vmem:[%s249 + $0x34] sm:$0xf]
      %v277 = vld [vmem:[%s249 + $0x38] sm:$0x1]
      %v278 = vld [vmem:[%s249 + $0x3c] sm:$0xf]
      %v279 = vld [vmem:[%s249 + $0x40] sm:$0xf]
      %v280 = vld [vmem:[%s249 + $0x44] sm:$0xf]
      %v281 = vld [vmem:[%s249 + $0x48] sm:$0xf]
      %v282 = vld [vmem:[%s249 + $0x4c] sm:$0x1]
      %v283 = vld [vmem:[%s249 + $0x50] sm:$0xf]
      %v284 = vld [vmem:[%s249 + $0x54] sm:$0xf]
      %v285 = vld [vmem:[%s249 + $0x58] sm:$0xf]
      %v286 = vld [vmem:[%s249 + $0x5c] sm:$0xf]
      %v287 = vld [vmem:[%s249 + $0x60] sm:$0x1]
      %v288 = vld [vmem:[%s249 + $0x64] sm:$0xf]
      %v289 = vld [vmem:[%s249 + $0x68] sm:$0xf]
      %v290 = vld [vmem:[%s249 + $0x6c] sm:$0xf]
      %v291 = vld [vmem:[%s249 + $0x70] sm:$0xf]
      %v292 = vld [vmem:[%s249 + $0x74] sm:$0x1]
      %v293 = vld [vmem:[%s249 + $0x78] sm:$0xf]
      %v294 = vld [vmem:[%s249 + $0x7c] sm:$0xf]
      %v295 = vld [vmem:[%s249 + $0x80] sm:$0xf]
      %v296 = vld [vmem:[%s249 + $0x84] sm:$0xf]
      %v297 = vld [vmem:[%s249 + $0x88] sm:$0x1]
      %v298 = vld [vmem:[%s249 + $0x8c] sm:$0xf]
      %v299 = vld [vmem:[%s249 + $0x90] sm:$0xf]
      %v300 = vld [vmem:[%s249 + $0x94] sm:$0xf]
      %v301 = vld [vmem:[%s249 + $0x98] sm:$0xf]
      %v302 = vld [vmem:[%s249 + $0x9c] sm:$0x1]
      %v303 = vld [vmem:[%s249 + $0xa0] sm:$0xf]
      %v304 = vld [vmem:[%s249 + $0xa4] sm:$0xf]
      %v305 = vld [vmem:[%s249 + $0xa8] sm:$0xf]
      %v306 = vld [vmem:[%s249 + $0xac] sm:$0xf]
      %v307 = vld [vmem:[%s249 + $0xb0] sm:$0x1]
      %v308 = vld [vmem:[%s249 + $0xb4] sm:$0xf]
      %v309 = vld [vmem:[%s249 + $0xb8] sm:$0xf]
      %v310 = vld [vmem:[%s249 + $0xbc] sm:$0xf]
      %v311 = vld [vmem:[%s249 + $0xc0] sm:$0xf]
      %v312 = vld [vmem:[%s249 + $0xc4] sm:$0x1]
      %v313 = vld [vmem:[%s249 + $0xc8] sm:$0xf]
      %v314 = vld [vmem:[%s249 + $0xcc] sm:$0xf]
      %v315 = vld [vmem:[%s249 + $0xd0] sm:$0xf]
      %v316 = vld [vmem:[%s249 + $0xd4] sm:$0xf]
      %v317 = vld [vmem:[%s249 + $0xd8] sm:$0x1]
      %v318 = vld [vmem:[%s249 + $0xdc] sm:$0xf]
      %v319 = vld [vmem:[%s249 + $0xe0] sm:$0xf]
      %v320 = vld [vmem:[%s249 + $0xe4] sm:$0xf]
      %v321 = vld [vmem:[%s249 + $0xe8] sm:$0xf]
      %v322 = vld [vmem:[%s249 + $0xec] sm:$0x1]
      %v323 = vld [vmem:[%s249 + $0xf0] sm:$0xf]
      %v324 = vld [vmem:[%s249 + $0xf4] sm:$0xf]
      %v325 = vld [vmem:[%s249 + $0xf8] sm:$0xf]
      %v326 = vld [vmem:[%s249 + $0xfc] sm:$0xf]
      %v327 = vld [vmem:[%s249 + $0x100] sm:$0x1]
      %v328 = vld [vmem:[%s249 + $0x104] sm:$0xf]
      %v329 = vld [vmem:[%s249 + $0x108] sm:$0xf]
      %v330 = vld [vmem:[%s249 + $0x10c] sm:$0xf]
      %v331 = vld [vmem:[%s249 + $0x110] sm:$0xf]
      %v332 = vld [vmem:[%s249 + $0x114] sm:$0x1]
      %v333 = vld [vmem:[%s249 + $0x118] sm:$0xf]
      %v334 = vld [vmem:[%s249 + $0x11c] sm:$0xf]
      %v335 = vld [vmem:[%s249 + $0x120] sm:$0xf]
      %v336 = vld [vmem:[%s249 + $0x124] sm:$0xf]
      %v337 = vld [vmem:[%s249 + $0x128] sm:$0x1]
      %v338 = vld [vmem:[%s249 + $0x12c] sm:$0xf]
      %v339 = vld [vmem:[%s249 + $0x130] sm:$0xf]
      %v340 = vld [vmem:[%s249 + $0x134] sm:$0xf]
      %v341 = vld [vmem:[%s249 + $0x138] sm:$0xf]
      %v342 = vld [vmem:[%s249 + $0x13c] sm:$0x1]
      %v343 = vld [vmem:[%s249 + $0x140] sm:$0xf]
      %v344 = vld [vmem:[%s249 + $0x144] sm:$0xf]
      %v345 = vld [vmem:[%s249 + $0x148] sm:$0xf]
      %v346 = vld [vmem:[%s249 + $0x14c] sm:$0xf]
      %v347 = vld [vmem:[%s249 + $0x150] sm:$0x1]
      %v348 = vld [vmem:[%s249 + $0x154] sm:$0xf]
      %v349 = vld [vmem:[%s249 + $0x158] sm:$0xf]
      %v350 = vld [vmem:[%s249 + $0x15c] sm:$0xf]
      %v351 = vld [vmem:[%s249 + $0x160] sm:$0xf]
      %v352 = vld [vmem:[%s249 + $0x164] sm:$0x1]
      %v353 = vld [vmem:[%s249 + $0x168] sm:$0xf]
      %v354 = vld [vmem:[%s249 + $0x16c] sm:$0xf]
      %v355 = vld [vmem:[%s249 + $0x170] sm:$0xf]
      %v356 = vld [vmem:[%s249 + $0x174] sm:$0xf]
      %v357 = vld [vmem:[%s249 + $0x178] sm:$0x1]
      %v358 = vld [vmem:[%s249 + $0x17c] sm:$0xf]
      %v359 = vld [vmem:[%s249 + $0x180] sm:$0xf]
      %v360 = vld [vmem:[%s249 + $0x184] sm:$0xf]
      %v361 = vld [vmem:[%s249 + $0x188] sm:$0xf]
      %v362 = vld [vmem:[%s249 + $0x18c] sm:$0x1]
      %vm363 = vsmask.f32 3328
      %vm364 = vsmask.f32 7440
      %vm365 = vmor %vm363, %vm364
      %v367 = vshrl.u32 %v263, 16
      %v369 = vrot.slane %v367, 4
      %v370 = vshll.u32 %v263, 16
      %v372 = vrot.slane %v370, 5
      %v373 = vor.u32 %v369, %v372
      %v374 = vrot.slane %v373, 4
      %v376 = vshll.u32 %v264, 16
      %v378 = vrot.slane %v376, 5
      %v379 = vsel %vm365, %v374, %v378
      %v380 = vshrl.u32 %v264, 16
      %v382 = vrot.slane %v380, 4
      %v383 = vor.u32 %v382, %v378
      %v384 = vrot.slane %v383, 4
      %v386 = vshll.u32 %v265, 16
      %v388 = vrot.slane %v386, 5
      %v389 = vsel %vm365, %v384, %v388
      %v390 = vshrl.u32 %v265, 16
      %v392 = vrot.slane %v390, 4
      %v393 = vor.u32 %v392, %v388
      %v394 = vrot.slane %v393, 4
      %v396 = vshll.u32 %v266, 16
      %v398 = vrot.slane %v396, 5
      %v399 = vsel %vm365, %v394, %v398
      %v400 = vshrl.u32 %v266, 16
      %v402 = vrot.slane %v400, 4
      %v403 = vor.u32 %v402, %v398
      %v404 = vrot.slane %v403, 4
      %v406 = vshll.u32 %v267, 16
      %v408 = vrot.slane %v406, 5
      %v409 = vsel %vm365, %v404, %v408
      %v411 = vshrl.u32 %v268, 16
      %v413 = vrot.slane %v411, 4
      %v414 = vshll.u32 %v268, 16
      %v416 = vrot.slane %v414, 5
      %v417 = vor.u32 %v413, %v416
      %v418 = vrot.slane %v417, 4
      %v420 = vshll.u32 %v269, 16
      %v422 = vrot.slane %v420, 5
      %v423 = vsel %vm365, %v418, %v422
      %v424 = vshrl.u32 %v269, 16
      %v426 = vrot.slane %v424, 4
      %v427 = vor.u32 %v426, %v422
      %v428 = vrot.slane %v427, 4
      %v430 = vshll.u32 %v270, 16
      %v432 = vrot.slane %v430, 5
      %v433 = vsel %vm365, %v428, %v432
      %v434 = vshrl.u32 %v270, 16
      %v436 = vrot.slane %v434, 4
      %v437 = vor.u32 %v436, %v432
      %v438 = vrot.slane %v437, 4
      %v440 = vshll.u32 %v271, 16
      %v442 = vrot.slane %v440, 5
      %v443 = vsel %vm365, %v438, %v442
      %v444 = vshrl.u32 %v271, 16
      %v446 = vrot.slane %v444, 4
      %v447 = vor.u32 %v446, %v442
      %v448 = vrot.slane %v447, 4
      %v450 = vshll.u32 %v272, 16
      %v452 = vrot.slane %v450, 5
      %v453 = vsel %vm365, %v448, %v452
      %v455 = vshrl.u32 %v273, 16
      %v457 = vrot.slane %v455, 4
      %v458 = vshll.u32 %v273, 16
      %v460 = vrot.slane %v458, 5
      %v461 = vor.u32 %v457, %v460
      %v462 = vrot.slane %v461, 4
      %v464 = vshll.u32 %v274, 16
      %v466 = vrot.slane %v464, 5
      %v467 = vsel %vm365, %v462, %v466
      %v468 = vshrl.u32 %v274, 16
      %v470 = vrot.slane %v468, 4
      %v471 = vor.u32 %v470, %v466
      %v472 = vrot.slane %v471, 4
      %v474 = vshll.u32 %v275, 16
      %v476 = vrot.slane %v474, 5
      %v477 = vsel %vm365, %v472, %v476
      %v478 = vshrl.u32 %v275, 16
      %v480 = vrot.slane %v478, 4
      %v481 = vor.u32 %v480, %v476
      %v482 = vrot.slane %v481, 4
      %v484 = vshll.u32 %v276, 16
      %v486 = vrot.slane %v484, 5
      %v487 = vsel %vm365, %v482, %v486
      %v488 = vshrl.u32 %v276, 16
      %v490 = vrot.slane %v488, 4
      %v491 = vor.u32 %v490, %v486
      %v492 = vrot.slane %v491, 4
      %v494 = vshll.u32 %v277, 16
      %v496 = vrot.slane %v494, 5
      %v497 = vsel %vm365, %v492, %v496
      %v499 = vshrl.u32 %v278, 16
      %v501 = vrot.slane %v499, 4
      %v502 = vshll.u32 %v278, 16
      %v504 = vrot.slane %v502, 5
      %v505 = vor.u32 %v501, %v504
      %v506 = vrot.slane %v505, 4
      %v508 = vshll.u32 %v279, 16
      %v510 = vrot.slane %v508, 5
      %v511 = vsel %vm365, %v506, %v510
      %v512 = vshrl.u32 %v279, 16
      %v514 = vrot.slane %v512, 4
      %v515 = vor.u32 %v514, %v510
      %v516 = vrot.slane %v515, 4
      %v518 = vshll.u32 %v280, 16
      %v520 = vrot.slane %v518, 5
      %v521 = vsel %vm365, %v516, %v520
      %v522 = vshrl.u32 %v280, 16
      %v524 = vrot.slane %v522, 4
      %v525 = vor.u32 %v524, %v520
      %v526 = vrot.slane %v525, 4
      %v528 = vshll.u32 %v281, 16
      %v530 = vrot.slane %v528, 5
      %v531 = vsel %vm365, %v526, %v530
      %v532 = vshrl.u32 %v281, 16
      %v534 = vrot.slane %v532, 4
      %v535 = vor.u32 %v534, %v530
      %v536 = vrot.slane %v535, 4
      %v538 = vshll.u32 %v282, 16
      %v540 = vrot.slane %v538, 5
      %v541 = vsel %vm365, %v536, %v540
      %v543 = vshrl.u32 %v283, 16
      %v545 = vrot.slane %v543, 4
      %v546 = vshll.u32 %v283, 16
      %v548 = vrot.slane %v546, 5
      %v549 = vor.u32 %v545, %v548
      %v550 = vrot.slane %v549, 4
      %v552 = vshll.u32 %v284, 16
      %v554 = vrot.slane %v552, 5
      %v555 = vsel %vm365, %v550, %v554
      %v556 = vshrl.u32 %v284, 16
      %v558 = vrot.slane %v556, 4
      %v559 = vor.u32 %v558, %v554
      %v560 = vrot.slane %v559, 4
      %v562 = vshll.u32 %v285, 16
      %v564 = vrot.slane %v562, 5
      %v565 = vsel %vm365, %v560, %v564
      %v566 = vshrl.u32 %v285, 16
      %v568 = vrot.slane %v566, 4
      %v569 = vor.u32 %v568, %v564
      %v570 = vrot.slane %v569, 4
      %v572 = vshll.u32 %v286, 16
      %v574 = vrot.slane %v572, 5
      %v575 = vsel %vm365, %v570, %v574
      %v576 = vshrl.u32 %v286, 16
      %v578 = vrot.slane %v576, 4
      %v579 = vor.u32 %v578, %v574
      %v580 = vrot.slane %v579, 4
      %v582 = vshll.u32 %v287, 16
      %v584 = vrot.slane %v582, 5
      %v585 = vsel %vm365, %v580, %v584
      %v587 = vshrl.u32 %v288, 16
      %v589 = vrot.slane %v587, 4
      %v590 = vshll.u32 %v288, 16
      %v592 = vrot.slane %v590, 5
      %v593 = vor.u32 %v589, %v592
      %v594 = vrot.slane %v593, 4
      %v596 = vshll.u32 %v289, 16
      %v598 = vrot.slane %v596, 5
      %v599 = vsel %vm365, %v594, %v598
      %v600 = vshrl.u32 %v289, 16
      %v602 = vrot.slane %v600, 4
      %v603 = vor.u32 %v602, %v598
      %v604 = vrot.slane %v603, 4
      %v606 = vshll.u32 %v290, 16
      %v608 = vrot.slane %v606, 5
      %v609 = vsel %vm365, %v604, %v608
      %v610 = vshrl.u32 %v290, 16
      %v612 = vrot.slane %v610, 4
      %v613 = vor.u32 %v612, %v608
      %v614 = vrot.slane %v613, 4
      %v616 = vshll.u32 %v291, 16
      %v618 = vrot.slane %v616, 5
      %v619 = vsel %vm365, %v614, %v618
      %v620 = vshrl.u32 %v291, 16
      %v622 = vrot.slane %v620, 4
      %v623 = vor.u32 %v622, %v618
      %v624 = vrot.slane %v623, 4
      %v626 = vshll.u32 %v292, 16
      %v628 = vrot.slane %v626, 5
      %v629 = vsel %vm365, %v624, %v628
      %v631 = vshrl.u32 %v293, 16
      %v633 = vrot.slane %v631, 4
      %v634 = vshll.u32 %v293, 16
      %v636 = vrot.slane %v634, 5
      %v637 = vor.u32 %v633, %v636
      %v638 = vrot.slane %v637, 4
      %v640 = vshll.u32 %v294, 16
      %v642 = vrot.slane %v640, 5
      %v643 = vsel %vm365, %v638, %v642
      %v644 = vshrl.u32 %v294, 16
      %v646 = vrot.slane %v644, 4
      %v647 = vor.u32 %v646, %v642
      %v648 = vrot.slane %v647, 4
      %v650 = vshll.u32 %v295, 16
      %v652 = vrot.slane %v650, 5
      %v653 = vsel %vm365, %v648, %v652
      %v654 = vshrl.u32 %v295, 16
      %v656 = vrot.slane %v654, 4
      %v657 = vor.u32 %v656, %v652
      %v658 = vrot.slane %v657, 4
      %v660 = vshll.u32 %v296, 16
      %v662 = vrot.slane %v660, 5
      %v663 = vsel %vm365, %v658, %v662
      %v664 = vshrl.u32 %v296, 16
      %v666 = vrot.slane %v664, 4
      %v667 = vor.u32 %v666, %v662
      %v668 = vrot.slane %v667, 4
      %v670 = vshll.u32 %v297, 16
      %v672 = vrot.slane %v670, 5
      %v673 = vsel %vm365, %v668, %v672
      %v675 = vshrl.u32 %v298, 16
      %v677 = vrot.slane %v675, 4
      %v678 = vshll.u32 %v298, 16
      %v680 = vrot.slane %v678, 5
      %v681 = vor.u32 %v677, %v680
      %v682 = vrot.slane %v681, 4
      %v684 = vshll.u32 %v299, 16
      %v686 = vrot.slane %v684, 5
      %v687 = vsel %vm365, %v682, %v686
      %v688 = vshrl.u32 %v299, 16
      %v690 = vrot.slane %v688, 4
      %v691 = vor.u32 %v690, %v686
      %v692 = vrot.slane %v691, 4
      %v694 = vshll.u32 %v300, 16
      %v696 = vrot.slane %v694, 5
      %v697 = vsel %vm365, %v692, %v696
      %v698 = vshrl.u32 %v300, 16
      %v700 = vrot.slane %v698, 4
      %v701 = vor.u32 %v700, %v696
      %v702 = vrot.slane %v701, 4
      %v704 = vshll.u32 %v301, 16
      %v706 = vrot.slane %v704, 5
      %v707 = vsel %vm365, %v702, %v706
      %v708 = vshrl.u32 %v301, 16
      %v710 = vrot.slane %v708, 4
      %v711 = vor.u32 %v710, %v706
      %v712 = vrot.slane %v711, 4
      %v714 = vshll.u32 %v302, 16
      %v716 = vrot.slane %v714, 5
      %v717 = vsel %vm365, %v712, %v716
      %v719 = vshrl.u32 %v303, 16
      %v721 = vrot.slane %v719, 4
      %v722 = vshll.u32 %v303, 16
      %v724 = vrot.slane %v722, 5
      %v725 = vor.u32 %v721, %v724
      %v726 = vrot.slane %v725, 4
      %v728 = vshll.u32 %v304, 16
      %v730 = vrot.slane %v728, 5
      %v731 = vsel %vm365, %v726, %v730
      %v732 = vshrl.u32 %v304, 16
      %v734 = vrot.slane %v732, 4
      %v735 = vor.u32 %v734, %v730
      %v736 = vrot.slane %v735, 4
      %v738 = vshll.u32 %v305, 16
      %v740 = vrot.slane %v738, 5
      %v741 = vsel %vm365, %v736, %v740
      %v742 = vshrl.u32 %v305, 16
      %v744 = vrot.slane %v742, 4
      %v745 = vor.u32 %v744, %v740
      %v746 = vrot.slane %v745, 4
      %v748 = vshll.u32 %v306, 16
      %v750 = vrot.slane %v748, 5
      %v751 = vsel %vm365, %v746, %v750
      %v752 = vshrl.u32 %v306, 16
      %v754 = vrot.slane %v752, 4
      %v755 = vor.u32 %v754, %v750
      %v756 = vrot.slane %v755, 4
      %v758 = vshll.u32 %v307, 16
      %v760 = vrot.slane %v758, 5
      %v761 = vsel %vm365, %v756, %v760
      %v763 = vshrl.u32 %v308, 16
      %v765 = vrot.slane %v763, 4
      %v766 = vshll.u32 %v308, 16
      %v768 = vrot.slane %v766, 5
      %v769 = vor.u32 %v765, %v768
      %v770 = vrot.slane %v769, 4
      %v772 = vshll.u32 %v309, 16
      %v774 = vrot.slane %v772, 5
      %v775 = vsel %vm365, %v770, %v774
      %v776 = vshrl.u32 %v309, 16
      %v778 = vrot.slane %v776, 4
      %v779 = vor.u32 %v778, %v774
      %v780 = vrot.slane %v779, 4
      %v782 = vshll.u32 %v310, 16
      %v784 = vrot.slane %v782, 5
      %v785 = vsel %vm365, %v780, %v784
      %v786 = vshrl.u32 %v310, 16
      %v788 = vrot.slane %v786, 4
      %v789 = vor.u32 %v788, %v784
      %v790 = vrot.slane %v789, 4
      %v792 = vshll.u32 %v311, 16
      %v794 = vrot.slane %v792, 5
      %v795 = vsel %vm365, %v790, %v794
      %v796 = vshrl.u32 %v311, 16
      %v798 = vrot.slane %v796, 4
      %v799 = vor.u32 %v798, %v794
      %v800 = vrot.slane %v799, 4
      %v802 = vshll.u32 %v312, 16
      %v804 = vrot.slane %v802, 5
      %v805 = vsel %vm365, %v800, %v804
      %v807 = vshrl.u32 %v313, 16
      %v809 = vrot.slane %v807, 4
      %v810 = vshll.u32 %v313, 16
      %v812 = vrot.slane %v810, 5
      %v813 = vor.u32 %v809, %v812
      %v814 = vrot.slane %v813, 4
      %v816 = vshll.u32 %v314, 16
      %v818 = vrot.slane %v816, 5
      %v819 = vsel %vm365, %v814, %v818
      %v820 = vshrl.u32 %v314, 16
      %v822 = vrot.slane %v820, 4
      %v823 = vor.u32 %v822, %v818
      %v824 = vrot.slane %v823, 4
      %v826 = vshll.u32 %v315, 16
      %v828 = vrot.slane %v826, 5
      %v829 = vsel %vm365, %v824, %v828
      %v830 = vshrl.u32 %v315, 16
      %v832 = vrot.slane %v830, 4
      %v833 = vor.u32 %v832, %v828
      %v834 = vrot.slane %v833, 4
      %v836 = vshll.u32 %v316, 16
      %v838 = vrot.slane %v836, 5
      %v839 = vsel %vm365, %v834, %v838
      %v840 = vshrl.u32 %v316, 16
      %v842 = vrot.slane %v840, 4
      %v843 = vor.u32 %v842, %v838
      %v844 = vrot.slane %v843, 4
      %v846 = vshll.u32 %v317, 16
      %v848 = vrot.slane %v846, 5
      %v849 = vsel %vm365, %v844, %v848
      %v851 = vshrl.u32 %v318, 16
      %v853 = vrot.slane %v851, 4
      %v854 = vshll.u32 %v318, 16
      %v856 = vrot.slane %v854, 5
      %v857 = vor.u32 %v853, %v856
      %v858 = vrot.slane %v857, 4
      %v860 = vshll.u32 %v319, 16
      %v862 = vrot.slane %v860, 5
      %v863 = vsel %vm365, %v858, %v862
      %v864 = vshrl.u32 %v319, 16
      %v866 = vrot.slane %v864, 4
      %v867 = vor.u32 %v866, %v862
      %v868 = vrot.slane %v867, 4
      %v870 = vshll.u32 %v320, 16
      %v872 = vrot.slane %v870, 5
      %v873 = vsel %vm365, %v868, %v872
      %v874 = vshrl.u32 %v320, 16
      %v876 = vrot.slane %v874, 4
      %v877 = vor.u32 %v876, %v872
      %v878 = vrot.slane %v877, 4
      %v880 = vshll.u32 %v321, 16
      %v882 = vrot.slane %v880, 5
      %v883 = vsel %vm365, %v878, %v882
      %v884 = vshrl.u32 %v321, 16
      %v886 = vrot.slane %v884, 4
      %v887 = vor.u32 %v886, %v882
      %v888 = vrot.slane %v887, 4
      %v890 = vshll.u32 %v322, 16
      %v892 = vrot.slane %v890, 5
      %v893 = vsel %vm365, %v888, %v892
      %v895 = vshrl.u32 %v323, 16
      %v897 = vrot.slane %v895, 4
      %v898 = vshll.u32 %v323, 16
      %v900 = vrot.slane %v898, 5
      %v901 = vor.u32 %v897, %v900
      %v902 = vrot.slane %v901, 4
      %v904 = vshll.u32 %v324, 16
      %v906 = vrot.slane %v904, 5
      %v907 = vsel %vm365, %v902, %v906
      %v908 = vshrl.u32 %v324, 16
      %v910 = vrot.slane %v908, 4
      %v911 = vor.u32 %v910, %v906
      %v912 = vrot.slane %v911, 4
      %v914 = vshll.u32 %v325, 16
      %v916 = vrot.slane %v914, 5
      %v917 = vsel %vm365, %v912, %v916
      %v918 = vshrl.u32 %v325, 16
      %v920 = vrot.slane %v918, 4
      %v921 = vor.u32 %v920, %v916
      %v922 = vrot.slane %v921, 4
      %v924 = vshll.u32 %v326, 16
      %v926 = vrot.slane %v924, 5
      %v927 = vsel %vm365, %v922, %v926
      %v928 = vshrl.u32 %v326, 16
      %v930 = vrot.slane %v928, 4
      %v931 = vor.u32 %v930, %v926
      %v932 = vrot.slane %v931, 4
      %v934 = vshll.u32 %v327, 16
      %v936 = vrot.slane %v934, 5
      %v937 = vsel %vm365, %v932, %v936
      %v939 = vshrl.u32 %v328, 16
      %v941 = vrot.slane %v939, 4
      %v942 = vshll.u32 %v328, 16
      %v944 = vrot.slane %v942, 5
      %v945 = vor.u32 %v941, %v944
      %v946 = vrot.slane %v945, 4
      %v948 = vshll.u32 %v329, 16
      %v950 = vrot.slane %v948, 5
      %v951 = vsel %vm365, %v946, %v950
      %v952 = vshrl.u32 %v329, 16
      %v954 = vrot.slane %v952, 4
      %v955 = vor.u32 %v954, %v950
      %v956 = vrot.slane %v955, 4
      %v958 = vshll.u32 %v330, 16
      %v960 = vrot.slane %v958, 5
      %v961 = vsel %vm365, %v956, %v960
      %v962 = vshrl.u32 %v330, 16
      %v964 = vrot.slane %v962, 4
      %v965 = vor.u32 %v964, %v960
      %v966 = vrot.slane %v965, 4
      %v968 = vshll.u32 %v331, 16
      %v970 = vrot.slane %v968, 5
      %v971 = vsel %vm365, %v966, %v970
      %v972 = vshrl.u32 %v331, 16
      %v974 = vrot.slane %v972, 4
      %v975 = vor.u32 %v974, %v970
      %v976 = vrot.slane %v975, 4
      %v978 = vshll.u32 %v332, 16
      %v980 = vrot.slane %v978, 5
      %v981 = vsel %vm365, %v976, %v980
      %v983 = vshrl.u32 %v333, 16
      %v985 = vrot.slane %v983, 4
      %v986 = vshll.u32 %v333, 16
      %v988 = vrot.slane %v986, 5
      %v989 = vor.u32 %v985, %v988
      %v990 = vrot.slane %v989, 4
      %v992 = vshll.u32 %v334, 16
      %v994 = vrot.slane %v992, 5
      %v995 = vsel %vm365, %v990, %v994
      %v996 = vshrl.u32 %v334, 16
      %v998 = vrot.slane %v996, 4
      %v999 = vor.u32 %v998, %v994
      %v1000 = vrot.slane %v999, 4
      %v1002 = vshll.u32 %v335, 16
      %v1004 = vrot.slane %v1002, 5
      %v1005 = vsel %vm365, %v1000, %v1004
      %v1006 = vshrl.u32 %v335, 16
      %v1008 = vrot.slane %v1006, 4
      %v1009 = vor.u32 %v1008, %v1004
      %v1010 = vrot.slane %v1009, 4
      %v1012 = vshll.u32 %v336, 16
      %v1014 = vrot.slane %v1012, 5
      %v1015 = vsel %vm365, %v1010, %v1014
      %v1016 = vshrl.u32 %v336, 16
      %v1018 = vrot.slane %v1016, 4
      %v1019 = vor.u32 %v1018, %v1014
      %v1020 = vrot.slane %v1019, 4
      %v1022 = vshll.u32 %v337, 16
      %v1024 = vrot.slane %v1022, 5
      %v1025 = vsel %vm365, %v1020, %v1024
      %v1027 = vshrl.u32 %v338, 16
      %v1029 = vrot.slane %v1027, 4
      %v1030 = vshll.u32 %v338, 16
      %v1032 = vrot.slane %v1030, 5
      %v1033 = vor.u32 %v1029, %v1032
      %v1034 = vrot.slane %v1033, 4
      %v1036 = vshll.u32 %v339, 16
      %v1038 = vrot.slane %v1036, 5
      %v1039 = vsel %vm365, %v1034, %v1038
      %v1040 = vshrl.u32 %v339, 16
      %v1042 = vrot.slane %v1040, 4
      %v1043 = vor.u32 %v1042, %v1038
      %v1044 = vrot.slane %v1043, 4
      %v1046 = vshll.u32 %v340, 16
      %v1048 = vrot.slane %v1046, 5
      %v1049 = vsel %vm365, %v1044, %v1048
      %v1050 = vshrl.u32 %v340, 16
      %v1052 = vrot.slane %v1050, 4
      %v1053 = vor.u32 %v1052, %v1048
      %v1054 = vrot.slane %v1053, 4
      %v1056 = vshll.u32 %v341, 16
      %v1058 = vrot.slane %v1056, 5
      %v1059 = vsel %vm365, %v1054, %v1058
      %v1060 = vshrl.u32 %v341, 16
      %v1062 = vrot.slane %v1060, 4
      %v1063 = vor.u32 %v1062, %v1058
      %v1064 = vrot.slane %v1063, 4
      %v1066 = vshll.u32 %v342, 16
      %v1068 = vrot.slane %v1066, 5
      %v1069 = vsel %vm365, %v1064, %v1068
      %v1071 = vshrl.u32 %v343, 16
      %v1073 = vrot.slane %v1071, 4
      %v1074 = vshll.u32 %v343, 16
      %v1076 = vrot.slane %v1074, 5
      %v1077 = vor.u32 %v1073, %v1076
      %v1078 = vrot.slane %v1077, 4
      %v1080 = vshll.u32 %v344, 16
      %v1082 = vrot.slane %v1080, 5
      %v1083 = vsel %vm365, %v1078, %v1082
      %v1084 = vshrl.u32 %v344, 16
      %v1086 = vrot.slane %v1084, 4
      %v1087 = vor.u32 %v1086, %v1082
      %v1088 = vrot.slane %v1087, 4
      %v1090 = vshll.u32 %v345, 16
      %v1092 = vrot.slane %v1090, 5
      %v1093 = vsel %vm365, %v1088, %v1092
      %v1094 = vshrl.u32 %v345, 16
      %v1096 = vrot.slane %v1094, 4
      %v1097 = vor.u32 %v1096, %v1092
      %v1098 = vrot.slane %v1097, 4
      %v1100 = vshll.u32 %v346, 16
      %v1102 = vrot.slane %v1100, 5
      %v1103 = vsel %vm365, %v1098, %v1102
      %v1104 = vshrl.u32 %v346, 16
      %v1106 = vrot.slane %v1104, 4
      %v1107 = vor.u32 %v1106, %v1102
      %v1108 = vrot.slane %v1107, 4
      %v1110 = vshll.u32 %v347, 16
      %v1112 = vrot.slane %v1110, 5
      %v1113 = vsel %vm365, %v1108, %v1112
      %v1115 = vshrl.u32 %v348, 16
      %v1117 = vrot.slane %v1115, 4
      %v1118 = vshll.u32 %v348, 16
      %v1120 = vrot.slane %v1118, 5
      %v1121 = vor.u32 %v1117, %v1120
      %v1122 = vrot.slane %v1121, 4
      %v1124 = vshll.u32 %v349, 16
      %v1126 = vrot.slane %v1124, 5
      %v1127 = vsel %vm365, %v1122, %v1126
      %v1128 = vshrl.u32 %v349, 16
      %v1130 = vrot.slane %v1128, 4
      %v1131 = vor.u32 %v1130, %v1126
      %v1132 = vrot.slane %v1131, 4
      %v1134 = vshll.u32 %v350, 16
      %v1136 = vrot.slane %v1134, 5
      %v1137 = vsel %vm365, %v1132, %v1136
      %v1138 = vshrl.u32 %v350, 16
      %v1140 = vrot.slane %v1138, 4
      %v1141 = vor.u32 %v1140, %v1136
      %v1142 = vrot.slane %v1141, 4
      %v1144 = vshll.u32 %v351, 16
      %v1146 = vrot.slane %v1144, 5
      %v1147 = vsel %vm365, %v1142, %v1146
      %v1148 = vshrl.u32 %v351, 16
      %v1150 = vrot.slane %v1148, 4
      %v1151 = vor.u32 %v1150, %v1146
      %v1152 = vrot.slane %v1151, 4
      %v1154 = vshll.u32 %v352, 16
      %v1156 = vrot.slane %v1154, 5
      %v1157 = vsel %vm365, %v1152, %v1156
      %vm1248 = vcmask 1042432
      %vm1249 = vcmask 1046532
      %vm1250 = vmor %vm1248, %vm1249
      %v1251 = vrot.slane %v263, 5
      %v1252 = vrot.slane %v1251, 4
      %v1253 = vrot.slane %v264, 5
      %v1254 = vsel %vm1250, %v1252, %v1253
      %v1255 = vrot.slane %v1253, 4
      %v1256 = vrot.slane %v265, 5
      %v1257 = vsel %vm1250, %v1255, %v1256
      %v1258 = vrot.slane %v1256, 4
      %v1259 = vrot.slane %v266, 5
      %v1260 = vsel %vm1250, %v1258, %v1259
      %v1261 = vrot.slane %v1259, 4
      %v1262 = vrot.slane %v267, 5
      %v1263 = vsel %vm1250, %v1261, %v1262
      %v1264 = vrot.slane %v268, 5
      %v1265 = vrot.slane %v1264, 4
      %v1266 = vrot.slane %v269, 5
      %v1267 = vsel %vm1250, %v1265, %v1266
      %v1268 = vrot.slane %v1266, 4
      %v1269 = vrot.slane %v270, 5
      %v1270 = vsel %vm1250, %v1268, %v1269
      %v1271 = vrot.slane %v1269, 4
      %v1272 = vrot.slane %v271, 5
      %v1273 = vsel %vm1250, %v1271, %v1272
      %v1274 = vrot.slane %v1272, 4
      %v1275 = vrot.slane %v272, 5
      %v1276 = vsel %vm1250, %v1274, %v1275
      %v1277 = vrot.slane %v273, 5
      %v1278 = vrot.slane %v1277, 4
      %v1279 = vrot.slane %v274, 5
      %v1280 = vsel %vm1250, %v1278, %v1279
      %v1281 = vrot.slane %v1279, 4
      %v1282 = vrot.slane %v275, 5
      %v1283 = vsel %vm1250, %v1281, %v1282
      %v1284 = vrot.slane %v1282, 4
      %v1285 = vrot.slane %v276, 5
      %v1286 = vsel %vm1250, %v1284, %v1285
      %v1287 = vrot.slane %v1285, 4
      %v1288 = vrot.slane %v277, 5
      %v1289 = vsel %vm1250, %v1287, %v1288
      %v1290 = vrot.slane %v278, 5
      %v1291 = vrot.slane %v1290, 4
      %v1292 = vrot.slane %v279, 5
      %v1293 = vsel %vm1250, %v1291, %v1292
      %v1294 = vrot.slane %v1292, 4
      %v1295 = vrot.slane %v280, 5
      %v1296 = vsel %vm1250, %v1294, %v1295
      %v1297 = vrot.slane %v1295, 4
      %v1298 = vrot.slane %v281, 5
      %v1299 = vsel %vm1250, %v1297, %v1298
      %v1300 = vrot.slane %v1298, 4
      %v1301 = vrot.slane %v282, 5
      %v1302 = vsel %vm1250, %v1300, %v1301
      %v1303 = vrot.slane %v283, 5
      %v1304 = vrot.slane %v1303, 4
      %v1305 = vrot.slane %v284, 5
      %v1306 = vsel %vm1250, %v1304, %v1305
      %v1307 = vrot.slane %v1305, 4
      %v1308 = vrot.slane %v285, 5
      %v1309 = vsel %vm1250, %v1307, %v1308
      %v1310 = vrot.slane %v1308, 4
      %v1311 = vrot.slane %v286, 5
      %v1312 = vsel %vm1250, %v1310, %v1311
      %v1313 = vrot.slane %v1311, 4
      %v1314 = vrot.slane %v287, 5
      %v1315 = vsel %vm1250, %v1313, %v1314
      %v1316 = vrot.slane %v288, 5
      %v1317 = vrot.slane %v1316, 4
      %v1318 = vrot.slane %v289, 5
      %v1319 = vsel %vm1250, %v1317, %v1318
      %v1320 = vrot.slane %v1318, 4
      %v1321 = vrot.slane %v290, 5
      %v1322 = vsel %vm1250, %v1320, %v1321
      %v1323 = vrot.slane %v1321, 4
      %v1324 = vrot.slane %v291, 5
      %v1325 = vsel %vm1250, %v1323, %v1324
      %v1326 = vrot.slane %v1324, 4
      %v1327 = vrot.slane %v292, 5
      %v1328 = vsel %vm1250, %v1326, %v1327
      %v1329 = vrot.slane %v293, 5
      %v1330 = vrot.slane %v1329, 4
      %v1331 = vrot.slane %v294, 5
      %v1332 = vsel %vm1250, %v1330, %v1331
      %v1333 = vrot.slane %v1331, 4
      %v1334 = vrot.slane %v295, 5
      %v1335 = vsel %vm1250, %v1333, %v1334
      %v1336 = vrot.slane %v1334, 4
      %v1337 = vrot.slane %v296, 5
      %v1338 = vsel %vm1250, %v1336, %v1337
      %v1339 = vrot.slane %v1337, 4
      %v1340 = vrot.slane %v297, 5
      %v1341 = vsel %vm1250, %v1339, %v1340
      %v1342 = vrot.slane %v298, 5
      %v1343 = vrot.slane %v1342, 4
      %v1344 = vrot.slane %v299, 5
      %v1345 = vsel %vm1250, %v1343, %v1344
      %v1346 = vrot.slane %v1344, 4
      %v1347 = vrot.slane %v300, 5
      %v1348 = vsel %vm1250, %v1346, %v1347
      %v1349 = vrot.slane %v1347, 4
      %v1350 = vrot.slane %v301, 5
      %v1351 = vsel %vm1250, %v1349, %v1350
      %v1352 = vrot.slane %v1350, 4
      %v1353 = vrot.slane %v302, 5
      %v1354 = vsel %vm1250, %v1352, %v1353
      %v1355 = vrot.slane %v303, 5
      %v1356 = vrot.slane %v1355, 4
      %v1357 = vrot.slane %v304, 5
      %v1358 = vsel %vm1250, %v1356, %v1357
      %v1359 = vrot.slane %v1357, 4
      %v1360 = vrot.slane %v305, 5
      %v1361 = vsel %vm1250, %v1359, %v1360
      %v1362 = vrot.slane %v1360, 4
      %v1363 = vrot.slane %v306, 5
      %v1364 = vsel %vm1250, %v1362, %v1363
      %v1365 = vrot.slane %v1363, 4
      %v1366 = vrot.slane %v307, 5
      %v1367 = vsel %vm1250, %v1365, %v1366
      %v1368 = vrot.slane %v308, 5
      %v1369 = vrot.slane %v1368, 4
      %v1370 = vrot.slane %v309, 5
      %v1371 = vsel %vm1250, %v1369, %v1370
      %v1372 = vrot.slane %v1370, 4
      %v1373 = vrot.slane %v310, 5
      %v1374 = vsel %vm1250, %v1372, %v1373
      %v1375 = vrot.slane %v1373, 4
      %v1376 = vrot.slane %v311, 5
      %v1377 = vsel %vm1250, %v1375, %v1376
      %v1378 = vrot.slane %v1376, 4
      %v1379 = vrot.slane %v312, 5
      %v1380 = vsel %vm1250, %v1378, %v1379
      %v1381 = vrot.slane %v313, 5
      %v1382 = vrot.slane %v1381, 4
      %v1383 = vrot.slane %v314, 5
      %v1384 = vsel %vm1250, %v1382, %v1383
      %v1385 = vrot.slane %v1383, 4
      %v1386 = vrot.slane %v315, 5
      %v1387 = vsel %vm1250, %v1385, %v1386
      %v1388 = vrot.slane %v1386, 4
      %v1389 = vrot.slane %v316, 5
      %v1390 = vsel %vm1250, %v1388, %v1389
      %v1391 = vrot.slane %v1389, 4
      %v1392 = vrot.slane %v317, 5
      %v1393 = vsel %vm1250, %v1391, %v1392
      %v1394 = vrot.slane %v318, 5
      %v1395 = vrot.slane %v1394, 4
      %v1396 = vrot.slane %v319, 5
      %v1397 = vsel %vm1250, %v1395, %v1396
      %v1398 = vrot.slane %v1396, 4
      %v1399 = vrot.slane %v320, 5
      %v1400 = vsel %vm1250, %v1398, %v1399
      %v1401 = vrot.slane %v1399, 4
      %v1402 = vrot.slane %v321, 5
      %v1403 = vsel %vm1250, %v1401, %v1402
      %v1404 = vrot.slane %v1402, 4
      %v1405 = vrot.slane %v322, 5
      %v1406 = vsel %vm1250, %v1404, %v1405
      %v1407 = vrot.slane %v323, 5
      %v1408 = vrot.slane %v1407, 4
      %v1409 = vrot.slane %v324, 5
      %v1410 = vsel %vm1250, %v1408, %v1409
      %v1411 = vrot.slane %v1409, 4
      %v1412 = vrot.slane %v325, 5
      %v1413 = vsel %vm1250, %v1411, %v1412
      %v1414 = vrot.slane %v1412, 4
      %v1415 = vrot.slane %v326, 5
      %v1416 = vsel %vm1250, %v1414, %v1415
      %v1417 = vrot.slane %v1415, 4
      %v1418 = vrot.slane %v327, 5
      %v1419 = vsel %vm1250, %v1417, %v1418
      %v1420 = vrot.slane %v328, 5
      %v1421 = vrot.slane %v1420, 4
      %v1422 = vrot.slane %v329, 5
      %v1423 = vsel %vm1250, %v1421, %v1422
      %v1424 = vrot.slane %v1422, 4
      %v1425 = vrot.slane %v330, 5
      %v1426 = vsel %vm1250, %v1424, %v1425
      %v1427 = vrot.slane %v1425, 4
      %v1428 = vrot.slane %v331, 5
      %v1429 = vsel %vm1250, %v1427, %v1428
      %v1430 = vrot.slane %v1428, 4
      %v1431 = vrot.slane %v332, 5
      %v1432 = vsel %vm1250, %v1430, %v1431
      %v1433 = vrot.slane %v333, 5
      %v1434 = vrot.slane %v1433, 4
      %v1435 = vrot.slane %v334, 5
      %v1436 = vsel %vm1250, %v1434, %v1435
      %v1437 = vrot.slane %v1435, 4
      %v1438 = vrot.slane %v335, 5
      %v1439 = vsel %vm1250, %v1437, %v1438
      %v1440 = vrot.slane %v1438, 4
      %v1441 = vrot.slane %v336, 5
      %v1442 = vsel %vm1250, %v1440, %v1441
      %v1443 = vrot.slane %v1441, 4
      %v1444 = vrot.slane %v337, 5
      %v1445 = vsel %vm1250, %v1443, %v1444
      %v1446 = vrot.slane %v338, 5
      %v1447 = vrot.slane %v1446, 4
      %v1448 = vrot.slane %v339, 5
      %v1449 = vsel %vm1250, %v1447, %v1448
      %v1450 = vrot.slane %v1448, 4
      %v1451 = vrot.slane %v340, 5
      %v1452 = vsel %vm1250, %v1450, %v1451
      %v1453 = vrot.slane %v1451, 4
      %v1454 = vrot.slane %v341, 5
      %v1455 = vsel %vm1250, %v1453, %v1454
      %v1456 = vrot.slane %v1454, 4
      %v1457 = vrot.slane %v342, 5
      %v1458 = vsel %vm1250, %v1456, %v1457
      %v1459 = vrot.slane %v343, 5
      %v1460 = vrot.slane %v1459, 4
      %v1461 = vrot.slane %v344, 5
      %v1462 = vsel %vm1250, %v1460, %v1461
      %v1463 = vrot.slane %v1461, 4
      %v1464 = vrot.slane %v345, 5
      %v1465 = vsel %vm1250, %v1463, %v1464
      %v1466 = vrot.slane %v1464, 4
      %v1467 = vrot.slane %v346, 5
      %v1468 = vsel %vm1250, %v1466, %v1467
      %v1469 = vrot.slane %v1467, 4
      %v1470 = vrot.slane %v347, 5
      %v1471 = vsel %vm1250, %v1469, %v1470
      %v1472 = vrot.slane %v348, 5
      %v1473 = vrot.slane %v1472, 4
      %v1474 = vrot.slane %v349, 5
      %v1475 = vsel %vm1250, %v1473, %v1474
      %v1476 = vrot.slane %v1474, 4
      %v1477 = vrot.slane %v350, 5
      %v1478 = vsel %vm1250, %v1476, %v1477
      %v1479 = vrot.slane %v1477, 4
      %v1480 = vrot.slane %v351, 5
      %v1481 = vsel %vm1250, %v1479, %v1480
      %v1482 = vrot.slane %v1480, 4
      %v1483 = vrot.slane %v352, 5
      %v1484 = vsel %vm1250, %v1482, %v1483
      %v1486 = vshrl.u32 %v353, 16
      %v1488 = vrot.slane %v1486, 4
      %v1489 = vshll.u32 %v353, 16
      %v1491 = vrot.slane %v1489, 5
      %v1492 = vor.u32 %v1488, %v1491
      %v1493 = vrot.slane %v1492, 4
      %v1495 = vshll.u32 %v354, 16
      %v1497 = vrot.slane %v1495, 5
      %v1498 = vsel %vm365, %v1493, %v1497
      %v1499 = vshrl.u32 %v354, 16
      %v1501 = vrot.slane %v1499, 4
      %v1502 = vor.u32 %v1501, %v1497
      %v1503 = vrot.slane %v1502, 4
      %v1505 = vshll.u32 %v355, 16
      %v1507 = vrot.slane %v1505, 5
      %v1508 = vsel %vm365, %v1503, %v1507
      %v1509 = vshrl.u32 %v355, 16
      %v1511 = vrot.slane %v1509, 4
      %v1512 = vor.u32 %v1511, %v1507
      %v1513 = vrot.slane %v1512, 4
      %v1515 = vshll.u32 %v356, 16
      %v1517 = vrot.slane %v1515, 5
      %v1518 = vsel %vm365, %v1513, %v1517
      %v1519 = vshrl.u32 %v356, 16
      %v1521 = vrot.slane %v1519, 4
      %v1522 = vor.u32 %v1521, %v1517
      %v1523 = vrot.slane %v1522, 4
      %v1525 = vshll.u32 %v357, 16
      %v1527 = vrot.slane %v1525, 5
      %v1528 = vsel %vm365, %v1523, %v1527
      %v1534 = vrot.slane %v353, 5
      %v1535 = vrot.slane %v1534, 4
      %v1536 = vrot.slane %v354, 5
      %v1537 = vsel %vm1250, %v1535, %v1536
      %v1538 = vrot.slane %v1536, 4
      %v1539 = vrot.slane %v355, 5
      %v1540 = vsel %vm1250, %v1538, %v1539
      %v1541 = vrot.slane %v1539, 4
      %v1542 = vrot.slane %v356, 5
      %v1543 = vsel %vm1250, %v1541, %v1542
      %v1544 = vrot.slane %v1542, 4
      %v1545 = vrot.slane %v357, 5
      %v1546 = vsel %vm1250, %v1544, %v1545
      %v1548 = vshrl.u32 %v358, 16
      %v1550 = vrot.slane %v1548, 4
      %v1551 = vshll.u32 %v358, 16
      %v1553 = vrot.slane %v1551, 5
      %v1554 = vor.u32 %v1550, %v1553
      %v1555 = vrot.slane %v1554, 4
      %v1557 = vshll.u32 %v359, 16
      %v1559 = vrot.slane %v1557, 5
      %v1560 = vsel %vm365, %v1555, %v1559
      %v1561 = vshrl.u32 %v359, 16
      %v1563 = vrot.slane %v1561, 4
      %v1564 = vor.u32 %v1563, %v1559
      %v1565 = vrot.slane %v1564, 4
      %v1567 = vshll.u32 %v360, 16
      %v1569 = vrot.slane %v1567, 5
      %v1570 = vsel %vm365, %v1565, %v1569
      %v1571 = vshrl.u32 %v360, 16
      %v1573 = vrot.slane %v1571, 4
      %v1574 = vor.u32 %v1573, %v1569
      %v1575 = vrot.slane %v1574, 4
      %v1577 = vshll.u32 %v361, 16
      %v1579 = vrot.slane %v1577, 5
      %v1580 = vsel %vm365, %v1575, %v1579
      %v1581 = vshrl.u32 %v361, 16
      %v1583 = vrot.slane %v1581, 4
      %v1584 = vor.u32 %v1583, %v1579
      %v1585 = vrot.slane %v1584, 4
      %v1587 = vshll.u32 %v362, 16
      %v1589 = vrot.slane %v1587, 5
      %v1590 = vsel %vm365, %v1585, %v1589
      %v1596 = vrot.slane %v358, 5
      %v1597 = vrot.slane %v1596, 4
      %v1598 = vrot.slane %v359, 5
      %v1599 = vsel %vm1250, %v1597, %v1598
      %v1600 = vrot.slane %v1598, 4
      %v1601 = vrot.slane %v360, 5
      %v1602 = vsel %vm1250, %v1600, %v1601
      %v1603 = vrot.slane %v1601, 4
      %v1604 = vrot.slane %v361, 5
      %v1605 = vsel %vm1250, %v1603, %v1604
      %v1606 = vrot.slane %v1604, 4
      %v1607 = vrot.slane %v362, 5
      %v1608 = vsel %vm1250, %v1606, %v1607
      %v1609 = vunpack.c.l.b16 %v263
      %v1610 = vunpack.c.l.b16 %v264
      %v1611 = vunpack.c.l.b16 %v265
      %v1612 = vunpack.c.l.b16 %v266
      %v1613 = vunpack.c.l.b16 %v268
      %v1614 = vunpack.c.l.b16 %v269
      %v1615 = vunpack.c.l.b16 %v270
      %v1616 = vunpack.c.l.b16 %v271
      %v1617 = vunpack.c.l.b16 %v273
      %v1618 = vunpack.c.l.b16 %v274
      %v1619 = vunpack.c.l.b16 %v275
      %v1620 = vunpack.c.l.b16 %v276
      %v1621 = vunpack.c.l.b16 %v278
      %v1622 = vunpack.c.l.b16 %v279
      %v1623 = vunpack.c.l.b16 %v280
      %v1624 = vunpack.c.l.b16 %v281
      %v1625 = vunpack.c.l.b16 %v283
      %v1626 = vunpack.c.l.b16 %v284
      %v1627 = vunpack.c.l.b16 %v285
      %v1628 = vunpack.c.l.b16 %v286
      %v1629 = vunpack.c.l.b16 %v288
      %v1630 = vunpack.c.l.b16 %v289
      %v1631 = vunpack.c.l.b16 %v290
      %v1632 = vunpack.c.l.b16 %v291
      %v1633 = vunpack.c.l.b16 %v293
      %v1634 = vunpack.c.l.b16 %v294
      %v1635 = vunpack.c.l.b16 %v295
      %v1636 = vunpack.c.l.b16 %v296
      %v1637 = vunpack.c.l.b16 %v298
      %v1638 = vunpack.c.l.b16 %v299
      %v1639 = vunpack.c.l.b16 %v300
      %v1640 = vunpack.c.l.b16 %v301
      %v1641 = vunpack.c.l.b16 %v303
      %v1642 = vunpack.c.l.b16 %v304
      %v1643 = vunpack.c.l.b16 %v305
      %v1644 = vunpack.c.l.b16 %v306
      %v1645 = vunpack.c.l.b16 %v308
      %v1646 = vunpack.c.l.b16 %v309
      %v1647 = vunpack.c.l.b16 %v310
      %v1648 = vunpack.c.l.b16 %v311
      %v1649 = vunpack.c.l.b16 %v313
      %v1650 = vunpack.c.l.b16 %v314
      %v1651 = vunpack.c.l.b16 %v315
      %v1652 = vunpack.c.l.b16 %v316
      %v1653 = vunpack.c.l.b16 %v318
      %v1654 = vunpack.c.l.b16 %v319
      %v1655 = vunpack.c.l.b16 %v320
      %v1656 = vunpack.c.l.b16 %v321
      %v1657 = vunpack.c.l.b16 %v323
      %v1658 = vunpack.c.l.b16 %v324
      %v1659 = vunpack.c.l.b16 %v325
      %v1660 = vunpack.c.l.b16 %v326
      %v1661 = vunpack.c.l.b16 %v328
      %v1662 = vunpack.c.l.b16 %v329
      %v1663 = vunpack.c.l.b16 %v330
      %v1664 = vunpack.c.l.b16 %v331
      %v1665 = vunpack.c.l.b16 %v333
      %v1666 = vunpack.c.l.b16 %v334
      %v1667 = vunpack.c.l.b16 %v335
      %v1668 = vunpack.c.l.b16 %v336
      %v1669 = vunpack.c.l.b16 %v338
      %v1670 = vunpack.c.l.b16 %v339
      %v1671 = vunpack.c.l.b16 %v340
      %v1672 = vunpack.c.l.b16 %v341
      %v1673 = vunpack.c.l.b16 %v343
      %v1674 = vunpack.c.l.b16 %v344
      %v1675 = vunpack.c.l.b16 %v345
      %v1676 = vunpack.c.l.b16 %v346
      %v1677 = vunpack.c.l.b16 %v348
      %v1678 = vunpack.c.l.b16 %v349
      %v1679 = vunpack.c.l.b16 %v350
      %v1680 = vunpack.c.l.b16 %v351
      %v1681 = vpack.c.b16 %v1610, %v1609
      %v1682 = vpack.c.b16 %v1612, %v1611
      %v1683 = vpack.c.b16 %v1614, %v1613
      %v1684 = vpack.c.b16 %v1616, %v1615
      %v1685 = vpack.c.b16 %v1618, %v1617
      %v1686 = vpack.c.b16 %v1620, %v1619
      %v1687 = vpack.c.b16 %v1622, %v1621
      %v1688 = vpack.c.b16 %v1624, %v1623
      %v1689 = vpack.c.b16 %v1626, %v1625
      %v1690 = vpack.c.b16 %v1628, %v1627
      %v1691 = vpack.c.b16 %v1630, %v1629
      %v1692 = vpack.c.b16 %v1632, %v1631
      %v1693 = vpack.c.b16 %v1634, %v1633
      %v1694 = vpack.c.b16 %v1636, %v1635
      %v1695 = vpack.c.b16 %v1638, %v1637
      %v1696 = vpack.c.b16 %v1640, %v1639
      %v1697 = vpack.c.b16 %v1642, %v1641
      %v1698 = vpack.c.b16 %v1644, %v1643
      %v1699 = vpack.c.b16 %v1646, %v1645
      %v1700 = vpack.c.b16 %v1648, %v1647
      %v1701 = vpack.c.b16 %v1650, %v1649
      %v1702 = vpack.c.b16 %v1652, %v1651
      %v1703 = vpack.c.b16 %v1654, %v1653
      %v1704 = vpack.c.b16 %v1656, %v1655
      %v1705 = vpack.c.b16 %v1658, %v1657
      %v1706 = vpack.c.b16 %v1660, %v1659
      %v1707 = vpack.c.b16 %v1662, %v1661
      %v1708 = vpack.c.b16 %v1664, %v1663
      %v1709 = vpack.c.b16 %v1666, %v1665
      %v1710 = vpack.c.b16 %v1668, %v1667
      %v1711 = vpack.c.b16 %v1670, %v1669
      %v1712 = vpack.c.b16 %v1672, %v1671
      %v1713 = vpack.c.b16 %v1674, %v1673
      %v1714 = vpack.c.b16 %v1676, %v1675
      %v1715 = vpack.c.b16 %v1678, %v1677
      %v1716 = vpack.c.b16 %v1680, %v1679
      %v1717 = vunpack.c.l.b16 %v379
      %v1718 = vunpack.c.l.b16 %v389
      %v1719 = vunpack.c.l.b16 %v399
      %v1720 = vunpack.c.l.b16 %v409
      %v1721 = vunpack.c.l.b16 %v423
      %v1722 = vunpack.c.l.b16 %v433
      %v1723 = vunpack.c.l.b16 %v443
      %v1724 = vunpack.c.l.b16 %v453
      %v1725 = vunpack.c.l.b16 %v467
      %v1726 = vunpack.c.l.b16 %v477
      %v1727 = vunpack.c.l.b16 %v487
      %v1728 = vunpack.c.l.b16 %v497
      %v1729 = vunpack.c.l.b16 %v511
      %v1730 = vunpack.c.l.b16 %v521
      %v1731 = vunpack.c.l.b16 %v531
      %v1732 = vunpack.c.l.b16 %v541
      %v1733 = vunpack.c.l.b16 %v555
      %v1734 = vunpack.c.l.b16 %v565
      %v1735 = vunpack.c.l.b16 %v575
      %v1736 = vunpack.c.l.b16 %v585
      %v1737 = vunpack.c.l.b16 %v599
      %v1738 = vunpack.c.l.b16 %v609
      %v1739 = vunpack.c.l.b16 %v619
      %v1740 = vunpack.c.l.b16 %v629
      %v1741 = vunpack.c.l.b16 %v643
      %v1742 = vunpack.c.l.b16 %v653
      %v1743 = vunpack.c.l.b16 %v663
      %v1744 = vunpack.c.l.b16 %v673
      %v1745 = vunpack.c.l.b16 %v687
      %v1746 = vunpack.c.l.b16 %v697
      %v1747 = vunpack.c.l.b16 %v707
      %v1748 = vunpack.c.l.b16 %v717
      %v1749 = vunpack.c.l.b16 %v731
      %v1750 = vunpack.c.l.b16 %v741
      %v1751 = vunpack.c.l.b16 %v751
      %v1752 = vunpack.c.l.b16 %v761
      %v1753 = vunpack.c.l.b16 %v775
      %v1754 = vunpack.c.l.b16 %v785
      %v1755 = vunpack.c.l.b16 %v795
      %v1756 = vunpack.c.l.b16 %v805
      %v1757 = vunpack.c.l.b16 %v819
      %v1758 = vunpack.c.l.b16 %v829
      %v1759 = vunpack.c.l.b16 %v839
      %v1760 = vunpack.c.l.b16 %v849
      %v1761 = vunpack.c.l.b16 %v863
      %v1762 = vunpack.c.l.b16 %v873
      %v1763 = vunpack.c.l.b16 %v883
      %v1764 = vunpack.c.l.b16 %v893
      %v1765 = vunpack.c.l.b16 %v907
      %v1766 = vunpack.c.l.b16 %v917
      %v1767 = vunpack.c.l.b16 %v927
      %v1768 = vunpack.c.l.b16 %v937
      %v1769 = vunpack.c.l.b16 %v951
      %v1770 = vunpack.c.l.b16 %v961
      %v1771 = vunpack.c.l.b16 %v971
      %v1772 = vunpack.c.l.b16 %v981
      %v1773 = vunpack.c.l.b16 %v995
      %v1774 = vunpack.c.l.b16 %v1005
      %v1775 = vunpack.c.l.b16 %v1015
      %v1776 = vunpack.c.l.b16 %v1025
      %v1777 = vunpack.c.l.b16 %v1039
      %v1778 = vunpack.c.l.b16 %v1049
      %v1779 = vunpack.c.l.b16 %v1059
      %v1780 = vunpack.c.l.b16 %v1069
      %v1781 = vunpack.c.l.b16 %v1083
      %v1782 = vunpack.c.l.b16 %v1093
      %v1783 = vunpack.c.l.b16 %v1103
      %v1784 = vunpack.c.l.b16 %v1113
      %v1785 = vunpack.c.l.b16 %v1127
      %v1786 = vunpack.c.l.b16 %v1137
      %v1787 = vunpack.c.l.b16 %v1147
      %v1788 = vunpack.c.l.b16 %v1157
      %v1789 = vpack.c.b16 %v1718, %v1717
      %v1790 = vpack.c.b16 %v1720, %v1719
      %v1791 = vpack.c.b16 %v1722, %v1721
      %v1792 = vpack.c.b16 %v1724, %v1723
      %v1793 = vpack.c.b16 %v1726, %v1725
      %v1794 = vpack.c.b16 %v1728, %v1727
      %v1795 = vpack.c.b16 %v1730, %v1729
      %v1796 = vpack.c.b16 %v1732, %v1731
      %v1797 = vpack.c.b16 %v1734, %v1733
      %v1798 = vpack.c.b16 %v1736, %v1735
      %v1799 = vpack.c.b16 %v1738, %v1737
      %v1800 = vpack.c.b16 %v1740, %v1739
      %v1801 = vpack.c.b16 %v1742, %v1741
      %v1802 = vpack.c.b16 %v1744, %v1743
      %v1803 = vpack.c.b16 %v1746, %v1745
      %v1804 = vpack.c.b16 %v1748, %v1747
      %v1805 = vpack.c.b16 %v1750, %v1749
      %v1806 = vpack.c.b16 %v1752, %v1751
      %v1807 = vpack.c.b16 %v1754, %v1753
      %v1808 = vpack.c.b16 %v1756, %v1755
      %v1809 = vpack.c.b16 %v1758, %v1757
      %v1810 = vpack.c.b16 %v1760, %v1759
      %v1811 = vpack.c.b16 %v1762, %v1761
      %v1812 = vpack.c.b16 %v1764, %v1763
      %v1813 = vpack.c.b16 %v1766, %v1765
      %v1814 = vpack.c.b16 %v1768, %v1767
      %v1815 = vpack.c.b16 %v1770, %v1769
      %v1816 = vpack.c.b16 %v1772, %v1771
      %v1817 = vpack.c.b16 %v1774, %v1773
      %v1818 = vpack.c.b16 %v1776, %v1775
      %v1819 = vpack.c.b16 %v1778, %v1777
      %v1820 = vpack.c.b16 %v1780, %v1779
      %v1821 = vpack.c.b16 %v1782, %v1781
      %v1822 = vpack.c.b16 %v1784, %v1783
      %v1823 = vpack.c.b16 %v1786, %v1785
      %v1824 = vpack.c.b16 %v1788, %v1787
      %1825 = vrot.lane.b32.xlu0 %v1789, 4
      %v1826 = vpop.permute.xlu0 %1825
      %1827 = vrot.lane.b32.xlu0 %v1790, 4
      %v1828 = vpop.permute.xlu0 %1827
      %1829 = vrot.lane.b32.xlu0 %v1791, 4
      %v1830 = vpop.permute.xlu0 %1829
      %1831 = vrot.lane.b32.xlu0 %v1792, 4
      %v1832 = vpop.permute.xlu0 %1831
      %1833 = vrot.lane.b32.xlu0 %v1793, 4
      %v1834 = vpop.permute.xlu0 %1833
      %1835 = vrot.lane.b32.xlu0 %v1794, 4
      %v1836 = vpop.permute.xlu0 %1835
      %1837 = vrot.lane.b32.xlu0 %v1795, 4
      %v1838 = vpop.permute.xlu0 %1837
      %1839 = vrot.lane.b32.xlu0 %v1796, 4
      %v1840 = vpop.permute.xlu0 %1839
      %1841 = vrot.lane.b32.xlu0 %v1797, 4
      %v1842 = vpop.permute.xlu0 %1841
      %1843 = vrot.lane.b32.xlu0 %v1798, 4
      %v1844 = vpop.permute.xlu0 %1843
      %1845 = vrot.lane.b32.xlu0 %v1799, 4
      %v1846 = vpop.permute.xlu0 %1845
      %1847 = vrot.lane.b32.xlu0 %v1800, 4
      %v1848 = vpop.permute.xlu0 %1847
      %1849 = vrot.lane.b32.xlu0 %v1801, 4
      %v1850 = vpop.permute.xlu0 %1849
      %1851 = vrot.lane.b32.xlu0 %v1802, 4
      %v1852 = vpop.permute.xlu0 %1851
      %1853 = vrot.lane.b32.xlu0 %v1803, 4
      %v1854 = vpop.permute.xlu0 %1853
      %1855 = vrot.lane.b32.xlu0 %v1804, 4
      %v1856 = vpop.permute.xlu0 %1855
      %1857 = vrot.lane.b32.xlu0 %v1805, 4
      %v1858 = vpop.permute.xlu0 %1857
      %1859 = vrot.lane.b32.xlu0 %v1806, 4
      %v1860 = vpop.permute.xlu0 %1859
      %1861 = vrot.lane.b32.xlu0 %v1807, 4
      %v1862 = vpop.permute.xlu0 %1861
      %1863 = vrot.lane.b32.xlu0 %v1808, 4
      %v1864 = vpop.permute.xlu0 %1863
      %1865 = vrot.lane.b32.xlu0 %v1809, 4
      %v1866 = vpop.permute.xlu0 %1865
      %1867 = vrot.lane.b32.xlu0 %v1810, 4
      %v1868 = vpop.permute.xlu0 %1867
      %1869 = vrot.lane.b32.xlu0 %v1811, 4
      %v1870 = vpop.permute.xlu0 %1869
      %1871 = vrot.lane.b32.xlu0 %v1812, 4
      %v1872 = vpop.permute.xlu0 %1871
      %1873 = vrot.lane.b32.xlu0 %v1813, 4
      %v1874 = vpop.permute.xlu0 %1873
      %1875 = vrot.lane.b32.xlu0 %v1814, 4
      %v1876 = vpop.permute.xlu0 %1875
      %1877 = vrot.lane.b32.xlu0 %v1815, 4
      %v1878 = vpop.permute.xlu0 %1877
      %1879 = vrot.lane.b32.xlu0 %v1816, 4
      %v1880 = vpop.permute.xlu0 %1879
      %1881 = vrot.lane.b32.xlu0 %v1817, 4
      %v1882 = vpop.permute.xlu0 %1881
      %1883 = vrot.lane.b32.xlu0 %v1818, 4
      %v1884 = vpop.permute.xlu0 %1883
      %1885 = vrot.lane.b32.xlu0 %v1819, 4
      %v1886 = vpop.permute.xlu0 %1885
      %1887 = vrot.lane.b32.xlu0 %v1820, 4
      %v1888 = vpop.permute.xlu0 %1887
      %1889 = vrot.lane.b32.xlu0 %v1821, 4
      %v1890 = vpop.permute.xlu0 %1889
      %1891 = vrot.lane.b32.xlu0 %v1822, 4
      %v1892 = vpop.permute.xlu0 %1891
      %1893 = vrot.lane.b32.xlu0 %v1823, 4
      %v1894 = vpop.permute.xlu0 %1893
      %1895 = vrot.lane.b32.xlu0 %v1824, 4
      %v1896 = vpop.permute.xlu0 %1895
      %v1897 = vunpack.c.l.b16 %v1254
      %v1898 = vunpack.c.l.b16 %v1257
      %v1899 = vunpack.c.l.b16 %v1260
      %v1900 = vunpack.c.l.b16 %v1263
      %v1901 = vunpack.c.l.b16 %v1267
      %v1902 = vunpack.c.l.b16 %v1270
      %v1903 = vunpack.c.l.b16 %v1273
      %v1904 = vunpack.c.l.b16 %v1276
      %v1905 = vunpack.c.l.b16 %v1280
      %v1906 = vunpack.c.l.b16 %v1283
      %v1907 = vunpack.c.l.b16 %v1286
      %v1908 = vunpack.c.l.b16 %v1289
      %v1909 = vunpack.c.l.b16 %v1293
      %v1910 = vunpack.c.l.b16 %v1296
      %v1911 = vunpack.c.l.b16 %v1299
      %v1912 = vunpack.c.l.b16 %v1302
      %v1913 = vunpack.c.l.b16 %v1306
      %v1914 = vunpack.c.l.b16 %v1309
      %v1915 = vunpack.c.l.b16 %v1312
      %v1916 = vunpack.c.l.b16 %v1315
      %v1917 = vunpack.c.l.b16 %v1319
      %v1918 = vunpack.c.l.b16 %v1322
      %v1919 = vunpack.c.l.b16 %v1325
      %v1920 = vunpack.c.l.b16 %v1328
      %v1921 = vunpack.c.l.b16 %v1332
      %v1922 = vunpack.c.l.b16 %v1335
      %v1923 = vunpack.c.l.b16 %v1338
      %v1924 = vunpack.c.l.b16 %v1341
      %v1925 = vunpack.c.l.b16 %v1345
      %v1926 = vunpack.c.l.b16 %v1348
      %v1927 = vunpack.c.l.b16 %v1351
      %v1928 = vunpack.c.l.b16 %v1354
      %v1929 = vunpack.c.l.b16 %v1358
      %v1930 = vunpack.c.l.b16 %v1361
      %v1931 = vunpack.c.l.b16 %v1364
      %v1932 = vunpack.c.l.b16 %v1367
      %v1933 = vunpack.c.l.b16 %v1371
      %v1934 = vunpack.c.l.b16 %v1374
      %v1935 = vunpack.c.l.b16 %v1377
      %v1936 = vunpack.c.l.b16 %v1380
      %v1937 = vunpack.c.l.b16 %v1384
      %v1938 = vunpack.c.l.b16 %v1387
      %v1939 = vunpack.c.l.b16 %v1390
      %v1940 = vunpack.c.l.b16 %v1393
      %v1941 = vunpack.c.l.b16 %v1397
      %v1942 = vunpack.c.l.b16 %v1400
      %v1943 = vunpack.c.l.b16 %v1403
      %v1944 = vunpack.c.l.b16 %v1406
      %v1945 = vunpack.c.l.b16 %v1410
      %v1946 = vunpack.c.l.b16 %v1413
      %v1947 = vunpack.c.l.b16 %v1416
      %v1948 = vunpack.c.l.b16 %v1419
      %v1949 = vunpack.c.l.b16 %v1423
      %v1950 = vunpack.c.l.b16 %v1426
      %v1951 = vunpack.c.l.b16 %v1429
      %v1952 = vunpack.c.l.b16 %v1432
      %v1953 = vunpack.c.l.b16 %v1436
      %v1954 = vunpack.c.l.b16 %v1439
      %v1955 = vunpack.c.l.b16 %v1442
      %v1956 = vunpack.c.l.b16 %v1445
      %v1957 = vunpack.c.l.b16 %v1449
      %v1958 = vunpack.c.l.b16 %v1452
      %v1959 = vunpack.c.l.b16 %v1455
      %v1960 = vunpack.c.l.b16 %v1458
      %v1961 = vunpack.c.l.b16 %v1462
      %v1962 = vunpack.c.l.b16 %v1465
      %v1963 = vunpack.c.l.b16 %v1468
      %v1964 = vunpack.c.l.b16 %v1471
      %v1965 = vunpack.c.l.b16 %v1475
      %v1966 = vunpack.c.l.b16 %v1478
      %v1967 = vunpack.c.l.b16 %v1481
      %v1968 = vunpack.c.l.b16 %v1484
      %v1969 = vpack.c.b16 %v1898, %v1897
      %v1970 = vpack.c.b16 %v1900, %v1899
      %v1971 = vpack.c.b16 %v1902, %v1901
      %v1972 = vpack.c.b16 %v1904, %v1903
      %v1973 = vpack.c.b16 %v1906, %v1905
      %v1974 = vpack.c.b16 %v1908, %v1907
      %v1975 = vpack.c.b16 %v1910, %v1909
      %v1976 = vpack.c.b16 %v1912, %v1911
      %v1977 = vpack.c.b16 %v1914, %v1913
      %v1978 = vpack.c.b16 %v1916, %v1915
      %v1979 = vpack.c.b16 %v1918, %v1917
      %v1980 = vpack.c.b16 %v1920, %v1919
      %v1981 = vpack.c.b16 %v1922, %v1921
      %v1982 = vpack.c.b16 %v1924, %v1923
      %v1983 = vpack.c.b16 %v1926, %v1925
      %v1984 = vpack.c.b16 %v1928, %v1927
      %v1985 = vpack.c.b16 %v1930, %v1929
      %v1986 = vpack.c.b16 %v1932, %v1931
      %v1987 = vpack.c.b16 %v1934, %v1933
      %v1988 = vpack.c.b16 %v1936, %v1935
      %v1989 = vpack.c.b16 %v1938, %v1937
      %v1990 = vpack.c.b16 %v1940, %v1939
      %v1991 = vpack.c.b16 %v1942, %v1941
      %v1992 = vpack.c.b16 %v1944, %v1943
      %v1993 = vpack.c.b16 %v1946, %v1945
      %v1994 = vpack.c.b16 %v1948, %v1947
      %v1995 = vpack.c.b16 %v1950, %v1949
      %v1996 = vpack.c.b16 %v1952, %v1951
      %v1997 = vpack.c.b16 %v1954, %v1953
      %v1998 = vpack.c.b16 %v1956, %v1955
      %v1999 = vpack.c.b16 %v1958, %v1957
      %v2000 = vpack.c.b16 %v1960, %v1959
      %v2001 = vpack.c.b16 %v1962, %v1961
      %v2002 = vpack.c.b16 %v1964, %v1963
      %v2003 = vpack.c.b16 %v1966, %v1965
      %v2004 = vpack.c.b16 %v1968, %v1967
      %2005 = vrot.lane.b32.xlu0 %v1969, 8
      %v2006 = vpop.permute.xlu0 %2005
      %2007 = vrot.lane.b32.xlu0 %v1970, 8
      %v2008 = vpop.permute.xlu0 %2007
      %2009 = vrot.lane.b32.xlu0 %v1971, 8
      %v2010 = vpop.permute.xlu0 %2009
      %2011 = vrot.lane.b32.xlu0 %v1972, 8
      %v2012 = vpop.permute.xlu0 %2011
      %2013 = vrot.lane.b32.xlu0 %v1973, 8
      %v2014 = vpop.permute.xlu0 %2013
      %2015 = vrot.lane.b32.xlu0 %v1974, 8
      %v2016 = vpop.permute.xlu0 %2015
      %2017 = vrot.lane.b32.xlu0 %v1975, 8
      %v2018 = vpop.permute.xlu0 %2017
      %2019 = vrot.lane.b32.xlu0 %v1976, 8
      %v2020 = vpop.permute.xlu0 %2019
      %2021 = vrot.lane.b32.xlu0 %v1977, 8
      %v2022 = vpop.permute.xlu0 %2021
      %2023 = vrot.lane.b32.xlu0 %v1978, 8
      %v2024 = vpop.permute.xlu0 %2023
      %2025 = vrot.lane.b32.xlu0 %v1979, 8
      %v2026 = vpop.permute.xlu0 %2025
      %2027 = vrot.lane.b32.xlu0 %v1980, 8
      %v2028 = vpop.permute.xlu0 %2027
      %2029 = vrot.lane.b32.xlu0 %v1981, 8
      %v2030 = vpop.permute.xlu0 %2029
      %2031 = vrot.lane.b32.xlu0 %v1982, 8
      %v2032 = vpop.permute.xlu0 %2031
      %2033 = vrot.lane.b32.xlu0 %v1983, 8
      %v2034 = vpop.permute.xlu0 %2033
      %2035 = vrot.lane.b32.xlu0 %v1984, 8
      %v2036 = vpop.permute.xlu0 %2035
      %2037 = vrot.lane.b32.xlu0 %v1985, 8
      %v2038 = vpop.permute.xlu0 %2037
      %2039 = vrot.lane.b32.xlu0 %v1986, 8
      %v2040 = vpop.permute.xlu0 %2039
      %2041 = vrot.lane.b32.xlu0 %v1987, 8
      %v2042 = vpop.permute.xlu0 %2041
      %2043 = vrot.lane.b32.xlu0 %v1988, 8
      %v2044 = vpop.permute.xlu0 %2043
      %2045 = vrot.lane.b32.xlu0 %v1989, 8
      %v2046 = vpop.permute.xlu0 %2045
      %2047 = vrot.lane.b32.xlu0 %v1990, 8
      %v2048 = vpop.permute.xlu0 %2047
      %2049 = vrot.lane.b32.xlu0 %v1991, 8
      %v2050 = vpop.permute.xlu0 %2049
      %2051 = vrot.lane.b32.xlu0 %v1992, 8
      %v2052 = vpop.permute.xlu0 %2051
      %2053 = vrot.lane.b32.xlu0 %v1993, 8
      %v2054 = vpop.permute.xlu0 %2053
      %2055 = vrot.lane.b32.xlu0 %v1994, 8
      %v2056 = vpop.permute.xlu0 %2055
      %2057 = vrot.lane.b32.xlu0 %v1995, 8
      %v2058 = vpop.permute.xlu0 %2057
      %2059 = vrot.lane.b32.xlu0 %v1996, 8
      %v2060 = vpop.permute.xlu0 %2059
      %2061 = vrot.lane.b32.xlu0 %v1997, 8
      %v2062 = vpop.permute.xlu0 %2061
      %2063 = vrot.lane.b32.xlu0 %v1998, 8
      %v2064 = vpop.permute.xlu0 %2063
      %2065 = vrot.lane.b32.xlu0 %v1999, 8
      %v2066 = vpop.permute.xlu0 %2065
      %2067 = vrot.lane.b32.xlu0 %v2000, 8
      %v2068 = vpop.permute.xlu0 %2067
      %2069 = vrot.lane.b32.xlu0 %v2001, 8
      %v2070 = vpop.permute.xlu0 %2069
      %2071 = vrot.lane.b32.xlu0 %v2002, 8
      %v2072 = vpop.permute.xlu0 %2071
      %2073 = vrot.lane.b32.xlu0 %v2003, 8
      %v2074 = vpop.permute.xlu0 %2073
      %2075 = vrot.lane.b32.xlu0 %v2004, 8
      %v2076 = vpop.permute.xlu0 %2075
      %v2077 = vunpack.c.l.b16 %v353
      %v2078 = vunpack.c.l.b16 %v354
      %v2079 = vunpack.c.l.b16 %v355
      %v2080 = vunpack.c.l.b16 %v356
      %v2081 = vpack.c.b16 %v2078, %v2077
      %v2082 = vpack.c.b16 %v2080, %v2079
      %2083 = vrot.lane.b32.xlu0 %v1683, 12
      %v2084 = vpop.permute.xlu0 %2083
      %2085 = vrot.lane.b32.xlu0 %v1684, 12
      %v2086 = vpop.permute.xlu0 %2085
      %2087 = vrot.lane.b32.xlu0 %v1685, 12
      %v2088 = vpop.permute.xlu0 %2087
      %2089 = vrot.lane.b32.xlu0 %v1686, 12
      %v2090 = vpop.permute.xlu0 %2089
      %2091 = vrot.lane.b32.xlu0 %v1687, 12
      %v2092 = vpop.permute.xlu0 %2091
      %2093 = vrot.lane.b32.xlu0 %v1688, 12
      %v2094 = vpop.permute.xlu0 %2093
      %2095 = vrot.lane.b32.xlu0 %v1689, 12
      %v2096 = vpop.permute.xlu0 %2095
      %2097 = vrot.lane.b32.xlu0 %v1690, 12
      %v2098 = vpop.permute.xlu0 %2097
      %2099 = vrot.lane.b32.xlu0 %v1691, 12
      %v2100 = vpop.permute.xlu0 %2099
      %2101 = vrot.lane.b32.xlu0 %v1692, 12
      %v2102 = vpop.permute.xlu0 %2101
      %2103 = vrot.lane.b32.xlu0 %v1693, 12
      %v2104 = vpop.permute.xlu0 %2103
      %2105 = vrot.lane.b32.xlu0 %v1694, 12
      %v2106 = vpop.permute.xlu0 %2105
      %2107 = vrot.lane.b32.xlu0 %v1695, 12
      %v2108 = vpop.permute.xlu0 %2107
      %2109 = vrot.lane.b32.xlu0 %v1696, 12
      %v2110 = vpop.permute.xlu0 %2109
      %2111 = vrot.lane.b32.xlu0 %v1697, 12
      %v2112 = vpop.permute.xlu0 %2111
      %2113 = vrot.lane.b32.xlu0 %v1698, 12
      %v2114 = vpop.permute.xlu0 %2113
      %2115 = vrot.lane.b32.xlu0 %v1699, 12
      %v2116 = vpop.permute.xlu0 %2115
      %2117 = vrot.lane.b32.xlu0 %v1700, 12
      %v2118 = vpop.permute.xlu0 %2117
      %2119 = vrot.lane.b32.xlu0 %v1701, 12
      %v2120 = vpop.permute.xlu0 %2119
      %2121 = vrot.lane.b32.xlu0 %v1702, 12
      %v2122 = vpop.permute.xlu0 %2121
      %2123 = vrot.lane.b32.xlu0 %v1703, 12
      %v2124 = vpop.permute.xlu0 %2123
      %2125 = vrot.lane.b32.xlu0 %v1704, 12
      %v2126 = vpop.permute.xlu0 %2125
      %2127 = vrot.lane.b32.xlu0 %v1705, 12
      %v2128 = vpop.permute.xlu0 %2127
      %2129 = vrot.lane.b32.xlu0 %v1706, 12
      %v2130 = vpop.permute.xlu0 %2129
      %2131 = vrot.lane.b32.xlu0 %v1707, 12
      %v2132 = vpop.permute.xlu0 %2131
      %2133 = vrot.lane.b32.xlu0 %v1708, 12
      %v2134 = vpop.permute.xlu0 %2133
      %2135 = vrot.lane.b32.xlu0 %v1709, 12
      %v2136 = vpop.permute.xlu0 %2135
      %2137 = vrot.lane.b32.xlu0 %v1710, 12
      %v2138 = vpop.permute.xlu0 %2137
      %2139 = vrot.lane.b32.xlu0 %v1711, 12
      %v2140 = vpop.permute.xlu0 %2139
      %2141 = vrot.lane.b32.xlu0 %v1712, 12
      %v2142 = vpop.permute.xlu0 %2141
      %2143 = vrot.lane.b32.xlu0 %v1713, 12
      %v2144 = vpop.permute.xlu0 %2143
      %2145 = vrot.lane.b32.xlu0 %v1714, 12
      %v2146 = vpop.permute.xlu0 %2145
      %2147 = vrot.lane.b32.xlu0 %v1715, 12
      %v2148 = vpop.permute.xlu0 %2147
      %2149 = vrot.lane.b32.xlu0 %v1716, 12
      %v2150 = vpop.permute.xlu0 %2149
      %2151 = vrot.lane.b32.xlu0 %v2081, 12
      %v2152 = vpop.permute.xlu0 %2151
      %2153 = vrot.lane.b32.xlu0 %v2082, 12
      %v2154 = vpop.permute.xlu0 %2153
      %v2155 = vunpack.c.l.b16 %v1498
      %v2156 = vunpack.c.l.b16 %v1508
      %v2157 = vunpack.c.l.b16 %v1518
      %v2158 = vunpack.c.l.b16 %v1528
      %v2159 = vpack.c.b16 %v2156, %v2155
      %v2160 = vpack.c.b16 %v2158, %v2157
      %2161 = vrot.lane.b32.xlu0 %v1791, 16
      %v2162 = vpop.permute.xlu0 %2161
      %2163 = vrot.lane.b32.xlu0 %v1792, 16
      %v2164 = vpop.permute.xlu0 %2163
      %2165 = vrot.lane.b32.xlu0 %v1793, 16
      %v2166 = vpop.permute.xlu0 %2165
      %2167 = vrot.lane.b32.xlu0 %v1794, 16
      %v2168 = vpop.permute.xlu0 %2167
      %2169 = vrot.lane.b32.xlu0 %v1795, 16
      %v2170 = vpop.permute.xlu0 %2169
      %2171 = vrot.lane.b32.xlu0 %v1796, 16
      %v2172 = vpop.permute.xlu0 %2171
      %2173 = vrot.lane.b32.xlu0 %v1797, 16
      %v2174 = vpop.permute.xlu0 %2173
      %2175 = vrot.lane.b32.xlu0 %v1798, 16
      %v2176 = vpop.permute.xlu0 %2175
      %2177 = vrot.lane.b32.xlu0 %v1799, 16
      %v2178 = vpop.permute.xlu0 %2177
      %2179 = vrot.lane.b32.xlu0 %v1800, 16
      %v2180 = vpop.permute.xlu0 %2179
      %2181 = vrot.lane.b32.xlu0 %v1801, 16
      %v2182 = vpop.permute.xlu0 %2181
      %2183 = vrot.lane.b32.xlu0 %v1802, 16
      %v2184 = vpop.permute.xlu0 %2183
      %2185 = vrot.lane.b32.xlu0 %v1803, 16
      %v2186 = vpop.permute.xlu0 %2185
      %2187 = vrot.lane.b32.xlu0 %v1804, 16
      %v2188 = vpop.permute.xlu0 %2187
      %2189 = vrot.lane.b32.xlu0 %v1805, 16
      %v2190 = vpop.permute.xlu0 %2189
      %2191 = vrot.lane.b32.xlu0 %v1806, 16
      %v2192 = vpop.permute.xlu0 %2191
      %2193 = vrot.lane.b32.xlu0 %v1807, 16
      %v2194 = vpop.permute.xlu0 %2193
      %2195 = vrot.lane.b32.xlu0 %v1808, 16
      %v2196 = vpop.permute.xlu0 %2195
      %2197 = vrot.lane.b32.xlu0 %v1809, 16
      %v2198 = vpop.permute.xlu0 %2197
      %2199 = vrot.lane.b32.xlu0 %v1810, 16
      %v2200 = vpop.permute.xlu0 %2199
      %2201 = vrot.lane.b32.xlu0 %v1811, 16
      %v2202 = vpop.permute.xlu0 %2201
      %2203 = vrot.lane.b32.xlu0 %v1812, 16
      %v2204 = vpop.permute.xlu0 %2203
      %2205 = vrot.lane.b32.xlu0 %v1813, 16
      %v2206 = vpop.permute.xlu0 %2205
      %2207 = vrot.lane.b32.xlu0 %v1814, 16
      %v2208 = vpop.permute.xlu0 %2207
      %2209 = vrot.lane.b32.xlu0 %v1815, 16
      %v2210 = vpop.permute.xlu0 %2209
      %2211 = vrot.lane.b32.xlu0 %v1816, 16
      %v2212 = vpop.permute.xlu0 %2211
      %2213 = vrot.lane.b32.xlu0 %v1817, 16
      %v2214 = vpop.permute.xlu0 %2213
      %2215 = vrot.lane.b32.xlu0 %v1818, 16
      %v2216 = vpop.permute.xlu0 %2215
      %2217 = vrot.lane.b32.xlu0 %v1819, 16
      %v2218 = vpop.permute.xlu0 %2217
      %2219 = vrot.lane.b32.xlu0 %v1820, 16
      %v2220 = vpop.permute.xlu0 %2219
      %2221 = vrot.lane.b32.xlu0 %v1821, 16
      %v2222 = vpop.permute.xlu0 %2221
      %2223 = vrot.lane.b32.xlu0 %v1822, 16
      %v2224 = vpop.permute.xlu0 %2223
      %2225 = vrot.lane.b32.xlu0 %v1823, 16
      %v2226 = vpop.permute.xlu0 %2225
      %2227 = vrot.lane.b32.xlu0 %v1824, 16
      %v2228 = vpop.permute.xlu0 %2227
      %2229 = vrot.lane.b32.xlu0 %v2159, 16
      %v2230 = vpop.permute.xlu0 %2229
      %2231 = vrot.lane.b32.xlu0 %v2160, 16
      %v2232 = vpop.permute.xlu0 %2231
      %v2233 = vunpack.c.l.b16 %v1537
      %v2234 = vunpack.c.l.b16 %v1540
      %v2235 = vunpack.c.l.b16 %v1543
      %v2236 = vunpack.c.l.b16 %v1546
      %v2237 = vpack.c.b16 %v2234, %v2233
      %v2238 = vpack.c.b16 %v2236, %v2235
      %2239 = vrot.lane.b32.xlu0 %v1971, 20
      %v2240 = vpop.permute.xlu0 %2239
      %2241 = vrot.lane.b32.xlu0 %v1972, 20
      %v2242 = vpop.permute.xlu0 %2241
      %2243 = vrot.lane.b32.xlu0 %v1973, 20
      %v2244 = vpop.permute.xlu0 %2243
      %2245 = vrot.lane.b32.xlu0 %v1974, 20
      %v2246 = vpop.permute.xlu0 %2245
      %2247 = vrot.lane.b32.xlu0 %v1975, 20
      %v2248 = vpop.permute.xlu0 %2247
      %2249 = vrot.lane.b32.xlu0 %v1976, 20
      %v2250 = vpop.permute.xlu0 %2249
      %2251 = vrot.lane.b32.xlu0 %v1977, 20
      %v2252 = vpop.permute.xlu0 %2251
      %2253 = vrot.lane.b32.xlu0 %v1978, 20
      %v2254 = vpop.permute.xlu0 %2253
      %2255 = vrot.lane.b32.xlu0 %v1979, 20
      %v2256 = vpop.permute.xlu0 %2255
      %2257 = vrot.lane.b32.xlu0 %v1980, 20
      %v2258 = vpop.permute.xlu0 %2257
      %2259 = vrot.lane.b32.xlu0 %v1981, 20
      %v2260 = vpop.permute.xlu0 %2259
      %2261 = vrot.lane.b32.xlu0 %v1982, 20
      %v2262 = vpop.permute.xlu0 %2261
      %2263 = vrot.lane.b32.xlu0 %v1983, 20
      %v2264 = vpop.permute.xlu0 %2263
      %2265 = vrot.lane.b32.xlu0 %v1984, 20
      %v2266 = vpop.permute.xlu0 %2265
      %2267 = vrot.lane.b32.xlu0 %v1985, 20
      %v2268 = vpop.permute.xlu0 %2267
      %2269 = vrot.lane.b32.xlu0 %v1986, 20
      %v2270 = vpop.permute.xlu0 %2269
      %2271 = vrot.lane.b32.xlu0 %v1987, 20
      %v2272 = vpop.permute.xlu0 %2271
      %2273 = vrot.lane.b32.xlu0 %v1988, 20
      %v2274 = vpop.permute.xlu0 %2273
      %2275 = vrot.lane.b32.xlu0 %v1989, 20
      %v2276 = vpop.permute.xlu0 %2275
      %2277 = vrot.lane.b32.xlu0 %v1990, 20
      %v2278 = vpop.permute.xlu0 %2277
      %2279 = vrot.lane.b32.xlu0 %v1991, 20
      %v2280 = vpop.permute.xlu0 %2279
      %2281 = vrot.lane.b32.xlu0 %v1992, 20
      %v2282 = vpop.permute.xlu0 %2281
      %2283 = vrot.lane.b32.xlu0 %v1993, 20
      %v2284 = vpop.permute.xlu0 %2283
      %2285 = vrot.lane.b32.xlu0 %v1994, 20
      %v2286 = vpop.permute.xlu0 %2285
      %2287 = vrot.lane.b32.xlu0 %v1995, 20
      %v2288 = vpop.permute.xlu0 %2287
      %2289 = vrot.lane.b32.xlu0 %v1996, 20
      %v2290 = vpop.permute.xlu0 %2289
      %2291 = vrot.lane.b32.xlu0 %v1997, 20
      %v2292 = vpop.permute.xlu0 %2291
      %2293 = vrot.lane.b32.xlu0 %v1998, 20
      %v2294 = vpop.permute.xlu0 %2293
      %2295 = vrot.lane.b32.xlu0 %v1999, 20
      %v2296 = vpop.permute.xlu0 %2295
      %2297 = vrot.lane.b32.xlu0 %v2000, 20
      %v2298 = vpop.permute.xlu0 %2297
      %2299 = vrot.lane.b32.xlu0 %v2001, 20
      %v2300 = vpop.permute.xlu0 %2299
      %2301 = vrot.lane.b32.xlu0 %v2002, 20
      %v2302 = vpop.permute.xlu0 %2301
      %2303 = vrot.lane.b32.xlu0 %v2003, 20
      %v2304 = vpop.permute.xlu0 %2303
      %2305 = vrot.lane.b32.xlu0 %v2004, 20
      %v2306 = vpop.permute.xlu0 %2305
      %2307 = vrot.lane.b32.xlu0 %v2237, 20
      %v2308 = vpop.permute.xlu0 %2307
      %2309 = vrot.lane.b32.xlu0 %v2238, 20
      %v2310 = vpop.permute.xlu0 %2309
      %v2311 = vunpack.c.l.b16 %v358
      %v2312 = vunpack.c.l.b16 %v359
      %v2313 = vunpack.c.l.b16 %v360
      %v2314 = vunpack.c.l.b16 %v361
      %v2315 = vpack.c.b16 %v2312, %v2311
      %v2316 = vpack.c.b16 %v2314, %v2313
      %2317 = vrot.lane.b32.xlu0 %v1685, 24
      %v2318 = vpop.permute.xlu0 %2317
      %2319 = vrot.lane.b32.xlu0 %v1686, 24
      %v2320 = vpop.permute.xlu0 %2319
      %2321 = vrot.lane.b32.xlu0 %v1687, 24
      %v2322 = vpop.permute.xlu0 %2321
      %2323 = vrot.lane.b32.xlu0 %v1688, 24
      %v2324 = vpop.permute.xlu0 %2323
      %2325 = vrot.lane.b32.xlu0 %v1689, 24
      %v2326 = vpop.permute.xlu0 %2325
      %2327 = vrot.lane.b32.xlu0 %v1690, 24
      %v2328 = vpop.permute.xlu0 %2327
      %2329 = vrot.lane.b32.xlu0 %v1691, 24
      %v2330 = vpop.permute.xlu0 %2329
      %2331 = vrot.lane.b32.xlu0 %v1692, 24
      %v2332 = vpop.permute.xlu0 %2331
      %2333 = vrot.lane.b32.xlu0 %v1693, 24
      %v2334 = vpop.permute.xlu0 %2333
      %2335 = vrot.lane.b32.xlu0 %v1694, 24
      %v2336 = vpop.permute.xlu0 %2335
      %2337 = vrot.lane.b32.xlu0 %v1695, 24
      %v2338 = vpop.permute.xlu0 %2337
      %2339 = vrot.lane.b32.xlu0 %v1696, 24
      %v2340 = vpop.permute.xlu0 %2339
      %2341 = vrot.lane.b32.xlu0 %v1697, 24
      %v2342 = vpop.permute.xlu0 %2341
      %2343 = vrot.lane.b32.xlu0 %v1698, 24
      %v2344 = vpop.permute.xlu0 %2343
      %2345 = vrot.lane.b32.xlu0 %v1699, 24
      %v2346 = vpop.permute.xlu0 %2345
      %2347 = vrot.lane.b32.xlu0 %v1700, 24
      %v2348 = vpop.permute.xlu0 %2347
      %2349 = vrot.lane.b32.xlu0 %v1701, 24
      %v2350 = vpop.permute.xlu0 %2349
      %2351 = vrot.lane.b32.xlu0 %v1702, 24
      %v2352 = vpop.permute.xlu0 %2351
      %2353 = vrot.lane.b32.xlu0 %v1703, 24
      %v2354 = vpop.permute.xlu0 %2353
      %2355 = vrot.lane.b32.xlu0 %v1704, 24
      %v2356 = vpop.permute.xlu0 %2355
      %2357 = vrot.lane.b32.xlu0 %v1705, 24
      %v2358 = vpop.permute.xlu0 %2357
      %2359 = vrot.lane.b32.xlu0 %v1706, 24
      %v2360 = vpop.permute.xlu0 %2359
      %2361 = vrot.lane.b32.xlu0 %v1707, 24
      %v2362 = vpop.permute.xlu0 %2361
      %2363 = vrot.lane.b32.xlu0 %v1708, 24
      %v2364 = vpop.permute.xlu0 %2363
      %2365 = vrot.lane.b32.xlu0 %v1709, 24
      %v2366 = vpop.permute.xlu0 %2365
      %2367 = vrot.lane.b32.xlu0 %v1710, 24
      %v2368 = vpop.permute.xlu0 %2367
      %2369 = vrot.lane.b32.xlu0 %v1711, 24
      %v2370 = vpop.permute.xlu0 %2369
      %2371 = vrot.lane.b32.xlu0 %v1712, 24
      %v2372 = vpop.permute.xlu0 %2371
      %2373 = vrot.lane.b32.xlu0 %v1713, 24
      %v2374 = vpop.permute.xlu0 %2373
      %2375 = vrot.lane.b32.xlu0 %v1714, 24
      %v2376 = vpop.permute.xlu0 %2375
      %2377 = vrot.lane.b32.xlu0 %v1715, 24
      %v2378 = vpop.permute.xlu0 %2377
      %2379 = vrot.lane.b32.xlu0 %v1716, 24
      %v2380 = vpop.permute.xlu0 %2379
      %2381 = vrot.lane.b32.xlu0 %v2081, 24
      %v2382 = vpop.permute.xlu0 %2381
      %2383 = vrot.lane.b32.xlu0 %v2082, 24
      %v2384 = vpop.permute.xlu0 %2383
      %2385 = vrot.lane.b32.xlu0 %v2315, 24
      %v2386 = vpop.permute.xlu0 %2385
      %2387 = vrot.lane.b32.xlu0 %v2316, 24
      %v2388 = vpop.permute.xlu0 %2387
      %v2389 = vunpack.c.l.b16 %v1560
      %v2390 = vunpack.c.l.b16 %v1570
      %v2391 = vunpack.c.l.b16 %v1580
      %v2392 = vunpack.c.l.b16 %v1590
      %v2393 = vpack.c.b16 %v2390, %v2389
      %v2394 = vpack.c.b16 %v2392, %v2391
      %2395 = vrot.lane.b32.xlu0 %v1793, 28
      %v2396 = vpop.permute.xlu0 %2395
      %2397 = vrot.lane.b32.xlu0 %v1794, 28
      %v2398 = vpop.permute.xlu0 %2397
      %2399 = vrot.lane.b32.xlu0 %v1795, 28
      %v2400 = vpop.permute.xlu0 %2399
      %2401 = vrot.lane.b32.xlu0 %v1796, 28
      %v2402 = vpop.permute.xlu0 %2401
      %2403 = vrot.lane.b32.xlu0 %v1797, 28
      %v2404 = vpop.permute.xlu0 %2403
      %2405 = vrot.lane.b32.xlu0 %v1798, 28
      %v2406 = vpop.permute.xlu0 %2405
      %2407 = vrot.lane.b32.xlu0 %v1799, 28
      %v2408 = vpop.permute.xlu0 %2407
      %2409 = vrot.lane.b32.xlu0 %v1800, 28
      %v2410 = vpop.permute.xlu0 %2409
      %2411 = vrot.lane.b32.xlu0 %v1801, 28
      %v2412 = vpop.permute.xlu0 %2411
      %2413 = vrot.lane.b32.xlu0 %v1802, 28
      %v2414 = vpop.permute.xlu0 %2413
      %2415 = vrot.lane.b32.xlu0 %v1803, 28
      %v2416 = vpop.permute.xlu0 %2415
      %2417 = vrot.lane.b32.xlu0 %v1804, 28
      %v2418 = vpop.permute.xlu0 %2417
      %2419 = vrot.lane.b32.xlu0 %v1805, 28
      %v2420 = vpop.permute.xlu0 %2419
      %2421 = vrot.lane.b32.xlu0 %v1806, 28
      %v2422 = vpop.permute.xlu0 %2421
      %2423 = vrot.lane.b32.xlu0 %v1807, 28
      %v2424 = vpop.permute.xlu0 %2423
      %2425 = vrot.lane.b32.xlu0 %v1808, 28
      %v2426 = vpop.permute.xlu0 %2425
      %2427 = vrot.lane.b32.xlu0 %v1809, 28
      %v2428 = vpop.permute.xlu0 %2427
      %2429 = vrot.lane.b32.xlu0 %v1810, 28
      %v2430 = vpop.permute.xlu0 %2429
      %2431 = vrot.lane.b32.xlu0 %v1811, 28
      %v2432 = vpop.permute.xlu0 %2431
      %2433 = vrot.lane.b32.xlu0 %v1812, 28
      %v2434 = vpop.permute.xlu0 %2433
      %2435 = vrot.lane.b32.xlu0 %v1813, 28
      %v2436 = vpop.permute.xlu0 %2435
      %2437 = vrot.lane.b32.xlu0 %v1814, 28
      %v2438 = vpop.permute.xlu0 %2437
      %2439 = vrot.lane.b32.xlu0 %v1815, 28
      %v2440 = vpop.permute.xlu0 %2439
      %2441 = vrot.lane.b32.xlu0 %v1816, 28
      %v2442 = vpop.permute.xlu0 %2441
      %2443 = vrot.lane.b32.xlu0 %v1817, 28
      %v2444 = vpop.permute.xlu0 %2443
      %2445 = vrot.lane.b32.xlu0 %v1818, 28
      %v2446 = vpop.permute.xlu0 %2445
      %2447 = vrot.lane.b32.xlu0 %v1819, 28
      %v2448 = vpop.permute.xlu0 %2447
      %2449 = vrot.lane.b32.xlu0 %v1820, 28
      %v2450 = vpop.permute.xlu0 %2449
      %2451 = vrot.lane.b32.xlu0 %v1821, 28
      %v2452 = vpop.permute.xlu0 %2451
      %2453 = vrot.lane.b32.xlu0 %v1822, 28
      %v2454 = vpop.permute.xlu0 %2453
      %2455 = vrot.lane.b32.xlu0 %v1823, 28
      %v2456 = vpop.permute.xlu0 %2455
      %2457 = vrot.lane.b32.xlu0 %v1824, 28
      %v2458 = vpop.permute.xlu0 %2457
      %2459 = vrot.lane.b32.xlu0 %v2159, 28
      %v2460 = vpop.permute.xlu0 %2459
      %2461 = vrot.lane.b32.xlu0 %v2160, 28
      %v2462 = vpop.permute.xlu0 %2461
      %2463 = vrot.lane.b32.xlu0 %v2393, 28
      %v2464 = vpop.permute.xlu0 %2463
      %2465 = vrot.lane.b32.xlu0 %v2394, 28
      %v2466 = vpop.permute.xlu0 %2465
      %v2467 = vunpack.c.l.b16 %v1599
      %v2468 = vunpack.c.l.b16 %v1602
      %v2469 = vunpack.c.l.b16 %v1605
      %v2470 = vunpack.c.l.b16 %v1608
      %v2471 = vpack.c.b16 %v2468, %v2467
      %v2472 = vpack.c.b16 %v2470, %v2469
      %2473 = vrot.lane.b32.xlu0 %v1973, 32
      %v2474 = vpop.permute.xlu0 %2473
      %2475 = vrot.lane.b32.xlu0 %v1974, 32
      %v2476 = vpop.permute.xlu0 %2475
      %2477 = vrot.lane.b32.xlu0 %v1975, 32
      %v2478 = vpop.permute.xlu0 %2477
      %2479 = vrot.lane.b32.xlu0 %v1976, 32
      %v2480 = vpop.permute.xlu0 %2479
      %2481 = vrot.lane.b32.xlu0 %v1977, 32
      %v2482 = vpop.permute.xlu0 %2481
      %2483 = vrot.lane.b32.xlu0 %v1978, 32
      %v2484 = vpop.permute.xlu0 %2483
      %2485 = vrot.lane.b32.xlu0 %v1979, 32
      %v2486 = vpop.permute.xlu0 %2485
      %2487 = vrot.lane.b32.xlu0 %v1980, 32
      %v2488 = vpop.permute.xlu0 %2487
      %2489 = vrot.lane.b32.xlu0 %v1981, 32
      %v2490 = vpop.permute.xlu0 %2489
      %2491 = vrot.lane.b32.xlu0 %v1982, 32
      %v2492 = vpop.permute.xlu0 %2491
      %2493 = vrot.lane.b32.xlu0 %v1983, 32
      %v2494 = vpop.permute.xlu0 %2493
      %2495 = vrot.lane.b32.xlu0 %v1984, 32
      %v2496 = vpop.permute.xlu0 %2495
      %2497 = vrot.lane.b32.xlu0 %v1985, 32
      %v2498 = vpop.permute.xlu0 %2497
      %2499 = vrot.lane.b32.xlu0 %v1986, 32
      %v2500 = vpop.permute.xlu0 %2499
      %2501 = vrot.lane.b32.xlu0 %v1987, 32
      %v2502 = vpop.permute.xlu0 %2501
      %2503 = vrot.lane.b32.xlu0 %v1988, 32
      %v2504 = vpop.permute.xlu0 %2503
      %2505 = vrot.lane.b32.xlu0 %v1989, 32
      %v2506 = vpop.permute.xlu0 %2505
      %2507 = vrot.lane.b32.xlu0 %v1990, 32
      %v2508 = vpop.permute.xlu0 %2507
      %2509 = vrot.lane.b32.xlu0 %v1991, 32
      %v2510 = vpop.permute.xlu0 %2509
      %2511 = vrot.lane.b32.xlu0 %v1992, 32
      %v2512 = vpop.permute.xlu0 %2511
      %2513 = vrot.lane.b32.xlu0 %v1993, 32
      %v2514 = vpop.permute.xlu0 %2513
      %2515 = vrot.lane.b32.xlu0 %v1994, 32
      %v2516 = vpop.permute.xlu0 %2515
      %2517 = vrot.lane.b32.xlu0 %v1995, 32
      %v2518 = vpop.permute.xlu0 %2517
      %2519 = vrot.lane.b32.xlu0 %v1996, 32
      %v2520 = vpop.permute.xlu0 %2519
      %2521 = vrot.lane.b32.xlu0 %v1997, 32
      %v2522 = vpop.permute.xlu0 %2521
      %2523 = vrot.lane.b32.xlu0 %v1998, 32
      %v2524 = vpop.permute.xlu0 %2523
      %2525 = vrot.lane.b32.xlu0 %v1999, 32
      %v2526 = vpop.permute.xlu0 %2525
      %2527 = vrot.lane.b32.xlu0 %v2000, 32
      %v2528 = vpop.permute.xlu0 %2527
      %2529 = vrot.lane.b32.xlu0 %v2001, 32
      %v2530 = vpop.permute.xlu0 %2529
      %2531 = vrot.lane.b32.xlu0 %v2002, 32
      %v2532 = vpop.permute.xlu0 %2531
      %2533 = vrot.lane.b32.xlu0 %v2003, 32
      %v2534 = vpop.permute.xlu0 %2533
      %2535 = vrot.lane.b32.xlu0 %v2004, 32
      %v2536 = vpop.permute.xlu0 %2535
      %2537 = vrot.lane.b32.xlu0 %v2237, 32
      %v2538 = vpop.permute.xlu0 %2537
      %2539 = vrot.lane.b32.xlu0 %v2238, 32
      %v2540 = vpop.permute.xlu0 %2539
      %2541 = vrot.lane.b32.xlu0 %v2471, 32
      %v2542 = vpop.permute.xlu0 %2541
      %2543 = vrot.lane.b32.xlu0 %v2472, 32
      %v2544 = vpop.permute.xlu0 %2543
      %vm2545 = vcmask 31744
      %v2548 = vsel %vm2545, %v1681, %v1826
      %v2551 = vsel %vm2545, %v1682, %v1828
      %v2554 = vsel %vm2545, %v1683, %v1830
      %v2557 = vsel %vm2545, %v1684, %v1832
      %v2560 = vsel %vm2545, %v1685, %v1834
      %v2563 = vsel %vm2545, %v1686, %v1836
      %v2566 = vsel %vm2545, %v1687, %v1838
      %v2569 = vsel %vm2545, %v1688, %v1840
      %v2572 = vsel %vm2545, %v1689, %v1842
      %v2575 = vsel %vm2545, %v1690, %v1844
      %v2578 = vsel %vm2545, %v1691, %v1846
      %v2581 = vsel %vm2545, %v1692, %v1848
      %v2584 = vsel %vm2545, %v1693, %v1850
      %v2587 = vsel %vm2545, %v1694, %v1852
      %v2590 = vsel %vm2545, %v1695, %v1854
      %v2593 = vsel %vm2545, %v1696, %v1856
      %v2596 = vsel %vm2545, %v1697, %v1858
      %v2599 = vsel %vm2545, %v1698, %v1860
      %v2602 = vsel %vm2545, %v1699, %v1862
      %v2605 = vsel %vm2545, %v1700, %v1864
      %v2608 = vsel %vm2545, %v1701, %v1866
      %v2611 = vsel %vm2545, %v1702, %v1868
      %v2614 = vsel %vm2545, %v1703, %v1870
      %v2617 = vsel %vm2545, %v1704, %v1872
      %v2620 = vsel %vm2545, %v1705, %v1874
      %v2623 = vsel %vm2545, %v1706, %v1876
      %v2626 = vsel %vm2545, %v1707, %v1878
      %v2629 = vsel %vm2545, %v1708, %v1880
      %v2632 = vsel %vm2545, %v1709, %v1882
      %v2635 = vsel %vm2545, %v1710, %v1884
      %v2638 = vsel %vm2545, %v1711, %v1886
      %v2641 = vsel %vm2545, %v1712, %v1888
      %v2644 = vsel %vm2545, %v1713, %v1890
      %v2647 = vsel %vm2545, %v1714, %v1892
      %v2650 = vsel %vm2545, %v1715, %v1894
      %v2653 = vsel %vm2545, %v1716, %v1896
      %vm2654 = vcmask 64512
      %v2656 = vsel %vm2654, %v2548, %v2006
      %v2658 = vsel %vm2654, %v2551, %v2008
      %v2660 = vsel %vm2654, %v2554, %v2010
      %v2662 = vsel %vm2654, %v2557, %v2012
      %v2664 = vsel %vm2654, %v2560, %v2014
      %v2666 = vsel %vm2654, %v2563, %v2016
      %v2668 = vsel %vm2654, %v2566, %v2018
      %v2670 = vsel %vm2654, %v2569, %v2020
      %v2672 = vsel %vm2654, %v2572, %v2022
      %v2674 = vsel %vm2654, %v2575, %v2024
      %v2676 = vsel %vm2654, %v2578, %v2026
      %v2678 = vsel %vm2654, %v2581, %v2028
      %v2680 = vsel %vm2654, %v2584, %v2030
      %v2682 = vsel %vm2654, %v2587, %v2032
      %v2684 = vsel %vm2654, %v2590, %v2034
      %v2686 = vsel %vm2654, %v2593, %v2036
      %v2688 = vsel %vm2654, %v2596, %v2038
      %v2690 = vsel %vm2654, %v2599, %v2040
      %v2692 = vsel %vm2654, %v2602, %v2042
      %v2694 = vsel %vm2654, %v2605, %v2044
      %v2696 = vsel %vm2654, %v2608, %v2046
      %v2698 = vsel %vm2654, %v2611, %v2048
      %v2700 = vsel %vm2654, %v2614, %v2050
      %v2702 = vsel %vm2654, %v2617, %v2052
      %v2704 = vsel %vm2654, %v2620, %v2054
      %v2706 = vsel %vm2654, %v2623, %v2056
      %v2708 = vsel %vm2654, %v2626, %v2058
      %v2710 = vsel %vm2654, %v2629, %v2060
      %v2712 = vsel %vm2654, %v2632, %v2062
      %v2714 = vsel %vm2654, %v2635, %v2064
      %v2716 = vsel %vm2654, %v2638, %v2066
      %v2718 = vsel %vm2654, %v2641, %v2068
      %v2720 = vsel %vm2654, %v2644, %v2070
      %v2722 = vsel %vm2654, %v2647, %v2072
      %v2724 = vsel %vm2654, %v2650, %v2074
      %v2726 = vsel %vm2654, %v2653, %v2076
      %vm2727 = vcmask 97280
      %v2729 = vsel %vm2727, %v2656, %v2084
      %v2731 = vsel %vm2727, %v2658, %v2086
      %v2733 = vsel %vm2727, %v2660, %v2088
      %v2735 = vsel %vm2727, %v2662, %v2090
      %v2737 = vsel %vm2727, %v2664, %v2092
      %v2739 = vsel %vm2727, %v2666, %v2094
      %v2741 = vsel %vm2727, %v2668, %v2096
      %v2743 = vsel %vm2727, %v2670, %v2098
      %v2745 = vsel %vm2727, %v2672, %v2100
      %v2747 = vsel %vm2727, %v2674, %v2102
      %v2749 = vsel %vm2727, %v2676, %v2104
      %v2751 = vsel %vm2727, %v2678, %v2106
      %v2753 = vsel %vm2727, %v2680, %v2108
      %v2755 = vsel %vm2727, %v2682, %v2110
      %v2757 = vsel %vm2727, %v2684, %v2112
      %v2759 = vsel %vm2727, %v2686, %v2114
      %v2761 = vsel %vm2727, %v2688, %v2116
      %v2763 = vsel %vm2727, %v2690, %v2118
      %v2765 = vsel %vm2727, %v2692, %v2120
      %v2767 = vsel %vm2727, %v2694, %v2122
      %v2769 = vsel %vm2727, %v2696, %v2124
      %v2771 = vsel %vm2727, %v2698, %v2126
      %v2773 = vsel %vm2727, %v2700, %v2128
      %v2775 = vsel %vm2727, %v2702, %v2130
      %v2777 = vsel %vm2727, %v2704, %v2132
      %v2779 = vsel %vm2727, %v2706, %v2134
      %v2781 = vsel %vm2727, %v2708, %v2136
      %v2783 = vsel %vm2727, %v2710, %v2138
      %v2785 = vsel %vm2727, %v2712, %v2140
      %v2787 = vsel %vm2727, %v2714, %v2142
      %v2789 = vsel %vm2727, %v2716, %v2144
      %v2791 = vsel %vm2727, %v2718, %v2146
      %v2793 = vsel %vm2727, %v2720, %v2148
      %v2795 = vsel %vm2727, %v2722, %v2150
      %v2797 = vsel %vm2727, %v2724, %v2152
      %v2799 = vsel %vm2727, %v2726, %v2154
      %vm2800 = vcmask 130048
      %v2802 = vsel %vm2800, %v2729, %v2162
      %v2804 = vsel %vm2800, %v2731, %v2164
      %v2806 = vsel %vm2800, %v2733, %v2166
      %v2808 = vsel %vm2800, %v2735, %v2168
      %v2810 = vsel %vm2800, %v2737, %v2170
      %v2812 = vsel %vm2800, %v2739, %v2172
      %v2814 = vsel %vm2800, %v2741, %v2174
      %v2816 = vsel %vm2800, %v2743, %v2176
      %v2818 = vsel %vm2800, %v2745, %v2178
      %v2820 = vsel %vm2800, %v2747, %v2180
      %v2822 = vsel %vm2800, %v2749, %v2182
      %v2824 = vsel %vm2800, %v2751, %v2184
      %v2826 = vsel %vm2800, %v2753, %v2186
      %v2828 = vsel %vm2800, %v2755, %v2188
      %v2830 = vsel %vm2800, %v2757, %v2190
      %v2832 = vsel %vm2800, %v2759, %v2192
      %v2834 = vsel %vm2800, %v2761, %v2194
      %v2836 = vsel %vm2800, %v2763, %v2196
      %v2838 = vsel %vm2800, %v2765, %v2198
      %v2840 = vsel %vm2800, %v2767, %v2200
      %v2842 = vsel %vm2800, %v2769, %v2202
      %v2844 = vsel %vm2800, %v2771, %v2204
      %v2846 = vsel %vm2800, %v2773, %v2206
      %v2848 = vsel %vm2800, %v2775, %v2208
      %v2850 = vsel %vm2800, %v2777, %v2210
      %v2852 = vsel %vm2800, %v2779, %v2212
      %v2854 = vsel %vm2800, %v2781, %v2214
      %v2856 = vsel %vm2800, %v2783, %v2216
      %v2858 = vsel %vm2800, %v2785, %v2218
      %v2860 = vsel %vm2800, %v2787, %v2220
      %v2862 = vsel %vm2800, %v2789, %v2222
      %v2864 = vsel %vm2800, %v2791, %v2224
      %v2866 = vsel %vm2800, %v2793, %v2226
      %v2868 = vsel %vm2800, %v2795, %v2228
      %v2870 = vsel %vm2800, %v2797, %v2230
      %v2872 = vsel %vm2800, %v2799, %v2232
      %vm2873 = vcmask 162816
      %v2875 = vsel %vm2873, %v2802, %v2240
      %v2877 = vsel %vm2873, %v2804, %v2242
      %v2879 = vsel %vm2873, %v2806, %v2244
      %v2881 = vsel %vm2873, %v2808, %v2246
      %v2883 = vsel %vm2873, %v2810, %v2248
      %v2885 = vsel %vm2873, %v2812, %v2250
      %v2887 = vsel %vm2873, %v2814, %v2252
      %v2889 = vsel %vm2873, %v2816, %v2254
      %v2891 = vsel %vm2873, %v2818, %v2256
      %v2893 = vsel %vm2873, %v2820, %v2258
      %v2895 = vsel %vm2873, %v2822, %v2260
      %v2897 = vsel %vm2873, %v2824, %v2262
      %v2899 = vsel %vm2873, %v2826, %v2264
      %v2901 = vsel %vm2873, %v2828, %v2266
      %v2903 = vsel %vm2873, %v2830, %v2268
      %v2905 = vsel %vm2873, %v2832, %v2270
      %v2907 = vsel %vm2873, %v2834, %v2272
      %v2909 = vsel %vm2873, %v2836, %v2274
      %v2911 = vsel %vm2873, %v2838, %v2276
      %v2913 = vsel %vm2873, %v2840, %v2278
      %v2915 = vsel %vm2873, %v2842, %v2280
      %v2917 = vsel %vm2873, %v2844, %v2282
      %v2919 = vsel %vm2873, %v2846, %v2284
      %v2921 = vsel %vm2873, %v2848, %v2286
      %v2923 = vsel %vm2873, %v2850, %v2288
      %v2925 = vsel %vm2873, %v2852, %v2290
      %v2927 = vsel %vm2873, %v2854, %v2292
      %v2929 = vsel %vm2873, %v2856, %v2294
      %v2931 = vsel %vm2873, %v2858, %v2296
      %v2933 = vsel %vm2873, %v2860, %v2298
      %v2935 = vsel %vm2873, %v2862, %v2300
      %v2937 = vsel %vm2873, %v2864, %v2302
      %v2939 = vsel %vm2873, %v2866, %v2304
      %v2941 = vsel %vm2873, %v2868, %v2306
      %v2943 = vsel %vm2873, %v2870, %v2308
      %v2945 = vsel %vm2873, %v2872, %v2310
      %vm2946 = vcmask 195584
      %v2948 = vsel %vm2946, %v2875, %v2318
      %v2950 = vsel %vm2946, %v2877, %v2320
      %v2952 = vsel %vm2946, %v2879, %v2322
      %v2954 = vsel %vm2946, %v2881, %v2324
      %v2956 = vsel %vm2946, %v2883, %v2326
      %v2958 = vsel %vm2946, %v2885, %v2328
      %v2960 = vsel %vm2946, %v2887, %v2330
      %v2962 = vsel %vm2946, %v2889, %v2332
      %v2964 = vsel %vm2946, %v2891, %v2334
      %v2966 = vsel %vm2946, %v2893, %v2336
      %v2968 = vsel %vm2946, %v2895, %v2338
      %v2970 = vsel %vm2946, %v2897, %v2340
      %v2972 = vsel %vm2946, %v2899, %v2342
      %v2974 = vsel %vm2946, %v2901, %v2344
      %v2976 = vsel %vm2946, %v2903, %v2346
      %v2978 = vsel %vm2946, %v2905, %v2348
      %v2980 = vsel %vm2946, %v2907, %v2350
      %v2982 = vsel %vm2946, %v2909, %v2352
      %v2984 = vsel %vm2946, %v2911, %v2354
      %v2986 = vsel %vm2946, %v2913, %v2356
      %v2988 = vsel %vm2946, %v2915, %v2358
      %v2990 = vsel %vm2946, %v2917, %v2360
      %v2992 = vsel %vm2946, %v2919, %v2362
      %v2994 = vsel %vm2946, %v2921, %v2364
      %v2996 = vsel %vm2946, %v2923, %v2366
      %v2998 = vsel %vm2946, %v2925, %v2368
      %v3000 = vsel %vm2946, %v2927, %v2370
      %v3002 = vsel %vm2946, %v2929, %v2372
      %v3004 = vsel %vm2946, %v2931, %v2374
      %v3006 = vsel %vm2946, %v2933, %v2376
      %v3008 = vsel %vm2946, %v2935, %v2378
      %v3010 = vsel %vm2946, %v2937, %v2380
      %v3012 = vsel %vm2946, %v2939, %v2382
      %v3014 = vsel %vm2946, %v2941, %v2384
      %v3016 = vsel %vm2946, %v2943, %v2386
      %v3018 = vsel %vm2946, %v2945, %v2388
      %vm3019 = vcmask 228352
      %v3021 = vsel %vm3019, %v2948, %v2396
      %v3023 = vsel %vm3019, %v2950, %v2398
      %v3025 = vsel %vm3019, %v2952, %v2400
      %v3027 = vsel %vm3019, %v2954, %v2402
      %v3029 = vsel %vm3019, %v2956, %v2404
      %v3031 = vsel %vm3019, %v2958, %v2406
      %v3033 = vsel %vm3019, %v2960, %v2408
      %v3035 = vsel %vm3019, %v2962, %v2410
      %v3037 = vsel %vm3019, %v2964, %v2412
      %v3039 = vsel %vm3019, %v2966, %v2414
      %v3041 = vsel %vm3019, %v2968, %v2416
      %v3043 = vsel %vm3019, %v2970, %v2418
      %v3045 = vsel %vm3019, %v2972, %v2420
      %v3047 = vsel %vm3019, %v2974, %v2422
      %v3049 = vsel %vm3019, %v2976, %v2424
      %v3051 = vsel %vm3019, %v2978, %v2426
      %v3053 = vsel %vm3019, %v2980, %v2428
      %v3055 = vsel %vm3019, %v2982, %v2430
      %v3057 = vsel %vm3019, %v2984, %v2432
      %v3059 = vsel %vm3019, %v2986, %v2434
      %v3061 = vsel %vm3019, %v2988, %v2436
      %v3063 = vsel %vm3019, %v2990, %v2438
      %v3065 = vsel %vm3019, %v2992, %v2440
      %v3067 = vsel %vm3019, %v2994, %v2442
      %v3069 = vsel %vm3019, %v2996, %v2444
      %v3071 = vsel %vm3019, %v2998, %v2446
      %v3073 = vsel %vm3019, %v3000, %v2448
      %v3075 = vsel %vm3019, %v3002, %v2450
      %v3077 = vsel %vm3019, %v3004, %v2452
      %v3079 = vsel %vm3019, %v3006, %v2454
      %v3081 = vsel %vm3019, %v3008, %v2456
      %v3083 = vsel %vm3019, %v3010, %v2458
      %v3085 = vsel %vm3019, %v3012, %v2460
      %v3087 = vsel %vm3019, %v3014, %v2462
      %v3089 = vsel %vm3019, %v3016, %v2464
      %v3091 = vsel %vm3019, %v3018, %v2466
      %vm3092 = vcmask 261120
      %v3094 = vsel %vm3092, %v3021, %v2474
      %v3096 = vsel %vm3092, %v3023, %v2476
      %v3098 = vsel %vm3092, %v3025, %v2478
      %v3100 = vsel %vm3092, %v3027, %v2480
      %v3102 = vsel %vm3092, %v3029, %v2482
      %v3104 = vsel %vm3092, %v3031, %v2484
      %v3106 = vsel %vm3092, %v3033, %v2486
      %v3108 = vsel %vm3092, %v3035, %v2488
      %v3110 = vsel %vm3092, %v3037, %v2490
      %v3112 = vsel %vm3092, %v3039, %v2492
      %v3114 = vsel %vm3092, %v3041, %v2494
      %v3116 = vsel %vm3092, %v3043, %v2496
      %v3118 = vsel %vm3092, %v3045, %v2498
      %v3120 = vsel %vm3092, %v3047, %v2500
      %v3122 = vsel %vm3092, %v3049, %v2502
      %v3124 = vsel %vm3092, %v3051, %v2504
      %v3126 = vsel %vm3092, %v3053, %v2506
      %v3128 = vsel %vm3092, %v3055, %v2508
      %v3130 = vsel %vm3092, %v3057, %v2510
      %v3132 = vsel %vm3092, %v3059, %v2512
      %v3134 = vsel %vm3092, %v3061, %v2514
      %v3136 = vsel %vm3092, %v3063, %v2516
      %v3138 = vsel %vm3092, %v3065, %v2518
      %v3140 = vsel %vm3092, %v3067, %v2520
      %v3142 = vsel %vm3092, %v3069, %v2522
      %v3144 = vsel %vm3092, %v3071, %v2524
      %v3146 = vsel %vm3092, %v3073, %v2526
      %v3148 = vsel %vm3092, %v3075, %v2528
      %v3150 = vsel %vm3092, %v3077, %v2530
      %v3152 = vsel %vm3092, %v3079, %v2532
      %v3154 = vsel %vm3092, %v3081, %v2534
      %v3156 = vsel %vm3092, %v3083, %v2536
      %v3158 = vsel %vm3092, %v3085, %v2538
      %v3160 = vsel %vm3092, %v3087, %v2540
      %v3162 = vsel %vm3092, %v3089, %v2542
      %v3164 = vsel %vm3092, %v3091, %v2544
      %v3165 = vld [vmem:[%s1] sm:$0xff]
      %v3166 = vld [vmem:[%s1 + $0x8] sm:$0xff]
      %v3167 = vld [vmem:[%s1 + $0x10] sm:$0xff]
      %v3168 = vld [vmem:[%s1 + $0x18] sm:$0xff]
      %v3169 = vld [vmem:[%s1 + $0x20] sm:$0x33]
      %v3175 = vunpack.c.l.b16 %v3165
      %v3176 = vunpack.c.h.b16 %v3165
      %v3177 = vunpack.c.l.b16 %v3166
      %v3178 = vunpack.c.h.b16 %v3166
      %v3179 = vunpack.c.l.b16 %v3167
      %v3180 = vunpack.c.h.b16 %v3167
      %v3181 = vunpack.c.l.b16 %v3168
      %v3182 = vunpack.c.h.b16 %v3168
      %v3183 = vunpack.c.l.b16 %v3169
      %v3184 = vunpack.c.h.b16 %v3169
      %v3185 = vpack.c.b16 %v3177, %v3175
      %v3186 = vpack.c.b16 %v3178, %v3176
      %v3187 = vpack.c.b16 %v3181, %v3179
      %v3188 = vpack.c.b16 %v3182, %v3180
      %v3189 = vpack.c.b16 %v3183, %v3183
      %v3190 = vpack.c.b16 %v3184, %v3184
      %vm3195 = vcmask 293888
      %v3196 = vsel %vm3195, %v3094, 0
      %v3198 = vsel %vm3195, %v3096, 0
      %v3200 = vsel %vm3195, %v3098, 0
      %v3202 = vsel %vm3195, %v3100, 0
      %v3204 = vsel %vm3195, %v3102, 0
      %v3206 = vsel %vm3195, %v3104, 0
      %v3208 = vsel %vm3195, %v3106, 0
      %v3210 = vsel %vm3195, %v3108, 0
      %v3212 = vsel %vm3195, %v3110, 0
      %v3214 = vsel %vm3195, %v3112, 0
      %v3216 = vsel %vm3195, %v3114, 0
      %v3218 = vsel %vm3195, %v3116, 0
      %v3220 = vsel %vm3195, %v3118, 0
      %v3222 = vsel %vm3195, %v3120, 0
      %v3224 = vsel %vm3195, %v3122, 0
      %v3226 = vsel %vm3195, %v3124, 0
      %v3228 = vsel %vm3195, %v3126, 0
      %v3230 = vsel %vm3195, %v3128, 0
      %v3232 = vsel %vm3195, %v3130, 0
      %v3234 = vsel %vm3195, %v3132, 0
      %v3236 = vsel %vm3195, %v3134, 0
      %v3238 = vsel %vm3195, %v3136, 0
      %v3240 = vsel %vm3195, %v3138, 0
      %v3242 = vsel %vm3195, %v3140, 0
      %v3244 = vsel %vm3195, %v3142, 0
      %v3246 = vsel %vm3195, %v3144, 0
      %v3248 = vsel %vm3195, %v3146, 0
      %v3250 = vsel %vm3195, %v3148, 0
      %v3252 = vsel %vm3195, %v3150, 0
      %v3254 = vsel %vm3195, %v3152, 0
      %v3256 = vsel %vm3195, %v3154, 0
      %v3258 = vsel %vm3195, %v3156, 0
      %v3260 = vsel %vm3195, %v3158, 0
      %v3262 = vsel %vm3195, %v3160, 0
      %v3264 = vsel %vm3195, %v3162, 0
      %v3266 = vsel %vm3195, %v3164, 0
      %vm3268 = vcmask 1041408
      %v3270 = vsel %vm3268, %v3189, 0
      %v3273 = vsel %vm3268, %v3190, 0
      %3275 = vmatprep.subr.bf16.mxu0 0
      %3276 = vmatpush1.bf16.msra.mxu0 0
      %3277 = vmatprep.subr.bf16.mxu0 0
      %3278 = vmatpush1.bf16.msra.mxu0 0
      %3279 = vmatprep.subr.bf16.mxu0 0
      %3280 = vmatpush1.bf16.msra.mxu0 0
      %3281 = vmatprep.subr.bf16.mxu0 0
      %3282 = vmatpush1.bf16.msra.mxu0 0
      %3283 = vmatprep.subr.bf16.mxu0 0
      %3284 = vmatpush1.bf16.msra.mxu0 0
      %3285 = vmatprep.subr.bf16.mxu0 %v3273
      %3286 = vmatpush1.bf16.msra.mxu0 %v3270
      %3287 = vmatprep.subr.bf16.mxu0 %v3188
      %3288 = vmatpush1.bf16.msra.mxu0 %v3187
      %3289 = vmatprep.subr.bf16.mxu0 %v3186
      %3290 = vmatpush1.bf16.msra.mxu0 %v3185
      %3291 = vmatprep.subr.bf16.mxu0 0
      %3292 = vmatpush2.bf16.msra.mxu0 0
      %3293 = vmatprep.subr.bf16.mxu0 0
      %3294 = vmatpush2.bf16.msra.mxu0 0
      %3295 = vmatprep.subr.bf16.mxu0 0
      %3296 = vmatpush2.bf16.msra.mxu0 0
      %3297 = vmatprep.subr.bf16.mxu0 0
      %3298 = vmatpush2.bf16.msra.mxu0 0
      %3299 = vmatprep.subr.bf16.mxu0 0
      %3300 = vmatpush2.bf16.msra.mxu0 0
      %3301 = vmatprep.subr.bf16.mxu0 0
      %3302 = vmatpush2.bf16.msra.mxu0 0
      %3303 = vmatprep.subr.bf16.mxu0 0
      %3304 = vmatpush2.bf16.msra.mxu0 0
      %3305 = vmatprep.subr.bf16.mxu0 0
      %3306 = vmatpush2.bf16.msra.mxu0 0
      %3307 = vmatprep.mubr.bf16.mxu0 0
      %3308 = vmatmul.mubr.bf16.gmra.mxu0 %v3196
      %v3309 = vpop.f32.mrf.mxu0
      %v3310 = vpop.f32.mrf.mxu0
      %v3311 = vadd.f32 0.0, %v3310
      %v3312 = vpop.f32.mrf.mxu0
      %v3313 = vpop.f32.mrf.mxu0
      %v3314 = vadd.f32 0.0, %v3313
      %3315 = vmatprep.mubr.bf16.mxu0 0
      %3316 = vmatmul.mubr.bf16.gmra.mxu0 %v3198
      %v3317 = vpop.f32.mrf.mxu0
      %v3318 = vpop.f32.mrf.mxu0
      %v3319 = vadd.f32 0.0, %v3318
      %v3320 = vpop.f32.mrf.mxu0
      %v3321 = vpop.f32.mrf.mxu0
      %v3322 = vadd.f32 0.0, %v3321
      %3323 = vmatprep.mubr.bf16.mxu0 0
      %3324 = vmatmul.mubr.bf16.gmra.mxu0 %v3200
      %v3325 = vpop.f32.mrf.mxu0
      %v3326 = vadd.f32 0.0, %v3325
      %v3327 = vpop.f32.mrf.mxu0
      %v3328 = vadd.f32 0.0, %v3327
      %v3329 = vpop.f32.mrf.mxu0
      %v3330 = vadd.f32 0.0, %v3329
      %v3331 = vpop.f32.mrf.mxu0
      %v3332 = vadd.f32 0.0, %v3331
      %3333 = vmatprep.mubr.bf16.mxu0 0
      %3334 = vmatmul.mubr.bf16.gmra.mxu0 %v3202
      %v3335 = vpop.f32.mrf.mxu0
      %v3336 = vadd.f32 0.0, %v3335
      %v3337 = vpop.f32.mrf.mxu0
      %v3338 = vadd.f32 0.0, %v3337
      %v3339 = vpop.f32.mrf.mxu0
      %v3340 = vadd.f32 0.0, %v3339
      %v3341 = vpop.f32.mrf.mxu0
      %v3342 = vadd.f32 0.0, %v3341
      %3343 = vmatprep.mubr.bf16.mxu0 0
      %3344 = vmatmul.mubr.bf16.gmra.mxu0 %v3204
      %v3345 = vpop.f32.mrf.mxu0
      %v3346 = vadd.f32 0.0, %v3345
      %v3347 = vpop.f32.mrf.mxu0
      %v3348 = vadd.f32 0.0, %v3347
      %v3349 = vpop.f32.mrf.mxu0
      %v3350 = vadd.f32 0.0, %v3349
      %v3351 = vpop.f32.mrf.mxu0
      %v3352 = vadd.f32 0.0, %v3351
      %3353 = vmatprep.mubr.bf16.mxu0 0
      %3354 = vmatmul.mubr.bf16.gmra.mxu0 %v3206
      %v3355 = vpop.f32.mrf.mxu0
      %v3356 = vadd.f32 0.0, %v3355
      %v3357 = vpop.f32.mrf.mxu0
      %v3358 = vadd.f32 0.0, %v3357
      %v3359 = vpop.f32.mrf.mxu0
      %v3360 = vadd.f32 0.0, %v3359
      %v3361 = vpop.f32.mrf.mxu0
      %v3362 = vadd.f32 0.0, %v3361
      %3363 = vmatprep.mubr.bf16.mxu0 0
      %3364 = vmatmul.mubr.bf16.gmra.mxu0 %v3208
      %v3365 = vpop.f32.mrf.mxu0
      %v3366 = vadd.f32 0.0, %v3365
      %v3367 = vpop.f32.mrf.mxu0
      %v3368 = vadd.f32 0.0, %v3367
      %v3369 = vpop.f32.mrf.mxu0
      %v3370 = vadd.f32 0.0, %v3369
      %v3371 = vpop.f32.mrf.mxu0
      %v3372 = vadd.f32 0.0, %v3371
      %3373 = vmatprep.mubr.bf16.mxu0 0
      %3374 = vmatmul.mubr.bf16.gmra.mxu0 %v3210
      %v3375 = vpop.f32.mrf.mxu0
      %v3376 = vadd.f32 0.0, %v3375
      %v3377 = vpop.f32.mrf.mxu0
      %v3378 = vadd.f32 0.0, %v3377
      %v3379 = vpop.f32.mrf.mxu0
      %v3380 = vadd.f32 0.0, %v3379
      %v3381 = vpop.f32.mrf.mxu0
      %v3382 = vadd.f32 0.0, %v3381
      %3383 = vmatprep.mubr.bf16.mxu0 0
      %3384 = vmatmul.mubr.bf16.gmra.mxu0 %v3212
      %v3385 = vpop.f32.mrf.mxu0
      %v3386 = vadd.f32 0.0, %v3385
      %v3387 = vpop.f32.mrf.mxu0
      %v3388 = vadd.f32 0.0, %v3387
      %v3389 = vpop.f32.mrf.mxu0
      %v3390 = vadd.f32 0.0, %v3389
      %v3391 = vpop.f32.mrf.mxu0
      %v3392 = vadd.f32 0.0, %v3391
      %3393 = vmatprep.mubr.bf16.mxu0 0
      %3394 = vmatmul.mubr.bf16.gmra.mxu0 %v3214
      %v3395 = vpop.f32.mrf.mxu0
      %v3396 = vadd.f32 0.0, %v3395
      %v3397 = vpop.f32.mrf.mxu0
      %v3398 = vadd.f32 0.0, %v3397
      %v3399 = vpop.f32.mrf.mxu0
      %v3400 = vadd.f32 0.0, %v3399
      %v3401 = vpop.f32.mrf.mxu0
      %v3402 = vadd.f32 0.0, %v3401
      %3403 = vmatprep.mubr.bf16.mxu0 0
      %3404 = vmatmul.mubr.bf16.gmra.mxu0 %v3216
      %v3405 = vpop.f32.mrf.mxu0
      %v3406 = vadd.f32 0.0, %v3405
      %v3407 = vpop.f32.mrf.mxu0
      %v3408 = vadd.f32 0.0, %v3407
      %v3409 = vpop.f32.mrf.mxu0
      %v3410 = vadd.f32 0.0, %v3409
      %v3411 = vpop.f32.mrf.mxu0
      %v3412 = vadd.f32 0.0, %v3411
      %3413 = vmatprep.mubr.bf16.mxu0 0
      %3414 = vmatmul.mubr.bf16.gmra.mxu0 %v3218
      %v3415 = vpop.f32.mrf.mxu0
      %v3416 = vadd.f32 0.0, %v3415
      %v3417 = vpop.f32.mrf.mxu0
      %v3418 = vadd.f32 0.0, %v3417
      %v3419 = vpop.f32.mrf.mxu0
      %v3420 = vadd.f32 0.0, %v3419
      %v3421 = vpop.f32.mrf.mxu0
      %v3422 = vadd.f32 0.0, %v3421
      %3423 = vmatprep.mubr.bf16.mxu0 0
      %3424 = vmatmul.mubr.bf16.gmra.mxu0 %v3220
      %v3425 = vpop.f32.mrf.mxu0
      %v3426 = vadd.f32 0.0, %v3425
      %v3427 = vpop.f32.mrf.mxu0
      %v3428 = vadd.f32 0.0, %v3427
      %v3429 = vpop.f32.mrf.mxu0
      %v3430 = vadd.f32 0.0, %v3429
      %v3431 = vpop.f32.mrf.mxu0
      %v3432 = vadd.f32 0.0, %v3431
      %3433 = vmatprep.mubr.bf16.mxu0 0
      %3434 = vmatmul.mubr.bf16.gmra.mxu0 %v3222
      %v3435 = vpop.f32.mrf.mxu0
      %v3436 = vadd.f32 0.0, %v3435
      %v3437 = vpop.f32.mrf.mxu0
      %v3438 = vadd.f32 0.0, %v3437
      %v3439 = vpop.f32.mrf.mxu0
      %v3440 = vadd.f32 0.0, %v3439
      %v3441 = vpop.f32.mrf.mxu0
      %v3442 = vadd.f32 0.0, %v3441
      %3443 = vmatprep.mubr.bf16.mxu0 0
      %3444 = vmatmul.mubr.bf16.gmra.mxu0 %v3224
      %v3445 = vpop.f32.mrf.mxu0
      %v3446 = vadd.f32 0.0, %v3445
      %v3447 = vpop.f32.mrf.mxu0
      %v3448 = vadd.f32 0.0, %v3447
      %v3449 = vpop.f32.mrf.mxu0
      %v3450 = vadd.f32 0.0, %v3449
      %v3451 = vpop.f32.mrf.mxu0
      %v3452 = vadd.f32 0.0, %v3451
      %3453 = vmatprep.mubr.bf16.mxu0 0
      %3454 = vmatmul.mubr.bf16.gmra.mxu0 %v3226
      %v3455 = vpop.f32.mrf.mxu0
      %v3456 = vadd.f32 0.0, %v3455
      %v3457 = vpop.f32.mrf.mxu0
      %v3458 = vadd.f32 0.0, %v3457
      %v3459 = vpop.f32.mrf.mxu0
      %v3460 = vadd.f32 0.0, %v3459
      %v3461 = vpop.f32.mrf.mxu0
      %v3462 = vadd.f32 0.0, %v3461
      %3463 = vmatprep.mubr.bf16.mxu0 0
      %3464 = vmatmul.mubr.bf16.gmra.mxu0 %v3228
      %v3465 = vpop.f32.mrf.mxu0
      %v3466 = vadd.f32 0.0, %v3465
      %v3467 = vpop.f32.mrf.mxu0
      %v3468 = vadd.f32 0.0, %v3467
      %v3469 = vpop.f32.mrf.mxu0
      %v3470 = vadd.f32 0.0, %v3469
      %v3471 = vpop.f32.mrf.mxu0
      %v3472 = vadd.f32 0.0, %v3471
      %3473 = vmatprep.mubr.bf16.mxu0 0
      %3474 = vmatmul.mubr.bf16.gmra.mxu0 %v3230
      %v3475 = vpop.f32.mrf.mxu0
      %v3476 = vadd.f32 0.0, %v3475
      %v3477 = vpop.f32.mrf.mxu0
      %v3478 = vadd.f32 0.0, %v3477
      %v3479 = vpop.f32.mrf.mxu0
      %v3480 = vadd.f32 0.0, %v3479
      %v3481 = vpop.f32.mrf.mxu0
      %v3482 = vadd.f32 0.0, %v3481
      %3483 = vmatprep.mubr.bf16.mxu0 0
      %3484 = vmatmul.mubr.bf16.gmra.mxu0 %v3232
      %v3485 = vpop.f32.mrf.mxu0
      %v3486 = vadd.f32 0.0, %v3485
      %v3487 = vpop.f32.mrf.mxu0
      %v3488 = vadd.f32 0.0, %v3487
      %v3489 = vpop.f32.mrf.mxu0
      %v3490 = vadd.f32 0.0, %v3489
      %v3491 = vpop.f32.mrf.mxu0
      %v3492 = vadd.f32 0.0, %v3491
      %3493 = vmatprep.mubr.bf16.mxu0 0
      %3494 = vmatmul.mubr.bf16.gmra.mxu0 %v3234
      %v3495 = vpop.f32.mrf.mxu0
      %v3496 = vadd.f32 0.0, %v3495
      %v3497 = vpop.f32.mrf.mxu0
      %v3498 = vadd.f32 0.0, %v3497
      %v3499 = vpop.f32.mrf.mxu0
      %v3500 = vadd.f32 0.0, %v3499
      %v3501 = vpop.f32.mrf.mxu0
      %v3502 = vadd.f32 0.0, %v3501
      %3503 = vmatprep.mubr.bf16.mxu0 0
      %3504 = vmatmul.mubr.bf16.gmra.mxu0 %v3236
      %v3505 = vpop.f32.mrf.mxu0
      %v3506 = vadd.f32 0.0, %v3505
      %v3507 = vpop.f32.mrf.mxu0
      %v3508 = vadd.f32 0.0, %v3507
      %v3509 = vpop.f32.mrf.mxu0
      %v3510 = vadd.f32 0.0, %v3509
      %v3511 = vpop.f32.mrf.mxu0
      %v3512 = vadd.f32 0.0, %v3511
      %3513 = vmatprep.mubr.bf16.mxu0 0
      %3514 = vmatmul.mubr.bf16.gmra.mxu0 %v3238
      %v3515 = vpop.f32.mrf.mxu0
      %v3516 = vadd.f32 0.0, %v3515
      %v3517 = vpop.f32.mrf.mxu0
      %v3518 = vadd.f32 0.0, %v3517
      %v3519 = vpop.f32.mrf.mxu0
      %v3520 = vadd.f32 0.0, %v3519
      %v3521 = vpop.f32.mrf.mxu0
      %v3522 = vadd.f32 0.0, %v3521
      %3523 = vmatprep.mubr.bf16.mxu0 0
      %3524 = vmatmul.mubr.bf16.gmra.mxu0 %v3240
      %v3525 = vpop.f32.mrf.mxu0
      %v3526 = vadd.f32 0.0, %v3525
      %v3527 = vpop.f32.mrf.mxu0
      %v3528 = vadd.f32 0.0, %v3527
      %v3529 = vpop.f32.mrf.mxu0
      %v3530 = vadd.f32 0.0, %v3529
      %v3531 = vpop.f32.mrf.mxu0
      %v3532 = vadd.f32 0.0, %v3531
      %3533 = vmatprep.mubr.bf16.mxu0 0
      %3534 = vmatmul.mubr.bf16.gmra.mxu0 %v3242
      %v3535 = vpop.f32.mrf.mxu0
      %v3536 = vadd.f32 0.0, %v3535
      %v3537 = vpop.f32.mrf.mxu0
      %v3538 = vadd.f32 0.0, %v3537
      %v3539 = vpop.f32.mrf.mxu0
      %v3540 = vadd.f32 0.0, %v3539
      %v3541 = vpop.f32.mrf.mxu0
      %v3542 = vadd.f32 0.0, %v3541
      %3543 = vmatprep.mubr.bf16.mxu0 0
      %3544 = vmatmul.mubr.bf16.gmra.mxu0 %v3244
      %v3545 = vpop.f32.mrf.mxu0
      %v3546 = vadd.f32 0.0, %v3545
      %v3547 = vpop.f32.mrf.mxu0
      %v3548 = vadd.f32 0.0, %v3547
      %v3549 = vpop.f32.mrf.mxu0
      %v3550 = vadd.f32 0.0, %v3549
      %v3551 = vpop.f32.mrf.mxu0
      %v3552 = vadd.f32 0.0, %v3551
      %3553 = vmatprep.mubr.bf16.mxu0 0
      %3554 = vmatmul.mubr.bf16.gmra.mxu0 %v3246
      %v3555 = vpop.f32.mrf.mxu0
      %v3556 = vadd.f32 0.0, %v3555
      %v3557 = vpop.f32.mrf.mxu0
      %v3558 = vadd.f32 0.0, %v3557
      %v3559 = vpop.f32.mrf.mxu0
      %v3560 = vadd.f32 0.0, %v3559
      %v3561 = vpop.f32.mrf.mxu0
      %v3562 = vadd.f32 0.0, %v3561
      %3563 = vmatprep.mubr.bf16.mxu0 0
      %3564 = vmatmul.mubr.bf16.gmra.mxu0 %v3248
      %v3565 = vpop.f32.mrf.mxu0
      %v3566 = vadd.f32 0.0, %v3565
      %v3567 = vpop.f32.mrf.mxu0
      %v3568 = vadd.f32 0.0, %v3567
      %v3569 = vpop.f32.mrf.mxu0
      %v3570 = vadd.f32 0.0, %v3569
      %v3571 = vpop.f32.mrf.mxu0
      %v3572 = vadd.f32 0.0, %v3571
      %3573 = vmatprep.mubr.bf16.mxu0 0
      %3574 = vmatmul.mubr.bf16.gmra.mxu0 %v3250
      %v3575 = vpop.f32.mrf.mxu0
      %v3576 = vadd.f32 0.0, %v3575
      %v3577 = vpop.f32.mrf.mxu0
      %v3578 = vadd.f32 0.0, %v3577
      %v3579 = vpop.f32.mrf.mxu0
      %v3580 = vadd.f32 0.0, %v3579
      %v3581 = vpop.f32.mrf.mxu0
      %v3582 = vadd.f32 0.0, %v3581
      %3583 = vmatprep.mubr.bf16.mxu0 0
      %3584 = vmatmul.mubr.bf16.gmra.mxu0 %v3252
      %v3585 = vpop.f32.mrf.mxu0
      %v3586 = vadd.f32 0.0, %v3585
      %v3587 = vpop.f32.mrf.mxu0
      %v3588 = vadd.f32 0.0, %v3587
      %v3589 = vpop.f32.mrf.mxu0
      %v3590 = vadd.f32 0.0, %v3589
      %v3591 = vpop.f32.mrf.mxu0
      %v3592 = vadd.f32 0.0, %v3591
      %3593 = vmatprep.mubr.bf16.mxu0 0
      %3594 = vmatmul.mubr.bf16.gmra.mxu0 %v3254
      %v3595 = vpop.f32.mrf.mxu0
      %v3596 = vadd.f32 0.0, %v3595
      %v3597 = vpop.f32.mrf.mxu0
      %v3598 = vadd.f32 0.0, %v3597
      %v3599 = vpop.f32.mrf.mxu0
      %v3600 = vadd.f32 0.0, %v3599
      %v3601 = vpop.f32.mrf.mxu0
      %v3602 = vadd.f32 0.0, %v3601
      %3603 = vmatprep.mubr.bf16.mxu0 0
      %3604 = vmatmul.mubr.bf16.gmra.mxu0 %v3256
      %v3605 = vpop.f32.mrf.mxu0
      %v3606 = vadd.f32 0.0, %v3605
      %v3607 = vpop.f32.mrf.mxu0
      %v3608 = vadd.f32 0.0, %v3607
      %v3609 = vpop.f32.mrf.mxu0
      %v3610 = vadd.f32 0.0, %v3609
      %v3611 = vpop.f32.mrf.mxu0
      %v3612 = vadd.f32 0.0, %v3611
      %3613 = vmatprep.mubr.bf16.mxu0 0
      %3614 = vmatmul.mubr.bf16.gmra.mxu0 %v3258
      %v3615 = vpop.f32.mrf.mxu0
      %v3616 = vadd.f32 0.0, %v3615
      %v3617 = vpop.f32.mrf.mxu0
      %v3618 = vadd.f32 0.0, %v3617
      %v3619 = vpop.f32.mrf.mxu0
      %v3620 = vadd.f32 0.0, %v3619
      %v3621 = vpop.f32.mrf.mxu0
      %v3622 = vadd.f32 0.0, %v3621
      %3623 = vmatprep.mubr.bf16.mxu0 0
      %3624 = vmatmul.mubr.bf16.gmra.mxu0 %v3260
      %v3625 = vpop.f32.mrf.mxu0
      %v3626 = vadd.f32 0.0, %v3625
      %v3627 = vpop.f32.mrf.mxu0
      %v3628 = vadd.f32 0.0, %v3627
      %v3629 = vpop.f32.mrf.mxu0
      %v3630 = vadd.f32 0.0, %v3629
      %v3631 = vpop.f32.mrf.mxu0
      %v3632 = vadd.f32 0.0, %v3631
      %3633 = vmatprep.mubr.bf16.mxu0 0
      %3634 = vmatmul.mubr.bf16.gmra.mxu0 %v3262
      %v3635 = vpop.f32.mrf.mxu0
      %v3636 = vadd.f32 0.0, %v3635
      %v3637 = vpop.f32.mrf.mxu0
      %v3638 = vadd.f32 0.0, %v3637
      %v3639 = vpop.f32.mrf.mxu0
      %v3640 = vadd.f32 0.0, %v3639
      %v3641 = vpop.f32.mrf.mxu0
      %v3642 = vadd.f32 0.0, %v3641
      %3643 = vmatprep.mubr.bf16.mxu0 0
      %3644 = vmatmul.mubr.bf16.gmra.mxu0 %v3264
      %v3645 = vpop.f32.mrf.mxu0
      %v3646 = vpop.f32.mrf.mxu0
      %v3647 = vadd.f32 0.0, %v3646
      %v3648 = vpop.f32.mrf.mxu0
      %v3649 = vpop.f32.mrf.mxu0
      %v3650 = vadd.f32 0.0, %v3649
      %3651 = vmatprep.mubr.bf16.mxu0 0
      %3652 = vmatmul.mubr.bf16.gmra.mxu0 %v3266
      %v3653 = vpop.f32.mrf.mxu0
      %v3654 = vpop.f32.mrf.mxu0
      %v3655 = vadd.f32 0.0, %v3654
      %v3656 = vpop.f32.mrf.mxu0
      %v3657 = vpop.f32.mrf.mxu0
      %v3658 = vadd.f32 0.0, %v3657
      %3659 = vdwg.mxu0
      %v3660 = vld [vmem:[%s2] ss:$2 sm:$0x3]
      %v3662 = vlaneseq
      %v3663 = vshrl.u32 %v3662, 7
      %v3664 = vsub.s32 0, %v3663
      %v3665 = vrot.slane %v3660, %v3664
      %v3666 = vlaneseq
      %v3667 = vshrl.u32 %v3666, 7
      %v3668 = vsub.s32 1, %v3667
      %v3669 = vrot.slane %v3660, %v3668
      %v3672 = vmul.f32 %v3311, %v3669
      %v3673 = vmul.f32 %v3314, %v3669
      %v3674 = vmul.f32 %v3319, %v3669
      %v3675 = vmul.f32 %v3322, %v3669
      %v3676 = vmul.f32 %v3326, %v3665
      %v3677 = vmul.f32 %v3328, %v3669
      %v3678 = vmul.f32 %v3330, %v3665
      %v3679 = vmul.f32 %v3332, %v3669
      %v3680 = vmul.f32 %v3336, %v3665
      %v3681 = vmul.f32 %v3338, %v3669
      %v3682 = vmul.f32 %v3340, %v3665
      %v3683 = vmul.f32 %v3342, %v3669
      %v3684 = vmul.f32 %v3346, %v3665
      %v3685 = vmul.f32 %v3348, %v3669
      %v3686 = vmul.f32 %v3350, %v3665
      %v3687 = vmul.f32 %v3352, %v3669
      %v3688 = vmul.f32 %v3356, %v3665
      %v3689 = vmul.f32 %v3358, %v3669
      %v3690 = vmul.f32 %v3360, %v3665
      %v3691 = vmul.f32 %v3362, %v3669
      %v3692 = vmul.f32 %v3366, %v3665
      %v3693 = vmul.f32 %v3368, %v3669
      %v3694 = vmul.f32 %v3370, %v3665
      %v3695 = vmul.f32 %v3372, %v3669
      %v3696 = vmul.f32 %v3376, %v3665
      %v3697 = vmul.f32 %v3378, %v3669
      %v3698 = vmul.f32 %v3380, %v3665
      %v3699 = vmul.f32 %v3382, %v3669
      %v3700 = vmul.f32 %v3386, %v3665
      %v3701 = vmul.f32 %v3388, %v3669
      %v3702 = vmul.f32 %v3390, %v3665
      %v3703 = vmul.f32 %v3392, %v3669
      %v3704 = vmul.f32 %v3396, %v3665
      %v3705 = vmul.f32 %v3398, %v3669
      %v3706 = vmul.f32 %v3400, %v3665
      %v3707 = vmul.f32 %v3402, %v3669
      %v3708 = vmul.f32 %v3406, %v3665
      %v3709 = vmul.f32 %v3408, %v3669
      %v3710 = vmul.f32 %v3410, %v3665
      %v3711 = vmul.f32 %v3412, %v3669
      %v3712 = vmul.f32 %v3416, %v3665
      %v3713 = vmul.f32 %v3418, %v3669
      %v3714 = vmul.f32 %v3420, %v3665
      %v3715 = vmul.f32 %v3422, %v3669
      %v3716 = vmul.f32 %v3426, %v3665
      %v3717 = vmul.f32 %v3428, %v3669
      %v3718 = vmul.f32 %v3430, %v3665
      %v3719 = vmul.f32 %v3432, %v3669
      %v3720 = vmul.f32 %v3436, %v3665
      %v3721 = vmul.f32 %v3438, %v3669
      %v3722 = vmul.f32 %v3440, %v3665
      %v3723 = vmul.f32 %v3442, %v3669
      %v3724 = vmul.f32 %v3446, %v3665
      %v3725 = vmul.f32 %v3448, %v3669
      %v3726 = vmul.f32 %v3450, %v3665
      %v3727 = vmul.f32 %v3452, %v3669
      %v3728 = vmul.f32 %v3456, %v3665
      %v3729 = vmul.f32 %v3458, %v3669
      %v3730 = vmul.f32 %v3460, %v3665
      %v3731 = vmul.f32 %v3462, %v3669
      %v3732 = vmul.f32 %v3466, %v3665
      %v3733 = vmul.f32 %v3468, %v3669
      %v3734 = vmul.f32 %v3470, %v3665
      %v3735 = vmul.f32 %v3472, %v3669
      %v3736 = vmul.f32 %v3476, %v3665
      %v3737 = vmul.f32 %v3478, %v3669
      %v3738 = vmul.f32 %v3480, %v3665
      %v3739 = vmul.f32 %v3482, %v3669
      %v3740 = vmul.f32 %v3486, %v3665
      %v3741 = vmul.f32 %v3488, %v3669
      %v3742 = vmul.f32 %v3490, %v3665
      %v3743 = vmul.f32 %v3492, %v3669
      %v3744 = vmul.f32 %v3496, %v3665
      %v3745 = vmul.f32 %v3498, %v3669
      %v3746 = vmul.f32 %v3500, %v3665
      %v3747 = vmul.f32 %v3502, %v3669
      %v3748 = vmul.f32 %v3506, %v3665
      %v3749 = vmul.f32 %v3508, %v3669
      %v3750 = vmul.f32 %v3510, %v3665
      %v3751 = vmul.f32 %v3512, %v3669
      %v3752 = vmul.f32 %v3516, %v3665
      %v3753 = vmul.f32 %v3518, %v3669
      %v3754 = vmul.f32 %v3520, %v3665
      %v3755 = vmul.f32 %v3522, %v3669
      %v3756 = vmul.f32 %v3526, %v3665
      %v3757 = vmul.f32 %v3528, %v3669
      %v3758 = vmul.f32 %v3530, %v3665
      %v3759 = vmul.f32 %v3532, %v3669
      %v3760 = vmul.f32 %v3536, %v3665
      %v3761 = vmul.f32 %v3538, %v3669
      %v3762 = vmul.f32 %v3540, %v3665
      %v3763 = vmul.f32 %v3542, %v3669
      %v3764 = vmul.f32 %v3546, %v3665
      %v3765 = vmul.f32 %v3548, %v3669
      %v3766 = vmul.f32 %v3550, %v3665
      %v3767 = vmul.f32 %v3552, %v3669
      %v3768 = vmul.f32 %v3556, %v3665
      %v3769 = vmul.f32 %v3558, %v3669
      %v3770 = vmul.f32 %v3560, %v3665
      %v3771 = vmul.f32 %v3562, %v3669
      %v3772 = vmul.f32 %v3566, %v3665
      %v3773 = vmul.f32 %v3568, %v3669
      %v3774 = vmul.f32 %v3570, %v3665
      %v3775 = vmul.f32 %v3572, %v3669
      %v3776 = vmul.f32 %v3576, %v3665
      %v3777 = vmul.f32 %v3578, %v3669
      %v3778 = vmul.f32 %v3580, %v3665
      %v3779 = vmul.f32 %v3582, %v3669
      %v3780 = vmul.f32 %v3586, %v3665
      %v3781 = vmul.f32 %v3588, %v3669
      %v3782 = vmul.f32 %v3590, %v3665
      %v3783 = vmul.f32 %v3592, %v3669
      %v3784 = vmul.f32 %v3596, %v3665
      %v3785 = vmul.f32 %v3598, %v3669
      %v3786 = vmul.f32 %v3600, %v3665
      %v3787 = vmul.f32 %v3602, %v3669
      %v3788 = vmul.f32 %v3606, %v3665
      %v3789 = vmul.f32 %v3608, %v3669
      %v3790 = vmul.f32 %v3610, %v3665
      %v3791 = vmul.f32 %v3612, %v3669
      %v3792 = vmul.f32 %v3616, %v3665
      %v3793 = vmul.f32 %v3618, %v3669
      %v3794 = vmul.f32 %v3620, %v3665
      %v3795 = vmul.f32 %v3622, %v3669
      %v3796 = vmul.f32 %v3626, %v3665
      %v3797 = vmul.f32 %v3628, %v3669
      %v3798 = vmul.f32 %v3630, %v3665
      %v3799 = vmul.f32 %v3632, %v3669
      %v3800 = vmul.f32 %v3636, %v3665
      %v3801 = vmul.f32 %v3638, %v3669
      %v3802 = vmul.f32 %v3640, %v3665
      %v3803 = vmul.f32 %v3642, %v3669
      %v3804 = vmul.f32 %v3647, %v3669
      %v3805 = vmul.f32 %v3650, %v3669
      %v3806 = vmul.f32 %v3655, %v3669
      %v3807 = vmul.f32 %v3658, %v3669
      %s3808 = scalar_lea.vmem %s2, 1
      %v3809 = vld [vmem:[%s3808] ss:$2 sm:$0x3]
      %v3811 = vlaneseq
      %v3812 = vshrl.u32 %v3811, 7
      %v3813 = vsub.s32 0, %v3812
      %v3814 = vrot.slane %v3809, %v3813
      %v3815 = vlaneseq
      %v3816 = vshrl.u32 %v3815, 7
      %v3817 = vsub.s32 1, %v3816
      %v3818 = vrot.slane %v3809, %v3817
      %v3821 = vadd.f32 %v3672, %v3818
      %v3822 = vadd.f32 %v3673, %v3818
      %v3823 = vadd.f32 %v3674, %v3818
      %v3824 = vadd.f32 %v3675, %v3818
      %v3825 = vadd.f32 %v3676, %v3814
      %v3826 = vadd.f32 %v3677, %v3818
      %v3827 = vadd.f32 %v3678, %v3814
      %v3828 = vadd.f32 %v3679, %v3818
      %v3829 = vadd.f32 %v3680, %v3814
      %v3830 = vadd.f32 %v3681, %v3818
      %v3831 = vadd.f32 %v3682, %v3814
      %v3832 = vadd.f32 %v3683, %v3818
      %v3833 = vadd.f32 %v3684, %v3814
      %v3834 = vadd.f32 %v3685, %v3818
      %v3835 = vadd.f32 %v3686, %v3814
      %v3836 = vadd.f32 %v3687, %v3818
      %v3837 = vadd.f32 %v3688, %v3814
      %v3838 = vadd.f32 %v3689, %v3818
      %v3839 = vadd.f32 %v3690, %v3814
      %v3840 = vadd.f32 %v3691, %v3818
      %v3841 = vadd.f32 %v3692, %v3814
      %v3842 = vadd.f32 %v3693, %v3818
      %v3843 = vadd.f32 %v3694, %v3814
      %v3844 = vadd.f32 %v3695, %v3818
      %v3845 = vadd.f32 %v3696, %v3814
      %v3846 = vadd.f32 %v3697, %v3818
      %v3847 = vadd.f32 %v3698, %v3814
      %v3848 = vadd.f32 %v3699, %v3818
      %v3849 = vadd.f32 %v3700, %v3814
      %v3850 = vadd.f32 %v3701, %v3818
      %v3851 = vadd.f32 %v3702, %v3814
      %v3852 = vadd.f32 %v3703, %v3818
      %v3853 = vadd.f32 %v3704, %v3814
      %v3854 = vadd.f32 %v3705, %v3818
      %v3855 = vadd.f32 %v3706, %v3814
      %v3856 = vadd.f32 %v3707, %v3818
      %v3857 = vadd.f32 %v3708, %v3814
      %v3858 = vadd.f32 %v3709, %v3818
      %v3859 = vadd.f32 %v3710, %v3814
      %v3860 = vadd.f32 %v3711, %v3818
      %v3861 = vadd.f32 %v3712, %v3814
      %v3862 = vadd.f32 %v3713, %v3818
      %v3863 = vadd.f32 %v3714, %v3814
      %v3864 = vadd.f32 %v3715, %v3818
      %v3865 = vadd.f32 %v3716, %v3814
      %v3866 = vadd.f32 %v3717, %v3818
      %v3867 = vadd.f32 %v3718, %v3814
      %v3868 = vadd.f32 %v3719, %v3818
      %v3869 = vadd.f32 %v3720, %v3814
      %v3870 = vadd.f32 %v3721, %v3818
      %v3871 = vadd.f32 %v3722, %v3814
      %v3872 = vadd.f32 %v3723, %v3818
      %v3873 = vadd.f32 %v3724, %v3814
      %v3874 = vadd.f32 %v3725, %v3818
      %v3875 = vadd.f32 %v3726, %v3814
      %v3876 = vadd.f32 %v3727, %v3818
      %v3877 = vadd.f32 %v3728, %v3814
      %v3878 = vadd.f32 %v3729, %v3818
      %v3879 = vadd.f32 %v3730, %v3814
      %v3880 = vadd.f32 %v3731, %v3818
      %v3881 = vadd.f32 %v3732, %v3814
      %v3882 = vadd.f32 %v3733, %v3818
      %v3883 = vadd.f32 %v3734, %v3814
      %v3884 = vadd.f32 %v3735, %v3818
      %v3885 = vadd.f32 %v3736, %v3814
      %v3886 = vadd.f32 %v3737, %v3818
      %v3887 = vadd.f32 %v3738, %v3814
      %v3888 = vadd.f32 %v3739, %v3818
      %v3889 = vadd.f32 %v3740, %v3814
      %v3890 = vadd.f32 %v3741, %v3818
      %v3891 = vadd.f32 %v3742, %v3814
      %v3892 = vadd.f32 %v3743, %v3818
      %v3893 = vadd.f32 %v3744, %v3814
      %v3894 = vadd.f32 %v3745, %v3818
      %v3895 = vadd.f32 %v3746, %v3814
      %v3896 = vadd.f32 %v3747, %v3818
      %v3897 = vadd.f32 %v3748, %v3814
      %v3898 = vadd.f32 %v3749, %v3818
      %v3899 = vadd.f32 %v3750, %v3814
      %v3900 = vadd.f32 %v3751, %v3818
      %v3901 = vadd.f32 %v3752, %v3814
      %v3902 = vadd.f32 %v3753, %v3818
      %v3903 = vadd.f32 %v3754, %v3814
      %v3904 = vadd.f32 %v3755, %v3818
      %v3905 = vadd.f32 %v3756, %v3814
      %v3906 = vadd.f32 %v3757, %v3818
      %v3907 = vadd.f32 %v3758, %v3814
      %v3908 = vadd.f32 %v3759, %v3818
      %v3909 = vadd.f32 %v3760, %v3814
      %v3910 = vadd.f32 %v3761, %v3818
      %v3911 = vadd.f32 %v3762, %v3814
      %v3912 = vadd.f32 %v3763, %v3818
      %v3913 = vadd.f32 %v3764, %v3814
      %v3914 = vadd.f32 %v3765, %v3818
      %v3915 = vadd.f32 %v3766, %v3814
      %v3916 = vadd.f32 %v3767, %v3818
      %v3917 = vadd.f32 %v3768, %v3814
      %v3918 = vadd.f32 %v3769, %v3818
      %v3919 = vadd.f32 %v3770, %v3814
      %v3920 = vadd.f32 %v3771, %v3818
      %v3921 = vadd.f32 %v3772, %v3814
      %v3922 = vadd.f32 %v3773, %v3818
      %v3923 = vadd.f32 %v3774, %v3814
      %v3924 = vadd.f32 %v3775, %v3818
      %v3925 = vadd.f32 %v3776, %v3814
      %v3926 = vadd.f32 %v3777, %v3818
      %v3927 = vadd.f32 %v3778, %v3814
      %v3928 = vadd.f32 %v3779, %v3818
      %v3929 = vadd.f32 %v3780, %v3814
      %v3930 = vadd.f32 %v3781, %v3818
      %v3931 = vadd.f32 %v3782, %v3814
      %v3932 = vadd.f32 %v3783, %v3818
      %v3933 = vadd.f32 %v3784, %v3814
      %v3934 = vadd.f32 %v3785, %v3818
      %v3935 = vadd.f32 %v3786, %v3814
      %v3936 = vadd.f32 %v3787, %v3818
      %v3937 = vadd.f32 %v3788, %v3814
      %v3938 = vadd.f32 %v3789, %v3818
      %v3939 = vadd.f32 %v3790, %v3814
      %v3940 = vadd.f32 %v3791, %v3818
      %v3941 = vadd.f32 %v3792, %v3814
      %v3942 = vadd.f32 %v3793, %v3818
      %v3943 = vadd.f32 %v3794, %v3814
      %v3944 = vadd.f32 %v3795, %v3818
      %v3945 = vadd.f32 %v3796, %v3814
      %v3946 = vadd.f32 %v3797, %v3818
      %v3947 = vadd.f32 %v3798, %v3814
      %v3948 = vadd.f32 %v3799, %v3818
      %v3949 = vadd.f32 %v3800, %v3814
      %v3950 = vadd.f32 %v3801, %v3818
      %v3951 = vadd.f32 %v3802, %v3814
      %v3952 = vadd.f32 %v3803, %v3818
      %v3953 = vadd.f32 %v3804, %v3818
      %v3954 = vadd.f32 %v3805, %v3818
      %v3955 = vadd.f32 %v3806, %v3818
      %v3956 = vadd.f32 %v3807, %v3818
      %v3957 = vmax.f32 %v3821, 0.0
      %v3958 = vmax.f32 %v3822, 0.0
      %v3959 = vmax.f32 %v3823, 0.0
      %v3960 = vmax.f32 %v3824, 0.0
      %v3961 = vmax.f32 %v3826, 0.0
      %v3962 = vmax.f32 %v3828, 0.0
      %v3963 = vmax.f32 %v3830, 0.0
      %v3964 = vmax.f32 %v3832, 0.0
      %v3965 = vmax.f32 %v3834, 0.0
      %v3966 = vmax.f32 %v3836, 0.0
      %v3967 = vmax.f32 %v3838, 0.0
      %v3968 = vmax.f32 %v3840, 0.0
      %v3969 = vmax.f32 %v3842, 0.0
      %v3970 = vmax.f32 %v3844, 0.0
      %v3971 = vmax.f32 %v3846, 0.0
      %v3972 = vmax.f32 %v3848, 0.0
      %v3973 = vmax.f32 %v3850, 0.0
      %v3974 = vmax.f32 %v3852, 0.0
      %v3975 = vmax.f32 %v3854, 0.0
      %v3976 = vmax.f32 %v3856, 0.0
      %v3977 = vmax.f32 %v3858, 0.0
      %v3978 = vmax.f32 %v3860, 0.0
      %v3979 = vmax.f32 %v3862, 0.0
      %v3980 = vmax.f32 %v3864, 0.0
      %v3981 = vmax.f32 %v3866, 0.0
      %v3982 = vmax.f32 %v3868, 0.0
      %v3983 = vmax.f32 %v3870, 0.0
      %v3984 = vmax.f32 %v3872, 0.0
      %v3985 = vmax.f32 %v3874, 0.0
      %v3986 = vmax.f32 %v3876, 0.0
      %v3987 = vmax.f32 %v3878, 0.0
      %v3988 = vmax.f32 %v3880, 0.0
      %v3989 = vmax.f32 %v3882, 0.0
      %v3990 = vmax.f32 %v3884, 0.0
      %v3991 = vmax.f32 %v3886, 0.0
      %v3992 = vmax.f32 %v3888, 0.0
      %v3993 = vmax.f32 %v3890, 0.0
      %v3994 = vmax.f32 %v3892, 0.0
      %v3995 = vmax.f32 %v3894, 0.0
      %v3996 = vmax.f32 %v3896, 0.0
      %v3997 = vmax.f32 %v3898, 0.0
      %v3998 = vmax.f32 %v3900, 0.0
      %v3999 = vmax.f32 %v3902, 0.0
      %v4000 = vmax.f32 %v3904, 0.0
      %v4001 = vmax.f32 %v3906, 0.0
      %v4002 = vmax.f32 %v3908, 0.0
      %v4003 = vmax.f32 %v3910, 0.0
      %v4004 = vmax.f32 %v3912, 0.0
      %v4005 = vmax.f32 %v3914, 0.0
      %v4006 = vmax.f32 %v3916, 0.0
      %v4007 = vmax.f32 %v3918, 0.0
      %v4008 = vmax.f32 %v3920, 0.0
      %v4009 = vmax.f32 %v3922, 0.0
      %v4010 = vmax.f32 %v3924, 0.0
      %v4011 = vmax.f32 %v3926, 0.0
      %v4012 = vmax.f32 %v3928, 0.0
      %v4013 = vmax.f32 %v3930, 0.0
      %v4014 = vmax.f32 %v3932, 0.0
      %v4015 = vmax.f32 %v3934, 0.0
      %v4016 = vmax.f32 %v3936, 0.0
      %v4017 = vmax.f32 %v3938, 0.0
      %v4018 = vmax.f32 %v3940, 0.0
      %v4019 = vmax.f32 %v3942, 0.0
      %v4020 = vmax.f32 %v3944, 0.0
      %v4021 = vmax.f32 %v3946, 0.0
      %v4022 = vmax.f32 %v3948, 0.0
      %v4023 = vmax.f32 %v3950, 0.0
      %v4024 = vmax.f32 %v3952, 0.0
      %v4025 = vmax.f32 %v3953, 0.0
      %v4026 = vmax.f32 %v3954, 0.0
      %v4027 = vmax.f32 %v3955, 0.0
      %v4028 = vmax.f32 %v3956, 0.0
      %s4029 = smul.u32 %s21, 16
      %s4030 = ssub.s32 %s4029, 1
      %v4031 = vlaneseq
      %v4032 = vshrl.u32 %v4031, 7
      %v4033 = vadd.s32 %v4032, 8
      %v4034 = vadd.s32 %v4032, 16
      %v4035 = vstv %s4030
      %v4036 = vadd.s32 %v4035, %v4032
      %v4037 = vadd.s32 %v4035, %v4033
      %v4038 = vadd.s32 %v4035, %v4034
      %vm4039 = vcmp.ge.s32.totalorder %v4036, 0
      %vm4040 = vcmp.ge.s32.totalorder %v4037, 0
      %vm4041 = vcmp.ge.s32.totalorder %v4038, 0
      %vm4042 = vcmp.lt.s32.totalorder %v4036, 32
      %vm4043 = vcmp.lt.s32.totalorder %v4037, 32
      %vm4044 = vcmp.lt.s32.totalorder %v4038, 32
      %vm4045 = vmand %vm4039, %vm4042
      %vm4046 = vmand %vm4040, %vm4043
      %vm4047 = vmand %vm4041, %vm4044
      %v4048 = vsel %vm4045, 1, 0
      %v4049 = vsel %vm4046, 1, 0
      %v4050 = vsel %vm4047, 1, 0
      %v4051 = vlaneseq
      %v4052 = vshrl.u32 %v4051, 7
      %v4053 = vsub.s32 0, %v4052
      %v4054 = vrot.slane %v4048, %v4053
      %v4055 = vlaneseq
      %v4056 = vshrl.u32 %v4055, 7
      %v4057 = vsub.s32 1, %v4056
      %v4058 = vrot.slane %v4048, %v4057
      %v4059 = vlaneseq
      %v4060 = vshrl.u32 %v4059, 7
      %v4061 = vsub.s32 2, %v4060
      %v4062 = vrot.slane %v4048, %v4061
      %v4063 = vlaneseq
      %v4064 = vshrl.u32 %v4063, 7
      %v4065 = vsub.s32 3, %v4064
      %v4066 = vrot.slane %v4048, %v4065
      %v4067 = vlaneseq
      %v4068 = vshrl.u32 %v4067, 7
      %v4069 = vsub.s32 4, %v4068
      %v4070 = vrot.slane %v4048, %v4069
      %v4071 = vlaneseq
      %v4072 = vshrl.u32 %v4071, 7
      %v4073 = vsub.s32 5, %v4072
      %v4074 = vrot.slane %v4048, %v4073
      %v4075 = vlaneseq
      %v4076 = vshrl.u32 %v4075, 7
      %v4077 = vsub.s32 6, %v4076
      %v4078 = vrot.slane %v4048, %v4077
      %v4079 = vlaneseq
      %v4080 = vshrl.u32 %v4079, 7
      %v4081 = vsub.s32 7, %v4080
      %v4082 = vrot.slane %v4048, %v4081
      %v4083 = vlaneseq
      %v4084 = vshrl.u32 %v4083, 7
      %v4085 = vsub.s32 0, %v4084
      %v4086 = vrot.slane %v4049, %v4085
      %v4087 = vlaneseq
      %v4088 = vshrl.u32 %v4087, 7
      %v4089 = vsub.s32 1, %v4088
      %v4090 = vrot.slane %v4049, %v4089
      %v4091 = vlaneseq
      %v4092 = vshrl.u32 %v4091, 7
      %v4093 = vsub.s32 2, %v4092
      %v4094 = vrot.slane %v4049, %v4093
      %v4095 = vlaneseq
      %v4096 = vshrl.u32 %v4095, 7
      %v4097 = vsub.s32 3, %v4096
      %v4098 = vrot.slane %v4049, %v4097
      %v4099 = vlaneseq
      %v4100 = vshrl.u32 %v4099, 7
      %v4101 = vsub.s32 4, %v4100
      %v4102 = vrot.slane %v4049, %v4101
      %v4103 = vlaneseq
      %v4104 = vshrl.u32 %v4103, 7
      %v4105 = vsub.s32 5, %v4104
      %v4106 = vrot.slane %v4049, %v4105
      %v4107 = vlaneseq
      %v4108 = vshrl.u32 %v4107, 7
      %v4109 = vsub.s32 6, %v4108
      %v4110 = vrot.slane %v4049, %v4109
      %v4111 = vlaneseq
      %v4112 = vshrl.u32 %v4111, 7
      %v4113 = vsub.s32 7, %v4112
      %v4114 = vrot.slane %v4049, %v4113
      %v4115 = vlaneseq
      %v4116 = vshrl.u32 %v4115, 7
      %v4117 = vsub.s32 0, %v4116
      %v4118 = vrot.slane %v4050, %v4117
      %v4119 = vlaneseq
      %v4120 = vshrl.u32 %v4119, 7
      %v4121 = vsub.s32 1, %v4120
      %v4122 = vrot.slane %v4050, %v4121
      %vm4123 = vcmp.ne.s32.totalorder %v4054, 0
      %vm4124 = vcmp.ne.s32.totalorder %v4058, 0
      %vm4125 = vcmp.ne.s32.totalorder %v4062, 0
      %vm4126 = vcmp.ne.s32.totalorder %v4066, 0
      %vm4127 = vcmp.ne.s32.totalorder %v4070, 0
      %vm4128 = vcmp.ne.s32.totalorder %v4074, 0
      %vm4129 = vcmp.ne.s32.totalorder %v4078, 0
      %vm4130 = vcmp.ne.s32.totalorder %v4082, 0
      %vm4131 = vcmp.ne.s32.totalorder %v4086, 0
      %vm4132 = vcmp.ne.s32.totalorder %v4090, 0
      %vm4133 = vcmp.ne.s32.totalorder %v4094, 0
      %vm4134 = vcmp.ne.s32.totalorder %v4098, 0
      %vm4135 = vcmp.ne.s32.totalorder %v4102, 0
      %vm4136 = vcmp.ne.s32.totalorder %v4106, 0
      %vm4137 = vcmp.ne.s32.totalorder %v4110, 0
      %vm4138 = vcmp.ne.s32.totalorder %v4114, 0
      %vm4139 = vcmp.ne.s32.totalorder %v4118, 0
      %vm4140 = vcmp.ne.s32.totalorder %v4122, 0
      %v4141 = vsel %vm4123, 1, 0
      %v4142 = vsel %vm4124, 1, 0
      %v4143 = vsel %vm4125, 1, 0
      %v4144 = vsel %vm4126, 1, 0
      %v4145 = vsel %vm4127, 1, 0
      %v4146 = vsel %vm4128, 1, 0
      %v4147 = vsel %vm4129, 1, 0
      %v4148 = vsel %vm4130, 1, 0
      %v4149 = vsel %vm4131, 1, 0
      %v4150 = vsel %vm4132, 1, 0
      %v4151 = vsel %vm4133, 1, 0
      %v4152 = vsel %vm4134, 1, 0
      %v4153 = vsel %vm4135, 1, 0
      %v4154 = vsel %vm4136, 1, 0
      %v4155 = vsel %vm4137, 1, 0
      %v4156 = vsel %vm4138, 1, 0
      %v4157 = vsel %vm4139, 1, 0
      %v4158 = vsel %vm4140, 1, 0
      %vm4159 = vcmp.eq.s32.totalorder %v4141, 1
      %vm4160 = vcmp.eq.s32.totalorder %v4142, 1
      %vm4161 = vcmp.eq.s32.totalorder %v4143, 1
      %vm4162 = vcmp.eq.s32.totalorder %v4144, 1
      %vm4163 = vcmp.eq.s32.totalorder %v4145, 1
      %vm4164 = vcmp.eq.s32.totalorder %v4146, 1
      %vm4165 = vcmp.eq.s32.totalorder %v4147, 1
      %vm4166 = vcmp.eq.s32.totalorder %v4148, 1
      %vm4167 = vcmp.eq.s32.totalorder %v4149, 1
      %vm4168 = vcmp.eq.s32.totalorder %v4150, 1
      %vm4169 = vcmp.eq.s32.totalorder %v4151, 1
      %vm4170 = vcmp.eq.s32.totalorder %v4152, 1
      %vm4171 = vcmp.eq.s32.totalorder %v4153, 1
      %vm4172 = vcmp.eq.s32.totalorder %v4154, 1
      %vm4173 = vcmp.eq.s32.totalorder %v4155, 1
      %vm4174 = vcmp.eq.s32.totalorder %v4156, 1
      %vm4175 = vcmp.eq.s32.totalorder %v4157, 1
      %vm4176 = vcmp.eq.s32.totalorder %v4158, 1
      %v4177 = vsel %vm4159, %v3957, 0.0
      %v4178 = vsel %vm4159, %v3958, 0.0
      %v4179 = vsel %vm4159, %v3959, 0.0
      %v4180 = vsel %vm4159, %v3960, 0.0
      %v4181 = vsel %vm4160, %v3961, 0.0
      %v4182 = vsel %vm4160, %v3962, 0.0
      %v4183 = vsel %vm4160, %v3963, 0.0
      %v4184 = vsel %vm4160, %v3964, 0.0
      %v4185 = vsel %vm4161, %v3965, 0.0
      %v4186 = vsel %vm4161, %v3966, 0.0
      %v4187 = vsel %vm4161, %v3967, 0.0
      %v4188 = vsel %vm4161, %v3968, 0.0
      %v4189 = vsel %vm4162, %v3969, 0.0
      %v4190 = vsel %vm4162, %v3970, 0.0
      %v4191 = vsel %vm4162, %v3971, 0.0
      %v4192 = vsel %vm4162, %v3972, 0.0
      %v4193 = vsel %vm4163, %v3973, 0.0
      %v4194 = vsel %vm4163, %v3974, 0.0
      %v4195 = vsel %vm4163, %v3975, 0.0
      %v4196 = vsel %vm4163, %v3976, 0.0
      %v4197 = vsel %vm4164, %v3977, 0.0
      %v4198 = vsel %vm4164, %v3978, 0.0
      %v4199 = vsel %vm4164, %v3979, 0.0
      %v4200 = vsel %vm4164, %v3980, 0.0
      %v4201 = vsel %vm4165, %v3981, 0.0
      %v4202 = vsel %vm4165, %v3982, 0.0
      %v4203 = vsel %vm4165, %v3983, 0.0
      %v4204 = vsel %vm4165, %v3984, 0.0
      %v4205 = vsel %vm4166, %v3985, 0.0
      %v4206 = vsel %vm4166, %v3986, 0.0
      %v4207 = vsel %vm4166, %v3987, 0.0
      %v4208 = vsel %vm4166, %v3988, 0.0
      %v4209 = vsel %vm4167, %v3989, 0.0
      %v4210 = vsel %vm4167, %v3990, 0.0
      %v4211 = vsel %vm4167, %v3991, 0.0
      %v4212 = vsel %vm4167, %v3992, 0.0
      %v4213 = vsel %vm4168, %v3993, 0.0
      %v4214 = vsel %vm4168, %v3994, 0.0
      %v4215 = vsel %vm4168, %v3995, 0.0
      %v4216 = vsel %vm4168, %v3996, 0.0
      %v4217 = vsel %vm4169, %v3997, 0.0
      %v4218 = vsel %vm4169, %v3998, 0.0
      %v4219 = vsel %vm4169, %v3999, 0.0
      %v4220 = vsel %vm4169, %v4000, 0.0
      %v4221 = vsel %vm4170, %v4001, 0.0
      %v4222 = vsel %vm4170, %v4002, 0.0
      %v4223 = vsel %vm4170, %v4003, 0.0
      %v4224 = vsel %vm4170, %v4004, 0.0
      %v4225 = vsel %vm4171, %v4005, 0.0
      %v4226 = vsel %vm4171, %v4006, 0.0
      %v4227 = vsel %vm4171, %v4007, 0.0
      %v4228 = vsel %vm4171, %v4008, 0.0
      %v4229 = vsel %vm4172, %v4009, 0.0
      %v4230 = vsel %vm4172, %v4010, 0.0
      %v4231 = vsel %vm4172, %v4011, 0.0
      %v4232 = vsel %vm4172, %v4012, 0.0
      %v4233 = vsel %vm4173, %v4013, 0.0
      %v4234 = vsel %vm4173, %v4014, 0.0
      %v4235 = vsel %vm4173, %v4015, 0.0
      %v4236 = vsel %vm4173, %v4016, 0.0
      %v4237 = vsel %vm4174, %v4017, 0.0
      %v4238 = vsel %vm4174, %v4018, 0.0
      %v4239 = vsel %vm4174, %v4019, 0.0
      %v4240 = vsel %vm4174, %v4020, 0.0
      %v4241 = vsel %vm4175, %v4021, 0.0
      %v4242 = vsel %vm4175, %v4022, 0.0
      %v4243 = vsel %vm4175, %v4023, 0.0
      %v4244 = vsel %vm4175, %v4024, 0.0
      %v4245 = vsel %vm4176, %v4025, 0.0
      %v4246 = vsel %vm4176, %v4026, 0.0
      %v4247 = vsel %vm4176, %v4027, 0.0
      %v4248 = vsel %vm4176, %v4028, 0.0
      %v4249 = vpack.c.bf16 %v4178, %v4177
      %v4250 = vpack.c.bf16 %v4180, %v4179
      %v4251 = vpack.c.bf16 %v4182, %v4181
      %v4252 = vpack.c.bf16 %v4184, %v4183
      %v4253 = vpack.c.bf16 %v4186, %v4185
      %v4254 = vpack.c.bf16 %v4188, %v4187
      %v4255 = vpack.c.bf16 %v4190, %v4189
      %v4256 = vpack.c.bf16 %v4192, %v4191
      %v4257 = vpack.c.bf16 %v4194, %v4193
      %v4258 = vpack.c.bf16 %v4196, %v4195
      %v4259 = vpack.c.bf16 %v4198, %v4197
      %v4260 = vpack.c.bf16 %v4200, %v4199
      %v4261 = vpack.c.bf16 %v4202, %v4201
      %v4262 = vpack.c.bf16 %v4204, %v4203
      %v4263 = vpack.c.bf16 %v4206, %v4205
      %v4264 = vpack.c.bf16 %v4208, %v4207
      %v4265 = vpack.c.bf16 %v4210, %v4209
      %v4266 = vpack.c.bf16 %v4212, %v4211
      %v4267 = vpack.c.bf16 %v4214, %v4213
      %v4268 = vpack.c.bf16 %v4216, %v4215
      %v4269 = vpack.c.bf16 %v4218, %v4217
      %v4270 = vpack.c.bf16 %v4220, %v4219
      %v4271 = vpack.c.bf16 %v4222, %v4221
      %v4272 = vpack.c.bf16 %v4224, %v4223
      %v4273 = vpack.c.bf16 %v4226, %v4225
      %v4274 = vpack.c.bf16 %v4228, %v4227
      %v4275 = vpack.c.bf16 %v4230, %v4229
      %v4276 = vpack.c.bf16 %v4232, %v4231
      %v4277 = vpack.c.bf16 %v4234, %v4233
      %v4278 = vpack.c.bf16 %v4236, %v4235
      %v4279 = vpack.c.bf16 %v4238, %v4237
      %v4280 = vpack.c.bf16 %v4240, %v4239
      %v4281 = vpack.c.bf16 %v4242, %v4241
      %v4282 = vpack.c.bf16 %v4244, %v4243
      %v4283 = vpack.c.bf16 %v4246, %v4245
      %v4284 = vpack.c.bf16 %v4248, %v4247
      %v4321 = vunpack.c.l.b16 %v4249
      %v4322 = vunpack.c.h.b16 %v4249
      %v4323 = vunpack.c.l.b16 %v4250
      %v4324 = vunpack.c.h.b16 %v4250
      %v4325 = vunpack.c.l.b16 %v4251
      %v4326 = vunpack.c.h.b16 %v4251
      %v4327 = vunpack.c.l.b16 %v4252
      %v4328 = vunpack.c.h.b16 %v4252
      %v4329 = vunpack.c.l.b16 %v4253
      %v4330 = vunpack.c.h.b16 %v4253
      %v4331 = vunpack.c.l.b16 %v4254
      %v4332 = vunpack.c.h.b16 %v4254
      %v4333 = vunpack.c.l.b16 %v4255
      %v4334 = vunpack.c.h.b16 %v4255
      %v4335 = vunpack.c.l.b16 %v4256
      %v4336 = vunpack.c.h.b16 %v4256
      %v4337 = vunpack.c.l.b16 %v4257
      %v4338 = vunpack.c.h.b16 %v4257
      %v4339 = vunpack.c.l.b16 %v4258
      %v4340 = vunpack.c.h.b16 %v4258
      %v4341 = vunpack.c.l.b16 %v4259
      %v4342 = vunpack.c.h.b16 %v4259
      %v4343 = vunpack.c.l.b16 %v4260
      %v4344 = vunpack.c.h.b16 %v4260
      %v4345 = vunpack.c.l.b16 %v4261
      %v4346 = vunpack.c.h.b16 %v4261
      %v4347 = vunpack.c.l.b16 %v4262
      %v4348 = vunpack.c.h.b16 %v4262
      %v4349 = vunpack.c.l.b16 %v4263
      %v4350 = vunpack.c.h.b16 %v4263
      %v4351 = vunpack.c.l.b16 %v4264
      %v4352 = vunpack.c.h.b16 %v4264
      %v4353 = vunpack.c.l.b16 %v4265
      %v4354 = vunpack.c.h.b16 %v4265
      %v4355 = vunpack.c.l.b16 %v4266
      %v4356 = vunpack.c.h.b16 %v4266
      %v4357 = vunpack.c.l.b16 %v4267
      %v4358 = vunpack.c.h.b16 %v4267
      %v4359 = vunpack.c.l.b16 %v4268
      %v4360 = vunpack.c.h.b16 %v4268
      %v4361 = vunpack.c.l.b16 %v4269
      %v4362 = vunpack.c.h.b16 %v4269
      %v4363 = vunpack.c.l.b16 %v4270
      %v4364 = vunpack.c.h.b16 %v4270
      %v4365 = vunpack.c.l.b16 %v4271
      %v4366 = vunpack.c.h.b16 %v4271
      %v4367 = vunpack.c.l.b16 %v4272
      %v4368 = vunpack.c.h.b16 %v4272
      %v4369 = vunpack.c.l.b16 %v4273
      %v4370 = vunpack.c.h.b16 %v4273
      %v4371 = vunpack.c.l.b16 %v4274
      %v4372 = vunpack.c.h.b16 %v4274
      %v4373 = vunpack.c.l.b16 %v4275
      %v4374 = vunpack.c.h.b16 %v4275
      %v4375 = vunpack.c.l.b16 %v4276
      %v4376 = vunpack.c.h.b16 %v4276
      %v4377 = vunpack.c.l.b16 %v4277
      %v4378 = vunpack.c.h.b16 %v4277
      %v4379 = vunpack.c.l.b16 %v4278
      %v4380 = vunpack.c.h.b16 %v4278
      %v4381 = vunpack.c.l.b16 %v4279
      %v4382 = vunpack.c.h.b16 %v4279
      %v4383 = vunpack.c.l.b16 %v4280
      %v4384 = vunpack.c.h.b16 %v4280
      %v4385 = vunpack.c.l.b16 %v4281
      %v4386 = vunpack.c.h.b16 %v4281
      %v4387 = vunpack.c.l.b16 %v4282
      %v4388 = vunpack.c.h.b16 %v4282
      %v4389 = vunpack.c.l.b16 %v4283
      %v4390 = vunpack.c.h.b16 %v4283
      %v4391 = vunpack.c.l.b16 %v4284
      %v4392 = vunpack.c.h.b16 %v4284
      %v4393 = vpack.c.b16 %v4321, %v4321
      %v4394 = vpack.c.b16 %v4322, %v4322
      %v4395 = vpack.c.b16 %v4323, %v4323
      %v4396 = vpack.c.b16 %v4324, %v4324
      %v4397 = vpack.c.b16 %v4325, %v4325
      %v4398 = vpack.c.b16 %v4326, %v4326
      %v4399 = vpack.c.b16 %v4327, %v4327
      %v4400 = vpack.c.b16 %v4328, %v4328
      %v4401 = vpack.c.b16 %v4329, %v4329
      %v4402 = vpack.c.b16 %v4330, %v4330
      %v4403 = vpack.c.b16 %v4331, %v4331
      %v4404 = vpack.c.b16 %v4332, %v4332
      %v4405 = vpack.c.b16 %v4333, %v4333
      %v4406 = vpack.c.b16 %v4334, %v4334
      %v4407 = vpack.c.b16 %v4335, %v4335
      %v4408 = vpack.c.b16 %v4336, %v4336
      %v4409 = vpack.c.b16 %v4337, %v4337
      %v4410 = vpack.c.b16 %v4338, %v4338
      %v4411 = vpack.c.b16 %v4339, %v4339
      %v4412 = vpack.c.b16 %v4340, %v4340
      %v4413 = vpack.c.b16 %v4341, %v4341
      %v4414 = vpack.c.b16 %v4342, %v4342
      %v4415 = vpack.c.b16 %v4343, %v4343
      %v4416 = vpack.c.b16 %v4344, %v4344
      %v4417 = vpack.c.b16 %v4345, %v4345
      %v4418 = vpack.c.b16 %v4346, %v4346
      %v4419 = vpack.c.b16 %v4347, %v4347
      %v4420 = vpack.c.b16 %v4348, %v4348
      %v4421 = vpack.c.b16 %v4349, %v4349
      %v4422 = vpack.c.b16 %v4350, %v4350
      %v4423 = vpack.c.b16 %v4351, %v4351
      %v4424 = vpack.c.b16 %v4352, %v4352
      %v4425 = vpack.c.b16 %v4353, %v4353
      %v4426 = vpack.c.b16 %v4354, %v4354
      %v4427 = vpack.c.b16 %v4355, %v4355
      %v4428 = vpack.c.b16 %v4356, %v4356
      %v4429 = vpack.c.b16 %v4357, %v4357
      %v4430 = vpack.c.b16 %v4358, %v4358
      %v4431 = vpack.c.b16 %v4359, %v4359
      %v4432 = vpack.c.b16 %v4360, %v4360
      %v4433 = vpack.c.b16 %v4361, %v4361
      %v4434 = vpack.c.b16 %v4362, %v4362
      %v4435 = vpack.c.b16 %v4363, %v4363
      %v4436 = vpack.c.b16 %v4364, %v4364
      %v4437 = vpack.c.b16 %v4365, %v4365
      %v4438 = vpack.c.b16 %v4366, %v4366
      %v4439 = vpack.c.b16 %v4367, %v4367
      %v4440 = vpack.c.b16 %v4368, %v4368
      %v4441 = vpack.c.b16 %v4369, %v4369
      %v4442 = vpack.c.b16 %v4370, %v4370
      %v4443 = vpack.c.b16 %v4371, %v4371
      %v4444 = vpack.c.b16 %v4372, %v4372
      %v4445 = vpack.c.b16 %v4373, %v4373
      %v4446 = vpack.c.b16 %v4374, %v4374
      %v4447 = vpack.c.b16 %v4375, %v4375
      %v4448 = vpack.c.b16 %v4376, %v4376
      %v4449 = vpack.c.b16 %v4377, %v4377
      %v4450 = vpack.c.b16 %v4378, %v4378
      %v4451 = vpack.c.b16 %v4379, %v4379
      %v4452 = vpack.c.b16 %v4380, %v4380
      %v4453 = vpack.c.b16 %v4381, %v4381
      %v4454 = vpack.c.b16 %v4382, %v4382
      %v4455 = vpack.c.b16 %v4383, %v4383
      %v4456 = vpack.c.b16 %v4384, %v4384
      %v4457 = vpack.c.b16 %v4385, %v4385
      %v4458 = vpack.c.b16 %v4386, %v4386
      %v4459 = vpack.c.b16 %v4387, %v4387
      %v4460 = vpack.c.b16 %v4388, %v4388
      %v4461 = vpack.c.b16 %v4389, %v4389
      %v4462 = vpack.c.b16 %v4390, %v4390
      %v4463 = vpack.c.b16 %v4391, %v4391
      %v4464 = vpack.c.b16 %v4392, %v4392
      %vm4465 = vsmask.f32 256
      %vm4466 = vsmask.f32 4368
      %vm4467 = vmor %vm4465, %vm4466
      %v4469 = vshrl.u32 %v4393, 16
      %v4471 = vrot.slane %v4469, 7
      %v4472 = vshll.u32 %v4393, 16
      %v4474 = vor.u32 %v4471, %v4472
      %v4475 = vrot.slane %v4471, 4
      %v4477 = vshrl.u32 %v4394, 16
      %v4479 = vrot.slane %v4477, 7
      %v4480 = vshll.u32 %v4394, 16
      %v4482 = vor.u32 %v4479, %v4480
      %v4483 = vsel %vm4467, %v4475, %v4482
      %v4484 = vrot.slane %v4479, 4
      %v4486 = vshrl.u32 %v4395, 16
      %v4488 = vrot.slane %v4486, 7
      %v4489 = vshll.u32 %v4395, 16
      %v4491 = vor.u32 %v4488, %v4489
      %v4492 = vsel %vm4467, %v4484, %v4491
      %v4493 = vrot.slane %v4488, 4
      %v4495 = vshrl.u32 %v4396, 16
      %v4497 = vrot.slane %v4495, 7
      %v4498 = vshll.u32 %v4396, 16
      %v4500 = vor.u32 %v4497, %v4498
      %v4501 = vsel %vm4467, %v4493, %v4500
      %v4502 = vrot.slane %v4497, 4
      %v4504 = vshrl.u32 %v4397, 16
      %v4506 = vrot.slane %v4504, 7
      %v4507 = vshll.u32 %v4397, 16
      %v4509 = vor.u32 %v4506, %v4507
      %v4510 = vrot.slane %v4506, 4
      %v4512 = vshrl.u32 %v4398, 16
      %v4514 = vrot.slane %v4512, 7
      %v4515 = vshll.u32 %v4398, 16
      %v4517 = vor.u32 %v4514, %v4515
      %v4518 = vsel %vm4467, %v4510, %v4517
      %v4519 = vrot.slane %v4514, 4
      %v4521 = vshrl.u32 %v4399, 16
      %v4523 = vrot.slane %v4521, 7
      %v4524 = vshll.u32 %v4399, 16
      %v4526 = vor.u32 %v4523, %v4524
      %v4527 = vsel %vm4467, %v4519, %v4526
      %v4528 = vrot.slane %v4523, 4
      %v4530 = vshrl.u32 %v4400, 16
      %v4532 = vrot.slane %v4530, 7
      %v4533 = vshll.u32 %v4400, 16
      %v4535 = vor.u32 %v4532, %v4533
      %v4536 = vsel %vm4467, %v4528, %v4535
      %v4537 = vrot.slane %v4532, 4
      %v4539 = vshrl.u32 %v4401, 16
      %v4541 = vrot.slane %v4539, 7
      %v4542 = vshll.u32 %v4401, 16
      %v4544 = vor.u32 %v4541, %v4542
      %v4545 = vrot.slane %v4541, 4
      %v4547 = vshrl.u32 %v4402, 16
      %v4549 = vrot.slane %v4547, 7
      %v4550 = vshll.u32 %v4402, 16
      %v4552 = vor.u32 %v4549, %v4550
      %v4553 = vsel %vm4467, %v4545, %v4552
      %v4554 = vrot.slane %v4549, 4
      %v4556 = vshrl.u32 %v4403, 16
      %v4558 = vrot.slane %v4556, 7
      %v4559 = vshll.u32 %v4403, 16
      %v4561 = vor.u32 %v4558, %v4559
      %v4562 = vsel %vm4467, %v4554, %v4561
      %v4563 = vrot.slane %v4558, 4
      %v4565 = vshrl.u32 %v4404, 16
      %v4567 = vrot.slane %v4565, 7
      %v4568 = vshll.u32 %v4404, 16
      %v4570 = vor.u32 %v4567, %v4568
      %v4571 = vsel %vm4467, %v4563, %v4570
      %v4572 = vrot.slane %v4567, 4
      %v4574 = vshrl.u32 %v4405, 16
      %v4576 = vrot.slane %v4574, 7
      %v4577 = vshll.u32 %v4405, 16
      %v4579 = vor.u32 %v4576, %v4577
      %v4580 = vrot.slane %v4576, 4
      %v4582 = vshrl.u32 %v4406, 16
      %v4584 = vrot.slane %v4582, 7
      %v4585 = vshll.u32 %v4406, 16
      %v4587 = vor.u32 %v4584, %v4585
      %v4588 = vsel %vm4467, %v4580, %v4587
      %v4589 = vrot.slane %v4584, 4
      %v4591 = vshrl.u32 %v4407, 16
      %v4593 = vrot.slane %v4591, 7
      %v4594 = vshll.u32 %v4407, 16
      %v4596 = vor.u32 %v4593, %v4594
      %v4597 = vsel %vm4467, %v4589, %v4596
      %v4598 = vrot.slane %v4593, 4
      %v4600 = vshrl.u32 %v4408, 16
      %v4602 = vrot.slane %v4600, 7
      %v4603 = vshll.u32 %v4408, 16
      %v4605 = vor.u32 %v4602, %v4603
      %v4606 = vsel %vm4467, %v4598, %v4605
      %v4607 = vrot.slane %v4602, 4
      %v4609 = vshrl.u32 %v4409, 16
      %v4611 = vrot.slane %v4609, 7
      %v4612 = vshll.u32 %v4409, 16
      %v4614 = vor.u32 %v4611, %v4612
      %v4615 = vrot.slane %v4611, 4
      %v4617 = vshrl.u32 %v4410, 16
      %v4619 = vrot.slane %v4617, 7
      %v4620 = vshll.u32 %v4410, 16
      %v4622 = vor.u32 %v4619, %v4620
      %v4623 = vsel %vm4467, %v4615, %v4622
      %v4624 = vrot.slane %v4619, 4
      %v4626 = vshrl.u32 %v4411, 16
      %v4628 = vrot.slane %v4626, 7
      %v4629 = vshll.u32 %v4411, 16
      %v4631 = vor.u32 %v4628, %v4629
      %v4632 = vsel %vm4467, %v4624, %v4631
      %v4633 = vrot.slane %v4628, 4
      %v4635 = vshrl.u32 %v4412, 16
      %v4637 = vrot.slane %v4635, 7
      %v4638 = vshll.u32 %v4412, 16
      %v4640 = vor.u32 %v4637, %v4638
      %v4641 = vsel %vm4467, %v4633, %v4640
      %v4642 = vrot.slane %v4637, 4
      %v4644 = vshrl.u32 %v4413, 16
      %v4646 = vrot.slane %v4644, 7
      %v4647 = vshll.u32 %v4413, 16
      %v4649 = vor.u32 %v4646, %v4647
      %v4650 = vrot.slane %v4646, 4
      %v4652 = vshrl.u32 %v4414, 16
      %v4654 = vrot.slane %v4652, 7
      %v4655 = vshll.u32 %v4414, 16
      %v4657 = vor.u32 %v4654, %v4655
      %v4658 = vsel %vm4467, %v4650, %v4657
      %v4659 = vrot.slane %v4654, 4
      %v4661 = vshrl.u32 %v4415, 16
      %v4663 = vrot.slane %v4661, 7
      %v4664 = vshll.u32 %v4415, 16
      %v4666 = vor.u32 %v4663, %v4664
      %v4667 = vsel %vm4467, %v4659, %v4666
      %v4668 = vrot.slane %v4663, 4
      %v4670 = vshrl.u32 %v4416, 16
      %v4672 = vrot.slane %v4670, 7
      %v4673 = vshll.u32 %v4416, 16
      %v4675 = vor.u32 %v4672, %v4673
      %v4676 = vsel %vm4467, %v4668, %v4675
      %v4677 = vrot.slane %v4672, 4
      %v4679 = vshrl.u32 %v4417, 16
      %v4681 = vrot.slane %v4679, 7
      %v4682 = vshll.u32 %v4417, 16
      %v4684 = vor.u32 %v4681, %v4682
      %v4685 = vrot.slane %v4681, 4
      %v4687 = vshrl.u32 %v4418, 16
      %v4689 = vrot.slane %v4687, 7
      %v4690 = vshll.u32 %v4418, 16
      %v4692 = vor.u32 %v4689, %v4690
      %v4693 = vsel %vm4467, %v4685, %v4692
      %v4694 = vrot.slane %v4689, 4
      %v4696 = vshrl.u32 %v4419, 16
      %v4698 = vrot.slane %v4696, 7
      %v4699 = vshll.u32 %v4419, 16
      %v4701 = vor.u32 %v4698, %v4699
      %v4702 = vsel %vm4467, %v4694, %v4701
      %v4703 = vrot.slane %v4698, 4
      %v4705 = vshrl.u32 %v4420, 16
      %v4707 = vrot.slane %v4705, 7
      %v4708 = vshll.u32 %v4420, 16
      %v4710 = vor.u32 %v4707, %v4708
      %v4711 = vsel %vm4467, %v4703, %v4710
      %v4712 = vrot.slane %v4707, 4
      %v4714 = vshrl.u32 %v4421, 16
      %v4716 = vrot.slane %v4714, 7
      %v4717 = vshll.u32 %v4421, 16
      %v4719 = vor.u32 %v4716, %v4717
      %v4720 = vrot.slane %v4716, 4
      %v4722 = vshrl.u32 %v4422, 16
      %v4724 = vrot.slane %v4722, 7
      %v4725 = vshll.u32 %v4422, 16
      %v4727 = vor.u32 %v4724, %v4725
      %v4728 = vsel %vm4467, %v4720, %v4727
      %v4729 = vrot.slane %v4724, 4
      %v4731 = vshrl.u32 %v4423, 16
      %v4733 = vrot.slane %v4731, 7
      %v4734 = vshll.u32 %v4423, 16
      %v4736 = vor.u32 %v4733, %v4734
      %v4737 = vsel %vm4467, %v4729, %v4736
      %v4738 = vrot.slane %v4733, 4
      %v4740 = vshrl.u32 %v4424, 16
      %v4742 = vrot.slane %v4740, 7
      %v4743 = vshll.u32 %v4424, 16
      %v4745 = vor.u32 %v4742, %v4743
      %v4746 = vsel %vm4467, %v4738, %v4745
      %v4747 = vrot.slane %v4742, 4
      %v4749 = vshrl.u32 %v4425, 16
      %v4751 = vrot.slane %v4749, 7
      %v4752 = vshll.u32 %v4425, 16
      %v4754 = vor.u32 %v4751, %v4752
      %v4755 = vrot.slane %v4751, 4
      %v4757 = vshrl.u32 %v4426, 16
      %v4759 = vrot.slane %v4757, 7
      %v4760 = vshll.u32 %v4426, 16
      %v4762 = vor.u32 %v4759, %v4760
      %v4763 = vsel %vm4467, %v4755, %v4762
      %v4764 = vrot.slane %v4759, 4
      %v4766 = vshrl.u32 %v4427, 16
      %v4768 = vrot.slane %v4766, 7
      %v4769 = vshll.u32 %v4427, 16
      %v4771 = vor.u32 %v4768, %v4769
      %v4772 = vsel %vm4467, %v4764, %v4771
      %v4773 = vrot.slane %v4768, 4
      %v4775 = vshrl.u32 %v4428, 16
      %v4777 = vrot.slane %v4775, 7
      %v4778 = vshll.u32 %v4428, 16
      %v4780 = vor.u32 %v4777, %v4778
      %v4781 = vsel %vm4467, %v4773, %v4780
      %v4782 = vrot.slane %v4777, 4
      %v4784 = vshrl.u32 %v4429, 16
      %v4786 = vrot.slane %v4784, 7
      %v4787 = vshll.u32 %v4429, 16
      %v4789 = vor.u32 %v4786, %v4787
      %v4790 = vrot.slane %v4786, 4
      %v4792 = vshrl.u32 %v4430, 16
      %v4794 = vrot.slane %v4792, 7
      %v4795 = vshll.u32 %v4430, 16
      %v4797 = vor.u32 %v4794, %v4795
      %v4798 = vsel %vm4467, %v4790, %v4797
      %v4799 = vrot.slane %v4794, 4
      %v4801 = vshrl.u32 %v4431, 16
      %v4803 = vrot.slane %v4801, 7
      %v4804 = vshll.u32 %v4431, 16
      %v4806 = vor.u32 %v4803, %v4804
      %v4807 = vsel %vm4467, %v4799, %v4806
      %v4808 = vrot.slane %v4803, 4
      %v4810 = vshrl.u32 %v4432, 16
      %v4812 = vrot.slane %v4810, 7
      %v4813 = vshll.u32 %v4432, 16
      %v4815 = vor.u32 %v4812, %v4813
      %v4816 = vsel %vm4467, %v4808, %v4815
      %v4817 = vrot.slane %v4812, 4
      %v4819 = vshrl.u32 %v4433, 16
      %v4821 = vrot.slane %v4819, 7
      %v4822 = vshll.u32 %v4433, 16
      %v4824 = vor.u32 %v4821, %v4822
      %v4825 = vrot.slane %v4821, 4
      %v4827 = vshrl.u32 %v4434, 16
      %v4829 = vrot.slane %v4827, 7
      %v4830 = vshll.u32 %v4434, 16
      %v4832 = vor.u32 %v4829, %v4830
      %v4833 = vsel %vm4467, %v4825, %v4832
      %v4834 = vrot.slane %v4829, 4
      %v4836 = vshrl.u32 %v4435, 16
      %v4838 = vrot.slane %v4836, 7
      %v4839 = vshll.u32 %v4435, 16
      %v4841 = vor.u32 %v4838, %v4839
      %v4842 = vsel %vm4467, %v4834, %v4841
      %v4843 = vrot.slane %v4838, 4
      %v4845 = vshrl.u32 %v4436, 16
      %v4847 = vrot.slane %v4845, 7
      %v4848 = vshll.u32 %v4436, 16
      %v4850 = vor.u32 %v4847, %v4848
      %v4851 = vsel %vm4467, %v4843, %v4850
      %v4852 = vrot.slane %v4847, 4
      %v4854 = vshrl.u32 %v4437, 16
      %v4856 = vrot.slane %v4854, 7
      %v4857 = vshll.u32 %v4437, 16
      %v4859 = vor.u32 %v4856, %v4857
      %v4860 = vrot.slane %v4856, 4
      %v4862 = vshrl.u32 %v4438, 16
      %v4864 = vrot.slane %v4862, 7
      %v4865 = vshll.u32 %v4438, 16
      %v4867 = vor.u32 %v4864, %v4865
      %v4868 = vsel %vm4467, %v4860, %v4867
      %v4869 = vrot.slane %v4864, 4
      %v4871 = vshrl.u32 %v4439, 16
      %v4873 = vrot.slane %v4871, 7
      %v4874 = vshll.u32 %v4439, 16
      %v4876 = vor.u32 %v4873, %v4874
      %v4877 = vsel %vm4467, %v4869, %v4876
      %v4878 = vrot.slane %v4873, 4
      %v4880 = vshrl.u32 %v4440, 16
      %v4882 = vrot.slane %v4880, 7
      %v4883 = vshll.u32 %v4440, 16
      %v4885 = vor.u32 %v4882, %v4883
      %v4886 = vsel %vm4467, %v4878, %v4885
      %v4887 = vrot.slane %v4882, 4
      %v4889 = vshrl.u32 %v4441, 16
      %v4891 = vrot.slane %v4889, 7
      %v4892 = vshll.u32 %v4441, 16
      %v4894 = vor.u32 %v4891, %v4892
      %v4895 = vrot.slane %v4891, 4
      %v4897 = vshrl.u32 %v4442, 16
      %v4899 = vrot.slane %v4897, 7
      %v4900 = vshll.u32 %v4442, 16
      %v4902 = vor.u32 %v4899, %v4900
      %v4903 = vsel %vm4467, %v4895, %v4902
      %v4904 = vrot.slane %v4899, 4
      %v4906 = vshrl.u32 %v4443, 16
      %v4908 = vrot.slane %v4906, 7
      %v4909 = vshll.u32 %v4443, 16
      %v4911 = vor.u32 %v4908, %v4909
      %v4912 = vsel %vm4467, %v4904, %v4911
      %v4913 = vrot.slane %v4908, 4
      %v4915 = vshrl.u32 %v4444, 16
      %v4917 = vrot.slane %v4915, 7
      %v4918 = vshll.u32 %v4444, 16
      %v4920 = vor.u32 %v4917, %v4918
      %v4921 = vsel %vm4467, %v4913, %v4920
      %v4922 = vrot.slane %v4917, 4
      %v4924 = vshrl.u32 %v4445, 16
      %v4926 = vrot.slane %v4924, 7
      %v4927 = vshll.u32 %v4445, 16
      %v4929 = vor.u32 %v4926, %v4927
      %v4930 = vrot.slane %v4926, 4
      %v4932 = vshrl.u32 %v4446, 16
      %v4934 = vrot.slane %v4932, 7
      %v4935 = vshll.u32 %v4446, 16
      %v4937 = vor.u32 %v4934, %v4935
      %v4938 = vsel %vm4467, %v4930, %v4937
      %v4939 = vrot.slane %v4934, 4
      %v4941 = vshrl.u32 %v4447, 16
      %v4943 = vrot.slane %v4941, 7
      %v4944 = vshll.u32 %v4447, 16
      %v4946 = vor.u32 %v4943, %v4944
      %v4947 = vsel %vm4467, %v4939, %v4946
      %v4948 = vrot.slane %v4943, 4
      %v4950 = vshrl.u32 %v4448, 16
      %v4952 = vrot.slane %v4950, 7
      %v4953 = vshll.u32 %v4448, 16
      %v4955 = vor.u32 %v4952, %v4953
      %v4956 = vsel %vm4467, %v4948, %v4955
      %v4957 = vrot.slane %v4952, 4
      %v4959 = vshrl.u32 %v4449, 16
      %v4961 = vrot.slane %v4959, 7
      %v4962 = vshll.u32 %v4449, 16
      %v4964 = vor.u32 %v4961, %v4962
      %v4965 = vrot.slane %v4961, 4
      %v4967 = vshrl.u32 %v4450, 16
      %v4969 = vrot.slane %v4967, 7
      %v4970 = vshll.u32 %v4450, 16
      %v4972 = vor.u32 %v4969, %v4970
      %v4973 = vsel %vm4467, %v4965, %v4972
      %v4974 = vrot.slane %v4969, 4
      %v4976 = vshrl.u32 %v4451, 16
      %v4978 = vrot.slane %v4976, 7
      %v4979 = vshll.u32 %v4451, 16
      %v4981 = vor.u32 %v4978, %v4979
      %v4982 = vsel %vm4467, %v4974, %v4981
      %v4983 = vrot.slane %v4978, 4
      %v4985 = vshrl.u32 %v4452, 16
      %v4987 = vrot.slane %v4985, 7
      %v4988 = vshll.u32 %v4452, 16
      %v4990 = vor.u32 %v4987, %v4988
      %v4991 = vsel %vm4467, %v4983, %v4990
      %v4992 = vrot.slane %v4987, 4
      %v4994 = vshrl.u32 %v4453, 16
      %v4996 = vrot.slane %v4994, 7
      %v4997 = vshll.u32 %v4453, 16
      %v4999 = vor.u32 %v4996, %v4997
      %v5000 = vrot.slane %v4996, 4
      %v5002 = vshrl.u32 %v4454, 16
      %v5004 = vrot.slane %v5002, 7
      %v5005 = vshll.u32 %v4454, 16
      %v5007 = vor.u32 %v5004, %v5005
      %v5008 = vsel %vm4467, %v5000, %v5007
      %v5009 = vrot.slane %v5004, 4
      %v5011 = vshrl.u32 %v4455, 16
      %v5013 = vrot.slane %v5011, 7
      %v5014 = vshll.u32 %v4455, 16
      %v5016 = vor.u32 %v5013, %v5014
      %v5017 = vsel %vm4467, %v5009, %v5016
      %v5018 = vrot.slane %v5013, 4
      %v5020 = vshrl.u32 %v4456, 16
      %v5022 = vrot.slane %v5020, 7
      %v5023 = vshll.u32 %v4456, 16
      %v5025 = vor.u32 %v5022, %v5023
      %v5026 = vsel %vm4467, %v5018, %v5025
      %v5027 = vrot.slane %v5022, 4
      %v5029 = vshrl.u32 %v4457, 16
      %v5031 = vrot.slane %v5029, 7
      %v5032 = vshll.u32 %v4457, 16
      %v5034 = vor.u32 %v5031, %v5032
      %v5035 = vrot.slane %v5031, 4
      %v5037 = vshrl.u32 %v4458, 16
      %v5039 = vrot.slane %v5037, 7
      %v5040 = vshll.u32 %v4458, 16
      %v5042 = vor.u32 %v5039, %v5040
      %v5043 = vsel %vm4467, %v5035, %v5042
      %v5044 = vrot.slane %v5039, 4
      %v5046 = vshrl.u32 %v4459, 16
      %v5048 = vrot.slane %v5046, 7
      %v5049 = vshll.u32 %v4459, 16
      %v5051 = vor.u32 %v5048, %v5049
      %v5052 = vsel %vm4467, %v5044, %v5051
      %v5053 = vrot.slane %v5048, 4
      %v5055 = vshrl.u32 %v4460, 16
      %v5057 = vrot.slane %v5055, 7
      %v5058 = vshll.u32 %v4460, 16
      %v5060 = vor.u32 %v5057, %v5058
      %v5061 = vsel %vm4467, %v5053, %v5060
      %v5062 = vrot.slane %v5057, 4
      %v5064 = vshrl.u32 %v4461, 16
      %v5066 = vrot.slane %v5064, 7
      %v5067 = vshll.u32 %v4461, 16
      %v5069 = vor.u32 %v5066, %v5067
      %v5070 = vrot.slane %v5066, 4
      %v5072 = vshrl.u32 %v4462, 16
      %v5074 = vrot.slane %v5072, 7
      %v5075 = vshll.u32 %v4462, 16
      %v5077 = vor.u32 %v5074, %v5075
      %v5078 = vsel %vm4467, %v5070, %v5077
      %v5079 = vrot.slane %v5074, 4
      %v5081 = vshrl.u32 %v4463, 16
      %v5083 = vrot.slane %v5081, 7
      %v5084 = vshll.u32 %v4463, 16
      %v5086 = vor.u32 %v5083, %v5084
      %v5087 = vsel %vm4467, %v5079, %v5086
      %v5088 = vrot.slane %v5083, 4
      %v5090 = vshrl.u32 %v4464, 16
      %v5092 = vrot.slane %v5090, 7
      %v5093 = vshll.u32 %v4464, 16
      %v5095 = vor.u32 %v5092, %v5093
      %v5096 = vsel %vm4467, %v5088, %v5095
      %v5097 = vrot.slane %v5092, 4
      %vm5188 = vcmask 1043456
      %vm5189 = vsmask.f32 7938
      %vm5190 = vmand %vm5188, %vm5189
      %v5191 = vld [vmem:[#allocation2] sm:$0xf]
      %v5192 = vsel %vm5190, %v4474, %v5191
      %5193 = vst [vmem:[#allocation2] sm:$0xf] %v5192
      %5194 = vst [vmem:[#allocation2 + $0x4] sm:$0xf] %v4483
      %5195 = vst [vmem:[#allocation2 + $0x8] sm:$0xf] %v4492
      %5196 = vst [vmem:[#allocation2 + $0xc] sm:$0xf] %v4501
      %vm5197 = vcmask 1040384
      %vm5198 = vmand %vm5197, %vm4465
      %v5199 = vld [vmem:[#allocation2 + $0x10] sm:$0x1]
      %v5200 = vsel %vm5198, %v4502, %v5199
      %5201 = vst [vmem:[#allocation2 + $0x10] sm:$0x1] %v5200
      %v5202 = vld [vmem:[#allocation2 + $0x14] sm:$0xf]
      %v5203 = vsel %vm5190, %v4509, %v5202
      %5204 = vst [vmem:[#allocation2 + $0x14] sm:$0xf] %v5203
      %5205 = vst [vmem:[#allocation2 + $0x18] sm:$0xf] %v4518
      %5206 = vst [vmem:[#allocation2 + $0x1c] sm:$0xf] %v4527
      %5207 = vst [vmem:[#allocation2 + $0x20] sm:$0xf] %v4536
      %v5208 = vld [vmem:[#allocation2 + $0x24] sm:$0x1]
      %v5209 = vsel %vm5198, %v4537, %v5208
      %5210 = vst [vmem:[#allocation2 + $0x24] sm:$0x1] %v5209
      %v5211 = vld [vmem:[#allocation2 + $0x28] sm:$0xf]
      %v5212 = vsel %vm5190, %v4544, %v5211
      %5213 = vst [vmem:[#allocation2 + $0x28] sm:$0xf] %v5212
      %5214 = vst [vmem:[#allocation2 + $0x2c] sm:$0xf] %v4553
      %5215 = vst [vmem:[#allocation2 + $0x30] sm:$0xf] %v4562
      %5216 = vst [vmem:[#allocation2 + $0x34] sm:$0xf] %v4571
      %v5217 = vld [vmem:[#allocation2 + $0x38] sm:$0x1]
      %v5218 = vsel %vm5198, %v4572, %v5217
      %5219 = vst [vmem:[#allocation2 + $0x38] sm:$0x1] %v5218
      %v5220 = vld [vmem:[#allocation2 + $0x3c] sm:$0xf]
      %v5221 = vsel %vm5190, %v4579, %v5220
      %5222 = vst [vmem:[#allocation2 + $0x3c] sm:$0xf] %v5221
      %5223 = vst [vmem:[#allocation2 + $0x40] sm:$0xf] %v4588
      %5224 = vst [vmem:[#allocation2 + $0x44] sm:$0xf] %v4597
      %5225 = vst [vmem:[#allocation2 + $0x48] sm:$0xf] %v4606
      %v5226 = vld [vmem:[#allocation2 + $0x4c] sm:$0x1]
      %v5227 = vsel %vm5198, %v4607, %v5226
      %5228 = vst [vmem:[#allocation2 + $0x4c] sm:$0x1] %v5227
      %v5229 = vld [vmem:[#allocation2 + $0x50] sm:$0xf]
      %v5230 = vsel %vm5190, %v4614, %v5229
      %5231 = vst [vmem:[#allocation2 + $0x50] sm:$0xf] %v5230
      %5232 = vst [vmem:[#allocation2 + $0x54] sm:$0xf] %v4623
      %5233 = vst [vmem:[#allocation2 + $0x58] sm:$0xf] %v4632
      %5234 = vst [vmem:[#allocation2 + $0x5c] sm:$0xf] %v4641
      %v5235 = vld [vmem:[#allocation2 + $0x60] sm:$0x1]
      %v5236 = vsel %vm5198, %v4642, %v5235
      %5237 = vst [vmem:[#allocation2 + $0x60] sm:$0x1] %v5236
      %v5238 = vld [vmem:[#allocation2 + $0x64] sm:$0xf]
      %v5239 = vsel %vm5190, %v4649, %v5238
      %5240 = vst [vmem:[#allocation2 + $0x64] sm:$0xf] %v5239
      %5241 = vst [vmem:[#allocation2 + $0x68] sm:$0xf] %v4658
      %5242 = vst [vmem:[#allocation2 + $0x6c] sm:$0xf] %v4667
      %5243 = vst [vmem:[#allocation2 + $0x70] sm:$0xf] %v4676
      %v5244 = vld [vmem:[#allocation2 + $0x74] sm:$0x1]
      %v5245 = vsel %vm5198, %v4677, %v5244
      %5246 = vst [vmem:[#allocation2 + $0x74] sm:$0x1] %v5245
      %v5247 = vld [vmem:[#allocation2 + $0x78] sm:$0xf]
      %v5248 = vsel %vm5190, %v4684, %v5247
      %5249 = vst [vmem:[#allocation2 + $0x78] sm:$0xf] %v5248
      %5250 = vst [vmem:[#allocation2 + $0x7c] sm:$0xf] %v4693
      %5251 = vst [vmem:[#allocation2 + $0x80] sm:$0xf] %v4702
      %5252 = vst [vmem:[#allocation2 + $0x84] sm:$0xf] %v4711
      %v5253 = vld [vmem:[#allocation2 + $0x88] sm:$0x1]
      %v5254 = vsel %vm5198, %v4712, %v5253
      %5255 = vst [vmem:[#allocation2 + $0x88] sm:$0x1] %v5254
      %v5256 = vld [vmem:[#allocation2 + $0x8c] sm:$0xf]
      %v5257 = vsel %vm5190, %v4719, %v5256
      %5258 = vst [vmem:[#allocation2 + $0x8c] sm:$0xf] %v5257
      %5259 = vst [vmem:[#allocation2 + $0x90] sm:$0xf] %v4728
      %5260 = vst [vmem:[#allocation2 + $0x94] sm:$0xf] %v4737
      %5261 = vst [vmem:[#allocation2 + $0x98] sm:$0xf] %v4746
      %v5262 = vld [vmem:[#allocation2 + $0x9c] sm:$0x1]
      %v5263 = vsel %vm5198, %v4747, %v5262
      %5264 = vst [vmem:[#allocation2 + $0x9c] sm:$0x1] %v5263
      %v5265 = vld [vmem:[#allocation2 + $0xa0] sm:$0xf]
      %v5266 = vsel %vm5190, %v4754, %v5265
      %5267 = vst [vmem:[#allocation2 + $0xa0] sm:$0xf] %v5266
      %5268 = vst [vmem:[#allocation2 + $0xa4] sm:$0xf] %v4763
      %5269 = vst [vmem:[#allocation2 + $0xa8] sm:$0xf] %v4772
      %5270 = vst [vmem:[#allocation2 + $0xac] sm:$0xf] %v4781
      %v5271 = vld [vmem:[#allocation2 + $0xb0] sm:$0x1]
      %v5272 = vsel %vm5198, %v4782, %v5271
      %5273 = vst [vmem:[#allocation2 + $0xb0] sm:$0x1] %v5272
      %v5274 = vld [vmem:[#allocation2 + $0xb4] sm:$0xf]
      %v5275 = vsel %vm5190, %v4789, %v5274
      %5276 = vst [vmem:[#allocation2 + $0xb4] sm:$0xf] %v5275
      %5277 = vst [vmem:[#allocation2 + $0xb8] sm:$0xf] %v4798
      %5278 = vst [vmem:[#allocation2 + $0xbc] sm:$0xf] %v4807
      %5279 = vst [vmem:[#allocation2 + $0xc0] sm:$0xf] %v4816
      %v5280 = vld [vmem:[#allocation2 + $0xc4] sm:$0x1]
      %v5281 = vsel %vm5198, %v4817, %v5280
      %5282 = vst [vmem:[#allocation2 + $0xc4] sm:$0x1] %v5281
      %v5283 = vld [vmem:[#allocation2 + $0xc8] sm:$0xf]
      %v5284 = vsel %vm5190, %v4824, %v5283
      %5285 = vst [vmem:[#allocation2 + $0xc8] sm:$0xf] %v5284
      %5286 = vst [vmem:[#allocation2 + $0xcc] sm:$0xf] %v4833
      %5287 = vst [vmem:[#allocation2 + $0xd0] sm:$0xf] %v4842
      %5288 = vst [vmem:[#allocation2 + $0xd4] sm:$0xf] %v4851
      %v5289 = vld [vmem:[#allocation2 + $0xd8] sm:$0x1]
      %v5290 = vsel %vm5198, %v4852, %v5289
      %5291 = vst [vmem:[#allocation2 + $0xd8] sm:$0x1] %v5290
      %v5292 = vld [vmem:[#allocation2 + $0xdc] sm:$0xf]
      %v5293 = vsel %vm5190, %v4859, %v5292
      %5294 = vst [vmem:[#allocation2 + $0xdc] sm:$0xf] %v5293
      %5295 = vst [vmem:[#allocation2 + $0xe0] sm:$0xf] %v4868
      %5296 = vst [vmem:[#allocation2 + $0xe4] sm:$0xf] %v4877
      %5297 = vst [vmem:[#allocation2 + $0xe8] sm:$0xf] %v4886
      %v5298 = vld [vmem:[#allocation2 + $0xec] sm:$0x1]
      %v5299 = vsel %vm5198, %v4887, %v5298
      %5300 = vst [vmem:[#allocation2 + $0xec] sm:$0x1] %v5299
      %v5301 = vld [vmem:[#allocation2 + $0xf0] sm:$0xf]
      %v5302 = vsel %vm5190, %v4894, %v5301
      %5303 = vst [vmem:[#allocation2 + $0xf0] sm:$0xf] %v5302
      %5304 = vst [vmem:[#allocation2 + $0xf4] sm:$0xf] %v4903
      %5305 = vst [vmem:[#allocation2 + $0xf8] sm:$0xf] %v4912
      %5306 = vst [vmem:[#allocation2 + $0xfc] sm:$0xf] %v4921
      %v5307 = vld [vmem:[#allocation2 + $0x100] sm:$0x1]
      %v5308 = vsel %vm5198, %v4922, %v5307
      %5309 = vst [vmem:[#allocation2 + $0x100] sm:$0x1] %v5308
      %v5310 = vld [vmem:[#allocation2 + $0x104] sm:$0xf]
      %v5311 = vsel %vm5190, %v4929, %v5310
      %5312 = vst [vmem:[#allocation2 + $0x104] sm:$0xf] %v5311
      %5313 = vst [vmem:[#allocation2 + $0x108] sm:$0xf] %v4938
      %5314 = vst [vmem:[#allocation2 + $0x10c] sm:$0xf] %v4947
      %5315 = vst [vmem:[#allocation2 + $0x110] sm:$0xf] %v4956
      %v5316 = vld [vmem:[#allocation2 + $0x114] sm:$0x1]
      %v5317 = vsel %vm5198, %v4957, %v5316
      %5318 = vst [vmem:[#allocation2 + $0x114] sm:$0x1] %v5317
      %v5319 = vld [vmem:[#allocation2 + $0x118] sm:$0xf]
      %v5320 = vsel %vm5190, %v4964, %v5319
      %5321 = vst [vmem:[#allocation2 + $0x118] sm:$0xf] %v5320
      %5322 = vst [vmem:[#allocation2 + $0x11c] sm:$0xf] %v4973
      %5323 = vst [vmem:[#allocation2 + $0x120] sm:$0xf] %v4982
      %5324 = vst [vmem:[#allocation2 + $0x124] sm:$0xf] %v4991
      %v5325 = vld [vmem:[#allocation2 + $0x128] sm:$0x1]
      %v5326 = vsel %vm5198, %v4992, %v5325
      %5327 = vst [vmem:[#allocation2 + $0x128] sm:$0x1] %v5326
      %v5328 = vld [vmem:[#allocation2 + $0x12c] sm:$0xf]
      %v5329 = vsel %vm5190, %v4999, %v5328
      %5330 = vst [vmem:[#allocation2 + $0x12c] sm:$0xf] %v5329
      %5331 = vst [vmem:[#allocation2 + $0x130] sm:$0xf] %v5008
      %5332 = vst [vmem:[#allocation2 + $0x134] sm:$0xf] %v5017
      %5333 = vst [vmem:[#allocation2 + $0x138] sm:$0xf] %v5026
      %v5334 = vld [vmem:[#allocation2 + $0x13c] sm:$0x1]
      %v5335 = vsel %vm5198, %v5027, %v5334
      %5336 = vst [vmem:[#allocation2 + $0x13c] sm:$0x1] %v5335
      %v5337 = vld [vmem:[#allocation2 + $0x140] sm:$0xf]
      %v5338 = vsel %vm5190, %v5034, %v5337
      %5339 = vst [vmem:[#allocation2 + $0x140] sm:$0xf] %v5338
      %5340 = vst [vmem:[#allocation2 + $0x144] sm:$0xf] %v5043
      %5341 = vst [vmem:[#allocation2 + $0x148] sm:$0xf] %v5052
      %5342 = vst [vmem:[#allocation2 + $0x14c] sm:$0xf] %v5061
      %v5343 = vld [vmem:[#allocation2 + $0x150] sm:$0x1]
      %v5344 = vsel %vm5198, %v5062, %v5343
      %5345 = vst [vmem:[#allocation2 + $0x150] sm:$0x1] %v5344
      %v5346 = vld [vmem:[#allocation2 + $0x154] sm:$0xf]
      %v5347 = vsel %vm5190, %v5069, %v5346
      %5348 = vst [vmem:[#allocation2 + $0x154] sm:$0xf] %v5347
      %5349 = vst [vmem:[#allocation2 + $0x158] sm:$0xf] %v5078
      %5350 = vst [vmem:[#allocation2 + $0x15c] sm:$0xf] %v5087
      %5351 = vst [vmem:[#allocation2 + $0x160] sm:$0xf] %v5096
      %v5352 = vld [vmem:[#allocation2 + $0x164] sm:$0x1]
      %v5353 = vsel %vm5198, %v5097, %v5352
      %5354 = vst [vmem:[#allocation2 + $0x164] sm:$0x1] %v5353
      %v5355 = vld [vmem:[#allocation2] sm:$0x1]
      %v5356 = vsel %vm5198, 0, %v5355
      %5357 = vst [vmem:[#allocation2] sm:$0x1] %v5356
      %v5358 = vld [vmem:[#allocation2 + $0x14] sm:$0x1]
      %v5359 = vsel %vm5198, 0, %v5358
      %5360 = vst [vmem:[#allocation2 + $0x14] sm:$0x1] %v5359
      %v5361 = vld [vmem:[#allocation2 + $0x28] sm:$0x1]
      %v5362 = vsel %vm5198, 0, %v5361
      %5363 = vst [vmem:[#allocation2 + $0x28] sm:$0x1] %v5362
      %v5364 = vld [vmem:[#allocation2 + $0x3c] sm:$0x1]
      %v5365 = vsel %vm5198, 0, %v5364
      %5366 = vst [vmem:[#allocation2 + $0x3c] sm:$0x1] %v5365
      %v5367 = vld [vmem:[#allocation2 + $0x50] sm:$0x1]
      %v5368 = vsel %vm5198, 0, %v5367
      %5369 = vst [vmem:[#allocation2 + $0x50] sm:$0x1] %v5368
      %v5370 = vld [vmem:[#allocation2 + $0x64] sm:$0x1]
      %v5371 = vsel %vm5198, 0, %v5370
      %5372 = vst [vmem:[#allocation2 + $0x64] sm:$0x1] %v5371
      %v5373 = vld [vmem:[#allocation2 + $0x78] sm:$0x1]
      %v5374 = vsel %vm5198, 0, %v5373
      %5375 = vst [vmem:[#allocation2 + $0x78] sm:$0x1] %v5374
      %v5376 = vld [vmem:[#allocation2 + $0x8c] sm:$0x1]
      %v5377 = vsel %vm5198, 0, %v5376
      %5378 = vst [vmem:[#allocation2 + $0x8c] sm:$0x1] %v5377
      %v5379 = vld [vmem:[#allocation2 + $0xa0] sm:$0x1]
      %v5380 = vsel %vm5198, 0, %v5379
      %5381 = vst [vmem:[#allocation2 + $0xa0] sm:$0x1] %v5380
      %v5382 = vld [vmem:[#allocation2 + $0xb4] sm:$0x1]
      %v5383 = vsel %vm5198, 0, %v5382
      %5384 = vst [vmem:[#allocation2 + $0xb4] sm:$0x1] %v5383
      %v5385 = vld [vmem:[#allocation2 + $0xc8] sm:$0x1]
      %v5386 = vsel %vm5198, 0, %v5385
      %5387 = vst [vmem:[#allocation2 + $0xc8] sm:$0x1] %v5386
      %v5388 = vld [vmem:[#allocation2 + $0xdc] sm:$0x1]
      %v5389 = vsel %vm5198, 0, %v5388
      %5390 = vst [vmem:[#allocation2 + $0xdc] sm:$0x1] %v5389
      %v5391 = vld [vmem:[#allocation2 + $0xf0] sm:$0x1]
      %v5392 = vsel %vm5198, 0, %v5391
      %5393 = vst [vmem:[#allocation2 + $0xf0] sm:$0x1] %v5392
      %v5394 = vld [vmem:[#allocation2 + $0x104] sm:$0x1]
      %v5395 = vsel %vm5198, 0, %v5394
      %5396 = vst [vmem:[#allocation2 + $0x104] sm:$0x1] %v5395
      %v5397 = vld [vmem:[#allocation2 + $0x118] sm:$0x1]
      %v5398 = vsel %vm5198, 0, %v5397
      %5399 = vst [vmem:[#allocation2 + $0x118] sm:$0x1] %v5398
      %v5400 = vld [vmem:[#allocation2 + $0x12c] sm:$0x1]
      %v5401 = vsel %vm5198, 0, %v5400
      %5402 = vst [vmem:[#allocation2 + $0x12c] sm:$0x1] %v5401
      %v5403 = vld [vmem:[#allocation2 + $0x140] sm:$0x1]
      %v5404 = vsel %vm5198, 0, %v5403
      %5405 = vst [vmem:[#allocation2 + $0x140] sm:$0x1] %v5404
      %v5406 = vld [vmem:[#allocation2 + $0x154] sm:$0x1]
      %v5407 = vsel %vm5198, 0, %v5406
      %5408 = vst [vmem:[#allocation2 + $0x154] sm:$0x1] %v5407
      %vm5409 = vmand %vm5197, %vm5189
      %v5410 = vld [vmem:[#allocation2 + $0x10] sm:$0x1]
      %v5411 = vsel %vm5409, 0, %v5410
      %5412 = vst [vmem:[#allocation2 + $0x10] sm:$0x1] %v5411
      %v5413 = vld [vmem:[#allocation2 + $0x24] sm:$0x1]
      %v5414 = vsel %vm5409, 0, %v5413
      %5415 = vst [vmem:[#allocation2 + $0x24] sm:$0x1] %v5414
      %v5416 = vld [vmem:[#allocation2 + $0x38] sm:$0x1]
      %v5417 = vsel %vm5409, 0, %v5416
      %5418 = vst [vmem:[#allocation2 + $0x38] sm:$0x1] %v5417
      %v5419 = vld [vmem:[#allocation2 + $0x4c] sm:$0x1]
      %v5420 = vsel %vm5409, 0, %v5419
      %5421 = vst [vmem:[#allocation2 + $0x4c] sm:$0x1] %v5420
      %v5422 = vld [vmem:[#allocation2 + $0x60] sm:$0x1]
      %v5423 = vsel %vm5409, 0, %v5422
      %5424 = vst [vmem:[#allocation2 + $0x60] sm:$0x1] %v5423
      %v5425 = vld [vmem:[#allocation2 + $0x74] sm:$0x1]
      %v5426 = vsel %vm5409, 0, %v5425
      %5427 = vst [vmem:[#allocation2 + $0x74] sm:$0x1] %v5426
      %v5428 = vld [vmem:[#allocation2 + $0x88] sm:$0x1]
      %v5429 = vsel %vm5409, 0, %v5428
      %5430 = vst [vmem:[#allocation2 + $0x88] sm:$0x1] %v5429
      %v5431 = vld [vmem:[#allocation2 + $0x9c] sm:$0x1]
      %v5432 = vsel %vm5409, 0, %v5431
      %5433 = vst [vmem:[#allocation2 + $0x9c] sm:$0x1] %v5432
      %v5434 = vld [vmem:[#allocation2 + $0xb0] sm:$0x1]
      %v5435 = vsel %vm5409, 0, %v5434
      %5436 = vst [vmem:[#allocation2 + $0xb0] sm:$0x1] %v5435
      %v5437 = vld [vmem:[#allocation2 + $0xc4] sm:$0x1]
      %v5438 = vsel %vm5409, 0, %v5437
      %5439 = vst [vmem:[#allocation2 + $0xc4] sm:$0x1] %v5438
      %v5440 = vld [vmem:[#allocation2 + $0xd8] sm:$0x1]
      %v5441 = vsel %vm5409, 0, %v5440
      %5442 = vst [vmem:[#allocation2 + $0xd8] sm:$0x1] %v5441
      %v5443 = vld [vmem:[#allocation2 + $0xec] sm:$0x1]
      %v5444 = vsel %vm5409, 0, %v5443
      %5445 = vst [vmem:[#allocation2 + $0xec] sm:$0x1] %v5444
      %v5446 = vld [vmem:[#allocation2 + $0x100] sm:$0x1]
      %v5447 = vsel %vm5409, 0, %v5446
      %5448 = vst [vmem:[#allocation2 + $0x100] sm:$0x1] %v5447
      %v5449 = vld [vmem:[#allocation2 + $0x114] sm:$0x1]
      %v5450 = vsel %vm5409, 0, %v5449
      %5451 = vst [vmem:[#allocation2 + $0x114] sm:$0x1] %v5450
      %v5452 = vld [vmem:[#allocation2 + $0x128] sm:$0x1]
      %v5453 = vsel %vm5409, 0, %v5452
      %5454 = vst [vmem:[#allocation2 + $0x128] sm:$0x1] %v5453
      %v5455 = vld [vmem:[#allocation2 + $0x13c] sm:$0x1]
      %v5456 = vsel %vm5409, 0, %v5455
      %5457 = vst [vmem:[#allocation2 + $0x13c] sm:$0x1] %v5456
      %v5458 = vld [vmem:[#allocation2 + $0x150] sm:$0x1]
      %v5459 = vsel %vm5409, 0, %v5458
      %5460 = vst [vmem:[#allocation2 + $0x150] sm:$0x1] %v5459
      %v5461 = vld [vmem:[#allocation2 + $0x164] sm:$0x1]
      %v5462 = vsel %vm5409, 0, %v5461
      %5463 = vst [vmem:[#allocation2 + $0x164] sm:$0x1] %v5462
      %v5464 = vld [vmem:[#allocation2] sm:$0xf]
      %v5465 = vld [vmem:[#allocation2 + $0x4] sm:$0xf]
      %v5466 = vld [vmem:[#allocation2 + $0x8] sm:$0xf]
      %v5467 = vld [vmem:[#allocation2 + $0xc] sm:$0xf]
      %v5468 = vld [vmem:[#allocation2 + $0x14] sm:$0xf]
      %v5469 = vld [vmem:[#allocation2 + $0x18] sm:$0xf]
      %v5470 = vld [vmem:[#allocation2 + $0x1c] sm:$0xf]
      %v5471 = vld [vmem:[#allocation2 + $0x20] sm:$0xf]
      %v5472 = vld [vmem:[#allocation2 + $0x28] sm:$0xf]
      %v5473 = vld [vmem:[#allocation2 + $0x2c] sm:$0xf]
      %v5474 = vld [vmem:[#allocation2 + $0x30] sm:$0xf]
      %v5475 = vld [vmem:[#allocation2 + $0x34] sm:$0xf]
      %v5476 = vld [vmem:[#allocation2 + $0x3c] sm:$0xf]
      %v5477 = vld [vmem:[#allocation2 + $0x40] sm:$0xf]
      %v5478 = vld [vmem:[#allocation2 + $0x44] sm:$0xf]
      %v5479 = vld [vmem:[#allocation2 + $0x48] sm:$0xf]
      %v5480 = vld [vmem:[#allocation2 + $0x50] sm:$0xf]
      %v5481 = vld [vmem:[#allocation2 + $0x54] sm:$0xf]
      %v5482 = vld [vmem:[#allocation2 + $0x58] sm:$0xf]
      %v5483 = vld [vmem:[#allocation2 + $0x5c] sm:$0xf]
      %v5484 = vld [vmem:[#allocation2 + $0x64] sm:$0xf]
      %v5485 = vld [vmem:[#allocation2 + $0x68] sm:$0xf]
      %v5486 = vld [vmem:[#allocation2 + $0x6c] sm:$0xf]
      %v5487 = vld [vmem:[#allocation2 + $0x70] sm:$0xf]
      %v5488 = vld [vmem:[#allocation2 + $0x78] sm:$0xf]
      %v5489 = vld [vmem:[#allocation2 + $0x7c] sm:$0xf]
      %v5490 = vld [vmem:[#allocation2 + $0x80] sm:$0xf]
      %v5491 = vld [vmem:[#allocation2 + $0x84] sm:$0xf]
      %v5492 = vld [vmem:[#allocation2 + $0x8c] sm:$0xf]
      %v5493 = vld [vmem:[#allocation2 + $0x90] sm:$0xf]
      %v5494 = vld [vmem:[#allocation2 + $0x94] sm:$0xf]
      %v5495 = vld [vmem:[#allocation2 + $0x98] sm:$0xf]
      %v5496 = vld [vmem:[#allocation2 + $0xa0] sm:$0xf]
      %v5497 = vld [vmem:[#allocation2 + $0xa4] sm:$0xf]
      %v5498 = vld [vmem:[#allocation2 + $0xa8] sm:$0xf]
      %v5499 = vld [vmem:[#allocation2 + $0xac] sm:$0xf]
      %v5500 = vld [vmem:[#allocation2 + $0xb4] sm:$0xf]
      %v5501 = vld [vmem:[#allocation2 + $0xb8] sm:$0xf]
      %v5502 = vld [vmem:[#allocation2 + $0xbc] sm:$0xf]
      %v5503 = vld [vmem:[#allocation2 + $0xc0] sm:$0xf]
      %v5504 = vld [vmem:[#allocation2 + $0xc8] sm:$0xf]
      %v5505 = vld [vmem:[#allocation2 + $0xcc] sm:$0xf]
      %v5506 = vld [vmem:[#allocation2 + $0xd0] sm:$0xf]
      %v5507 = vld [vmem:[#allocation2 + $0xd4] sm:$0xf]
      %v5508 = vld [vmem:[#allocation2 + $0xdc] sm:$0xf]
      %v5509 = vld [vmem:[#allocation2 + $0xe0] sm:$0xf]
      %v5510 = vld [vmem:[#allocation2 + $0xe4] sm:$0xf]
      %v5511 = vld [vmem:[#allocation2 + $0xe8] sm:$0xf]
      %v5512 = vld [vmem:[#allocation2 + $0xf0] sm:$0xf]
      %v5513 = vld [vmem:[#allocation2 + $0xf4] sm:$0xf]
      %v5514 = vld [vmem:[#allocation2 + $0xf8] sm:$0xf]
      %v5515 = vld [vmem:[#allocation2 + $0xfc] sm:$0xf]
      %v5516 = vld [vmem:[#allocation2 + $0x104] sm:$0xf]
      %v5517 = vld [vmem:[#allocation2 + $0x108] sm:$0xf]
      %v5518 = vld [vmem:[#allocation2 + $0x10c] sm:$0xf]
      %v5519 = vld [vmem:[#allocation2 + $0x110] sm:$0xf]
      %v5520 = vld [vmem:[#allocation2 + $0x118] sm:$0xf]
      %v5521 = vld [vmem:[#allocation2 + $0x11c] sm:$0xf]
      %v5522 = vld [vmem:[#allocation2 + $0x120] sm:$0xf]
      %v5523 = vld [vmem:[#allocation2 + $0x124] sm:$0xf]
      %v5524 = vld [vmem:[#allocation2 + $0x12c] sm:$0xf]
      %v5525 = vld [vmem:[#allocation2 + $0x130] sm:$0xf]
      %v5526 = vld [vmem:[#allocation2 + $0x134] sm:$0xf]
      %v5527 = vld [vmem:[#allocation2 + $0x138] sm:$0xf]
      %v5528 = vld [vmem:[#allocation2 + $0x10] sm:$0x1]
      %v5529 = vld [vmem:[#allocation2 + $0x24] sm:$0x1]
      %v5530 = vld [vmem:[#allocation2 + $0x38] sm:$0x1]
      %v5531 = vld [vmem:[#allocation2 + $0x4c] sm:$0x1]
      %v5532 = vld [vmem:[#allocation2 + $0x60] sm:$0x1]
      %v5533 = vld [vmem:[#allocation2 + $0x74] sm:$0x1]
      %v5534 = vld [vmem:[#allocation2 + $0x88] sm:$0x1]
      %v5535 = vld [vmem:[#allocation2 + $0x9c] sm:$0x1]
      %v5536 = vld [vmem:[#allocation2 + $0xb0] sm:$0x1]
      %v5537 = vld [vmem:[#allocation2 + $0xc4] sm:$0x1]
      %v5538 = vld [vmem:[#allocation2 + $0xd8] sm:$0x1]
      %v5539 = vld [vmem:[#allocation2 + $0xec] sm:$0x1]
      %v5540 = vld [vmem:[#allocation2 + $0x100] sm:$0x1]
      %v5541 = vld [vmem:[#allocation2 + $0x114] sm:$0x1]
      %v5542 = vld [vmem:[#allocation2 + $0x128] sm:$0x1]
      %v5543 = vld [vmem:[#allocation2 + $0x13c] sm:$0x1]
      %v5545 = vshrl.u32 %v5464, 16
      %v5547 = vrot.slane %v5545, 4
      %v5548 = vshll.u32 %v5464, 16
      %v5550 = vrot.slane %v5548, 5
      %v5551 = vor.u32 %v5547, %v5550
      %v5552 = vrot.slane %v5551, 4
      %v5554 = vshll.u32 %v5465, 16
      %v5556 = vrot.slane %v5554, 5
      %v5557 = vsel %vm365, %v5552, %v5556
      %v5558 = vshrl.u32 %v5465, 16
      %v5560 = vrot.slane %v5558, 4
      %v5561 = vor.u32 %v5560, %v5556
      %v5562 = vrot.slane %v5561, 4
      %v5564 = vshll.u32 %v5466, 16
      %v5566 = vrot.slane %v5564, 5
      %v5567 = vsel %vm365, %v5562, %v5566
      %v5568 = vshrl.u32 %v5466, 16
      %v5570 = vrot.slane %v5568, 4
      %v5571 = vor.u32 %v5570, %v5566
      %v5572 = vrot.slane %v5571, 4
      %v5574 = vshll.u32 %v5467, 16
      %v5576 = vrot.slane %v5574, 5
      %v5577 = vsel %vm365, %v5572, %v5576
      %v5578 = vshrl.u32 %v5467, 16
      %v5580 = vrot.slane %v5578, 4
      %v5581 = vor.u32 %v5580, %v5576
      %v5582 = vrot.slane %v5581, 4
      %v5584 = vshll.u32 %v5528, 16
      %v5586 = vrot.slane %v5584, 5
      %v5587 = vsel %vm365, %v5582, %v5586
      %v5589 = vshrl.u32 %v5468, 16
      %v5591 = vrot.slane %v5589, 4
      %v5592 = vshll.u32 %v5468, 16
      %v5594 = vrot.slane %v5592, 5
      %v5595 = vor.u32 %v5591, %v5594
      %v5596 = vrot.slane %v5595, 4
      %v5598 = vshll.u32 %v5469, 16
      %v5600 = vrot.slane %v5598, 5
      %v5601 = vsel %vm365, %v5596, %v5600
      %v5602 = vshrl.u32 %v5469, 16
      %v5604 = vrot.slane %v5602, 4
      %v5605 = vor.u32 %v5604, %v5600
      %v5606 = vrot.slane %v5605, 4
      %v5608 = vshll.u32 %v5470, 16
      %v5610 = vrot.slane %v5608, 5
      %v5611 = vsel %vm365, %v5606, %v5610
      %v5612 = vshrl.u32 %v5470, 16
      %v5614 = vrot.slane %v5612, 4
      %v5615 = vor.u32 %v5614, %v5610
      %v5616 = vrot.slane %v5615, 4
      %v5618 = vshll.u32 %v5471, 16
      %v5620 = vrot.slane %v5618, 5
      %v5621 = vsel %vm365, %v5616, %v5620
      %v5622 = vshrl.u32 %v5471, 16
      %v5624 = vrot.slane %v5622, 4
      %v5625 = vor.u32 %v5624, %v5620
      %v5626 = vrot.slane %v5625, 4
      %v5628 = vshll.u32 %v5529, 16
      %v5630 = vrot.slane %v5628, 5
      %v5631 = vsel %vm365, %v5626, %v5630
      %v5633 = vshrl.u32 %v5472, 16
      %v5635 = vrot.slane %v5633, 4
      %v5636 = vshll.u32 %v5472, 16
      %v5638 = vrot.slane %v5636, 5
      %v5639 = vor.u32 %v5635, %v5638
      %v5640 = vrot.slane %v5639, 4
      %v5642 = vshll.u32 %v5473, 16
      %v5644 = vrot.slane %v5642, 5
      %v5645 = vsel %vm365, %v5640, %v5644
      %v5646 = vshrl.u32 %v5473, 16
      %v5648 = vrot.slane %v5646, 4
      %v5649 = vor.u32 %v5648, %v5644
      %v5650 = vrot.slane %v5649, 4
      %v5652 = vshll.u32 %v5474, 16
      %v5654 = vrot.slane %v5652, 5
      %v5655 = vsel %vm365, %v5650, %v5654
      %v5656 = vshrl.u32 %v5474, 16
      %v5658 = vrot.slane %v5656, 4
      %v5659 = vor.u32 %v5658, %v5654
      %v5660 = vrot.slane %v5659, 4
      %v5662 = vshll.u32 %v5475, 16
      %v5664 = vrot.slane %v5662, 5
      %v5665 = vsel %vm365, %v5660, %v5664
      %v5666 = vshrl.u32 %v5475, 16
      %v5668 = vrot.slane %v5666, 4
      %v5669 = vor.u32 %v5668, %v5664
      %v5670 = vrot.slane %v5669, 4
      %v5672 = vshll.u32 %v5530, 16
      %v5674 = vrot.slane %v5672, 5
      %v5675 = vsel %vm365, %v5670, %v5674
      %v5677 = vshrl.u32 %v5476, 16
      %v5679 = vrot.slane %v5677, 4
      %v5680 = vshll.u32 %v5476, 16
      %v5682 = vrot.slane %v5680, 5
      %v5683 = vor.u32 %v5679, %v5682
      %v5684 = vrot.slane %v5683, 4
      %v5686 = vshll.u32 %v5477, 16
      %v5688 = vrot.slane %v5686, 5
      %v5689 = vsel %vm365, %v5684, %v5688
      %v5690 = vshrl.u32 %v5477, 16
      %v5692 = vrot.slane %v5690, 4
      %v5693 = vor.u32 %v5692, %v5688
      %v5694 = vrot.slane %v5693, 4
      %v5696 = vshll.u32 %v5478, 16
      %v5698 = vrot.slane %v5696, 5
      %v5699 = vsel %vm365, %v5694, %v5698
      %v5700 = vshrl.u32 %v5478, 16
      %v5702 = vrot.slane %v5700, 4
      %v5703 = vor.u32 %v5702, %v5698
      %v5704 = vrot.slane %v5703, 4
      %v5706 = vshll.u32 %v5479, 16
      %v5708 = vrot.slane %v5706, 5
      %v5709 = vsel %vm365, %v5704, %v5708
      %v5710 = vshrl.u32 %v5479, 16
      %v5712 = vrot.slane %v5710, 4
      %v5713 = vor.u32 %v5712, %v5708
      %v5714 = vrot.slane %v5713, 4
      %v5716 = vshll.u32 %v5531, 16
      %v5718 = vrot.slane %v5716, 5
      %v5719 = vsel %vm365, %v5714, %v5718
      %v5721 = vshrl.u32 %v5480, 16
      %v5723 = vrot.slane %v5721, 4
      %v5724 = vshll.u32 %v5480, 16
      %v5726 = vrot.slane %v5724, 5
      %v5727 = vor.u32 %v5723, %v5726
      %v5728 = vrot.slane %v5727, 4
      %v5730 = vshll.u32 %v5481, 16
      %v5732 = vrot.slane %v5730, 5
      %v5733 = vsel %vm365, %v5728, %v5732
      %v5734 = vshrl.u32 %v5481, 16
      %v5736 = vrot.slane %v5734, 4
      %v5737 = vor.u32 %v5736, %v5732
      %v5738 = vrot.slane %v5737, 4
      %v5740 = vshll.u32 %v5482, 16
      %v5742 = vrot.slane %v5740, 5
      %v5743 = vsel %vm365, %v5738, %v5742
      %v5744 = vshrl.u32 %v5482, 16
      %v5746 = vrot.slane %v5744, 4
      %v5747 = vor.u32 %v5746, %v5742
      %v5748 = vrot.slane %v5747, 4
      %v5750 = vshll.u32 %v5483, 16
      %v5752 = vrot.slane %v5750, 5
      %v5753 = vsel %vm365, %v5748, %v5752
      %v5754 = vshrl.u32 %v5483, 16
      %v5756 = vrot.slane %v5754, 4
      %v5757 = vor.u32 %v5756, %v5752
      %v5758 = vrot.slane %v5757, 4
      %v5760 = vshll.u32 %v5532, 16
      %v5762 = vrot.slane %v5760, 5
      %v5763 = vsel %vm365, %v5758, %v5762
      %v5765 = vshrl.u32 %v5484, 16
      %v5767 = vrot.slane %v5765, 4
      %v5768 = vshll.u32 %v5484, 16
      %v5770 = vrot.slane %v5768, 5
      %v5771 = vor.u32 %v5767, %v5770
      %v5772 = vrot.slane %v5771, 4
      %v5774 = vshll.u32 %v5485, 16
      %v5776 = vrot.slane %v5774, 5
      %v5777 = vsel %vm365, %v5772, %v5776
      %v5778 = vshrl.u32 %v5485, 16
      %v5780 = vrot.slane %v5778, 4
      %v5781 = vor.u32 %v5780, %v5776
      %v5782 = vrot.slane %v5781, 4
      %v5784 = vshll.u32 %v5486, 16
      %v5786 = vrot.slane %v5784, 5
      %v5787 = vsel %vm365, %v5782, %v5786
      %v5788 = vshrl.u32 %v5486, 16
      %v5790 = vrot.slane %v5788, 4
      %v5791 = vor.u32 %v5790, %v5786
      %v5792 = vrot.slane %v5791, 4
      %v5794 = vshll.u32 %v5487, 16
      %v5796 = vrot.slane %v5794, 5
      %v5797 = vsel %vm365, %v5792, %v5796
      %v5798 = vshrl.u32 %v5487, 16
      %v5800 = vrot.slane %v5798, 4
      %v5801 = vor.u32 %v5800, %v5796
      %v5802 = vrot.slane %v5801, 4
      %v5804 = vshll.u32 %v5533, 16
      %v5806 = vrot.slane %v5804, 5
      %v5807 = vsel %vm365, %v5802, %v5806
      %v5809 = vshrl.u32 %v5488, 16
      %v5811 = vrot.slane %v5809, 4
      %v5812 = vshll.u32 %v5488, 16
      %v5814 = vrot.slane %v5812, 5
      %v5815 = vor.u32 %v5811, %v5814
      %v5816 = vrot.slane %v5815, 4
      %v5818 = vshll.u32 %v5489, 16
      %v5820 = vrot.slane %v5818, 5
      %v5821 = vsel %vm365, %v5816, %v5820
      %v5822 = vshrl.u32 %v5489, 16
      %v5824 = vrot.slane %v5822, 4
      %v5825 = vor.u32 %v5824, %v5820
      %v5826 = vrot.slane %v5825, 4
      %v5828 = vshll.u32 %v5490, 16
      %v5830 = vrot.slane %v5828, 5
      %v5831 = vsel %vm365, %v5826, %v5830
      %v5832 = vshrl.u32 %v5490, 16
      %v5834 = vrot.slane %v5832, 4
      %v5835 = vor.u32 %v5834, %v5830
      %v5836 = vrot.slane %v5835, 4
      %v5838 = vshll.u32 %v5491, 16
      %v5840 = vrot.slane %v5838, 5
      %v5841 = vsel %vm365, %v5836, %v5840
      %v5842 = vshrl.u32 %v5491, 16
      %v5844 = vrot.slane %v5842, 4
      %v5845 = vor.u32 %v5844, %v5840
      %v5846 = vrot.slane %v5845, 4
      %v5848 = vshll.u32 %v5534, 16
      %v5850 = vrot.slane %v5848, 5
      %v5851 = vsel %vm365, %v5846, %v5850
      %v5853 = vshrl.u32 %v5492, 16
      %v5855 = vrot.slane %v5853, 4
      %v5856 = vshll.u32 %v5492, 16
      %v5858 = vrot.slane %v5856, 5
      %v5859 = vor.u32 %v5855, %v5858
      %v5860 = vrot.slane %v5859, 4
      %v5862 = vshll.u32 %v5493, 16
      %v5864 = vrot.slane %v5862, 5
      %v5865 = vsel %vm365, %v5860, %v5864
      %v5866 = vshrl.u32 %v5493, 16
      %v5868 = vrot.slane %v5866, 4
      %v5869 = vor.u32 %v5868, %v5864
      %v5870 = vrot.slane %v5869, 4
      %v5872 = vshll.u32 %v5494, 16
      %v5874 = vrot.slane %v5872, 5
      %v5875 = vsel %vm365, %v5870, %v5874
      %v5876 = vshrl.u32 %v5494, 16
      %v5878 = vrot.slane %v5876, 4
      %v5879 = vor.u32 %v5878, %v5874
      %v5880 = vrot.slane %v5879, 4
      %v5882 = vshll.u32 %v5495, 16
      %v5884 = vrot.slane %v5882, 5
      %v5885 = vsel %vm365, %v5880, %v5884
      %v5886 = vshrl.u32 %v5495, 16
      %v5888 = vrot.slane %v5886, 4
      %v5889 = vor.u32 %v5888, %v5884
      %v5890 = vrot.slane %v5889, 4
      %v5892 = vshll.u32 %v5535, 16
      %v5894 = vrot.slane %v5892, 5
      %v5895 = vsel %vm365, %v5890, %v5894
      %v5897 = vshrl.u32 %v5496, 16
      %v5899 = vrot.slane %v5897, 4
      %v5900 = vshll.u32 %v5496, 16
      %v5902 = vrot.slane %v5900, 5
      %v5903 = vor.u32 %v5899, %v5902
      %v5904 = vrot.slane %v5903, 4
      %v5906 = vshll.u32 %v5497, 16
      %v5908 = vrot.slane %v5906, 5
      %v5909 = vsel %vm365, %v5904, %v5908
      %v5910 = vshrl.u32 %v5497, 16
      %v5912 = vrot.slane %v5910, 4
      %v5913 = vor.u32 %v5912, %v5908
      %v5914 = vrot.slane %v5913, 4
      %v5916 = vshll.u32 %v5498, 16
      %v5918 = vrot.slane %v5916, 5
      %v5919 = vsel %vm365, %v5914, %v5918
      %v5920 = vshrl.u32 %v5498, 16
      %v5922 = vrot.slane %v5920, 4
      %v5923 = vor.u32 %v5922, %v5918
      %v5924 = vrot.slane %v5923, 4
      %v5926 = vshll.u32 %v5499, 16
      %v5928 = vrot.slane %v5926, 5
      %v5929 = vsel %vm365, %v5924, %v5928
      %v5930 = vshrl.u32 %v5499, 16
      %v5932 = vrot.slane %v5930, 4
      %v5933 = vor.u32 %v5932, %v5928
      %v5934 = vrot.slane %v5933, 4
      %v5936 = vshll.u32 %v5536, 16
      %v5938 = vrot.slane %v5936, 5
      %v5939 = vsel %vm365, %v5934, %v5938
      %v5941 = vshrl.u32 %v5500, 16
      %v5943 = vrot.slane %v5941, 4
      %v5944 = vshll.u32 %v5500, 16
      %v5946 = vrot.slane %v5944, 5
      %v5947 = vor.u32 %v5943, %v5946
      %v5948 = vrot.slane %v5947, 4
      %v5950 = vshll.u32 %v5501, 16
      %v5952 = vrot.slane %v5950, 5
      %v5953 = vsel %vm365, %v5948, %v5952
      %v5954 = vshrl.u32 %v5501, 16
      %v5956 = vrot.slane %v5954, 4
      %v5957 = vor.u32 %v5956, %v5952
      %v5958 = vrot.slane %v5957, 4
      %v5960 = vshll.u32 %v5502, 16
      %v5962 = vrot.slane %v5960, 5
      %v5963 = vsel %vm365, %v5958, %v5962
      %v5964 = vshrl.u32 %v5502, 16
      %v5966 = vrot.slane %v5964, 4
      %v5967 = vor.u32 %v5966, %v5962
      %v5968 = vrot.slane %v5967, 4
      %v5970 = vshll.u32 %v5503, 16
      %v5972 = vrot.slane %v5970, 5
      %v5973 = vsel %vm365, %v5968, %v5972
      %v5974 = vshrl.u32 %v5503, 16
      %v5976 = vrot.slane %v5974, 4
      %v5977 = vor.u32 %v5976, %v5972
      %v5978 = vrot.slane %v5977, 4
      %v5980 = vshll.u32 %v5537, 16
      %v5982 = vrot.slane %v5980, 5
      %v5983 = vsel %vm365, %v5978, %v5982
      %v5985 = vshrl.u32 %v5504, 16
      %v5987 = vrot.slane %v5985, 4
      %v5988 = vshll.u32 %v5504, 16
      %v5990 = vrot.slane %v5988, 5
      %v5991 = vor.u32 %v5987, %v5990
      %v5992 = vrot.slane %v5991, 4
      %v5994 = vshll.u32 %v5505, 16
      %v5996 = vrot.slane %v5994, 5
      %v5997 = vsel %vm365, %v5992, %v5996
      %v5998 = vshrl.u32 %v5505, 16
      %v6000 = vrot.slane %v5998, 4
      %v6001 = vor.u32 %v6000, %v5996
      %v6002 = vrot.slane %v6001, 4
      %v6004 = vshll.u32 %v5506, 16
      %v6006 = vrot.slane %v6004, 5
      %v6007 = vsel %vm365, %v6002, %v6006
      %v6008 = vshrl.u32 %v5506, 16
      %v6010 = vrot.slane %v6008, 4
      %v6011 = vor.u32 %v6010, %v6006
      %v6012 = vrot.slane %v6011, 4
      %v6014 = vshll.u32 %v5507, 16
      %v6016 = vrot.slane %v6014, 5
      %v6017 = vsel %vm365, %v6012, %v6016
      %v6018 = vshrl.u32 %v5507, 16
      %v6020 = vrot.slane %v6018, 4
      %v6021 = vor.u32 %v6020, %v6016
      %v6022 = vrot.slane %v6021, 4
      %v6024 = vshll.u32 %v5538, 16
      %v6026 = vrot.slane %v6024, 5
      %v6027 = vsel %vm365, %v6022, %v6026
      %v6029 = vshrl.u32 %v5508, 16
      %v6031 = vrot.slane %v6029, 4
      %v6032 = vshll.u32 %v5508, 16
      %v6034 = vrot.slane %v6032, 5
      %v6035 = vor.u32 %v6031, %v6034
      %v6036 = vrot.slane %v6035, 4
      %v6038 = vshll.u32 %v5509, 16
      %v6040 = vrot.slane %v6038, 5
      %v6041 = vsel %vm365, %v6036, %v6040
      %v6042 = vshrl.u32 %v5509, 16
      %v6044 = vrot.slane %v6042, 4
      %v6045 = vor.u32 %v6044, %v6040
      %v6046 = vrot.slane %v6045, 4
      %v6048 = vshll.u32 %v5510, 16
      %v6050 = vrot.slane %v6048, 5
      %v6051 = vsel %vm365, %v6046, %v6050
      %v6052 = vshrl.u32 %v5510, 16
      %v6054 = vrot.slane %v6052, 4
      %v6055 = vor.u32 %v6054, %v6050
      %v6056 = vrot.slane %v6055, 4
      %v6058 = vshll.u32 %v5511, 16
      %v6060 = vrot.slane %v6058, 5
      %v6061 = vsel %vm365, %v6056, %v6060
      %v6062 = vshrl.u32 %v5511, 16
      %v6064 = vrot.slane %v6062, 4
      %v6065 = vor.u32 %v6064, %v6060
      %v6066 = vrot.slane %v6065, 4
      %v6068 = vshll.u32 %v5539, 16
      %v6070 = vrot.slane %v6068, 5
      %v6071 = vsel %vm365, %v6066, %v6070
      %v6073 = vshrl.u32 %v5512, 16
      %v6075 = vrot.slane %v6073, 4
      %v6076 = vshll.u32 %v5512, 16
      %v6078 = vrot.slane %v6076, 5
      %v6079 = vor.u32 %v6075, %v6078
      %v6080 = vrot.slane %v6079, 4
      %v6082 = vshll.u32 %v5513, 16
      %v6084 = vrot.slane %v6082, 5
      %v6085 = vsel %vm365, %v6080, %v6084
      %v6086 = vshrl.u32 %v5513, 16
      %v6088 = vrot.slane %v6086, 4
      %v6089 = vor.u32 %v6088, %v6084
      %v6090 = vrot.slane %v6089, 4
      %v6092 = vshll.u32 %v5514, 16
      %v6094 = vrot.slane %v6092, 5
      %v6095 = vsel %vm365, %v6090, %v6094
      %v6096 = vshrl.u32 %v5514, 16
      %v6098 = vrot.slane %v6096, 4
      %v6099 = vor.u32 %v6098, %v6094
      %v6100 = vrot.slane %v6099, 4
      %v6102 = vshll.u32 %v5515, 16
      %v6104 = vrot.slane %v6102, 5
      %v6105 = vsel %vm365, %v6100, %v6104
      %v6106 = vshrl.u32 %v5515, 16
      %v6108 = vrot.slane %v6106, 4
      %v6109 = vor.u32 %v6108, %v6104
      %v6110 = vrot.slane %v6109, 4
      %v6112 = vshll.u32 %v5540, 16
      %v6114 = vrot.slane %v6112, 5
      %v6115 = vsel %vm365, %v6110, %v6114
      %v6117 = vshrl.u32 %v5516, 16
      %v6119 = vrot.slane %v6117, 4
      %v6120 = vshll.u32 %v5516, 16
      %v6122 = vrot.slane %v6120, 5
      %v6123 = vor.u32 %v6119, %v6122
      %v6124 = vrot.slane %v6123, 4
      %v6126 = vshll.u32 %v5517, 16
      %v6128 = vrot.slane %v6126, 5
      %v6129 = vsel %vm365, %v6124, %v6128
      %v6130 = vshrl.u32 %v5517, 16
      %v6132 = vrot.slane %v6130, 4
      %v6133 = vor.u32 %v6132, %v6128
      %v6134 = vrot.slane %v6133, 4
      %v6136 = vshll.u32 %v5518, 16
      %v6138 = vrot.slane %v6136, 5
      %v6139 = vsel %vm365, %v6134, %v6138
      %v6140 = vshrl.u32 %v5518, 16
      %v6142 = vrot.slane %v6140, 4
      %v6143 = vor.u32 %v6142, %v6138
      %v6144 = vrot.slane %v6143, 4
      %v6146 = vshll.u32 %v5519, 16
      %v6148 = vrot.slane %v6146, 5
      %v6149 = vsel %vm365, %v6144, %v6148
      %v6150 = vshrl.u32 %v5519, 16
      %v6152 = vrot.slane %v6150, 4
      %v6153 = vor.u32 %v6152, %v6148
      %v6154 = vrot.slane %v6153, 4
      %v6156 = vshll.u32 %v5541, 16
      %v6158 = vrot.slane %v6156, 5
      %v6159 = vsel %vm365, %v6154, %v6158
      %v6161 = vshrl.u32 %v5520, 16
      %v6163 = vrot.slane %v6161, 4
      %v6164 = vshll.u32 %v5520, 16
      %v6166 = vrot.slane %v6164, 5
      %v6167 = vor.u32 %v6163, %v6166
      %v6168 = vrot.slane %v6167, 4
      %v6170 = vshll.u32 %v5521, 16
      %v6172 = vrot.slane %v6170, 5
      %v6173 = vsel %vm365, %v6168, %v6172
      %v6174 = vshrl.u32 %v5521, 16
      %v6176 = vrot.slane %v6174, 4
      %v6177 = vor.u32 %v6176, %v6172
      %v6178 = vrot.slane %v6177, 4
      %v6180 = vshll.u32 %v5522, 16
      %v6182 = vrot.slane %v6180, 5
      %v6183 = vsel %vm365, %v6178, %v6182
      %v6184 = vshrl.u32 %v5522, 16
      %v6186 = vrot.slane %v6184, 4
      %v6187 = vor.u32 %v6186, %v6182
      %v6188 = vrot.slane %v6187, 4
      %v6190 = vshll.u32 %v5523, 16
      %v6192 = vrot.slane %v6190, 5
      %v6193 = vsel %vm365, %v6188, %v6192
      %v6194 = vshrl.u32 %v5523, 16
      %v6196 = vrot.slane %v6194, 4
      %v6197 = vor.u32 %v6196, %v6192
      %v6198 = vrot.slane %v6197, 4
      %v6200 = vshll.u32 %v5542, 16
      %v6202 = vrot.slane %v6200, 5
      %v6203 = vsel %vm365, %v6198, %v6202
      %v6205 = vshrl.u32 %v5524, 16
      %v6207 = vrot.slane %v6205, 4
      %v6208 = vshll.u32 %v5524, 16
      %v6210 = vrot.slane %v6208, 5
      %v6211 = vor.u32 %v6207, %v6210
      %v6212 = vrot.slane %v6211, 4
      %v6214 = vshll.u32 %v5525, 16
      %v6216 = vrot.slane %v6214, 5
      %v6217 = vsel %vm365, %v6212, %v6216
      %v6218 = vshrl.u32 %v5525, 16
      %v6220 = vrot.slane %v6218, 4
      %v6221 = vor.u32 %v6220, %v6216
      %v6222 = vrot.slane %v6221, 4
      %v6224 = vshll.u32 %v5526, 16
      %v6226 = vrot.slane %v6224, 5
      %v6227 = vsel %vm365, %v6222, %v6226
      %v6228 = vshrl.u32 %v5526, 16
      %v6230 = vrot.slane %v6228, 4
      %v6231 = vor.u32 %v6230, %v6226
      %v6232 = vrot.slane %v6231, 4
      %v6234 = vshll.u32 %v5527, 16
      %v6236 = vrot.slane %v6234, 5
      %v6237 = vsel %vm365, %v6232, %v6236
      %v6238 = vshrl.u32 %v5527, 16
      %v6240 = vrot.slane %v6238, 4
      %v6241 = vor.u32 %v6240, %v6236
      %v6242 = vrot.slane %v6241, 4
      %v6244 = vshll.u32 %v5543, 16
      %v6246 = vrot.slane %v6244, 5
      %v6247 = vsel %vm365, %v6242, %v6246
      %v6248 = vld [vmem:[#allocation2] sm:$0xe]
      %v6249 = vld [vmem:[#allocation2 + $0x14] sm:$0xe]
      %v6250 = vld [vmem:[#allocation2 + $0x28] sm:$0xe]
      %v6251 = vld [vmem:[#allocation2 + $0x3c] sm:$0xe]
      %v6252 = vld [vmem:[#allocation2 + $0x50] sm:$0xe]
      %v6253 = vld [vmem:[#allocation2 + $0x64] sm:$0xe]
      %v6254 = vld [vmem:[#allocation2 + $0x78] sm:$0xe]
      %v6255 = vld [vmem:[#allocation2 + $0x8c] sm:$0xe]
      %v6256 = vld [vmem:[#allocation2 + $0xa0] sm:$0xe]
      %v6257 = vld [vmem:[#allocation2 + $0xb4] sm:$0xe]
      %v6258 = vld [vmem:[#allocation2 + $0xc8] sm:$0xe]
      %v6259 = vld [vmem:[#allocation2 + $0xdc] sm:$0xe]
      %v6260 = vld [vmem:[#allocation2 + $0xf0] sm:$0xe]
      %v6261 = vld [vmem:[#allocation2 + $0x104] sm:$0xe]
      %v6262 = vld [vmem:[#allocation2 + $0x118] sm:$0xe]
      %v6263 = vld [vmem:[#allocation2 + $0x12c] sm:$0xe]
      %v6344 = vrot.slane %v6248, 5
      %v6345 = vrot.slane %v6344, 4
      %v6346 = vrot.slane %v5465, 5
      %v6347 = vsel %vm1250, %v6345, %v6346
      %v6348 = vrot.slane %v6346, 4
      %v6349 = vrot.slane %v5466, 5
      %v6350 = vsel %vm1250, %v6348, %v6349
      %v6351 = vrot.slane %v6349, 4
      %v6352 = vrot.slane %v5467, 5
      %v6353 = vsel %vm1250, %v6351, %v6352
      %v6354 = vrot.slane %v6352, 4
      %v6355 = vrot.slane %v5528, 5
      %v6356 = vsel %vm1250, %v6354, %v6355
      %v6357 = vrot.slane %v6249, 5
      %v6358 = vrot.slane %v6357, 4
      %v6359 = vrot.slane %v5469, 5
      %v6360 = vsel %vm1250, %v6358, %v6359
      %v6361 = vrot.slane %v6359, 4
      %v6362 = vrot.slane %v5470, 5
      %v6363 = vsel %vm1250, %v6361, %v6362
      %v6364 = vrot.slane %v6362, 4
      %v6365 = vrot.slane %v5471, 5
      %v6366 = vsel %vm1250, %v6364, %v6365
      %v6367 = vrot.slane %v6365, 4
      %v6368 = vrot.slane %v5529, 5
      %v6369 = vsel %vm1250, %v6367, %v6368
      %v6370 = vrot.slane %v6250, 5
      %v6371 = vrot.slane %v6370, 4
      %v6372 = vrot.slane %v5473, 5
      %v6373 = vsel %vm1250, %v6371, %v6372
      %v6374 = vrot.slane %v6372, 4
      %v6375 = vrot.slane %v5474, 5
      %v6376 = vsel %vm1250, %v6374, %v6375
      %v6377 = vrot.slane %v6375, 4
      %v6378 = vrot.slane %v5475, 5
      %v6379 = vsel %vm1250, %v6377, %v6378
      %v6380 = vrot.slane %v6378, 4
      %v6381 = vrot.slane %v5530, 5
      %v6382 = vsel %vm1250, %v6380, %v6381
      %v6383 = vrot.slane %v6251, 5
      %v6384 = vrot.slane %v6383, 4
      %v6385 = vrot.slane %v5477, 5
      %v6386 = vsel %vm1250, %v6384, %v6385
      %v6387 = vrot.slane %v6385, 4
      %v6388 = vrot.slane %v5478, 5
      %v6389 = vsel %vm1250, %v6387, %v6388
      %v6390 = vrot.slane %v6388, 4
      %v6391 = vrot.slane %v5479, 5
      %v6392 = vsel %vm1250, %v6390, %v6391
      %v6393 = vrot.slane %v6391, 4
      %v6394 = vrot.slane %v5531, 5
      %v6395 = vsel %vm1250, %v6393, %v6394
      %v6396 = vrot.slane %v6252, 5
      %v6397 = vrot.slane %v6396, 4
      %v6398 = vrot.slane %v5481, 5
      %v6399 = vsel %vm1250, %v6397, %v6398
      %v6400 = vrot.slane %v6398, 4
      %v6401 = vrot.slane %v5482, 5
      %v6402 = vsel %vm1250, %v6400, %v6401
      %v6403 = vrot.slane %v6401, 4
      %v6404 = vrot.slane %v5483, 5
      %v6405 = vsel %vm1250, %v6403, %v6404
      %v6406 = vrot.slane %v6404, 4
      %v6407 = vrot.slane %v5532, 5
      %v6408 = vsel %vm1250, %v6406, %v6407
      %v6409 = vrot.slane %v6253, 5
      %v6410 = vrot.slane %v6409, 4
      %v6411 = vrot.slane %v5485, 5
      %v6412 = vsel %vm1250, %v6410, %v6411
      %v6413 = vrot.slane %v6411, 4
      %v6414 = vrot.slane %v5486, 5
      %v6415 = vsel %vm1250, %v6413, %v6414
      %v6416 = vrot.slane %v6414, 4
      %v6417 = vrot.slane %v5487, 5
      %v6418 = vsel %vm1250, %v6416, %v6417
      %v6419 = vrot.slane %v6417, 4
      %v6420 = vrot.slane %v5533, 5
      %v6421 = vsel %vm1250, %v6419, %v6420
      %v6422 = vrot.slane %v6254, 5
      %v6423 = vrot.slane %v6422, 4
      %v6424 = vrot.slane %v5489, 5
      %v6425 = vsel %vm1250, %v6423, %v6424
      %v6426 = vrot.slane %v6424, 4
      %v6427 = vrot.slane %v5490, 5
      %v6428 = vsel %vm1250, %v6426, %v6427
      %v6429 = vrot.slane %v6427, 4
      %v6430 = vrot.slane %v5491, 5
      %v6431 = vsel %vm1250, %v6429, %v6430
      %v6432 = vrot.slane %v6430, 4
      %v6433 = vrot.slane %v5534, 5
      %v6434 = vsel %vm1250, %v6432, %v6433
      %v6435 = vrot.slane %v6255, 5
      %v6436 = vrot.slane %v6435, 4
      %v6437 = vrot.slane %v5493, 5
      %v6438 = vsel %vm1250, %v6436, %v6437
      %v6439 = vrot.slane %v6437, 4
      %v6440 = vrot.slane %v5494, 5
      %v6441 = vsel %vm1250, %v6439, %v6440
      %v6442 = vrot.slane %v6440, 4
      %v6443 = vrot.slane %v5495, 5
      %v6444 = vsel %vm1250, %v6442, %v6443
      %v6445 = vrot.slane %v6443, 4
      %v6446 = vrot.slane %v5535, 5
      %v6447 = vsel %vm1250, %v6445, %v6446
      %v6448 = vrot.slane %v6256, 5
      %v6449 = vrot.slane %v6448, 4
      %v6450 = vrot.slane %v5497, 5
      %v6451 = vsel %vm1250, %v6449, %v6450
      %v6452 = vrot.slane %v6450, 4
      %v6453 = vrot.slane %v5498, 5
      %v6454 = vsel %vm1250, %v6452, %v6453
      %v6455 = vrot.slane %v6453, 4
      %v6456 = vrot.slane %v5499, 5
      %v6457 = vsel %vm1250, %v6455, %v6456
      %v6458 = vrot.slane %v6456, 4
      %v6459 = vrot.slane %v5536, 5
      %v6460 = vsel %vm1250, %v6458, %v6459
      %v6461 = vrot.slane %v6257, 5
      %v6462 = vrot.slane %v6461, 4
      %v6463 = vrot.slane %v5501, 5
      %v6464 = vsel %vm1250, %v6462, %v6463
      %v6465 = vrot.slane %v6463, 4
      %v6466 = vrot.slane %v5502, 5
      %v6467 = vsel %vm1250, %v6465, %v6466
      %v6468 = vrot.slane %v6466, 4
      %v6469 = vrot.slane %v5503, 5
      %v6470 = vsel %vm1250, %v6468, %v6469
      %v6471 = vrot.slane %v6469, 4
      %v6472 = vrot.slane %v5537, 5
      %v6473 = vsel %vm1250, %v6471, %v6472
      %v6474 = vrot.slane %v6258, 5
      %v6475 = vrot.slane %v6474, 4
      %v6476 = vrot.slane %v5505, 5
      %v6477 = vsel %vm1250, %v6475, %v6476
      %v6478 = vrot.slane %v6476, 4
      %v6479 = vrot.slane %v5506, 5
      %v6480 = vsel %vm1250, %v6478, %v6479
      %v6481 = vrot.slane %v6479, 4
      %v6482 = vrot.slane %v5507, 5
      %v6483 = vsel %vm1250, %v6481, %v6482
      %v6484 = vrot.slane %v6482, 4
      %v6485 = vrot.slane %v5538, 5
      %v6486 = vsel %vm1250, %v6484, %v6485
      %v6487 = vrot.slane %v6259, 5
      %v6488 = vrot.slane %v6487, 4
      %v6489 = vrot.slane %v5509, 5
      %v6490 = vsel %vm1250, %v6488, %v6489
      %v6491 = vrot.slane %v6489, 4
      %v6492 = vrot.slane %v5510, 5
      %v6493 = vsel %vm1250, %v6491, %v6492
      %v6494 = vrot.slane %v6492, 4
      %v6495 = vrot.slane %v5511, 5
      %v6496 = vsel %vm1250, %v6494, %v6495
      %v6497 = vrot.slane %v6495, 4
      %v6498 = vrot.slane %v5539, 5
      %v6499 = vsel %vm1250, %v6497, %v6498
      %v6500 = vrot.slane %v6260, 5
      %v6501 = vrot.slane %v6500, 4
      %v6502 = vrot.slane %v5513, 5
      %v6503 = vsel %vm1250, %v6501, %v6502
      %v6504 = vrot.slane %v6502, 4
      %v6505 = vrot.slane %v5514, 5
      %v6506 = vsel %vm1250, %v6504, %v6505
      %v6507 = vrot.slane %v6505, 4
      %v6508 = vrot.slane %v5515, 5
      %v6509 = vsel %vm1250, %v6507, %v6508
      %v6510 = vrot.slane %v6508, 4
      %v6511 = vrot.slane %v5540, 5
      %v6512 = vsel %vm1250, %v6510, %v6511
      %v6513 = vrot.slane %v6261, 5
      %v6514 = vrot.slane %v6513, 4
      %v6515 = vrot.slane %v5517, 5
      %v6516 = vsel %vm1250, %v6514, %v6515
      %v6517 = vrot.slane %v6515, 4
      %v6518 = vrot.slane %v5518, 5
      %v6519 = vsel %vm1250, %v6517, %v6518
      %v6520 = vrot.slane %v6518, 4
      %v6521 = vrot.slane %v5519, 5
      %v6522 = vsel %vm1250, %v6520, %v6521
      %v6523 = vrot.slane %v6521, 4
      %v6524 = vrot.slane %v5541, 5
      %v6525 = vsel %vm1250, %v6523, %v6524
      %v6526 = vrot.slane %v6262, 5
      %v6527 = vrot.slane %v6526, 4
      %v6528 = vrot.slane %v5521, 5
      %v6529 = vsel %vm1250, %v6527, %v6528
      %v6530 = vrot.slane %v6528, 4
      %v6531 = vrot.slane %v5522, 5
      %v6532 = vsel %vm1250, %v6530, %v6531
      %v6533 = vrot.slane %v6531, 4
      %v6534 = vrot.slane %v5523, 5
      %v6535 = vsel %vm1250, %v6533, %v6534
      %v6536 = vrot.slane %v6534, 4
      %v6537 = vrot.slane %v5542, 5
      %v6538 = vsel %vm1250, %v6536, %v6537
      %v6539 = vrot.slane %v6263, 5
      %v6540 = vrot.slane %v6539, 4
      %v6541 = vrot.slane %v5525, 5
      %v6542 = vsel %vm1250, %v6540, %v6541
      %v6543 = vrot.slane %v6541, 4
      %v6544 = vrot.slane %v5526, 5
      %v6545 = vsel %vm1250, %v6543, %v6544
      %v6546 = vrot.slane %v6544, 4
      %v6547 = vrot.slane %v5527, 5
      %v6548 = vsel %vm1250, %v6546, %v6547
      %v6549 = vrot.slane %v6547, 4
      %v6550 = vrot.slane %v5543, 5
      %v6551 = vsel %vm1250, %v6549, %v6550
      %s6552 = scalar_lea.vmem [#allocation2], 20
      %v6553 = vld [vmem:[%s6552] sm:$0xf]
      %v6554 = vld [vmem:[%s6552 + $0x4] sm:$0xf]
      %v6555 = vld [vmem:[%s6552 + $0x8] sm:$0xf]
      %v6556 = vld [vmem:[%s6552 + $0xc] sm:$0xf]
      %v6557 = vld [vmem:[%s6552 + $0x14] sm:$0xf]
      %v6558 = vld [vmem:[%s6552 + $0x18] sm:$0xf]
      %v6559 = vld [vmem:[%s6552 + $0x1c] sm:$0xf]
      %v6560 = vld [vmem:[%s6552 + $0x20] sm:$0xf]
      %v6561 = vld [vmem:[%s6552 + $0x28] sm:$0xf]
      %v6562 = vld [vmem:[%s6552 + $0x2c] sm:$0xf]
      %v6563 = vld [vmem:[%s6552 + $0x30] sm:$0xf]
      %v6564 = vld [vmem:[%s6552 + $0x34] sm:$0xf]
      %v6565 = vld [vmem:[%s6552 + $0x3c] sm:$0xf]
      %v6566 = vld [vmem:[%s6552 + $0x40] sm:$0xf]
      %v6567 = vld [vmem:[%s6552 + $0x44] sm:$0xf]
      %v6568 = vld [vmem:[%s6552 + $0x48] sm:$0xf]
      %v6569 = vld [vmem:[%s6552 + $0x50] sm:$0xf]
      %v6570 = vld [vmem:[%s6552 + $0x54] sm:$0xf]
      %v6571 = vld [vmem:[%s6552 + $0x58] sm:$0xf]
      %v6572 = vld [vmem:[%s6552 + $0x5c] sm:$0xf]
      %v6573 = vld [vmem:[%s6552 + $0x64] sm:$0xf]
      %v6574 = vld [vmem:[%s6552 + $0x68] sm:$0xf]
      %v6575 = vld [vmem:[%s6552 + $0x6c] sm:$0xf]
      %v6576 = vld [vmem:[%s6552 + $0x70] sm:$0xf]
      %v6577 = vld [vmem:[%s6552 + $0x78] sm:$0xf]
      %v6578 = vld [vmem:[%s6552 + $0x7c] sm:$0xf]
      %v6579 = vld [vmem:[%s6552 + $0x80] sm:$0xf]
      %v6580 = vld [vmem:[%s6552 + $0x84] sm:$0xf]
      %v6581 = vld [vmem:[%s6552 + $0x8c] sm:$0xf]
      %v6582 = vld [vmem:[%s6552 + $0x90] sm:$0xf]
      %v6583 = vld [vmem:[%s6552 + $0x94] sm:$0xf]
      %v6584 = vld [vmem:[%s6552 + $0x98] sm:$0xf]
      %v6585 = vld [vmem:[%s6552 + $0xa0] sm:$0xf]
      %v6586 = vld [vmem:[%s6552 + $0xa4] sm:$0xf]
      %v6587 = vld [vmem:[%s6552 + $0xa8] sm:$0xf]
      %v6588 = vld [vmem:[%s6552 + $0xac] sm:$0xf]
      %v6589 = vld [vmem:[%s6552 + $0xb4] sm:$0xf]
      %v6590 = vld [vmem:[%s6552 + $0xb8] sm:$0xf]
      %v6591 = vld [vmem:[%s6552 + $0xbc] sm:$0xf]
      %v6592 = vld [vmem:[%s6552 + $0xc0] sm:$0xf]
      %v6593 = vld [vmem:[%s6552 + $0xc8] sm:$0xf]
      %v6594 = vld [vmem:[%s6552 + $0xcc] sm:$0xf]
      %v6595 = vld [vmem:[%s6552 + $0xd0] sm:$0xf]
      %v6596 = vld [vmem:[%s6552 + $0xd4] sm:$0xf]
      %v6597 = vld [vmem:[%s6552 + $0xdc] sm:$0xf]
      %v6598 = vld [vmem:[%s6552 + $0xe0] sm:$0xf]
      %v6599 = vld [vmem:[%s6552 + $0xe4] sm:$0xf]
      %v6600 = vld [vmem:[%s6552 + $0xe8] sm:$0xf]
      %v6601 = vld [vmem:[%s6552 + $0xf0] sm:$0xf]
      %v6602 = vld [vmem:[%s6552 + $0xf4] sm:$0xf]
      %v6603 = vld [vmem:[%s6552 + $0xf8] sm:$0xf]
      %v6604 = vld [vmem:[%s6552 + $0xfc] sm:$0xf]
      %v6605 = vld [vmem:[%s6552 + $0x104] sm:$0xf]
      %v6606 = vld [vmem:[%s6552 + $0x108] sm:$0xf]
      %v6607 = vld [vmem:[%s6552 + $0x10c] sm:$0xf]
      %v6608 = vld [vmem:[%s6552 + $0x110] sm:$0xf]
      %v6609 = vld [vmem:[%s6552 + $0x118] sm:$0xf]
      %v6610 = vld [vmem:[%s6552 + $0x11c] sm:$0xf]
      %v6611 = vld [vmem:[%s6552 + $0x120] sm:$0xf]
      %v6612 = vld [vmem:[%s6552 + $0x124] sm:$0xf]
      %v6613 = vld [vmem:[%s6552 + $0x12c] sm:$0xf]
      %v6614 = vld [vmem:[%s6552 + $0x130] sm:$0xf]
      %v6615 = vld [vmem:[%s6552 + $0x134] sm:$0xf]
      %v6616 = vld [vmem:[%s6552 + $0x138] sm:$0xf]
      %v6617 = vld [vmem:[%s6552 + $0x10] sm:$0x1]
      %v6618 = vld [vmem:[%s6552 + $0x24] sm:$0x1]
      %v6619 = vld [vmem:[%s6552 + $0x38] sm:$0x1]
      %v6620 = vld [vmem:[%s6552 + $0x4c] sm:$0x1]
      %v6621 = vld [vmem:[%s6552 + $0x60] sm:$0x1]
      %v6622 = vld [vmem:[%s6552 + $0x74] sm:$0x1]
      %v6623 = vld [vmem:[%s6552 + $0x88] sm:$0x1]
      %v6624 = vld [vmem:[%s6552 + $0x9c] sm:$0x1]
      %v6625 = vld [vmem:[%s6552 + $0xb0] sm:$0x1]
      %v6626 = vld [vmem:[%s6552 + $0xc4] sm:$0x1]
      %v6627 = vld [vmem:[%s6552 + $0xd8] sm:$0x1]
      %v6628 = vld [vmem:[%s6552 + $0xec] sm:$0x1]
      %v6629 = vld [vmem:[%s6552 + $0x100] sm:$0x1]
      %v6630 = vld [vmem:[%s6552 + $0x114] sm:$0x1]
      %v6631 = vld [vmem:[%s6552 + $0x128] sm:$0x1]
      %v6632 = vld [vmem:[%s6552 + $0x13c] sm:$0x1]
      %v6634 = vshrl.u32 %v6553, 16
      %v6636 = vrot.slane %v6634, 4
      %v6637 = vshll.u32 %v6553, 16
      %v6639 = vrot.slane %v6637, 5
      %v6640 = vor.u32 %v6636, %v6639
      %v6641 = vrot.slane %v6640, 4
      %v6643 = vshll.u32 %v6554, 16
      %v6645 = vrot.slane %v6643, 5
      %v6646 = vsel %vm365, %v6641, %v6645
      %v6647 = vshrl.u32 %v6554, 16
      %v6649 = vrot.slane %v6647, 4
      %v6650 = vor.u32 %v6649, %v6645
      %v6651 = vrot.slane %v6650, 4
      %v6653 = vshll.u32 %v6555, 16
      %v6655 = vrot.slane %v6653, 5
      %v6656 = vsel %vm365, %v6651, %v6655
      %v6657 = vshrl.u32 %v6555, 16
      %v6659 = vrot.slane %v6657, 4
      %v6660 = vor.u32 %v6659, %v6655
      %v6661 = vrot.slane %v6660, 4
      %v6663 = vshll.u32 %v6556, 16
      %v6665 = vrot.slane %v6663, 5
      %v6666 = vsel %vm365, %v6661, %v6665
      %v6667 = vshrl.u32 %v6556, 16
      %v6669 = vrot.slane %v6667, 4
      %v6670 = vor.u32 %v6669, %v6665
      %v6671 = vrot.slane %v6670, 4
      %v6673 = vshll.u32 %v6617, 16
      %v6675 = vrot.slane %v6673, 5
      %v6676 = vsel %vm365, %v6671, %v6675
      %v6678 = vshrl.u32 %v6557, 16
      %v6680 = vrot.slane %v6678, 4
      %v6681 = vshll.u32 %v6557, 16
      %v6683 = vrot.slane %v6681, 5
      %v6684 = vor.u32 %v6680, %v6683
      %v6685 = vrot.slane %v6684, 4
      %v6687 = vshll.u32 %v6558, 16
      %v6689 = vrot.slane %v6687, 5
      %v6690 = vsel %vm365, %v6685, %v6689
      %v6691 = vshrl.u32 %v6558, 16
      %v6693 = vrot.slane %v6691, 4
      %v6694 = vor.u32 %v6693, %v6689
      %v6695 = vrot.slane %v6694, 4
      %v6697 = vshll.u32 %v6559, 16
      %v6699 = vrot.slane %v6697, 5
      %v6700 = vsel %vm365, %v6695, %v6699
      %v6701 = vshrl.u32 %v6559, 16
      %v6703 = vrot.slane %v6701, 4
      %v6704 = vor.u32 %v6703, %v6699
      %v6705 = vrot.slane %v6704, 4
      %v6707 = vshll.u32 %v6560, 16
      %v6709 = vrot.slane %v6707, 5
      %v6710 = vsel %vm365, %v6705, %v6709
      %v6711 = vshrl.u32 %v6560, 16
      %v6713 = vrot.slane %v6711, 4
      %v6714 = vor.u32 %v6713, %v6709
      %v6715 = vrot.slane %v6714, 4
      %v6717 = vshll.u32 %v6618, 16
      %v6719 = vrot.slane %v6717, 5
      %v6720 = vsel %vm365, %v6715, %v6719
      %v6722 = vshrl.u32 %v6561, 16
      %v6724 = vrot.slane %v6722, 4
      %v6725 = vshll.u32 %v6561, 16
      %v6727 = vrot.slane %v6725, 5
      %v6728 = vor.u32 %v6724, %v6727
      %v6729 = vrot.slane %v6728, 4
      %v6731 = vshll.u32 %v6562, 16
      %v6733 = vrot.slane %v6731, 5
      %v6734 = vsel %vm365, %v6729, %v6733
      %v6735 = vshrl.u32 %v6562, 16
      %v6737 = vrot.slane %v6735, 4
      %v6738 = vor.u32 %v6737, %v6733
      %v6739 = vrot.slane %v6738, 4
      %v6741 = vshll.u32 %v6563, 16
      %v6743 = vrot.slane %v6741, 5
      %v6744 = vsel %vm365, %v6739, %v6743
      %v6745 = vshrl.u32 %v6563, 16
      %v6747 = vrot.slane %v6745, 4
      %v6748 = vor.u32 %v6747, %v6743
      %v6749 = vrot.slane %v6748, 4
      %v6751 = vshll.u32 %v6564, 16
      %v6753 = vrot.slane %v6751, 5
      %v6754 = vsel %vm365, %v6749, %v6753
      %v6755 = vshrl.u32 %v6564, 16
      %v6757 = vrot.slane %v6755, 4
      %v6758 = vor.u32 %v6757, %v6753
      %v6759 = vrot.slane %v6758, 4
      %v6761 = vshll.u32 %v6619, 16
      %v6763 = vrot.slane %v6761, 5
      %v6764 = vsel %vm365, %v6759, %v6763
      %v6766 = vshrl.u32 %v6565, 16
      %v6768 = vrot.slane %v6766, 4
      %v6769 = vshll.u32 %v6565, 16
      %v6771 = vrot.slane %v6769, 5
      %v6772 = vor.u32 %v6768, %v6771
      %v6773 = vrot.slane %v6772, 4
      %v6775 = vshll.u32 %v6566, 16
      %v6777 = vrot.slane %v6775, 5
      %v6778 = vsel %vm365, %v6773, %v6777
      %v6779 = vshrl.u32 %v6566, 16
      %v6781 = vrot.slane %v6779, 4
      %v6782 = vor.u32 %v6781, %v6777
      %v6783 = vrot.slane %v6782, 4
      %v6785 = vshll.u32 %v6567, 16
      %v6787 = vrot.slane %v6785, 5
      %v6788 = vsel %vm365, %v6783, %v6787
      %v6789 = vshrl.u32 %v6567, 16
      %v6791 = vrot.slane %v6789, 4
      %v6792 = vor.u32 %v6791, %v6787
      %v6793 = vrot.slane %v6792, 4
      %v6795 = vshll.u32 %v6568, 16
      %v6797 = vrot.slane %v6795, 5
      %v6798 = vsel %vm365, %v6793, %v6797
      %v6799 = vshrl.u32 %v6568, 16
      %v6801 = vrot.slane %v6799, 4
      %v6802 = vor.u32 %v6801, %v6797
      %v6803 = vrot.slane %v6802, 4
      %v6805 = vshll.u32 %v6620, 16
      %v6807 = vrot.slane %v6805, 5
      %v6808 = vsel %vm365, %v6803, %v6807
      %v6810 = vshrl.u32 %v6569, 16
      %v6812 = vrot.slane %v6810, 4
      %v6813 = vshll.u32 %v6569, 16
      %v6815 = vrot.slane %v6813, 5
      %v6816 = vor.u32 %v6812, %v6815
      %v6817 = vrot.slane %v6816, 4
      %v6819 = vshll.u32 %v6570, 16
      %v6821 = vrot.slane %v6819, 5
      %v6822 = vsel %vm365, %v6817, %v6821
      %v6823 = vshrl.u32 %v6570, 16
      %v6825 = vrot.slane %v6823, 4
      %v6826 = vor.u32 %v6825, %v6821
      %v6827 = vrot.slane %v6826, 4
      %v6829 = vshll.u32 %v6571, 16
      %v6831 = vrot.slane %v6829, 5
      %v6832 = vsel %vm365, %v6827, %v6831
      %v6833 = vshrl.u32 %v6571, 16
      %v6835 = vrot.slane %v6833, 4
      %v6836 = vor.u32 %v6835, %v6831
      %v6837 = vrot.slane %v6836, 4
      %v6839 = vshll.u32 %v6572, 16
      %v6841 = vrot.slane %v6839, 5
      %v6842 = vsel %vm365, %v6837, %v6841
      %v6843 = vshrl.u32 %v6572, 16
      %v6845 = vrot.slane %v6843, 4
      %v6846 = vor.u32 %v6845, %v6841
      %v6847 = vrot.slane %v6846, 4
      %v6849 = vshll.u32 %v6621, 16
      %v6851 = vrot.slane %v6849, 5
      %v6852 = vsel %vm365, %v6847, %v6851
      %v6854 = vshrl.u32 %v6573, 16
      %v6856 = vrot.slane %v6854, 4
      %v6857 = vshll.u32 %v6573, 16
      %v6859 = vrot.slane %v6857, 5
      %v6860 = vor.u32 %v6856, %v6859
      %v6861 = vrot.slane %v6860, 4
      %v6863 = vshll.u32 %v6574, 16
      %v6865 = vrot.slane %v6863, 5
      %v6866 = vsel %vm365, %v6861, %v6865
      %v6867 = vshrl.u32 %v6574, 16
      %v6869 = vrot.slane %v6867, 4
      %v6870 = vor.u32 %v6869, %v6865
      %v6871 = vrot.slane %v6870, 4
      %v6873 = vshll.u32 %v6575, 16
      %v6875 = vrot.slane %v6873, 5
      %v6876 = vsel %vm365, %v6871, %v6875
      %v6877 = vshrl.u32 %v6575, 16
      %v6879 = vrot.slane %v6877, 4
      %v6880 = vor.u32 %v6879, %v6875
      %v6881 = vrot.slane %v6880, 4
      %v6883 = vshll.u32 %v6576, 16
      %v6885 = vrot.slane %v6883, 5
      %v6886 = vsel %vm365, %v6881, %v6885
      %v6887 = vshrl.u32 %v6576, 16
      %v6889 = vrot.slane %v6887, 4
      %v6890 = vor.u32 %v6889, %v6885
      %v6891 = vrot.slane %v6890, 4
      %v6893 = vshll.u32 %v6622, 16
      %v6895 = vrot.slane %v6893, 5
      %v6896 = vsel %vm365, %v6891, %v6895
      %v6898 = vshrl.u32 %v6577, 16
      %v6900 = vrot.slane %v6898, 4
      %v6901 = vshll.u32 %v6577, 16
      %v6903 = vrot.slane %v6901, 5
      %v6904 = vor.u32 %v6900, %v6903
      %v6905 = vrot.slane %v6904, 4
      %v6907 = vshll.u32 %v6578, 16
      %v6909 = vrot.slane %v6907, 5
      %v6910 = vsel %vm365, %v6905, %v6909
      %v6911 = vshrl.u32 %v6578, 16
      %v6913 = vrot.slane %v6911, 4
      %v6914 = vor.u32 %v6913, %v6909
      %v6915 = vrot.slane %v6914, 4
      %v6917 = vshll.u32 %v6579, 16
      %v6919 = vrot.slane %v6917, 5
      %v6920 = vsel %vm365, %v6915, %v6919
      %v6921 = vshrl.u32 %v6579, 16
      %v6923 = vrot.slane %v6921, 4
      %v6924 = vor.u32 %v6923, %v6919
      %v6925 = vrot.slane %v6924, 4
      %v6927 = vshll.u32 %v6580, 16
      %v6929 = vrot.slane %v6927, 5
      %v6930 = vsel %vm365, %v6925, %v6929
      %v6931 = vshrl.u32 %v6580, 16
      %v6933 = vrot.slane %v6931, 4
      %v6934 = vor.u32 %v6933, %v6929
      %v6935 = vrot.slane %v6934, 4
      %v6937 = vshll.u32 %v6623, 16
      %v6939 = vrot.slane %v6937, 5
      %v6940 = vsel %vm365, %v6935, %v6939
      %v6942 = vshrl.u32 %v6581, 16
      %v6944 = vrot.slane %v6942, 4
      %v6945 = vshll.u32 %v6581, 16
      %v6947 = vrot.slane %v6945, 5
      %v6948 = vor.u32 %v6944, %v6947
      %v6949 = vrot.slane %v6948, 4
      %v6951 = vshll.u32 %v6582, 16
      %v6953 = vrot.slane %v6951, 5
      %v6954 = vsel %vm365, %v6949, %v6953
      %v6955 = vshrl.u32 %v6582, 16
      %v6957 = vrot.slane %v6955, 4
      %v6958 = vor.u32 %v6957, %v6953
      %v6959 = vrot.slane %v6958, 4
      %v6961 = vshll.u32 %v6583, 16
      %v6963 = vrot.slane %v6961, 5
      %v6964 = vsel %vm365, %v6959, %v6963
      %v6965 = vshrl.u32 %v6583, 16
      %v6967 = vrot.slane %v6965, 4
      %v6968 = vor.u32 %v6967, %v6963
      %v6969 = vrot.slane %v6968, 4
      %v6971 = vshll.u32 %v6584, 16
      %v6973 = vrot.slane %v6971, 5
      %v6974 = vsel %vm365, %v6969, %v6973
      %v6975 = vshrl.u32 %v6584, 16
      %v6977 = vrot.slane %v6975, 4
      %v6978 = vor.u32 %v6977, %v6973
      %v6979 = vrot.slane %v6978, 4
      %v6981 = vshll.u32 %v6624, 16
      %v6983 = vrot.slane %v6981, 5
      %v6984 = vsel %vm365, %v6979, %v6983
      %v6986 = vshrl.u32 %v6585, 16
      %v6988 = vrot.slane %v6986, 4
      %v6989 = vshll.u32 %v6585, 16
      %v6991 = vrot.slane %v6989, 5
      %v6992 = vor.u32 %v6988, %v6991
      %v6993 = vrot.slane %v6992, 4
      %v6995 = vshll.u32 %v6586, 16
      %v6997 = vrot.slane %v6995, 5
      %v6998 = vsel %vm365, %v6993, %v6997
      %v6999 = vshrl.u32 %v6586, 16
      %v7001 = vrot.slane %v6999, 4
      %v7002 = vor.u32 %v7001, %v6997
      %v7003 = vrot.slane %v7002, 4
      %v7005 = vshll.u32 %v6587, 16
      %v7007 = vrot.slane %v7005, 5
      %v7008 = vsel %vm365, %v7003, %v7007
      %v7009 = vshrl.u32 %v6587, 16
      %v7011 = vrot.slane %v7009, 4
      %v7012 = vor.u32 %v7011, %v7007
      %v7013 = vrot.slane %v7012, 4
      %v7015 = vshll.u32 %v6588, 16
      %v7017 = vrot.slane %v7015, 5
      %v7018 = vsel %vm365, %v7013, %v7017
      %v7019 = vshrl.u32 %v6588, 16
      %v7021 = vrot.slane %v7019, 4
      %v7022 = vor.u32 %v7021, %v7017
      %v7023 = vrot.slane %v7022, 4
      %v7025 = vshll.u32 %v6625, 16
      %v7027 = vrot.slane %v7025, 5
      %v7028 = vsel %vm365, %v7023, %v7027
      %v7030 = vshrl.u32 %v6589, 16
      %v7032 = vrot.slane %v7030, 4
      %v7033 = vshll.u32 %v6589, 16
      %v7035 = vrot.slane %v7033, 5
      %v7036 = vor.u32 %v7032, %v7035
      %v7037 = vrot.slane %v7036, 4
      %v7039 = vshll.u32 %v6590, 16
      %v7041 = vrot.slane %v7039, 5
      %v7042 = vsel %vm365, %v7037, %v7041
      %v7043 = vshrl.u32 %v6590, 16
      %v7045 = vrot.slane %v7043, 4
      %v7046 = vor.u32 %v7045, %v7041
      %v7047 = vrot.slane %v7046, 4
      %v7049 = vshll.u32 %v6591, 16
      %v7051 = vrot.slane %v7049, 5
      %v7052 = vsel %vm365, %v7047, %v7051
      %v7053 = vshrl.u32 %v6591, 16
      %v7055 = vrot.slane %v7053, 4
      %v7056 = vor.u32 %v7055, %v7051
      %v7057 = vrot.slane %v7056, 4
      %v7059 = vshll.u32 %v6592, 16
      %v7061 = vrot.slane %v7059, 5
      %v7062 = vsel %vm365, %v7057, %v7061
      %v7063 = vshrl.u32 %v6592, 16
      %v7065 = vrot.slane %v7063, 4
      %v7066 = vor.u32 %v7065, %v7061
      %v7067 = vrot.slane %v7066, 4
      %v7069 = vshll.u32 %v6626, 16
      %v7071 = vrot.slane %v7069, 5
      %v7072 = vsel %vm365, %v7067, %v7071
      %v7074 = vshrl.u32 %v6593, 16
      %v7076 = vrot.slane %v7074, 4
      %v7077 = vshll.u32 %v6593, 16
      %v7079 = vrot.slane %v7077, 5
      %v7080 = vor.u32 %v7076, %v7079
      %v7081 = vrot.slane %v7080, 4
      %v7083 = vshll.u32 %v6594, 16
      %v7085 = vrot.slane %v7083, 5
      %v7086 = vsel %vm365, %v7081, %v7085
      %v7087 = vshrl.u32 %v6594, 16
      %v7089 = vrot.slane %v7087, 4
      %v7090 = vor.u32 %v7089, %v7085
      %v7091 = vrot.slane %v7090, 4
      %v7093 = vshll.u32 %v6595, 16
      %v7095 = vrot.slane %v7093, 5
      %v7096 = vsel %vm365, %v7091, %v7095
      %v7097 = vshrl.u32 %v6595, 16
      %v7099 = vrot.slane %v7097, 4
      %v7100 = vor.u32 %v7099, %v7095
      %v7101 = vrot.slane %v7100, 4
      %v7103 = vshll.u32 %v6596, 16
      %v7105 = vrot.slane %v7103, 5
      %v7106 = vsel %vm365, %v7101, %v7105
      %v7107 = vshrl.u32 %v6596, 16
      %v7109 = vrot.slane %v7107, 4
      %v7110 = vor.u32 %v7109, %v7105
      %v7111 = vrot.slane %v7110, 4
      %v7113 = vshll.u32 %v6627, 16
      %v7115 = vrot.slane %v7113, 5
      %v7116 = vsel %vm365, %v7111, %v7115
      %v7118 = vshrl.u32 %v6597, 16
      %v7120 = vrot.slane %v7118, 4
      %v7121 = vshll.u32 %v6597, 16
      %v7123 = vrot.slane %v7121, 5
      %v7124 = vor.u32 %v7120, %v7123
      %v7125 = vrot.slane %v7124, 4
      %v7127 = vshll.u32 %v6598, 16
      %v7129 = vrot.slane %v7127, 5
      %v7130 = vsel %vm365, %v7125, %v7129
      %v7131 = vshrl.u32 %v6598, 16
      %v7133 = vrot.slane %v7131, 4
      %v7134 = vor.u32 %v7133, %v7129
      %v7135 = vrot.slane %v7134, 4
      %v7137 = vshll.u32 %v6599, 16
      %v7139 = vrot.slane %v7137, 5
      %v7140 = vsel %vm365, %v7135, %v7139
      %v7141 = vshrl.u32 %v6599, 16
      %v7143 = vrot.slane %v7141, 4
      %v7144 = vor.u32 %v7143, %v7139
      %v7145 = vrot.slane %v7144, 4
      %v7147 = vshll.u32 %v6600, 16
      %v7149 = vrot.slane %v7147, 5
      %v7150 = vsel %vm365, %v7145, %v7149
      %v7151 = vshrl.u32 %v6600, 16
      %v7153 = vrot.slane %v7151, 4
      %v7154 = vor.u32 %v7153, %v7149
      %v7155 = vrot.slane %v7154, 4
      %v7157 = vshll.u32 %v6628, 16
      %v7159 = vrot.slane %v7157, 5
      %v7160 = vsel %vm365, %v7155, %v7159
      %v7162 = vshrl.u32 %v6601, 16
      %v7164 = vrot.slane %v7162, 4
      %v7165 = vshll.u32 %v6601, 16
      %v7167 = vrot.slane %v7165, 5
      %v7168 = vor.u32 %v7164, %v7167
      %v7169 = vrot.slane %v7168, 4
      %v7171 = vshll.u32 %v6602, 16
      %v7173 = vrot.slane %v7171, 5
      %v7174 = vsel %vm365, %v7169, %v7173
      %v7175 = vshrl.u32 %v6602, 16
      %v7177 = vrot.slane %v7175, 4
      %v7178 = vor.u32 %v7177, %v7173
      %v7179 = vrot.slane %v7178, 4
      %v7181 = vshll.u32 %v6603, 16
      %v7183 = vrot.slane %v7181, 5
      %v7184 = vsel %vm365, %v7179, %v7183
      %v7185 = vshrl.u32 %v6603, 16
      %v7187 = vrot.slane %v7185, 4
      %v7188 = vor.u32 %v7187, %v7183
      %v7189 = vrot.slane %v7188, 4
      %v7191 = vshll.u32 %v6604, 16
      %v7193 = vrot.slane %v7191, 5
      %v7194 = vsel %vm365, %v7189, %v7193
      %v7195 = vshrl.u32 %v6604, 16
      %v7197 = vrot.slane %v7195, 4
      %v7198 = vor.u32 %v7197, %v7193
      %v7199 = vrot.slane %v7198, 4
      %v7201 = vshll.u32 %v6629, 16
      %v7203 = vrot.slane %v7201, 5
      %v7204 = vsel %vm365, %v7199, %v7203
      %v7206 = vshrl.u32 %v6605, 16
      %v7208 = vrot.slane %v7206, 4
      %v7209 = vshll.u32 %v6605, 16
      %v7211 = vrot.slane %v7209, 5
      %v7212 = vor.u32 %v7208, %v7211
      %v7213 = vrot.slane %v7212, 4
      %v7215 = vshll.u32 %v6606, 16
      %v7217 = vrot.slane %v7215, 5
      %v7218 = vsel %vm365, %v7213, %v7217
      %v7219 = vshrl.u32 %v6606, 16
      %v7221 = vrot.slane %v7219, 4
      %v7222 = vor.u32 %v7221, %v7217
      %v7223 = vrot.slane %v7222, 4
      %v7225 = vshll.u32 %v6607, 16
      %v7227 = vrot.slane %v7225, 5
      %v7228 = vsel %vm365, %v7223, %v7227
      %v7229 = vshrl.u32 %v6607, 16
      %v7231 = vrot.slane %v7229, 4
      %v7232 = vor.u32 %v7231, %v7227
      %v7233 = vrot.slane %v7232, 4
      %v7235 = vshll.u32 %v6608, 16
      %v7237 = vrot.slane %v7235, 5
      %v7238 = vsel %vm365, %v7233, %v7237
      %v7239 = vshrl.u32 %v6608, 16
      %v7241 = vrot.slane %v7239, 4
      %v7242 = vor.u32 %v7241, %v7237
      %v7243 = vrot.slane %v7242, 4
      %v7245 = vshll.u32 %v6630, 16
      %v7247 = vrot.slane %v7245, 5
      %v7248 = vsel %vm365, %v7243, %v7247
      %v7250 = vshrl.u32 %v6609, 16
      %v7252 = vrot.slane %v7250, 4
      %v7253 = vshll.u32 %v6609, 16
      %v7255 = vrot.slane %v7253, 5
      %v7256 = vor.u32 %v7252, %v7255
      %v7257 = vrot.slane %v7256, 4
      %v7259 = vshll.u32 %v6610, 16
      %v7261 = vrot.slane %v7259, 5
      %v7262 = vsel %vm365, %v7257, %v7261
      %v7263 = vshrl.u32 %v6610, 16
      %v7265 = vrot.slane %v7263, 4
      %v7266 = vor.u32 %v7265, %v7261
      %v7267 = vrot.slane %v7266, 4
      %v7269 = vshll.u32 %v6611, 16
      %v7271 = vrot.slane %v7269, 5
      %v7272 = vsel %vm365, %v7267, %v7271
      %v7273 = vshrl.u32 %v6611, 16
      %v7275 = vrot.slane %v7273, 4
      %v7276 = vor.u32 %v7275, %v7271
      %v7277 = vrot.slane %v7276, 4
      %v7279 = vshll.u32 %v6612, 16
      %v7281 = vrot.slane %v7279, 5
      %v7282 = vsel %vm365, %v7277, %v7281
      %v7283 = vshrl.u32 %v6612, 16
      %v7285 = vrot.slane %v7283, 4
      %v7286 = vor.u32 %v7285, %v7281
      %v7287 = vrot.slane %v7286, 4
      %v7289 = vshll.u32 %v6631, 16
      %v7291 = vrot.slane %v7289, 5
      %v7292 = vsel %vm365, %v7287, %v7291
      %v7294 = vshrl.u32 %v6613, 16
      %v7296 = vrot.slane %v7294, 4
      %v7297 = vshll.u32 %v6613, 16
      %v7299 = vrot.slane %v7297, 5
      %v7300 = vor.u32 %v7296, %v7299
      %v7301 = vrot.slane %v7300, 4
      %v7303 = vshll.u32 %v6614, 16
      %v7305 = vrot.slane %v7303, 5
      %v7306 = vsel %vm365, %v7301, %v7305
      %v7307 = vshrl.u32 %v6614, 16
      %v7309 = vrot.slane %v7307, 4
      %v7310 = vor.u32 %v7309, %v7305
      %v7311 = vrot.slane %v7310, 4
      %v7313 = vshll.u32 %v6615, 16
      %v7315 = vrot.slane %v7313, 5
      %v7316 = vsel %vm365, %v7311, %v7315
      %v7317 = vshrl.u32 %v6615, 16
      %v7319 = vrot.slane %v7317, 4
      %v7320 = vor.u32 %v7319, %v7315
      %v7321 = vrot.slane %v7320, 4
      %v7323 = vshll.u32 %v6616, 16
      %v7325 = vrot.slane %v7323, 5
      %v7326 = vsel %vm365, %v7321, %v7325
      %v7327 = vshrl.u32 %v6616, 16
      %v7329 = vrot.slane %v7327, 4
      %v7330 = vor.u32 %v7329, %v7325
      %v7331 = vrot.slane %v7330, 4
      %v7333 = vshll.u32 %v6632, 16
      %v7335 = vrot.slane %v7333, 5
      %v7336 = vsel %vm365, %v7331, %v7335
      %v7337 = vld [vmem:[%s6552] sm:$0xe]
      %v7338 = vld [vmem:[%s6552 + $0x14] sm:$0xe]
      %v7339 = vld [vmem:[%s6552 + $0x28] sm:$0xe]
      %v7340 = vld [vmem:[%s6552 + $0x3c] sm:$0xe]
      %v7341 = vld [vmem:[%s6552 + $0x50] sm:$0xe]
      %v7342 = vld [vmem:[%s6552 + $0x64] sm:$0xe]
      %v7343 = vld [vmem:[%s6552 + $0x78] sm:$0xe]
      %v7344 = vld [vmem:[%s6552 + $0x8c] sm:$0xe]
      %v7345 = vld [vmem:[%s6552 + $0xa0] sm:$0xe]
      %v7346 = vld [vmem:[%s6552 + $0xb4] sm:$0xe]
      %v7347 = vld [vmem:[%s6552 + $0xc8] sm:$0xe]
      %v7348 = vld [vmem:[%s6552 + $0xdc] sm:$0xe]
      %v7349 = vld [vmem:[%s6552 + $0xf0] sm:$0xe]
      %v7350 = vld [vmem:[%s6552 + $0x104] sm:$0xe]
      %v7351 = vld [vmem:[%s6552 + $0x118] sm:$0xe]
      %v7352 = vld [vmem:[%s6552 + $0x12c] sm:$0xe]
      %v7433 = vrot.slane %v7337, 5
      %v7434 = vrot.slane %v7433, 4
      %v7435 = vrot.slane %v6554, 5
      %v7436 = vsel %vm1250, %v7434, %v7435
      %v7437 = vrot.slane %v7435, 4
      %v7438 = vrot.slane %v6555, 5
      %v7439 = vsel %vm1250, %v7437, %v7438
      %v7440 = vrot.slane %v7438, 4
      %v7441 = vrot.slane %v6556, 5
      %v7442 = vsel %vm1250, %v7440, %v7441
      %v7443 = vrot.slane %v7441, 4
      %v7444 = vrot.slane %v6617, 5
      %v7445 = vsel %vm1250, %v7443, %v7444
      %v7446 = vrot.slane %v7338, 5
      %v7447 = vrot.slane %v7446, 4
      %v7448 = vrot.slane %v6558, 5
      %v7449 = vsel %vm1250, %v7447, %v7448
      %v7450 = vrot.slane %v7448, 4
      %v7451 = vrot.slane %v6559, 5
      %v7452 = vsel %vm1250, %v7450, %v7451
      %v7453 = vrot.slane %v7451, 4
      %v7454 = vrot.slane %v6560, 5
      %v7455 = vsel %vm1250, %v7453, %v7454
      %v7456 = vrot.slane %v7454, 4
      %v7457 = vrot.slane %v6618, 5
      %v7458 = vsel %vm1250, %v7456, %v7457
      %v7459 = vrot.slane %v7339, 5
      %v7460 = vrot.slane %v7459, 4
      %v7461 = vrot.slane %v6562, 5
      %v7462 = vsel %vm1250, %v7460, %v7461
      %v7463 = vrot.slane %v7461, 4
      %v7464 = vrot.slane %v6563, 5
      %v7465 = vsel %vm1250, %v7463, %v7464
      %v7466 = vrot.slane %v7464, 4
      %v7467 = vrot.slane %v6564, 5
      %v7468 = vsel %vm1250, %v7466, %v7467
      %v7469 = vrot.slane %v7467, 4
      %v7470 = vrot.slane %v6619, 5
      %v7471 = vsel %vm1250, %v7469, %v7470
      %v7472 = vrot.slane %v7340, 5
      %v7473 = vrot.slane %v7472, 4
      %v7474 = vrot.slane %v6566, 5
      %v7475 = vsel %vm1250, %v7473, %v7474
      %v7476 = vrot.slane %v7474, 4
      %v7477 = vrot.slane %v6567, 5
      %v7478 = vsel %vm1250, %v7476, %v7477
      %v7479 = vrot.slane %v7477, 4
      %v7480 = vrot.slane %v6568, 5
      %v7481 = vsel %vm1250, %v7479, %v7480
      %v7482 = vrot.slane %v7480, 4
      %v7483 = vrot.slane %v6620, 5
      %v7484 = vsel %vm1250, %v7482, %v7483
      %v7485 = vrot.slane %v7341, 5
      %v7486 = vrot.slane %v7485, 4
      %v7487 = vrot.slane %v6570, 5
      %v7488 = vsel %vm1250, %v7486, %v7487
      %v7489 = vrot.slane %v7487, 4
      %v7490 = vrot.slane %v6571, 5
      %v7491 = vsel %vm1250, %v7489, %v7490
      %v7492 = vrot.slane %v7490, 4
      %v7493 = vrot.slane %v6572, 5
      %v7494 = vsel %vm1250, %v7492, %v7493
      %v7495 = vrot.slane %v7493, 4
      %v7496 = vrot.slane %v6621, 5
      %v7497 = vsel %vm1250, %v7495, %v7496
      %v7498 = vrot.slane %v7342, 5
      %v7499 = vrot.slane %v7498, 4
      %v7500 = vrot.slane %v6574, 5
      %v7501 = vsel %vm1250, %v7499, %v7500
      %v7502 = vrot.slane %v7500, 4
      %v7503 = vrot.slane %v6575, 5
      %v7504 = vsel %vm1250, %v7502, %v7503
      %v7505 = vrot.slane %v7503, 4
      %v7506 = vrot.slane %v6576, 5
      %v7507 = vsel %vm1250, %v7505, %v7506
      %v7508 = vrot.slane %v7506, 4
      %v7509 = vrot.slane %v6622, 5
      %v7510 = vsel %vm1250, %v7508, %v7509
      %v7511 = vrot.slane %v7343, 5
      %v7512 = vrot.slane %v7511, 4
      %v7513 = vrot.slane %v6578, 5
      %v7514 = vsel %vm1250, %v7512, %v7513
      %v7515 = vrot.slane %v7513, 4
      %v7516 = vrot.slane %v6579, 5
      %v7517 = vsel %vm1250, %v7515, %v7516
      %v7518 = vrot.slane %v7516, 4
      %v7519 = vrot.slane %v6580, 5
      %v7520 = vsel %vm1250, %v7518, %v7519
      %v7521 = vrot.slane %v7519, 4
      %v7522 = vrot.slane %v6623, 5
      %v7523 = vsel %vm1250, %v7521, %v7522
      %v7524 = vrot.slane %v7344, 5
      %v7525 = vrot.slane %v7524, 4
      %v7526 = vrot.slane %v6582, 5
      %v7527 = vsel %vm1250, %v7525, %v7526
      %v7528 = vrot.slane %v7526, 4
      %v7529 = vrot.slane %v6583, 5
      %v7530 = vsel %vm1250, %v7528, %v7529
      %v7531 = vrot.slane %v7529, 4
      %v7532 = vrot.slane %v6584, 5
      %v7533 = vsel %vm1250, %v7531, %v7532
      %v7534 = vrot.slane %v7532, 4
      %v7535 = vrot.slane %v6624, 5
      %v7536 = vsel %vm1250, %v7534, %v7535
      %v7537 = vrot.slane %v7345, 5
      %v7538 = vrot.slane %v7537, 4
      %v7539 = vrot.slane %v6586, 5
      %v7540 = vsel %vm1250, %v7538, %v7539
      %v7541 = vrot.slane %v7539, 4
      %v7542 = vrot.slane %v6587, 5
      %v7543 = vsel %vm1250, %v7541, %v7542
      %v7544 = vrot.slane %v7542, 4
      %v7545 = vrot.slane %v6588, 5
      %v7546 = vsel %vm1250, %v7544, %v7545
      %v7547 = vrot.slane %v7545, 4
      %v7548 = vrot.slane %v6625, 5
      %v7549 = vsel %vm1250, %v7547, %v7548
      %v7550 = vrot.slane %v7346, 5
      %v7551 = vrot.slane %v7550, 4
      %v7552 = vrot.slane %v6590, 5
      %v7553 = vsel %vm1250, %v7551, %v7552
      %v7554 = vrot.slane %v7552, 4
      %v7555 = vrot.slane %v6591, 5
      %v7556 = vsel %vm1250, %v7554, %v7555
      %v7557 = vrot.slane %v7555, 4
      %v7558 = vrot.slane %v6592, 5
      %v7559 = vsel %vm1250, %v7557, %v7558
      %v7560 = vrot.slane %v7558, 4
      %v7561 = vrot.slane %v6626, 5
      %v7562 = vsel %vm1250, %v7560, %v7561
      %v7563 = vrot.slane %v7347, 5
      %v7564 = vrot.slane %v7563, 4
      %v7565 = vrot.slane %v6594, 5
      %v7566 = vsel %vm1250, %v7564, %v7565
      %v7567 = vrot.slane %v7565, 4
      %v7568 = vrot.slane %v6595, 5
      %v7569 = vsel %vm1250, %v7567, %v7568
      %v7570 = vrot.slane %v7568, 4
      %v7571 = vrot.slane %v6596, 5
      %v7572 = vsel %vm1250, %v7570, %v7571
      %v7573 = vrot.slane %v7571, 4
      %v7574 = vrot.slane %v6627, 5
      %v7575 = vsel %vm1250, %v7573, %v7574
      %v7576 = vrot.slane %v7348, 5
      %v7577 = vrot.slane %v7576, 4
      %v7578 = vrot.slane %v6598, 5
      %v7579 = vsel %vm1250, %v7577, %v7578
      %v7580 = vrot.slane %v7578, 4
      %v7581 = vrot.slane %v6599, 5
      %v7582 = vsel %vm1250, %v7580, %v7581
      %v7583 = vrot.slane %v7581, 4
      %v7584 = vrot.slane %v6600, 5
      %v7585 = vsel %vm1250, %v7583, %v7584
      %v7586 = vrot.slane %v7584, 4
      %v7587 = vrot.slane %v6628, 5
      %v7588 = vsel %vm1250, %v7586, %v7587
      %v7589 = vrot.slane %v7349, 5
      %v7590 = vrot.slane %v7589, 4
      %v7591 = vrot.slane %v6602, 5
      %v7592 = vsel %vm1250, %v7590, %v7591
      %v7593 = vrot.slane %v7591, 4
      %v7594 = vrot.slane %v6603, 5
      %v7595 = vsel %vm1250, %v7593, %v7594
      %v7596 = vrot.slane %v7594, 4
      %v7597 = vrot.slane %v6604, 5
      %v7598 = vsel %vm1250, %v7596, %v7597
      %v7599 = vrot.slane %v7597, 4
      %v7600 = vrot.slane %v6629, 5
      %v7601 = vsel %vm1250, %v7599, %v7600
      %v7602 = vrot.slane %v7350, 5
      %v7603 = vrot.slane %v7602, 4
      %v7604 = vrot.slane %v6606, 5
      %v7605 = vsel %vm1250, %v7603, %v7604
      %v7606 = vrot.slane %v7604, 4
      %v7607 = vrot.slane %v6607, 5
      %v7608 = vsel %vm1250, %v7606, %v7607
      %v7609 = vrot.slane %v7607, 4
      %v7610 = vrot.slane %v6608, 5
      %v7611 = vsel %vm1250, %v7609, %v7610
      %v7612 = vrot.slane %v7610, 4
      %v7613 = vrot.slane %v6630, 5
      %v7614 = vsel %vm1250, %v7612, %v7613
      %v7615 = vrot.slane %v7351, 5
      %v7616 = vrot.slane %v7615, 4
      %v7617 = vrot.slane %v6610, 5
      %v7618 = vsel %vm1250, %v7616, %v7617
      %v7619 = vrot.slane %v7617, 4
      %v7620 = vrot.slane %v6611, 5
      %v7621 = vsel %vm1250, %v7619, %v7620
      %v7622 = vrot.slane %v7620, 4
      %v7623 = vrot.slane %v6612, 5
      %v7624 = vsel %vm1250, %v7622, %v7623
      %v7625 = vrot.slane %v7623, 4
      %v7626 = vrot.slane %v6631, 5
      %v7627 = vsel %vm1250, %v7625, %v7626
      %v7628 = vrot.slane %v7352, 5
      %v7629 = vrot.slane %v7628, 4
      %v7630 = vrot.slane %v6614, 5
      %v7631 = vsel %vm1250, %v7629, %v7630
      %v7632 = vrot.slane %v7630, 4
      %v7633 = vrot.slane %v6615, 5
      %v7634 = vsel %vm1250, %v7632, %v7633
      %v7635 = vrot.slane %v7633, 4
      %v7636 = vrot.slane %v6616, 5
      %v7637 = vsel %vm1250, %v7635, %v7636
      %v7638 = vrot.slane %v7636, 4
      %v7639 = vrot.slane %v6632, 5
      %v7640 = vsel %vm1250, %v7638, %v7639
      %s7641 = scalar_lea.vmem [#allocation2], 40
      %v7642 = vld [vmem:[%s7641] sm:$0xf]
      %v7643 = vld [vmem:[%s7641 + $0x4] sm:$0xf]
      %v7644 = vld [vmem:[%s7641 + $0x8] sm:$0xf]
      %v7645 = vld [vmem:[%s7641 + $0xc] sm:$0xf]
      %v7646 = vld [vmem:[%s7641 + $0x14] sm:$0xf]
      %v7647 = vld [vmem:[%s7641 + $0x18] sm:$0xf]
      %v7648 = vld [vmem:[%s7641 + $0x1c] sm:$0xf]
      %v7649 = vld [vmem:[%s7641 + $0x20] sm:$0xf]
      %v7650 = vld [vmem:[%s7641 + $0x28] sm:$0xf]
      %v7651 = vld [vmem:[%s7641 + $0x2c] sm:$0xf]
      %v7652 = vld [vmem:[%s7641 + $0x30] sm:$0xf]
      %v7653 = vld [vmem:[%s7641 + $0x34] sm:$0xf]
      %v7654 = vld [vmem:[%s7641 + $0x3c] sm:$0xf]
      %v7655 = vld [vmem:[%s7641 + $0x40] sm:$0xf]
      %v7656 = vld [vmem:[%s7641 + $0x44] sm:$0xf]
      %v7657 = vld [vmem:[%s7641 + $0x48] sm:$0xf]
      %v7658 = vld [vmem:[%s7641 + $0x50] sm:$0xf]
      %v7659 = vld [vmem:[%s7641 + $0x54] sm:$0xf]
      %v7660 = vld [vmem:[%s7641 + $0x58] sm:$0xf]
      %v7661 = vld [vmem:[%s7641 + $0x5c] sm:$0xf]
      %v7662 = vld [vmem:[%s7641 + $0x64] sm:$0xf]
      %v7663 = vld [vmem:[%s7641 + $0x68] sm:$0xf]
      %v7664 = vld [vmem:[%s7641 + $0x6c] sm:$0xf]
      %v7665 = vld [vmem:[%s7641 + $0x70] sm:$0xf]
      %v7666 = vld [vmem:[%s7641 + $0x78] sm:$0xf]
      %v7667 = vld [vmem:[%s7641 + $0x7c] sm:$0xf]
      %v7668 = vld [vmem:[%s7641 + $0x80] sm:$0xf]
      %v7669 = vld [vmem:[%s7641 + $0x84] sm:$0xf]
      %v7670 = vld [vmem:[%s7641 + $0x8c] sm:$0xf]
      %v7671 = vld [vmem:[%s7641 + $0x90] sm:$0xf]
      %v7672 = vld [vmem:[%s7641 + $0x94] sm:$0xf]
      %v7673 = vld [vmem:[%s7641 + $0x98] sm:$0xf]
      %v7674 = vld [vmem:[%s7641 + $0xa0] sm:$0xf]
      %v7675 = vld [vmem:[%s7641 + $0xa4] sm:$0xf]
      %v7676 = vld [vmem:[%s7641 + $0xa8] sm:$0xf]
      %v7677 = vld [vmem:[%s7641 + $0xac] sm:$0xf]
      %v7678 = vld [vmem:[%s7641 + $0xb4] sm:$0xf]
      %v7679 = vld [vmem:[%s7641 + $0xb8] sm:$0xf]
      %v7680 = vld [vmem:[%s7641 + $0xbc] sm:$0xf]
      %v7681 = vld [vmem:[%s7641 + $0xc0] sm:$0xf]
      %v7682 = vld [vmem:[%s7641 + $0xc8] sm:$0xf]
      %v7683 = vld [vmem:[%s7641 + $0xcc] sm:$0xf]
      %v7684 = vld [vmem:[%s7641 + $0xd0] sm:$0xf]
      %v7685 = vld [vmem:[%s7641 + $0xd4] sm:$0xf]
      %v7686 = vld [vmem:[%s7641 + $0xdc] sm:$0xf]
      %v7687 = vld [vmem:[%s7641 + $0xe0] sm:$0xf]
      %v7688 = vld [vmem:[%s7641 + $0xe4] sm:$0xf]
      %v7689 = vld [vmem:[%s7641 + $0xe8] sm:$0xf]
      %v7690 = vld [vmem:[%s7641 + $0xf0] sm:$0xf]
      %v7691 = vld [vmem:[%s7641 + $0xf4] sm:$0xf]
      %v7692 = vld [vmem:[%s7641 + $0xf8] sm:$0xf]
      %v7693 = vld [vmem:[%s7641 + $0xfc] sm:$0xf]
      %v7694 = vld [vmem:[%s7641 + $0x104] sm:$0xf]
      %v7695 = vld [vmem:[%s7641 + $0x108] sm:$0xf]
      %v7696 = vld [vmem:[%s7641 + $0x10c] sm:$0xf]
      %v7697 = vld [vmem:[%s7641 + $0x110] sm:$0xf]
      %v7698 = vld [vmem:[%s7641 + $0x118] sm:$0xf]
      %v7699 = vld [vmem:[%s7641 + $0x11c] sm:$0xf]
      %v7700 = vld [vmem:[%s7641 + $0x120] sm:$0xf]
      %v7701 = vld [vmem:[%s7641 + $0x124] sm:$0xf]
      %v7702 = vld [vmem:[%s7641 + $0x12c] sm:$0xf]
      %v7703 = vld [vmem:[%s7641 + $0x130] sm:$0xf]
      %v7704 = vld [vmem:[%s7641 + $0x134] sm:$0xf]
      %v7705 = vld [vmem:[%s7641 + $0x138] sm:$0xf]
      %v7706 = vld [vmem:[%s7641 + $0x10] sm:$0x1]
      %v7707 = vld [vmem:[%s7641 + $0x24] sm:$0x1]
      %v7708 = vld [vmem:[%s7641 + $0x38] sm:$0x1]
      %v7709 = vld [vmem:[%s7641 + $0x4c] sm:$0x1]
      %v7710 = vld [vmem:[%s7641 + $0x60] sm:$0x1]
      %v7711 = vld [vmem:[%s7641 + $0x74] sm:$0x1]
      %v7712 = vld [vmem:[%s7641 + $0x88] sm:$0x1]
      %v7713 = vld [vmem:[%s7641 + $0x9c] sm:$0x1]
      %v7714 = vld [vmem:[%s7641 + $0xb0] sm:$0x1]
      %v7715 = vld [vmem:[%s7641 + $0xc4] sm:$0x1]
      %v7716 = vld [vmem:[%s7641 + $0xd8] sm:$0x1]
      %v7717 = vld [vmem:[%s7641 + $0xec] sm:$0x1]
      %v7718 = vld [vmem:[%s7641 + $0x100] sm:$0x1]
      %v7719 = vld [vmem:[%s7641 + $0x114] sm:$0x1]
      %v7720 = vld [vmem:[%s7641 + $0x128] sm:$0x1]
      %v7721 = vld [vmem:[%s7641 + $0x13c] sm:$0x1]
      %v7723 = vshrl.u32 %v7642, 16
      %v7725 = vrot.slane %v7723, 4
      %v7726 = vshll.u32 %v7642, 16
      %v7728 = vrot.slane %v7726, 5
      %v7729 = vor.u32 %v7725, %v7728
      %v7730 = vrot.slane %v7729, 4
      %v7732 = vshll.u32 %v7643, 16
      %v7734 = vrot.slane %v7732, 5
      %v7735 = vsel %vm365, %v7730, %v7734
      %v7736 = vshrl.u32 %v7643, 16
      %v7738 = vrot.slane %v7736, 4
      %v7739 = vor.u32 %v7738, %v7734
      %v7740 = vrot.slane %v7739, 4
      %v7742 = vshll.u32 %v7644, 16
      %v7744 = vrot.slane %v7742, 5
      %v7745 = vsel %vm365, %v7740, %v7744
      %v7746 = vshrl.u32 %v7644, 16
      %v7748 = vrot.slane %v7746, 4
      %v7749 = vor.u32 %v7748, %v7744
      %v7750 = vrot.slane %v7749, 4
      %v7752 = vshll.u32 %v7645, 16
      %v7754 = vrot.slane %v7752, 5
      %v7755 = vsel %vm365, %v7750, %v7754
      %v7756 = vshrl.u32 %v7645, 16
      %v7758 = vrot.slane %v7756, 4
      %v7759 = vor.u32 %v7758, %v7754
      %v7760 = vrot.slane %v7759, 4
      %v7762 = vshll.u32 %v7706, 16
      %v7764 = vrot.slane %v7762, 5
      %v7765 = vsel %vm365, %v7760, %v7764
      %v7767 = vshrl.u32 %v7646, 16
      %v7769 = vrot.slane %v7767, 4
      %v7770 = vshll.u32 %v7646, 16
      %v7772 = vrot.slane %v7770, 5
      %v7773 = vor.u32 %v7769, %v7772
      %v7774 = vrot.slane %v7773, 4
      %v7776 = vshll.u32 %v7647, 16
      %v7778 = vrot.slane %v7776, 5
      %v7779 = vsel %vm365, %v7774, %v7778
      %v7780 = vshrl.u32 %v7647, 16
      %v7782 = vrot.slane %v7780, 4
      %v7783 = vor.u32 %v7782, %v7778
      %v7784 = vrot.slane %v7783, 4
      %v7786 = vshll.u32 %v7648, 16
      %v7788 = vrot.slane %v7786, 5
      %v7789 = vsel %vm365, %v7784, %v7788
      %v7790 = vshrl.u32 %v7648, 16
      %v7792 = vrot.slane %v7790, 4
      %v7793 = vor.u32 %v7792, %v7788
      %v7794 = vrot.slane %v7793, 4
      %v7796 = vshll.u32 %v7649, 16
      %v7798 = vrot.slane %v7796, 5
      %v7799 = vsel %vm365, %v7794, %v7798
      %v7800 = vshrl.u32 %v7649, 16
      %v7802 = vrot.slane %v7800, 4
      %v7803 = vor.u32 %v7802, %v7798
      %v7804 = vrot.slane %v7803, 4
      %v7806 = vshll.u32 %v7707, 16
      %v7808 = vrot.slane %v7806, 5
      %v7809 = vsel %vm365, %v7804, %v7808
      %v7811 = vshrl.u32 %v7650, 16
      %v7813 = vrot.slane %v7811, 4
      %v7814 = vshll.u32 %v7650, 16
      %v7816 = vrot.slane %v7814, 5
      %v7817 = vor.u32 %v7813, %v7816
      %v7818 = vrot.slane %v7817, 4
      %v7820 = vshll.u32 %v7651, 16
      %v7822 = vrot.slane %v7820, 5
      %v7823 = vsel %vm365, %v7818, %v7822
      %v7824 = vshrl.u32 %v7651, 16
      %v7826 = vrot.slane %v7824, 4
      %v7827 = vor.u32 %v7826, %v7822
      %v7828 = vrot.slane %v7827, 4
      %v7830 = vshll.u32 %v7652, 16
      %v7832 = vrot.slane %v7830, 5
      %v7833 = vsel %vm365, %v7828, %v7832
      %v7834 = vshrl.u32 %v7652, 16
      %v7836 = vrot.slane %v7834, 4
      %v7837 = vor.u32 %v7836, %v7832
      %v7838 = vrot.slane %v7837, 4
      %v7840 = vshll.u32 %v7653, 16
      %v7842 = vrot.slane %v7840, 5
      %v7843 = vsel %vm365, %v7838, %v7842
      %v7844 = vshrl.u32 %v7653, 16
      %v7846 = vrot.slane %v7844, 4
      %v7847 = vor.u32 %v7846, %v7842
      %v7848 = vrot.slane %v7847, 4
      %v7850 = vshll.u32 %v7708, 16
      %v7852 = vrot.slane %v7850, 5
      %v7853 = vsel %vm365, %v7848, %v7852
      %v7855 = vshrl.u32 %v7654, 16
      %v7857 = vrot.slane %v7855, 4
      %v7858 = vshll.u32 %v7654, 16
      %v7860 = vrot.slane %v7858, 5
      %v7861 = vor.u32 %v7857, %v7860
      %v7862 = vrot.slane %v7861, 4
      %v7864 = vshll.u32 %v7655, 16
      %v7866 = vrot.slane %v7864, 5
      %v7867 = vsel %vm365, %v7862, %v7866
      %v7868 = vshrl.u32 %v7655, 16
      %v7870 = vrot.slane %v7868, 4
      %v7871 = vor.u32 %v7870, %v7866
      %v7872 = vrot.slane %v7871, 4
      %v7874 = vshll.u32 %v7656, 16
      %v7876 = vrot.slane %v7874, 5
      %v7877 = vsel %vm365, %v7872, %v7876
      %v7878 = vshrl.u32 %v7656, 16
      %v7880 = vrot.slane %v7878, 4
      %v7881 = vor.u32 %v7880, %v7876
      %v7882 = vrot.slane %v7881, 4
      %v7884 = vshll.u32 %v7657, 16
      %v7886 = vrot.slane %v7884, 5
      %v7887 = vsel %vm365, %v7882, %v7886
      %v7888 = vshrl.u32 %v7657, 16
      %v7890 = vrot.slane %v7888, 4
      %v7891 = vor.u32 %v7890, %v7886
      %v7892 = vrot.slane %v7891, 4
      %v7894 = vshll.u32 %v7709, 16
      %v7896 = vrot.slane %v7894, 5
      %v7897 = vsel %vm365, %v7892, %v7896
      %v7899 = vshrl.u32 %v7658, 16
      %v7901 = vrot.slane %v7899, 4
      %v7902 = vshll.u32 %v7658, 16
      %v7904 = vrot.slane %v7902, 5
      %v7905 = vor.u32 %v7901, %v7904
      %v7906 = vrot.slane %v7905, 4
      %v7908 = vshll.u32 %v7659, 16
      %v7910 = vrot.slane %v7908, 5
      %v7911 = vsel %vm365, %v7906, %v7910
      %v7912 = vshrl.u32 %v7659, 16
      %v7914 = vrot.slane %v7912, 4
      %v7915 = vor.u32 %v7914, %v7910
      %v7916 = vrot.slane %v7915, 4
      %v7918 = vshll.u32 %v7660, 16
      %v7920 = vrot.slane %v7918, 5
      %v7921 = vsel %vm365, %v7916, %v7920
      %v7922 = vshrl.u32 %v7660, 16
      %v7924 = vrot.slane %v7922, 4
      %v7925 = vor.u32 %v7924, %v7920
      %v7926 = vrot.slane %v7925, 4
      %v7928 = vshll.u32 %v7661, 16
      %v7930 = vrot.slane %v7928, 5
      %v7931 = vsel %vm365, %v7926, %v7930
      %v7932 = vshrl.u32 %v7661, 16
      %v7934 = vrot.slane %v7932, 4
      %v7935 = vor.u32 %v7934, %v7930
      %v7936 = vrot.slane %v7935, 4
      %v7938 = vshll.u32 %v7710, 16
      %v7940 = vrot.slane %v7938, 5
      %v7941 = vsel %vm365, %v7936, %v7940
      %v7943 = vshrl.u32 %v7662, 16
      %v7945 = vrot.slane %v7943, 4
      %v7946 = vshll.u32 %v7662, 16
      %v7948 = vrot.slane %v7946, 5
      %v7949 = vor.u32 %v7945, %v7948
      %v7950 = vrot.slane %v7949, 4
      %v7952 = vshll.u32 %v7663, 16
      %v7954 = vrot.slane %v7952, 5
      %v7955 = vsel %vm365, %v7950, %v7954
      %v7956 = vshrl.u32 %v7663, 16
      %v7958 = vrot.slane %v7956, 4
      %v7959 = vor.u32 %v7958, %v7954
      %v7960 = vrot.slane %v7959, 4
      %v7962 = vshll.u32 %v7664, 16
      %v7964 = vrot.slane %v7962, 5
      %v7965 = vsel %vm365, %v7960, %v7964
      %v7966 = vshrl.u32 %v7664, 16
      %v7968 = vrot.slane %v7966, 4
      %v7969 = vor.u32 %v7968, %v7964
      %v7970 = vrot.slane %v7969, 4
      %v7972 = vshll.u32 %v7665, 16
      %v7974 = vrot.slane %v7972, 5
      %v7975 = vsel %vm365, %v7970, %v7974
      %v7976 = vshrl.u32 %v7665, 16
      %v7978 = vrot.slane %v7976, 4
      %v7979 = vor.u32 %v7978, %v7974
      %v7980 = vrot.slane %v7979, 4
      %v7982 = vshll.u32 %v7711, 16
      %v7984 = vrot.slane %v7982, 5
      %v7985 = vsel %vm365, %v7980, %v7984
      %v7987 = vshrl.u32 %v7666, 16
      %v7989 = vrot.slane %v7987, 4
      %v7990 = vshll.u32 %v7666, 16
      %v7992 = vrot.slane %v7990, 5
      %v7993 = vor.u32 %v7989, %v7992
      %v7994 = vrot.slane %v7993, 4
      %v7996 = vshll.u32 %v7667, 16
      %v7998 = vrot.slane %v7996, 5
      %v7999 = vsel %vm365, %v7994, %v7998
      %v8000 = vshrl.u32 %v7667, 16
      %v8002 = vrot.slane %v8000, 4
      %v8003 = vor.u32 %v8002, %v7998
      %v8004 = vrot.slane %v8003, 4
      %v8006 = vshll.u32 %v7668, 16
      %v8008 = vrot.slane %v8006, 5
      %v8009 = vsel %vm365, %v8004, %v8008
      %v8010 = vshrl.u32 %v7668, 16
      %v8012 = vrot.slane %v8010, 4
      %v8013 = vor.u32 %v8012, %v8008
      %v8014 = vrot.slane %v8013, 4
      %v8016 = vshll.u32 %v7669, 16
      %v8018 = vrot.slane %v8016, 5
      %v8019 = vsel %vm365, %v8014, %v8018
      %v8020 = vshrl.u32 %v7669, 16
      %v8022 = vrot.slane %v8020, 4
      %v8023 = vor.u32 %v8022, %v8018
      %v8024 = vrot.slane %v8023, 4
      %v8026 = vshll.u32 %v7712, 16
      %v8028 = vrot.slane %v8026, 5
      %v8029 = vsel %vm365, %v8024, %v8028
      %v8031 = vshrl.u32 %v7670, 16
      %v8033 = vrot.slane %v8031, 4
      %v8034 = vshll.u32 %v7670, 16
      %v8036 = vrot.slane %v8034, 5
      %v8037 = vor.u32 %v8033, %v8036
      %v8038 = vrot.slane %v8037, 4
      %v8040 = vshll.u32 %v7671, 16
      %v8042 = vrot.slane %v8040, 5
      %v8043 = vsel %vm365, %v8038, %v8042
      %v8044 = vshrl.u32 %v7671, 16
      %v8046 = vrot.slane %v8044, 4
      %v8047 = vor.u32 %v8046, %v8042
      %v8048 = vrot.slane %v8047, 4
      %v8050 = vshll.u32 %v7672, 16
      %v8052 = vrot.slane %v8050, 5
      %v8053 = vsel %vm365, %v8048, %v8052
      %v8054 = vshrl.u32 %v7672, 16
      %v8056 = vrot.slane %v8054, 4
      %v8057 = vor.u32 %v8056, %v8052
      %v8058 = vrot.slane %v8057, 4
      %v8060 = vshll.u32 %v7673, 16
      %v8062 = vrot.slane %v8060, 5
      %v8063 = vsel %vm365, %v8058, %v8062
      %v8064 = vshrl.u32 %v7673, 16
      %v8066 = vrot.slane %v8064, 4
      %v8067 = vor.u32 %v8066, %v8062
      %v8068 = vrot.slane %v8067, 4
      %v8070 = vshll.u32 %v7713, 16
      %v8072 = vrot.slane %v8070, 5
      %v8073 = vsel %vm365, %v8068, %v8072
      %v8075 = vshrl.u32 %v7674, 16
      %v8077 = vrot.slane %v8075, 4
      %v8078 = vshll.u32 %v7674, 16
      %v8080 = vrot.slane %v8078, 5
      %v8081 = vor.u32 %v8077, %v8080
      %v8082 = vrot.slane %v8081, 4
      %v8084 = vshll.u32 %v7675, 16
      %v8086 = vrot.slane %v8084, 5
      %v8087 = vsel %vm365, %v8082, %v8086
      %v8088 = vshrl.u32 %v7675, 16
      %v8090 = vrot.slane %v8088, 4
      %v8091 = vor.u32 %v8090, %v8086
      %v8092 = vrot.slane %v8091, 4
      %v8094 = vshll.u32 %v7676, 16
      %v8096 = vrot.slane %v8094, 5
      %v8097 = vsel %vm365, %v8092, %v8096
      %v8098 = vshrl.u32 %v7676, 16
      %v8100 = vrot.slane %v8098, 4
      %v8101 = vor.u32 %v8100, %v8096
      %v8102 = vrot.slane %v8101, 4
      %v8104 = vshll.u32 %v7677, 16
      %v8106 = vrot.slane %v8104, 5
      %v8107 = vsel %vm365, %v8102, %v8106
      %v8108 = vshrl.u32 %v7677, 16
      %v8110 = vrot.slane %v8108, 4
      %v8111 = vor.u32 %v8110, %v8106
      %v8112 = vrot.slane %v8111, 4
      %v8114 = vshll.u32 %v7714, 16
      %v8116 = vrot.slane %v8114, 5
      %v8117 = vsel %vm365, %v8112, %v8116
      %v8119 = vshrl.u32 %v7678, 16
      %v8121 = vrot.slane %v8119, 4
      %v8122 = vshll.u32 %v7678, 16
      %v8124 = vrot.slane %v8122, 5
      %v8125 = vor.u32 %v8121, %v8124
      %v8126 = vrot.slane %v8125, 4
      %v8128 = vshll.u32 %v7679, 16
      %v8130 = vrot.slane %v8128, 5
      %v8131 = vsel %vm365, %v8126, %v8130
      %v8132 = vshrl.u32 %v7679, 16
      %v8134 = vrot.slane %v8132, 4
      %v8135 = vor.u32 %v8134, %v8130
      %v8136 = vrot.slane %v8135, 4
      %v8138 = vshll.u32 %v7680, 16
      %v8140 = vrot.slane %v8138, 5
      %v8141 = vsel %vm365, %v8136, %v8140
      %v8142 = vshrl.u32 %v7680, 16
      %v8144 = vrot.slane %v8142, 4
      %v8145 = vor.u32 %v8144, %v8140
      %v8146 = vrot.slane %v8145, 4
      %v8148 = vshll.u32 %v7681, 16
      %v8150 = vrot.slane %v8148, 5
      %v8151 = vsel %vm365, %v8146, %v8150
      %v8152 = vshrl.u32 %v7681, 16
      %v8154 = vrot.slane %v8152, 4
      %v8155 = vor.u32 %v8154, %v8150
      %v8156 = vrot.slane %v8155, 4
      %v8158 = vshll.u32 %v7715, 16
      %v8160 = vrot.slane %v8158, 5
      %v8161 = vsel %vm365, %v8156, %v8160
      %v8163 = vshrl.u32 %v7682, 16
      %v8165 = vrot.slane %v8163, 4
      %v8166 = vshll.u32 %v7682, 16
      %v8168 = vrot.slane %v8166, 5
      %v8169 = vor.u32 %v8165, %v8168
      %v8170 = vrot.slane %v8169, 4
      %v8172 = vshll.u32 %v7683, 16
      %v8174 = vrot.slane %v8172, 5
      %v8175 = vsel %vm365, %v8170, %v8174
      %v8176 = vshrl.u32 %v7683, 16
      %v8178 = vrot.slane %v8176, 4
      %v8179 = vor.u32 %v8178, %v8174
      %v8180 = vrot.slane %v8179, 4
      %v8182 = vshll.u32 %v7684, 16
      %v8184 = vrot.slane %v8182, 5
      %v8185 = vsel %vm365, %v8180, %v8184
      %v8186 = vshrl.u32 %v7684, 16
      %v8188 = vrot.slane %v8186, 4
      %v8189 = vor.u32 %v8188, %v8184
      %v8190 = vrot.slane %v8189, 4
      %v8192 = vshll.u32 %v7685, 16
      %v8194 = vrot.slane %v8192, 5
      %v8195 = vsel %vm365, %v8190, %v8194
      %v8196 = vshrl.u32 %v7685, 16
      %v8198 = vrot.slane %v8196, 4
      %v8199 = vor.u32 %v8198, %v8194
      %v8200 = vrot.slane %v8199, 4
      %v8202 = vshll.u32 %v7716, 16
      %v8204 = vrot.slane %v8202, 5
      %v8205 = vsel %vm365, %v8200, %v8204
      %v8207 = vshrl.u32 %v7686, 16
      %v8209 = vrot.slane %v8207, 4
      %v8210 = vshll.u32 %v7686, 16
      %v8212 = vrot.slane %v8210, 5
      %v8213 = vor.u32 %v8209, %v8212
      %v8214 = vrot.slane %v8213, 4
      %v8216 = vshll.u32 %v7687, 16
      %v8218 = vrot.slane %v8216, 5
      %v8219 = vsel %vm365, %v8214, %v8218
      %v8220 = vshrl.u32 %v7687, 16
      %v8222 = vrot.slane %v8220, 4
      %v8223 = vor.u32 %v8222, %v8218
      %v8224 = vrot.slane %v8223, 4
      %v8226 = vshll.u32 %v7688, 16
      %v8228 = vrot.slane %v8226, 5
      %v8229 = vsel %vm365, %v8224, %v8228
      %v8230 = vshrl.u32 %v7688, 16
      %v8232 = vrot.slane %v8230, 4
      %v8233 = vor.u32 %v8232, %v8228
      %v8234 = vrot.slane %v8233, 4
      %v8236 = vshll.u32 %v7689, 16
      %v8238 = vrot.slane %v8236, 5
      %v8239 = vsel %vm365, %v8234, %v8238
      %v8240 = vshrl.u32 %v7689, 16
      %v8242 = vrot.slane %v8240, 4
      %v8243 = vor.u32 %v8242, %v8238
      %v8244 = vrot.slane %v8243, 4
      %v8246 = vshll.u32 %v7717, 16
      %v8248 = vrot.slane %v8246, 5
      %v8249 = vsel %vm365, %v8244, %v8248
      %v8251 = vshrl.u32 %v7690, 16
      %v8253 = vrot.slane %v8251, 4
      %v8254 = vshll.u32 %v7690, 16
      %v8256 = vrot.slane %v8254, 5
      %v8257 = vor.u32 %v8253, %v8256
      %v8258 = vrot.slane %v8257, 4
      %v8260 = vshll.u32 %v7691, 16
      %v8262 = vrot.slane %v8260, 5
      %v8263 = vsel %vm365, %v8258, %v8262
      %v8264 = vshrl.u32 %v7691, 16
      %v8266 = vrot.slane %v8264, 4
      %v8267 = vor.u32 %v8266, %v8262
      %v8268 = vrot.slane %v8267, 4
      %v8270 = vshll.u32 %v7692, 16
      %v8272 = vrot.slane %v8270, 5
      %v8273 = vsel %vm365, %v8268, %v8272
      %v8274 = vshrl.u32 %v7692, 16
      %v8276 = vrot.slane %v8274, 4
      %v8277 = vor.u32 %v8276, %v8272
      %v8278 = vrot.slane %v8277, 4
      %v8280 = vshll.u32 %v7693, 16
      %v8282 = vrot.slane %v8280, 5
      %v8283 = vsel %vm365, %v8278, %v8282
      %v8284 = vshrl.u32 %v7693, 16
      %v8286 = vrot.slane %v8284, 4
      %v8287 = vor.u32 %v8286, %v8282
      %v8288 = vrot.slane %v8287, 4
      %v8290 = vshll.u32 %v7718, 16
      %v8292 = vrot.slane %v8290, 5
      %v8293 = vsel %vm365, %v8288, %v8292
      %v8295 = vshrl.u32 %v7694, 16
      %v8297 = vrot.slane %v8295, 4
      %v8298 = vshll.u32 %v7694, 16
      %v8300 = vrot.slane %v8298, 5
      %v8301 = vor.u32 %v8297, %v8300
      %v8302 = vrot.slane %v8301, 4
      %v8304 = vshll.u32 %v7695, 16
      %v8306 = vrot.slane %v8304, 5
      %v8307 = vsel %vm365, %v8302, %v8306
      %v8308 = vshrl.u32 %v7695, 16
      %v8310 = vrot.slane %v8308, 4
      %v8311 = vor.u32 %v8310, %v8306
      %v8312 = vrot.slane %v8311, 4
      %v8314 = vshll.u32 %v7696, 16
      %v8316 = vrot.slane %v8314, 5
      %v8317 = vsel %vm365, %v8312, %v8316
      %v8318 = vshrl.u32 %v7696, 16
      %v8320 = vrot.slane %v8318, 4
      %v8321 = vor.u32 %v8320, %v8316
      %v8322 = vrot.slane %v8321, 4
      %v8324 = vshll.u32 %v7697, 16
      %v8326 = vrot.slane %v8324, 5
      %v8327 = vsel %vm365, %v8322, %v8326
      %v8328 = vshrl.u32 %v7697, 16
      %v8330 = vrot.slane %v8328, 4
      %v8331 = vor.u32 %v8330, %v8326
      %v8332 = vrot.slane %v8331, 4
      %v8334 = vshll.u32 %v7719, 16
      %v8336 = vrot.slane %v8334, 5
      %v8337 = vsel %vm365, %v8332, %v8336
      %v8339 = vshrl.u32 %v7698, 16
      %v8341 = vrot.slane %v8339, 4
      %v8342 = vshll.u32 %v7698, 16
      %v8344 = vrot.slane %v8342, 5
      %v8345 = vor.u32 %v8341, %v8344
      %v8346 = vrot.slane %v8345, 4
      %v8348 = vshll.u32 %v7699, 16
      %v8350 = vrot.slane %v8348, 5
      %v8351 = vsel %vm365, %v8346, %v8350
      %v8352 = vshrl.u32 %v7699, 16
      %v8354 = vrot.slane %v8352, 4
      %v8355 = vor.u32 %v8354, %v8350
      %v8356 = vrot.slane %v8355, 4
      %v8358 = vshll.u32 %v7700, 16
      %v8360 = vrot.slane %v8358, 5
      %v8361 = vsel %vm365, %v8356, %v8360
      %v8362 = vshrl.u32 %v7700, 16
      %v8364 = vrot.slane %v8362, 4
      %v8365 = vor.u32 %v8364, %v8360
      %v8366 = vrot.slane %v8365, 4
      %v8368 = vshll.u32 %v7701, 16
      %v8370 = vrot.slane %v8368, 5
      %v8371 = vsel %vm365, %v8366, %v8370
      %v8372 = vshrl.u32 %v7701, 16
      %v8374 = vrot.slane %v8372, 4
      %v8375 = vor.u32 %v8374, %v8370
      %v8376 = vrot.slane %v8375, 4
      %v8378 = vshll.u32 %v7720, 16
      %v8380 = vrot.slane %v8378, 5
      %v8381 = vsel %vm365, %v8376, %v8380
      %v8383 = vshrl.u32 %v7702, 16
      %v8385 = vrot.slane %v8383, 4
      %v8386 = vshll.u32 %v7702, 16
      %v8388 = vrot.slane %v8386, 5
      %v8389 = vor.u32 %v8385, %v8388
      %v8390 = vrot.slane %v8389, 4
      %v8392 = vshll.u32 %v7703, 16
      %v8394 = vrot.slane %v8392, 5
      %v8395 = vsel %vm365, %v8390, %v8394
      %v8396 = vshrl.u32 %v7703, 16
      %v8398 = vrot.slane %v8396, 4
      %v8399 = vor.u32 %v8398, %v8394
      %v8400 = vrot.slane %v8399, 4
      %v8402 = vshll.u32 %v7704, 16
      %v8404 = vrot.slane %v8402, 5
      %v8405 = vsel %vm365, %v8400, %v8404
      %v8406 = vshrl.u32 %v7704, 16
      %v8408 = vrot.slane %v8406, 4
      %v8409 = vor.u32 %v8408, %v8404
      %v8410 = vrot.slane %v8409, 4
      %v8412 = vshll.u32 %v7705, 16
      %v8414 = vrot.slane %v8412, 5
      %v8415 = vsel %vm365, %v8410, %v8414
      %v8416 = vshrl.u32 %v7705, 16
      %v8418 = vrot.slane %v8416, 4
      %v8419 = vor.u32 %v8418, %v8414
      %v8420 = vrot.slane %v8419, 4
      %v8422 = vshll.u32 %v7721, 16
      %v8424 = vrot.slane %v8422, 5
      %v8425 = vsel %vm365, %v8420, %v8424
      %v8426 = vld [vmem:[%s7641] sm:$0xe]
      %v8427 = vld [vmem:[%s7641 + $0x14] sm:$0xe]
      %v8428 = vld [vmem:[%s7641 + $0x28] sm:$0xe]
      %v8429 = vld [vmem:[%s7641 + $0x3c] sm:$0xe]
      %v8430 = vld [vmem:[%s7641 + $0x50] sm:$0xe]
      %v8431 = vld [vmem:[%s7641 + $0x64] sm:$0xe]
      %v8432 = vld [vmem:[%s7641 + $0x78] sm:$0xe]
      %v8433 = vld [vmem:[%s7641 + $0x8c] sm:$0xe]
      %v8434 = vld [vmem:[%s7641 + $0xa0] sm:$0xe]
      %v8435 = vld [vmem:[%s7641 + $0xb4] sm:$0xe]
      %v8436 = vld [vmem:[%s7641 + $0xc8] sm:$0xe]
      %v8437 = vld [vmem:[%s7641 + $0xdc] sm:$0xe]
      %v8438 = vld [vmem:[%s7641 + $0xf0] sm:$0xe]
      %v8439 = vld [vmem:[%s7641 + $0x104] sm:$0xe]
      %v8440 = vld [vmem:[%s7641 + $0x118] sm:$0xe]
      %v8441 = vld [vmem:[%s7641 + $0x12c] sm:$0xe]
      %v8522 = vrot.slane %v8426, 5
      %v8523 = vrot.slane %v8522, 4
      %v8524 = vrot.slane %v7643, 5
      %v8525 = vsel %vm1250, %v8523, %v8524
      %v8526 = vrot.slane %v8524, 4
      %v8527 = vrot.slane %v7644, 5
      %v8528 = vsel %vm1250, %v8526, %v8527
      %v8529 = vrot.slane %v8527, 4
      %v8530 = vrot.slane %v7645, 5
      %v8531 = vsel %vm1250, %v8529, %v8530
      %v8532 = vrot.slane %v8530, 4
      %v8533 = vrot.slane %v7706, 5
      %v8534 = vsel %vm1250, %v8532, %v8533
      %v8535 = vrot.slane %v8427, 5
      %v8536 = vrot.slane %v8535, 4
      %v8537 = vrot.slane %v7647, 5
      %v8538 = vsel %vm1250, %v8536, %v8537
      %v8539 = vrot.slane %v8537, 4
      %v8540 = vrot.slane %v7648, 5
      %v8541 = vsel %vm1250, %v8539, %v8540
      %v8542 = vrot.slane %v8540, 4
      %v8543 = vrot.slane %v7649, 5
      %v8544 = vsel %vm1250, %v8542, %v8543
      %v8545 = vrot.slane %v8543, 4
      %v8546 = vrot.slane %v7707, 5
      %v8547 = vsel %vm1250, %v8545, %v8546
      %v8548 = vrot.slane %v8428, 5
      %v8549 = vrot.slane %v8548, 4
      %v8550 = vrot.slane %v7651, 5
      %v8551 = vsel %vm1250, %v8549, %v8550
      %v8552 = vrot.slane %v8550, 4
      %v8553 = vrot.slane %v7652, 5
      %v8554 = vsel %vm1250, %v8552, %v8553
      %v8555 = vrot.slane %v8553, 4
      %v8556 = vrot.slane %v7653, 5
      %v8557 = vsel %vm1250, %v8555, %v8556
      %v8558 = vrot.slane %v8556, 4
      %v8559 = vrot.slane %v7708, 5
      %v8560 = vsel %vm1250, %v8558, %v8559
      %v8561 = vrot.slane %v8429, 5
      %v8562 = vrot.slane %v8561, 4
      %v8563 = vrot.slane %v7655, 5
      %v8564 = vsel %vm1250, %v8562, %v8563
      %v8565 = vrot.slane %v8563, 4
      %v8566 = vrot.slane %v7656, 5
      %v8567 = vsel %vm1250, %v8565, %v8566
      %v8568 = vrot.slane %v8566, 4
      %v8569 = vrot.slane %v7657, 5
      %v8570 = vsel %vm1250, %v8568, %v8569
      %v8571 = vrot.slane %v8569, 4
      %v8572 = vrot.slane %v7709, 5
      %v8573 = vsel %vm1250, %v8571, %v8572
      %v8574 = vrot.slane %v8430, 5
      %v8575 = vrot.slane %v8574, 4
      %v8576 = vrot.slane %v7659, 5
      %v8577 = vsel %vm1250, %v8575, %v8576
      %v8578 = vrot.slane %v8576, 4
      %v8579 = vrot.slane %v7660, 5
      %v8580 = vsel %vm1250, %v8578, %v8579
      %v8581 = vrot.slane %v8579, 4
      %v8582 = vrot.slane %v7661, 5
      %v8583 = vsel %vm1250, %v8581, %v8582
      %v8584 = vrot.slane %v8582, 4
      %v8585 = vrot.slane %v7710, 5
      %v8586 = vsel %vm1250, %v8584, %v8585
      %v8587 = vrot.slane %v8431, 5
      %v8588 = vrot.slane %v8587, 4
      %v8589 = vrot.slane %v7663, 5
      %v8590 = vsel %vm1250, %v8588, %v8589
      %v8591 = vrot.slane %v8589, 4
      %v8592 = vrot.slane %v7664, 5
      %v8593 = vsel %vm1250, %v8591, %v8592
      %v8594 = vrot.slane %v8592, 4
      %v8595 = vrot.slane %v7665, 5
      %v8596 = vsel %vm1250, %v8594, %v8595
      %v8597 = vrot.slane %v8595, 4
      %v8598 = vrot.slane %v7711, 5
      %v8599 = vsel %vm1250, %v8597, %v8598
      %v8600 = vrot.slane %v8432, 5
      %v8601 = vrot.slane %v8600, 4
      %v8602 = vrot.slane %v7667, 5
      %v8603 = vsel %vm1250, %v8601, %v8602
      %v8604 = vrot.slane %v8602, 4
      %v8605 = vrot.slane %v7668, 5
      %v8606 = vsel %vm1250, %v8604, %v8605
      %v8607 = vrot.slane %v8605, 4
      %v8608 = vrot.slane %v7669, 5
      %v8609 = vsel %vm1250, %v8607, %v8608
      %v8610 = vrot.slane %v8608, 4
      %v8611 = vrot.slane %v7712, 5
      %v8612 = vsel %vm1250, %v8610, %v8611
      %v8613 = vrot.slane %v8433, 5
      %v8614 = vrot.slane %v8613, 4
      %v8615 = vrot.slane %v7671, 5
      %v8616 = vsel %vm1250, %v8614, %v8615
      %v8617 = vrot.slane %v8615, 4
      %v8618 = vrot.slane %v7672, 5
      %v8619 = vsel %vm1250, %v8617, %v8618
      %v8620 = vrot.slane %v8618, 4
      %v8621 = vrot.slane %v7673, 5
      %v8622 = vsel %vm1250, %v8620, %v8621
      %v8623 = vrot.slane %v8621, 4
      %v8624 = vrot.slane %v7713, 5
      %v8625 = vsel %vm1250, %v8623, %v8624
      %v8626 = vrot.slane %v8434, 5
      %v8627 = vrot.slane %v8626, 4
      %v8628 = vrot.slane %v7675, 5
      %v8629 = vsel %vm1250, %v8627, %v8628
      %v8630 = vrot.slane %v8628, 4
      %v8631 = vrot.slane %v7676, 5
      %v8632 = vsel %vm1250, %v8630, %v8631
      %v8633 = vrot.slane %v8631, 4
      %v8634 = vrot.slane %v7677, 5
      %v8635 = vsel %vm1250, %v8633, %v8634
      %v8636 = vrot.slane %v8634, 4
      %v8637 = vrot.slane %v7714, 5
      %v8638 = vsel %vm1250, %v8636, %v8637
      %v8639 = vrot.slane %v8435, 5
      %v8640 = vrot.slane %v8639, 4
      %v8641 = vrot.slane %v7679, 5
      %v8642 = vsel %vm1250, %v8640, %v8641
      %v8643 = vrot.slane %v8641, 4
      %v8644 = vrot.slane %v7680, 5
      %v8645 = vsel %vm1250, %v8643, %v8644
      %v8646 = vrot.slane %v8644, 4
      %v8647 = vrot.slane %v7681, 5
      %v8648 = vsel %vm1250, %v8646, %v8647
      %v8649 = vrot.slane %v8647, 4
      %v8650 = vrot.slane %v7715, 5
      %v8651 = vsel %vm1250, %v8649, %v8650
      %v8652 = vrot.slane %v8436, 5
      %v8653 = vrot.slane %v8652, 4
      %v8654 = vrot.slane %v7683, 5
      %v8655 = vsel %vm1250, %v8653, %v8654
      %v8656 = vrot.slane %v8654, 4
      %v8657 = vrot.slane %v7684, 5
      %v8658 = vsel %vm1250, %v8656, %v8657
      %v8659 = vrot.slane %v8657, 4
      %v8660 = vrot.slane %v7685, 5
      %v8661 = vsel %vm1250, %v8659, %v8660
      %v8662 = vrot.slane %v8660, 4
      %v8663 = vrot.slane %v7716, 5
      %v8664 = vsel %vm1250, %v8662, %v8663
      %v8665 = vrot.slane %v8437, 5
      %v8666 = vrot.slane %v8665, 4
      %v8667 = vrot.slane %v7687, 5
      %v8668 = vsel %vm1250, %v8666, %v8667
      %v8669 = vrot.slane %v8667, 4
      %v8670 = vrot.slane %v7688, 5
      %v8671 = vsel %vm1250, %v8669, %v8670
      %v8672 = vrot.slane %v8670, 4
      %v8673 = vrot.slane %v7689, 5
      %v8674 = vsel %vm1250, %v8672, %v8673
      %v8675 = vrot.slane %v8673, 4
      %v8676 = vrot.slane %v7717, 5
      %v8677 = vsel %vm1250, %v8675, %v8676
      %v8678 = vrot.slane %v8438, 5
      %v8679 = vrot.slane %v8678, 4
      %v8680 = vrot.slane %v7691, 5
      %v8681 = vsel %vm1250, %v8679, %v8680
      %v8682 = vrot.slane %v8680, 4
      %v8683 = vrot.slane %v7692, 5
      %v8684 = vsel %vm1250, %v8682, %v8683
      %v8685 = vrot.slane %v8683, 4
      %v8686 = vrot.slane %v7693, 5
      %v8687 = vsel %vm1250, %v8685, %v8686
      %v8688 = vrot.slane %v8686, 4
      %v8689 = vrot.slane %v7718, 5
      %v8690 = vsel %vm1250, %v8688, %v8689
      %v8691 = vrot.slane %v8439, 5
      %v8692 = vrot.slane %v8691, 4
      %v8693 = vrot.slane %v7695, 5
      %v8694 = vsel %vm1250, %v8692, %v8693
      %v8695 = vrot.slane %v8693, 4
      %v8696 = vrot.slane %v7696, 5
      %v8697 = vsel %vm1250, %v8695, %v8696
      %v8698 = vrot.slane %v8696, 4
      %v8699 = vrot.slane %v7697, 5
      %v8700 = vsel %vm1250, %v8698, %v8699
      %v8701 = vrot.slane %v8699, 4
      %v8702 = vrot.slane %v7719, 5
      %v8703 = vsel %vm1250, %v8701, %v8702
      %v8704 = vrot.slane %v8440, 5
      %v8705 = vrot.slane %v8704, 4
      %v8706 = vrot.slane %v7699, 5
      %v8707 = vsel %vm1250, %v8705, %v8706
      %v8708 = vrot.slane %v8706, 4
      %v8709 = vrot.slane %v7700, 5
      %v8710 = vsel %vm1250, %v8708, %v8709
      %v8711 = vrot.slane %v8709, 4
      %v8712 = vrot.slane %v7701, 5
      %v8713 = vsel %vm1250, %v8711, %v8712
      %v8714 = vrot.slane %v8712, 4
      %v8715 = vrot.slane %v7720, 5
      %v8716 = vsel %vm1250, %v8714, %v8715
      %v8717 = vrot.slane %v8441, 5
      %v8718 = vrot.slane %v8717, 4
      %v8719 = vrot.slane %v7703, 5
      %v8720 = vsel %vm1250, %v8718, %v8719
      %v8721 = vrot.slane %v8719, 4
      %v8722 = vrot.slane %v7704, 5
      %v8723 = vsel %vm1250, %v8721, %v8722
      %v8724 = vrot.slane %v8722, 4
      %v8725 = vrot.slane %v7705, 5
      %v8726 = vsel %vm1250, %v8724, %v8725
      %v8727 = vrot.slane %v8725, 4
      %v8728 = vrot.slane %v7721, 5
      %v8729 = vsel %vm1250, %v8727, %v8728
      %v8746 = vunpack.c.l.b16 %v5464
      %v8747 = vunpack.c.l.b16 %v5465
      %v8748 = vunpack.c.l.b16 %v5466
      %v8749 = vunpack.c.l.b16 %v5467
      %v8750 = vunpack.c.l.b16 %v5468
      %v8751 = vunpack.c.l.b16 %v5469
      %v8752 = vunpack.c.l.b16 %v5470
      %v8753 = vunpack.c.l.b16 %v5471
      %v8754 = vunpack.c.l.b16 %v5472
      %v8755 = vunpack.c.l.b16 %v5473
      %v8756 = vunpack.c.l.b16 %v5474
      %v8757 = vunpack.c.l.b16 %v5475
      %v8758 = vunpack.c.l.b16 %v5476
      %v8759 = vunpack.c.l.b16 %v5477
      %v8760 = vunpack.c.l.b16 %v5478
      %v8761 = vunpack.c.l.b16 %v5479
      %v8762 = vunpack.c.l.b16 %v5480
      %v8763 = vunpack.c.l.b16 %v5481
      %v8764 = vunpack.c.l.b16 %v5482
      %v8765 = vunpack.c.l.b16 %v5483
      %v8766 = vunpack.c.l.b16 %v5484
      %v8767 = vunpack.c.l.b16 %v5485
      %v8768 = vunpack.c.l.b16 %v5486
      %v8769 = vunpack.c.l.b16 %v5487
      %v8770 = vunpack.c.l.b16 %v5488
      %v8771 = vunpack.c.l.b16 %v5489
      %v8772 = vunpack.c.l.b16 %v5490
      %v8773 = vunpack.c.l.b16 %v5491
      %v8774 = vunpack.c.l.b16 %v5492
      %v8775 = vunpack.c.l.b16 %v5493
      %v8776 = vunpack.c.l.b16 %v5494
      %v8777 = vunpack.c.l.b16 %v5495
      %v8778 = vunpack.c.l.b16 %v5496
      %v8779 = vunpack.c.l.b16 %v5497
      %v8780 = vunpack.c.l.b16 %v5498
      %v8781 = vunpack.c.l.b16 %v5499
      %v8782 = vunpack.c.l.b16 %v5500
      %v8783 = vunpack.c.l.b16 %v5501
      %v8784 = vunpack.c.l.b16 %v5502
      %v8785 = vunpack.c.l.b16 %v5503
      %v8786 = vunpack.c.l.b16 %v5504
      %v8787 = vunpack.c.l.b16 %v5505
      %v8788 = vunpack.c.l.b16 %v5506
      %v8789 = vunpack.c.l.b16 %v5507
      %v8790 = vunpack.c.l.b16 %v5508
      %v8791 = vunpack.c.l.b16 %v5509
      %v8792 = vunpack.c.l.b16 %v5510
      %v8793 = vunpack.c.l.b16 %v5511
      %v8794 = vunpack.c.l.b16 %v5512
      %v8795 = vunpack.c.l.b16 %v5513
      %v8796 = vunpack.c.l.b16 %v5514
      %v8797 = vunpack.c.l.b16 %v5515
      %v8798 = vunpack.c.l.b16 %v5516
      %v8799 = vunpack.c.l.b16 %v5517
      %v8800 = vunpack.c.l.b16 %v5518
      %v8801 = vunpack.c.l.b16 %v5519
      %v8802 = vunpack.c.l.b16 %v5520
      %v8803 = vunpack.c.l.b16 %v5521
      %v8804 = vunpack.c.l.b16 %v5522
      %v8805 = vunpack.c.l.b16 %v5523
      %v8806 = vunpack.c.l.b16 %v5524
      %v8807 = vunpack.c.l.b16 %v5525
      %v8808 = vunpack.c.l.b16 %v5526
      %v8809 = vunpack.c.l.b16 %v5527
      %v8810 = vpack.c.b16 %v8747, %v8746
      %v8811 = vpack.c.b16 %v8749, %v8748
      %v8812 = vpack.c.b16 %v8751, %v8750
      %v8813 = vpack.c.b16 %v8753, %v8752
      %v8814 = vpack.c.b16 %v8755, %v8754
      %v8815 = vpack.c.b16 %v8757, %v8756
      %v8816 = vpack.c.b16 %v8759, %v8758
      %v8817 = vpack.c.b16 %v8761, %v8760
      %v8818 = vpack.c.b16 %v8763, %v8762
      %v8819 = vpack.c.b16 %v8765, %v8764
      %v8820 = vpack.c.b16 %v8767, %v8766
      %v8821 = vpack.c.b16 %v8769, %v8768
      %v8822 = vpack.c.b16 %v8771, %v8770
      %v8823 = vpack.c.b16 %v8773, %v8772
      %v8824 = vpack.c.b16 %v8775, %v8774
      %v8825 = vpack.c.b16 %v8777, %v8776
      %v8826 = vpack.c.b16 %v8779, %v8778
      %v8827 = vpack.c.b16 %v8781, %v8780
      %v8828 = vpack.c.b16 %v8783, %v8782
      %v8829 = vpack.c.b16 %v8785, %v8784
      %v8830 = vpack.c.b16 %v8787, %v8786
      %v8831 = vpack.c.b16 %v8789, %v8788
      %v8832 = vpack.c.b16 %v8791, %v8790
      %v8833 = vpack.c.b16 %v8793, %v8792
      %v8834 = vpack.c.b16 %v8795, %v8794
      %v8835 = vpack.c.b16 %v8797, %v8796
      %v8836 = vpack.c.b16 %v8799, %v8798
      %v8837 = vpack.c.b16 %v8801, %v8800
      %v8838 = vpack.c.b16 %v8803, %v8802
      %v8839 = vpack.c.b16 %v8805, %v8804
      %v8840 = vpack.c.b16 %v8807, %v8806
      %v8841 = vpack.c.b16 %v8809, %v8808
      %v8874 = vunpack.c.l.b16 %v5557
      %v8875 = vunpack.c.l.b16 %v5567
      %v8876 = vunpack.c.l.b16 %v5577
      %v8877 = vunpack.c.l.b16 %v5587
      %v8878 = vunpack.c.l.b16 %v5601
      %v8879 = vunpack.c.l.b16 %v5611
      %v8880 = vunpack.c.l.b16 %v5621
      %v8881 = vunpack.c.l.b16 %v5631
      %v8882 = vunpack.c.l.b16 %v5645
      %v8883 = vunpack.c.l.b16 %v5655
      %v8884 = vunpack.c.l.b16 %v5665
      %v8885 = vunpack.c.l.b16 %v5675
      %v8886 = vunpack.c.l.b16 %v5689
      %v8887 = vunpack.c.l.b16 %v5699
      %v8888 = vunpack.c.l.b16 %v5709
      %v8889 = vunpack.c.l.b16 %v5719
      %v8890 = vunpack.c.l.b16 %v5733
      %v8891 = vunpack.c.l.b16 %v5743
      %v8892 = vunpack.c.l.b16 %v5753
      %v8893 = vunpack.c.l.b16 %v5763
      %v8894 = vunpack.c.l.b16 %v5777
      %v8895 = vunpack.c.l.b16 %v5787
      %v8896 = vunpack.c.l.b16 %v5797
      %v8897 = vunpack.c.l.b16 %v5807
      %v8898 = vunpack.c.l.b16 %v5821
      %v8899 = vunpack.c.l.b16 %v5831
      %v8900 = vunpack.c.l.b16 %v5841
      %v8901 = vunpack.c.l.b16 %v5851
      %v8902 = vunpack.c.l.b16 %v5865
      %v8903 = vunpack.c.l.b16 %v5875
      %v8904 = vunpack.c.l.b16 %v5885
      %v8905 = vunpack.c.l.b16 %v5895
      %v8906 = vunpack.c.l.b16 %v5909
      %v8907 = vunpack.c.l.b16 %v5919
      %v8908 = vunpack.c.l.b16 %v5929
      %v8909 = vunpack.c.l.b16 %v5939
      %v8910 = vunpack.c.l.b16 %v5953
      %v8911 = vunpack.c.l.b16 %v5963
      %v8912 = vunpack.c.l.b16 %v5973
      %v8913 = vunpack.c.l.b16 %v5983
      %v8914 = vunpack.c.l.b16 %v5997
      %v8915 = vunpack.c.l.b16 %v6007
      %v8916 = vunpack.c.l.b16 %v6017
      %v8917 = vunpack.c.l.b16 %v6027
      %v8918 = vunpack.c.l.b16 %v6041
      %v8919 = vunpack.c.l.b16 %v6051
      %v8920 = vunpack.c.l.b16 %v6061
      %v8921 = vunpack.c.l.b16 %v6071
      %v8922 = vunpack.c.l.b16 %v6085
      %v8923 = vunpack.c.l.b16 %v6095
      %v8924 = vunpack.c.l.b16 %v6105
      %v8925 = vunpack.c.l.b16 %v6115
      %v8926 = vunpack.c.l.b16 %v6129
      %v8927 = vunpack.c.l.b16 %v6139
      %v8928 = vunpack.c.l.b16 %v6149
      %v8929 = vunpack.c.l.b16 %v6159
      %v8930 = vunpack.c.l.b16 %v6173
      %v8931 = vunpack.c.l.b16 %v6183
      %v8932 = vunpack.c.l.b16 %v6193
      %v8933 = vunpack.c.l.b16 %v6203
      %v8934 = vunpack.c.l.b16 %v6217
      %v8935 = vunpack.c.l.b16 %v6227
      %v8936 = vunpack.c.l.b16 %v6237
      %v8937 = vunpack.c.l.b16 %v6247
      %v8938 = vpack.c.b16 %v8875, %v8874
      %v8939 = vpack.c.b16 %v8877, %v8876
      %v8940 = vpack.c.b16 %v8879, %v8878
      %v8941 = vpack.c.b16 %v8881, %v8880
      %v8942 = vpack.c.b16 %v8883, %v8882
      %v8943 = vpack.c.b16 %v8885, %v8884
      %v8944 = vpack.c.b16 %v8887, %v8886
      %v8945 = vpack.c.b16 %v8889, %v8888
      %v8946 = vpack.c.b16 %v8891, %v8890
      %v8947 = vpack.c.b16 %v8893, %v8892
      %v8948 = vpack.c.b16 %v8895, %v8894
      %v8949 = vpack.c.b16 %v8897, %v8896
      %v8950 = vpack.c.b16 %v8899, %v8898
      %v8951 = vpack.c.b16 %v8901, %v8900
      %v8952 = vpack.c.b16 %v8903, %v8902
      %v8953 = vpack.c.b16 %v8905, %v8904
      %v8954 = vpack.c.b16 %v8907, %v8906
      %v8955 = vpack.c.b16 %v8909, %v8908
      %v8956 = vpack.c.b16 %v8911, %v8910
      %v8957 = vpack.c.b16 %v8913, %v8912
      %v8958 = vpack.c.b16 %v8915, %v8914
      %v8959 = vpack.c.b16 %v8917, %v8916
      %v8960 = vpack.c.b16 %v8919, %v8918
      %v8961 = vpack.c.b16 %v8921, %v8920
      %v8962 = vpack.c.b16 %v8923, %v8922
      %v8963 = vpack.c.b16 %v8925, %v8924
      %v8964 = vpack.c.b16 %v8927, %v8926
      %v8965 = vpack.c.b16 %v8929, %v8928
      %v8966 = vpack.c.b16 %v8931, %v8930
      %v8967 = vpack.c.b16 %v8933, %v8932
      %v8968 = vpack.c.b16 %v8935, %v8934
      %v8969 = vpack.c.b16 %v8937, %v8936
      %v9002 = vunpack.c.l.b16 %v6347
      %v9003 = vunpack.c.l.b16 %v6350
      %v9004 = vunpack.c.l.b16 %v6353
      %v9005 = vunpack.c.l.b16 %v6356
      %v9006 = vunpack.c.l.b16 %v6360
      %v9007 = vunpack.c.l.b16 %v6363
      %v9008 = vunpack.c.l.b16 %v6366
      %v9009 = vunpack.c.l.b16 %v6369
      %v9010 = vunpack.c.l.b16 %v6373
      %v9011 = vunpack.c.l.b16 %v6376
      %v9012 = vunpack.c.l.b16 %v6379
      %v9013 = vunpack.c.l.b16 %v6382
      %v9014 = vunpack.c.l.b16 %v6386
      %v9015 = vunpack.c.l.b16 %v6389
      %v9016 = vunpack.c.l.b16 %v6392
      %v9017 = vunpack.c.l.b16 %v6395
      %v9018 = vunpack.c.l.b16 %v6399
      %v9019 = vunpack.c.l.b16 %v6402
      %v9020 = vunpack.c.l.b16 %v6405
      %v9021 = vunpack.c.l.b16 %v6408
      %v9022 = vunpack.c.l.b16 %v6412
      %v9023 = vunpack.c.l.b16 %v6415
      %v9024 = vunpack.c.l.b16 %v6418
      %v9025 = vunpack.c.l.b16 %v6421
      %v9026 = vunpack.c.l.b16 %v6425
      %v9027 = vunpack.c.l.b16 %v6428
      %v9028 = vunpack.c.l.b16 %v6431
      %v9029 = vunpack.c.l.b16 %v6434
      %v9030 = vunpack.c.l.b16 %v6438
      %v9031 = vunpack.c.l.b16 %v6441
      %v9032 = vunpack.c.l.b16 %v6444
      %v9033 = vunpack.c.l.b16 %v6447
      %v9034 = vunpack.c.l.b16 %v6451
      %v9035 = vunpack.c.l.b16 %v6454
      %v9036 = vunpack.c.l.b16 %v6457
      %v9037 = vunpack.c.l.b16 %v6460
      %v9038 = vunpack.c.l.b16 %v6464
      %v9039 = vunpack.c.l.b16 %v6467
      %v9040 = vunpack.c.l.b16 %v6470
      %v9041 = vunpack.c.l.b16 %v6473
      %v9042 = vunpack.c.l.b16 %v6477
      %v9043 = vunpack.c.l.b16 %v6480
      %v9044 = vunpack.c.l.b16 %v6483
      %v9045 = vunpack.c.l.b16 %v6486
      %v9046 = vunpack.c.l.b16 %v6490
      %v9047 = vunpack.c.l.b16 %v6493
      %v9048 = vunpack.c.l.b16 %v6496
      %v9049 = vunpack.c.l.b16 %v6499
      %v9050 = vunpack.c.l.b16 %v6503
      %v9051 = vunpack.c.l.b16 %v6506
      %v9052 = vunpack.c.l.b16 %v6509
      %v9053 = vunpack.c.l.b16 %v6512
      %v9054 = vunpack.c.l.b16 %v6516
      %v9055 = vunpack.c.l.b16 %v6519
      %v9056 = vunpack.c.l.b16 %v6522
      %v9057 = vunpack.c.l.b16 %v6525
      %v9058 = vunpack.c.l.b16 %v6529
      %v9059 = vunpack.c.l.b16 %v6532
      %v9060 = vunpack.c.l.b16 %v6535
      %v9061 = vunpack.c.l.b16 %v6538
      %v9062 = vunpack.c.l.b16 %v6542
      %v9063 = vunpack.c.l.b16 %v6545
      %v9064 = vunpack.c.l.b16 %v6548
      %v9065 = vunpack.c.l.b16 %v6551
      %v9066 = vpack.c.b16 %v9003, %v9002
      %v9067 = vpack.c.b16 %v9005, %v9004
      %v9068 = vpack.c.b16 %v9007, %v9006
      %v9069 = vpack.c.b16 %v9009, %v9008
      %v9070 = vpack.c.b16 %v9011, %v9010
      %v9071 = vpack.c.b16 %v9013, %v9012
      %v9072 = vpack.c.b16 %v9015, %v9014
      %v9073 = vpack.c.b16 %v9017, %v9016
      %v9074 = vpack.c.b16 %v9019, %v9018
      %v9075 = vpack.c.b16 %v9021, %v9020
      %v9076 = vpack.c.b16 %v9023, %v9022
      %v9077 = vpack.c.b16 %v9025, %v9024
      %v9078 = vpack.c.b16 %v9027, %v9026
      %v9079 = vpack.c.b16 %v9029, %v9028
      %v9080 = vpack.c.b16 %v9031, %v9030
      %v9081 = vpack.c.b16 %v9033, %v9032
      %v9082 = vpack.c.b16 %v9035, %v9034
      %v9083 = vpack.c.b16 %v9037, %v9036
      %v9084 = vpack.c.b16 %v9039, %v9038
      %v9085 = vpack.c.b16 %v9041, %v9040
      %v9086 = vpack.c.b16 %v9043, %v9042
      %v9087 = vpack.c.b16 %v9045, %v9044
      %v9088 = vpack.c.b16 %v9047, %v9046
      %v9089 = vpack.c.b16 %v9049, %v9048
      %v9090 = vpack.c.b16 %v9051, %v9050
      %v9091 = vpack.c.b16 %v9053, %v9052
      %v9092 = vpack.c.b16 %v9055, %v9054
      %v9093 = vpack.c.b16 %v9057, %v9056
      %v9094 = vpack.c.b16 %v9059, %v9058
      %v9095 = vpack.c.b16 %v9061, %v9060
      %v9096 = vpack.c.b16 %v9063, %v9062
      %v9097 = vpack.c.b16 %v9065, %v9064
      %v9146 = vunpack.c.l.b16 %v6553
      %v9147 = vunpack.c.l.b16 %v6554
      %v9148 = vunpack.c.l.b16 %v6555
      %v9149 = vunpack.c.l.b16 %v6556
      %v9150 = vunpack.c.l.b16 %v6557
      %v9151 = vunpack.c.l.b16 %v6558
      %v9152 = vunpack.c.l.b16 %v6559
      %v9153 = vunpack.c.l.b16 %v6560
      %v9154 = vunpack.c.l.b16 %v6561
      %v9155 = vunpack.c.l.b16 %v6562
      %v9156 = vunpack.c.l.b16 %v6563
      %v9157 = vunpack.c.l.b16 %v6564
      %v9158 = vunpack.c.l.b16 %v6565
      %v9159 = vunpack.c.l.b16 %v6566
      %v9160 = vunpack.c.l.b16 %v6567
      %v9161 = vunpack.c.l.b16 %v6568
      %v9162 = vunpack.c.l.b16 %v6569
      %v9163 = vunpack.c.l.b16 %v6570
      %v9164 = vunpack.c.l.b16 %v6571
      %v9165 = vunpack.c.l.b16 %v6572
      %v9166 = vunpack.c.l.b16 %v6573
      %v9167 = vunpack.c.l.b16 %v6574
      %v9168 = vunpack.c.l.b16 %v6575
      %v9169 = vunpack.c.l.b16 %v6576
      %v9170 = vunpack.c.l.b16 %v6577
      %v9171 = vunpack.c.l.b16 %v6578
      %v9172 = vunpack.c.l.b16 %v6579
      %v9173 = vunpack.c.l.b16 %v6580
      %v9174 = vunpack.c.l.b16 %v6581
      %v9175 = vunpack.c.l.b16 %v6582
      %v9176 = vunpack.c.l.b16 %v6583
      %v9177 = vunpack.c.l.b16 %v6584
      %v9178 = vunpack.c.l.b16 %v6585
      %v9179 = vunpack.c.l.b16 %v6586
      %v9180 = vunpack.c.l.b16 %v6587
      %v9181 = vunpack.c.l.b16 %v6588
      %v9182 = vunpack.c.l.b16 %v6589
      %v9183 = vunpack.c.l.b16 %v6590
      %v9184 = vunpack.c.l.b16 %v6591
      %v9185 = vunpack.c.l.b16 %v6592
      %v9186 = vunpack.c.l.b16 %v6593
      %v9187 = vunpack.c.l.b16 %v6594
      %v9188 = vunpack.c.l.b16 %v6595
      %v9189 = vunpack.c.l.b16 %v6596
      %v9190 = vunpack.c.l.b16 %v6597
      %v9191 = vunpack.c.l.b16 %v6598
      %v9192 = vunpack.c.l.b16 %v6599
      %v9193 = vunpack.c.l.b16 %v6600
      %v9194 = vunpack.c.l.b16 %v6601
      %v9195 = vunpack.c.l.b16 %v6602
      %v9196 = vunpack.c.l.b16 %v6603
      %v9197 = vunpack.c.l.b16 %v6604
      %v9198 = vunpack.c.l.b16 %v6605
      %v9199 = vunpack.c.l.b16 %v6606
      %v9200 = vunpack.c.l.b16 %v6607
      %v9201 = vunpack.c.l.b16 %v6608
      %v9202 = vunpack.c.l.b16 %v6609
      %v9203 = vunpack.c.l.b16 %v6610
      %v9204 = vunpack.c.l.b16 %v6611
      %v9205 = vunpack.c.l.b16 %v6612
      %v9206 = vunpack.c.l.b16 %v6613
      %v9207 = vunpack.c.l.b16 %v6614
      %v9208 = vunpack.c.l.b16 %v6615
      %v9209 = vunpack.c.l.b16 %v6616
      %v9210 = vpack.c.b16 %v9147, %v9146
      %v9211 = vpack.c.b16 %v9149, %v9148
      %v9212 = vpack.c.b16 %v9151, %v9150
      %v9213 = vpack.c.b16 %v9153, %v9152
      %v9214 = vpack.c.b16 %v9155, %v9154
      %v9215 = vpack.c.b16 %v9157, %v9156
      %v9216 = vpack.c.b16 %v9159, %v9158
      %v9217 = vpack.c.b16 %v9161, %v9160
      %v9218 = vpack.c.b16 %v9163, %v9162
      %v9219 = vpack.c.b16 %v9165, %v9164
      %v9220 = vpack.c.b16 %v9167, %v9166
      %v9221 = vpack.c.b16 %v9169, %v9168
      %v9222 = vpack.c.b16 %v9171, %v9170
      %v9223 = vpack.c.b16 %v9173, %v9172
      %v9224 = vpack.c.b16 %v9175, %v9174
      %v9225 = vpack.c.b16 %v9177, %v9176
      %v9226 = vpack.c.b16 %v9179, %v9178
      %v9227 = vpack.c.b16 %v9181, %v9180
      %v9228 = vpack.c.b16 %v9183, %v9182
      %v9229 = vpack.c.b16 %v9185, %v9184
      %v9230 = vpack.c.b16 %v9187, %v9186
      %v9231 = vpack.c.b16 %v9189, %v9188
      %v9232 = vpack.c.b16 %v9191, %v9190
      %v9233 = vpack.c.b16 %v9193, %v9192
      %v9234 = vpack.c.b16 %v9195, %v9194
      %v9235 = vpack.c.b16 %v9197, %v9196
      %v9236 = vpack.c.b16 %v9199, %v9198
      %v9237 = vpack.c.b16 %v9201, %v9200
      %v9238 = vpack.c.b16 %v9203, %v9202
      %v9239 = vpack.c.b16 %v9205, %v9204
      %v9240 = vpack.c.b16 %v9207, %v9206
      %v9241 = vpack.c.b16 %v9209, %v9208
      %v9274 = vunpack.c.l.b16 %v6646
      %v9275 = vunpack.c.l.b16 %v6656
      %v9276 = vunpack.c.l.b16 %v6666
      %v9277 = vunpack.c.l.b16 %v6676
      %v9278 = vunpack.c.l.b16 %v6690
      %v9279 = vunpack.c.l.b16 %v6700
      %v9280 = vunpack.c.l.b16 %v6710
      %v9281 = vunpack.c.l.b16 %v6720
      %v9282 = vunpack.c.l.b16 %v6734
      %v9283 = vunpack.c.l.b16 %v6744
      %v9284 = vunpack.c.l.b16 %v6754
      %v9285 = vunpack.c.l.b16 %v6764
      %v9286 = vunpack.c.l.b16 %v6778
      %v9287 = vunpack.c.l.b16 %v6788
      %v9288 = vunpack.c.l.b16 %v6798
      %v9289 = vunpack.c.l.b16 %v6808
      %v9290 = vunpack.c.l.b16 %v6822
      %v9291 = vunpack.c.l.b16 %v6832
      %v9292 = vunpack.c.l.b16 %v6842
      %v9293 = vunpack.c.l.b16 %v6852
      %v9294 = vunpack.c.l.b16 %v6866
      %v9295 = vunpack.c.l.b16 %v6876
      %v9296 = vunpack.c.l.b16 %v6886
      %v9297 = vunpack.c.l.b16 %v6896
      %v9298 = vunpack.c.l.b16 %v6910
      %v9299 = vunpack.c.l.b16 %v6920
      %v9300 = vunpack.c.l.b16 %v6930
      %v9301 = vunpack.c.l.b16 %v6940
      %v9302 = vunpack.c.l.b16 %v6954
      %v9303 = vunpack.c.l.b16 %v6964
      %v9304 = vunpack.c.l.b16 %v6974
      %v9305 = vunpack.c.l.b16 %v6984
      %v9306 = vunpack.c.l.b16 %v6998
      %v9307 = vunpack.c.l.b16 %v7008
      %v9308 = vunpack.c.l.b16 %v7018
      %v9309 = vunpack.c.l.b16 %v7028
      %v9310 = vunpack.c.l.b16 %v7042
      %v9311 = vunpack.c.l.b16 %v7052
      %v9312 = vunpack.c.l.b16 %v7062
      %v9313 = vunpack.c.l.b16 %v7072
      %v9314 = vunpack.c.l.b16 %v7086
      %v9315 = vunpack.c.l.b16 %v7096
      %v9316 = vunpack.c.l.b16 %v7106
      %v9317 = vunpack.c.l.b16 %v7116
      %v9318 = vunpack.c.l.b16 %v7130
      %v9319 = vunpack.c.l.b16 %v7140
      %v9320 = vunpack.c.l.b16 %v7150
      %v9321 = vunpack.c.l.b16 %v7160
      %v9322 = vunpack.c.l.b16 %v7174
      %v9323 = vunpack.c.l.b16 %v7184
      %v9324 = vunpack.c.l.b16 %v7194
      %v9325 = vunpack.c.l.b16 %v7204
      %v9326 = vunpack.c.l.b16 %v7218
      %v9327 = vunpack.c.l.b16 %v7228
      %v9328 = vunpack.c.l.b16 %v7238
      %v9329 = vunpack.c.l.b16 %v7248
      %v9330 = vunpack.c.l.b16 %v7262
      %v9331 = vunpack.c.l.b16 %v7272
      %v9332 = vunpack.c.l.b16 %v7282
      %v9333 = vunpack.c.l.b16 %v7292
      %v9334 = vunpack.c.l.b16 %v7306
      %v9335 = vunpack.c.l.b16 %v7316
      %v9336 = vunpack.c.l.b16 %v7326
      %v9337 = vunpack.c.l.b16 %v7336
      %v9338 = vpack.c.b16 %v9275, %v9274
      %v9339 = vpack.c.b16 %v9277, %v9276
      %v9340 = vpack.c.b16 %v9279, %v9278
      %v9341 = vpack.c.b16 %v9281, %v9280
      %v9342 = vpack.c.b16 %v9283, %v9282
      %v9343 = vpack.c.b16 %v9285, %v9284
      %v9344 = vpack.c.b16 %v9287, %v9286
      %v9345 = vpack.c.b16 %v9289, %v9288
      %v9346 = vpack.c.b16 %v9291, %v9290
      %v9347 = vpack.c.b16 %v9293, %v9292
      %v9348 = vpack.c.b16 %v9295, %v9294
      %v9349 = vpack.c.b16 %v9297, %v9296
      %v9350 = vpack.c.b16 %v9299, %v9298
      %v9351 = vpack.c.b16 %v9301, %v9300
      %v9352 = vpack.c.b16 %v9303, %v9302
      %v9353 = vpack.c.b16 %v9305, %v9304
      %v9354 = vpack.c.b16 %v9307, %v9306
      %v9355 = vpack.c.b16 %v9309, %v9308
      %v9356 = vpack.c.b16 %v9311, %v9310
      %v9357 = vpack.c.b16 %v9313, %v9312
      %v9358 = vpack.c.b16 %v9315, %v9314
      %v9359 = vpack.c.b16 %v9317, %v9316
      %v9360 = vpack.c.b16 %v9319, %v9318
      %v9361 = vpack.c.b16 %v9321, %v9320
      %v9362 = vpack.c.b16 %v9323, %v9322
      %v9363 = vpack.c.b16 %v9325, %v9324
      %v9364 = vpack.c.b16 %v9327, %v9326
      %v9365 = vpack.c.b16 %v9329, %v9328
      %v9366 = vpack.c.b16 %v9331, %v9330
      %v9367 = vpack.c.b16 %v9333, %v9332
      %v9368 = vpack.c.b16 %v9335, %v9334
      %v9369 = vpack.c.b16 %v9337, %v9336
      %v9402 = vunpack.c.l.b16 %v7436
      %v9403 = vunpack.c.l.b16 %v7439
      %v9404 = vunpack.c.l.b16 %v7442
      %v9405 = vunpack.c.l.b16 %v7445
      %v9406 = vunpack.c.l.b16 %v7449
      %v9407 = vunpack.c.l.b16 %v7452
      %v9408 = vunpack.c.l.b16 %v7455
      %v9409 = vunpack.c.l.b16 %v7458
      %v9410 = vunpack.c.l.b16 %v7462
      %v9411 = vunpack.c.l.b16 %v7465
      %v9412 = vunpack.c.l.b16 %v7468
      %v9413 = vunpack.c.l.b16 %v7471
      %v9414 = vunpack.c.l.b16 %v7475
      %v9415 = vunpack.c.l.b16 %v7478
      %v9416 = vunpack.c.l.b16 %v7481
      %v9417 = vunpack.c.l.b16 %v7484
      %v9418 = vunpack.c.l.b16 %v7488
      %v9419 = vunpack.c.l.b16 %v7491
      %v9420 = vunpack.c.l.b16 %v7494
      %v9421 = vunpack.c.l.b16 %v7497
      %v9422 = vunpack.c.l.b16 %v7501
      %v9423 = vunpack.c.l.b16 %v7504
      %v9424 = vunpack.c.l.b16 %v7507
      %v9425 = vunpack.c.l.b16 %v7510
      %v9426 = vunpack.c.l.b16 %v7514
      %v9427 = vunpack.c.l.b16 %v7517
      %v9428 = vunpack.c.l.b16 %v7520
      %v9429 = vunpack.c.l.b16 %v7523
      %v9430 = vunpack.c.l.b16 %v7527
      %v9431 = vunpack.c.l.b16 %v7530
      %v9432 = vunpack.c.l.b16 %v7533
      %v9433 = vunpack.c.l.b16 %v7536
      %v9434 = vunpack.c.l.b16 %v7540
      %v9435 = vunpack.c.l.b16 %v7543
      %v9436 = vunpack.c.l.b16 %v7546
      %v9437 = vunpack.c.l.b16 %v7549
      %v9438 = vunpack.c.l.b16 %v7553
      %v9439 = vunpack.c.l.b16 %v7556
      %v9440 = vunpack.c.l.b16 %v7559
      %v9441 = vunpack.c.l.b16 %v7562
      %v9442 = vunpack.c.l.b16 %v7566
      %v9443 = vunpack.c.l.b16 %v7569
      %v9444 = vunpack.c.l.b16 %v7572
      %v9445 = vunpack.c.l.b16 %v7575
      %v9446 = vunpack.c.l.b16 %v7579
      %v9447 = vunpack.c.l.b16 %v7582
      %v9448 = vunpack.c.l.b16 %v7585
      %v9449 = vunpack.c.l.b16 %v7588
      %v9450 = vunpack.c.l.b16 %v7592
      %v9451 = vunpack.c.l.b16 %v7595
      %v9452 = vunpack.c.l.b16 %v7598
      %v9453 = vunpack.c.l.b16 %v7601
      %v9454 = vunpack.c.l.b16 %v7605
      %v9455 = vunpack.c.l.b16 %v7608
      %v9456 = vunpack.c.l.b16 %v7611
      %v9457 = vunpack.c.l.b16 %v7614
      %v9458 = vunpack.c.l.b16 %v7618
      %v9459 = vunpack.c.l.b16 %v7621
      %v9460 = vunpack.c.l.b16 %v7624
      %v9461 = vunpack.c.l.b16 %v7627
      %v9462 = vunpack.c.l.b16 %v7631
      %v9463 = vunpack.c.l.b16 %v7634
      %v9464 = vunpack.c.l.b16 %v7637
      %v9465 = vunpack.c.l.b16 %v7640
      %v9466 = vpack.c.b16 %v9403, %v9402
      %v9467 = vpack.c.b16 %v9405, %v9404
      %v9468 = vpack.c.b16 %v9407, %v9406
      %v9469 = vpack.c.b16 %v9409, %v9408
      %v9470 = vpack.c.b16 %v9411, %v9410
      %v9471 = vpack.c.b16 %v9413, %v9412
      %v9472 = vpack.c.b16 %v9415, %v9414
      %v9473 = vpack.c.b16 %v9417, %v9416
      %v9474 = vpack.c.b16 %v9419, %v9418
      %v9475 = vpack.c.b16 %v9421, %v9420
      %v9476 = vpack.c.b16 %v9423, %v9422
      %v9477 = vpack.c.b16 %v9425, %v9424
      %v9478 = vpack.c.b16 %v9427, %v9426
      %v9479 = vpack.c.b16 %v9429, %v9428
      %v9480 = vpack.c.b16 %v9431, %v9430
      %v9481 = vpack.c.b16 %v9433, %v9432
      %v9482 = vpack.c.b16 %v9435, %v9434
      %v9483 = vpack.c.b16 %v9437, %v9436
      %v9484 = vpack.c.b16 %v9439, %v9438
      %v9485 = vpack.c.b16 %v9441, %v9440
      %v9486 = vpack.c.b16 %v9443, %v9442
      %v9487 = vpack.c.b16 %v9445, %v9444
      %v9488 = vpack.c.b16 %v9447, %v9446
      %v9489 = vpack.c.b16 %v9449, %v9448
      %v9490 = vpack.c.b16 %v9451, %v9450
      %v9491 = vpack.c.b16 %v9453, %v9452
      %v9492 = vpack.c.b16 %v9455, %v9454
      %v9493 = vpack.c.b16 %v9457, %v9456
      %v9494 = vpack.c.b16 %v9459, %v9458
      %v9495 = vpack.c.b16 %v9461, %v9460
      %v9496 = vpack.c.b16 %v9463, %v9462
      %v9497 = vpack.c.b16 %v9465, %v9464
      %v9546 = vunpack.c.l.b16 %v7642
      %v9547 = vunpack.c.l.b16 %v7643
      %v9548 = vunpack.c.l.b16 %v7644
      %v9549 = vunpack.c.l.b16 %v7645
      %v9550 = vunpack.c.l.b16 %v7646
      %v9551 = vunpack.c.l.b16 %v7647
      %v9552 = vunpack.c.l.b16 %v7648
      %v9553 = vunpack.c.l.b16 %v7649
      %v9554 = vunpack.c.l.b16 %v7650
      %v9555 = vunpack.c.l.b16 %v7651
      %v9556 = vunpack.c.l.b16 %v7652
      %v9557 = vunpack.c.l.b16 %v7653
      %v9558 = vunpack.c.l.b16 %v7654
      %v9559 = vunpack.c.l.b16 %v7655
      %v9560 = vunpack.c.l.b16 %v7656
      %v9561 = vunpack.c.l.b16 %v7657
      %v9562 = vunpack.c.l.b16 %v7658
      %v9563 = vunpack.c.l.b16 %v7659
      %v9564 = vunpack.c.l.b16 %v7660
      %v9565 = vunpack.c.l.b16 %v7661
      %v9566 = vunpack.c.l.b16 %v7662
      %v9567 = vunpack.c.l.b16 %v7663
      %v9568 = vunpack.c.l.b16 %v7664
      %v9569 = vunpack.c.l.b16 %v7665
      %v9570 = vunpack.c.l.b16 %v7666
      %v9571 = vunpack.c.l.b16 %v7667
      %v9572 = vunpack.c.l.b16 %v7668
      %v9573 = vunpack.c.l.b16 %v7669
      %v9574 = vunpack.c.l.b16 %v7670
      %v9575 = vunpack.c.l.b16 %v7671
      %v9576 = vunpack.c.l.b16 %v7672
      %v9577 = vunpack.c.l.b16 %v7673
      %v9578 = vunpack.c.l.b16 %v7674
      %v9579 = vunpack.c.l.b16 %v7675
      %v9580 = vunpack.c.l.b16 %v7676
      %v9581 = vunpack.c.l.b16 %v7677
      %v9582 = vunpack.c.l.b16 %v7678
      %v9583 = vunpack.c.l.b16 %v7679
      %v9584 = vunpack.c.l.b16 %v7680
      %v9585 = vunpack.c.l.b16 %v7681
      %v9586 = vunpack.c.l.b16 %v7682
      %v9587 = vunpack.c.l.b16 %v7683
      %v9588 = vunpack.c.l.b16 %v7684
      %v9589 = vunpack.c.l.b16 %v7685
      %v9590 = vunpack.c.l.b16 %v7686
      %v9591 = vunpack.c.l.b16 %v7687
      %v9592 = vunpack.c.l.b16 %v7688
      %v9593 = vunpack.c.l.b16 %v7689
      %v9594 = vunpack.c.l.b16 %v7690
      %v9595 = vunpack.c.l.b16 %v7691
      %v9596 = vunpack.c.l.b16 %v7692
      %v9597 = vunpack.c.l.b16 %v7693
      %v9598 = vunpack.c.l.b16 %v7694
      %v9599 = vunpack.c.l.b16 %v7695
      %v9600 = vunpack.c.l.b16 %v7696
      %v9601 = vunpack.c.l.b16 %v7697
      %v9602 = vunpack.c.l.b16 %v7698
      %v9603 = vunpack.c.l.b16 %v7699
      %v9604 = vunpack.c.l.b16 %v7700
      %v9605 = vunpack.c.l.b16 %v7701
      %v9606 = vunpack.c.l.b16 %v7702
      %v9607 = vunpack.c.l.b16 %v7703
      %v9608 = vunpack.c.l.b16 %v7704
      %v9609 = vunpack.c.l.b16 %v7705
      %v9610 = vpack.c.b16 %v9547, %v9546
      %v9611 = vpack.c.b16 %v9549, %v9548
      %v9612 = vpack.c.b16 %v9551, %v9550
      %v9613 = vpack.c.b16 %v9553, %v9552
      %v9614 = vpack.c.b16 %v9555, %v9554
      %v9615 = vpack.c.b16 %v9557, %v9556
      %v9616 = vpack.c.b16 %v9559, %v9558
      %v9617 = vpack.c.b16 %v9561, %v9560
      %v9618 = vpack.c.b16 %v9563, %v9562
      %v9619 = vpack.c.b16 %v9565, %v9564
      %v9620 = vpack.c.b16 %v9567, %v9566
      %v9621 = vpack.c.b16 %v9569, %v9568
      %v9622 = vpack.c.b16 %v9571, %v9570
      %v9623 = vpack.c.b16 %v9573, %v9572
      %v9624 = vpack.c.b16 %v9575, %v9574
      %v9625 = vpack.c.b16 %v9577, %v9576
      %v9626 = vpack.c.b16 %v9579, %v9578
      %v9627 = vpack.c.b16 %v9581, %v9580
      %v9628 = vpack.c.b16 %v9583, %v9582
      %v9629 = vpack.c.b16 %v9585, %v9584
      %v9630 = vpack.c.b16 %v9587, %v9586
      %v9631 = vpack.c.b16 %v9589, %v9588
      %v9632 = vpack.c.b16 %v9591, %v9590
      %v9633 = vpack.c.b16 %v9593, %v9592
      %v9634 = vpack.c.b16 %v9595, %v9594
      %v9635 = vpack.c.b16 %v9597, %v9596
      %v9636 = vpack.c.b16 %v9599, %v9598
      %v9637 = vpack.c.b16 %v9601, %v9600
      %v9638 = vpack.c.b16 %v9603, %v9602
      %v9639 = vpack.c.b16 %v9605, %v9604
      %v9640 = vpack.c.b16 %v9607, %v9606
      %v9641 = vpack.c.b16 %v9609, %v9608
      %v9674 = vunpack.c.l.b16 %v7735
      %v9675 = vunpack.c.l.b16 %v7745
      %v9676 = vunpack.c.l.b16 %v7755
      %v9677 = vunpack.c.l.b16 %v7765
      %v9678 = vunpack.c.l.b16 %v7779
      %v9679 = vunpack.c.l.b16 %v7789
      %v9680 = vunpack.c.l.b16 %v7799
      %v9681 = vunpack.c.l.b16 %v7809
      %v9682 = vunpack.c.l.b16 %v7823
      %v9683 = vunpack.c.l.b16 %v7833
      %v9684 = vunpack.c.l.b16 %v7843
      %v9685 = vunpack.c.l.b16 %v7853
      %v9686 = vunpack.c.l.b16 %v7867
      %v9687 = vunpack.c.l.b16 %v7877
      %v9688 = vunpack.c.l.b16 %v7887
      %v9689 = vunpack.c.l.b16 %v7897
      %v9690 = vunpack.c.l.b16 %v7911
      %v9691 = vunpack.c.l.b16 %v7921
      %v9692 = vunpack.c.l.b16 %v7931
      %v9693 = vunpack.c.l.b16 %v7941
      %v9694 = vunpack.c.l.b16 %v7955
      %v9695 = vunpack.c.l.b16 %v7965
      %v9696 = vunpack.c.l.b16 %v7975
      %v9697 = vunpack.c.l.b16 %v7985
      %v9698 = vunpack.c.l.b16 %v7999
      %v9699 = vunpack.c.l.b16 %v8009
      %v9700 = vunpack.c.l.b16 %v8019
      %v9701 = vunpack.c.l.b16 %v8029
      %v9702 = vunpack.c.l.b16 %v8043
      %v9703 = vunpack.c.l.b16 %v8053
      %v9704 = vunpack.c.l.b16 %v8063
      %v9705 = vunpack.c.l.b16 %v8073
      %v9706 = vunpack.c.l.b16 %v8087
      %v9707 = vunpack.c.l.b16 %v8097
      %v9708 = vunpack.c.l.b16 %v8107
      %v9709 = vunpack.c.l.b16 %v8117
      %v9710 = vunpack.c.l.b16 %v8131
      %v9711 = vunpack.c.l.b16 %v8141
      %v9712 = vunpack.c.l.b16 %v8151
      %v9713 = vunpack.c.l.b16 %v8161
      %v9714 = vunpack.c.l.b16 %v8175
      %v9715 = vunpack.c.l.b16 %v8185
      %v9716 = vunpack.c.l.b16 %v8195
      %v9717 = vunpack.c.l.b16 %v8205
      %v9718 = vunpack.c.l.b16 %v8219
      %v9719 = vunpack.c.l.b16 %v8229
      %v9720 = vunpack.c.l.b16 %v8239
      %v9721 = vunpack.c.l.b16 %v8249
      %v9722 = vunpack.c.l.b16 %v8263
      %v9723 = vunpack.c.l.b16 %v8273
      %v9724 = vunpack.c.l.b16 %v8283
      %v9725 = vunpack.c.l.b16 %v8293
      %v9726 = vunpack.c.l.b16 %v8307
      %v9727 = vunpack.c.l.b16 %v8317
      %v9728 = vunpack.c.l.b16 %v8327
      %v9729 = vunpack.c.l.b16 %v8337
      %v9730 = vunpack.c.l.b16 %v8351
      %v9731 = vunpack.c.l.b16 %v8361
      %v9732 = vunpack.c.l.b16 %v8371
      %v9733 = vunpack.c.l.b16 %v8381
      %v9734 = vunpack.c.l.b16 %v8395
      %v9735 = vunpack.c.l.b16 %v8405
      %v9736 = vunpack.c.l.b16 %v8415
      %v9737 = vunpack.c.l.b16 %v8425
      %v9738 = vpack.c.b16 %v9675, %v9674
      %v9739 = vpack.c.b16 %v9677, %v9676
      %v9740 = vpack.c.b16 %v9679, %v9678
      %v9741 = vpack.c.b16 %v9681, %v9680
      %v9742 = vpack.c.b16 %v9683, %v9682
      %v9743 = vpack.c.b16 %v9685, %v9684
      %v9744 = vpack.c.b16 %v9687, %v9686
      %v9745 = vpack.c.b16 %v9689, %v9688
      %v9746 = vpack.c.b16 %v9691, %v9690
      %v9747 = vpack.c.b16 %v9693, %v9692
      %v9748 = vpack.c.b16 %v9695, %v9694
      %v9749 = vpack.c.b16 %v9697, %v9696
      %v9750 = vpack.c.b16 %v9699, %v9698
      %v9751 = vpack.c.b16 %v9701, %v9700
      %v9752 = vpack.c.b16 %v9703, %v9702
      %v9753 = vpack.c.b16 %v9705, %v9704
      %v9754 = vpack.c.b16 %v9707, %v9706
      %v9755 = vpack.c.b16 %v9709, %v9708
      %v9756 = vpack.c.b16 %v9711, %v9710
      %v9757 = vpack.c.b16 %v9713, %v9712
      %v9758 = vpack.c.b16 %v9715, %v9714
      %v9759 = vpack.c.b16 %v9717, %v9716
      %v9760 = vpack.c.b16 %v9719, %v9718
      %v9761 = vpack.c.b16 %v9721, %v9720
      %v9762 = vpack.c.b16 %v9723, %v9722
      %v9763 = vpack.c.b16 %v9725, %v9724
      %v9764 = vpack.c.b16 %v9727, %v9726
      %v9765 = vpack.c.b16 %v9729, %v9728
      %v9766 = vpack.c.b16 %v9731, %v9730
      %v9767 = vpack.c.b16 %v9733, %v9732
      %v9768 = vpack.c.b16 %v9735, %v9734
      %v9769 = vpack.c.b16 %v9737, %v9736
      %v9802 = vunpack.c.l.b16 %v8525
      %v9803 = vunpack.c.l.b16 %v8528
      %v9804 = vunpack.c.l.b16 %v8531
      %v9805 = vunpack.c.l.b16 %v8534
      %v9806 = vunpack.c.l.b16 %v8538
      %v9807 = vunpack.c.l.b16 %v8541
      %v9808 = vunpack.c.l.b16 %v8544
      %v9809 = vunpack.c.l.b16 %v8547
      %v9810 = vunpack.c.l.b16 %v8551
      %v9811 = vunpack.c.l.b16 %v8554
      %v9812 = vunpack.c.l.b16 %v8557
      %v9813 = vunpack.c.l.b16 %v8560
      %v9814 = vunpack.c.l.b16 %v8564
      %v9815 = vunpack.c.l.b16 %v8567
      %v9816 = vunpack.c.l.b16 %v8570
      %v9817 = vunpack.c.l.b16 %v8573
      %v9818 = vunpack.c.l.b16 %v8577
      %v9819 = vunpack.c.l.b16 %v8580
      %v9820 = vunpack.c.l.b16 %v8583
      %v9821 = vunpack.c.l.b16 %v8586
      %v9822 = vunpack.c.l.b16 %v8590
      %v9823 = vunpack.c.l.b16 %v8593
      %v9824 = vunpack.c.l.b16 %v8596
      %v9825 = vunpack.c.l.b16 %v8599
      %v9826 = vunpack.c.l.b16 %v8603
      %v9827 = vunpack.c.l.b16 %v8606
      %v9828 = vunpack.c.l.b16 %v8609
      %v9829 = vunpack.c.l.b16 %v8612
      %v9830 = vunpack.c.l.b16 %v8616
      %v9831 = vunpack.c.l.b16 %v8619
      %v9832 = vunpack.c.l.b16 %v8622
      %v9833 = vunpack.c.l.b16 %v8625
      %v9834 = vunpack.c.l.b16 %v8629
      %v9835 = vunpack.c.l.b16 %v8632
      %v9836 = vunpack.c.l.b16 %v8635
      %v9837 = vunpack.c.l.b16 %v8638
      %v9838 = vunpack.c.l.b16 %v8642
      %v9839 = vunpack.c.l.b16 %v8645
      %v9840 = vunpack.c.l.b16 %v8648
      %v9841 = vunpack.c.l.b16 %v8651
      %v9842 = vunpack.c.l.b16 %v8655
      %v9843 = vunpack.c.l.b16 %v8658
      %v9844 = vunpack.c.l.b16 %v8661
      %v9845 = vunpack.c.l.b16 %v8664
      %v9846 = vunpack.c.l.b16 %v8668
      %v9847 = vunpack.c.l.b16 %v8671
      %v9848 = vunpack.c.l.b16 %v8674
      %v9849 = vunpack.c.l.b16 %v8677
      %v9850 = vunpack.c.l.b16 %v8681
      %v9851 = vunpack.c.l.b16 %v8684
      %v9852 = vunpack.c.l.b16 %v8687
      %v9853 = vunpack.c.l.b16 %v8690
      %v9854 = vunpack.c.l.b16 %v8694
      %v9855 = vunpack.c.l.b16 %v8697
      %v9856 = vunpack.c.l.b16 %v8700
      %v9857 = vunpack.c.l.b16 %v8703
      %v9858 = vunpack.c.l.b16 %v8707
      %v9859 = vunpack.c.l.b16 %v8710
      %v9860 = vunpack.c.l.b16 %v8713
      %v9861 = vunpack.c.l.b16 %v8716
      %v9862 = vunpack.c.l.b16 %v8720
      %v9863 = vunpack.c.l.b16 %v8723
      %v9864 = vunpack.c.l.b16 %v8726
      %v9865 = vunpack.c.l.b16 %v8729
      %v9866 = vpack.c.b16 %v9803, %v9802
      %v9867 = vpack.c.b16 %v9805, %v9804
      %v9868 = vpack.c.b16 %v9807, %v9806
      %v9869 = vpack.c.b16 %v9809, %v9808
      %v9870 = vpack.c.b16 %v9811, %v9810
      %v9871 = vpack.c.b16 %v9813, %v9812
      %v9872 = vpack.c.b16 %v9815, %v9814
      %v9873 = vpack.c.b16 %v9817, %v9816
      %v9874 = vpack.c.b16 %v9819, %v9818
      %v9875 = vpack.c.b16 %v9821, %v9820
      %v9876 = vpack.c.b16 %v9823, %v9822
      %v9877 = vpack.c.b16 %v9825, %v9824
      %v9878 = vpack.c.b16 %v9827, %v9826
      %v9879 = vpack.c.b16 %v9829, %v9828
      %v9880 = vpack.c.b16 %v9831, %v9830
      %v9881 = vpack.c.b16 %v9833, %v9832
      %v9882 = vpack.c.b16 %v9835, %v9834
      %v9883 = vpack.c.b16 %v9837, %v9836
      %v9884 = vpack.c.b16 %v9839, %v9838
      %v9885 = vpack.c.b16 %v9841, %v9840
      %v9886 = vpack.c.b16 %v9843, %v9842
      %v9887 = vpack.c.b16 %v9845, %v9844
      %v9888 = vpack.c.b16 %v9847, %v9846
      %v9889 = vpack.c.b16 %v9849, %v9848
      %v9890 = vpack.c.b16 %v9851, %v9850
      %v9891 = vpack.c.b16 %v9853, %v9852
      %v9892 = vpack.c.b16 %v9855, %v9854
      %v9893 = vpack.c.b16 %v9857, %v9856
      %v9894 = vpack.c.b16 %v9859, %v9858
      %v9895 = vpack.c.b16 %v9861, %v9860
      %v9896 = vpack.c.b16 %v9863, %v9862
      %v9897 = vpack.c.b16 %v9865, %v9864
      %v9930 = vld [vmem:[%s3] sm:$0xf]
      %v9931 = vld [vmem:[%s3 + $0x4] sm:$0xf]
      %v9932 = vld [vmem:[%s3 + $0x8] sm:$0xf]
      %v9933 = vld [vmem:[%s3 + $0xc] sm:$0xf]
      %v9934 = vld [vmem:[%s3 + $0x10] sm:$0xf]
      %v9935 = vld [vmem:[%s3 + $0x14] sm:$0xf]
      %v9936 = vld [vmem:[%s3 + $0x18] sm:$0xf]
      %v9937 = vld [vmem:[%s3 + $0x1c] sm:$0xf]
      %v9938 = vld [vmem:[%s3 + $0x20] sm:$0xf]
      %v9939 = vld [vmem:[%s3 + $0x24] sm:$0xf]
      %v9940 = vld [vmem:[%s3 + $0x28] sm:$0xf]
      %v9941 = vld [vmem:[%s3 + $0x2c] sm:$0xf]
      %v9942 = vld [vmem:[%s3 + $0x30] sm:$0xf]
      %v9943 = vld [vmem:[%s3 + $0x34] sm:$0xf]
      %v9944 = vld [vmem:[%s3 + $0x38] sm:$0xf]
      %v9945 = vld [vmem:[%s3 + $0x3c] sm:$0xf]
      %v9946 = vld [vmem:[%s3 + $0x40] sm:$0xf]
      %v9947 = vld [vmem:[%s3 + $0x44] sm:$0xf]
      %v9948 = vld [vmem:[%s3 + $0x48] sm:$0xf]
      %v9949 = vld [vmem:[%s3 + $0x4c] sm:$0xf]
      %v9950 = vld [vmem:[%s3 + $0x50] sm:$0xf]
      %v9951 = vld [vmem:[%s3 + $0x54] sm:$0xf]
      %v9952 = vld [vmem:[%s3 + $0x58] sm:$0xf]
      %v9953 = vld [vmem:[%s3 + $0x5c] sm:$0xf]
      %v9954 = vld [vmem:[%s3 + $0x60] sm:$0xf]
      %v9955 = vld [vmem:[%s3 + $0x64] sm:$0xf]
      %v9956 = vld [vmem:[%s3 + $0x68] sm:$0xf]
      %v9957 = vld [vmem:[%s3 + $0x6c] sm:$0xf]
      %v9958 = vld [vmem:[%s3 + $0x70] sm:$0xf]
      %v9959 = vld [vmem:[%s3 + $0x74] sm:$0xf]
      %v9960 = vld [vmem:[%s3 + $0x78] sm:$0xf]
      %v9961 = vld [vmem:[%s3 + $0x7c] sm:$0xf]
      %v9962 = vld [vmem:[%s3 + $0x80] sm:$0xf]
      %v9963 = vld [vmem:[%s3 + $0x84] sm:$0xf]
      %v9964 = vld [vmem:[%s3 + $0x88] sm:$0xf]
      %v9965 = vld [vmem:[%s3 + $0x8c] sm:$0xf]
      %v9966 = vld [vmem:[%s3 + $0x90] sm:$0xf]
      %v9967 = vld [vmem:[%s3 + $0x94] sm:$0xf]
      %v9968 = vld [vmem:[%s3 + $0x98] sm:$0xf]
      %v9969 = vld [vmem:[%s3 + $0x9c] sm:$0xf]
      %v9970 = vld [vmem:[%s3 + $0xa0] sm:$0xf]
      %v9971 = vld [vmem:[%s3 + $0xa4] sm:$0xf]
      %v9972 = vld [vmem:[%s3 + $0xa8] sm:$0xf]
      %v9973 = vld [vmem:[%s3 + $0xac] sm:$0xf]
      %v9974 = vld [vmem:[%s3 + $0xb0] sm:$0xf]
      %v9975 = vld [vmem:[%s3 + $0xb4] sm:$0xf]
      %v9976 = vld [vmem:[%s3 + $0xb8] sm:$0xf]
      %v9977 = vld [vmem:[%s3 + $0xbc] sm:$0xf]
      %v9978 = vld [vmem:[%s3 + $0xc0] sm:$0xf]
      %v9979 = vld [vmem:[%s3 + $0xc4] sm:$0xf]
      %v9980 = vld [vmem:[%s3 + $0xc8] sm:$0xf]
      %v9981 = vld [vmem:[%s3 + $0xcc] sm:$0xf]
      %v9982 = vld [vmem:[%s3 + $0xd0] sm:$0xf]
      %v9983 = vld [vmem:[%s3 + $0xd4] sm:$0xf]
      %v9984 = vld [vmem:[%s3 + $0xd8] sm:$0xf]
      %v9985 = vld [vmem:[%s3 + $0xdc] sm:$0xf]
      %v9986 = vld [vmem:[%s3 + $0xe0] sm:$0xf]
      %v9987 = vld [vmem:[%s3 + $0xe4] sm:$0xf]
      %v9988 = vld [vmem:[%s3 + $0xe8] sm:$0xf]
      %v9989 = vld [vmem:[%s3 + $0xec] sm:$0xf]
      %v9990 = vld [vmem:[%s3 + $0xf0] sm:$0xf]
      %v9991 = vld [vmem:[%s3 + $0xf4] sm:$0xf]
      %v9992 = vld [vmem:[%s3 + $0xf8] sm:$0xf]
      %v9993 = vld [vmem:[%s3 + $0xfc] sm:$0xf]
      %v9994 = vld [vmem:[%s3 + $0x100] sm:$0xf]
      %v9995 = vld [vmem:[%s3 + $0x104] sm:$0xf]
      %v9996 = vld [vmem:[%s3 + $0x108] sm:$0xf]
      %v9997 = vld [vmem:[%s3 + $0x10c] sm:$0xf]
      %v9998 = vld [vmem:[%s3 + $0x110] sm:$0xf]
      %v9999 = vld [vmem:[%s3 + $0x114] sm:$0xf]
      %v10000 = vld [vmem:[%s3 + $0x118] sm:$0xf]
      %v10001 = vld [vmem:[%s3 + $0x11c] sm:$0xf]
      %v10002 = vld [vmem:[%s3 + $0x120] sm:$0xf]
      %v10003 = vld [vmem:[%s3 + $0x124] sm:$0xf]
      %v10004 = vld [vmem:[%s3 + $0x128] sm:$0xf]
      %v10005 = vld [vmem:[%s3 + $0x12c] sm:$0xf]
      %v10006 = vld [vmem:[%s3 + $0x130] sm:$0xf]
      %v10007 = vld [vmem:[%s3 + $0x134] sm:$0xf]
      %v10008 = vld [vmem:[%s3 + $0x138] sm:$0xf]
      %v10009 = vld [vmem:[%s3 + $0x13c] sm:$0xf]
      %v10010 = vld [vmem:[%s3 + $0x140] sm:$0xf]
      %v10011 = vld [vmem:[%s3 + $0x144] sm:$0xf]
      %v10012 = vld [vmem:[%s3 + $0x148] sm:$0xf]
      %v10013 = vld [vmem:[%s3 + $0x14c] sm:$0xf]
      %v10014 = vld [vmem:[%s3 + $0x150] sm:$0xf]
      %v10015 = vld [vmem:[%s3 + $0x154] sm:$0xf]
      %v10016 = vld [vmem:[%s3 + $0x158] sm:$0xf]
      %v10017 = vld [vmem:[%s3 + $0x15c] sm:$0xf]
      %v10018 = vld [vmem:[%s3 + $0x160] sm:$0xf]
      %v10019 = vld [vmem:[%s3 + $0x164] sm:$0xf]
      %v10020 = vld [vmem:[%s3 + $0x168] sm:$0xf]
      %v10021 = vld [vmem:[%s3 + $0x16c] sm:$0xf]
      %v10022 = vld [vmem:[%s3 + $0x170] sm:$0xf]
      %v10023 = vld [vmem:[%s3 + $0x174] sm:$0xf]
      %v10024 = vld [vmem:[%s3 + $0x178] sm:$0xf]
      %v10025 = vld [vmem:[%s3 + $0x17c] sm:$0xf]
      %v10026 = vld [vmem:[%s3 + $0x180] sm:$0xf]
      %v10027 = vld [vmem:[%s3 + $0x184] sm:$0xf]
      %v10028 = vld [vmem:[%s3 + $0x188] sm:$0xf]
      %v10029 = vld [vmem:[%s3 + $0x18c] sm:$0xf]
      %v10030 = vld [vmem:[%s3 + $0x190] sm:$0xf]
      %v10031 = vld [vmem:[%s3 + $0x194] sm:$0xf]
      %v10032 = vld [vmem:[%s3 + $0x198] sm:$0xf]
      %v10033 = vld [vmem:[%s3 + $0x19c] sm:$0xf]
      %v10034 = vld [vmem:[%s3 + $0x1a0] sm:$0xf]
      %v10035 = vld [vmem:[%s3 + $0x1a4] sm:$0xf]
      %v10036 = vld [vmem:[%s3 + $0x1a8] sm:$0xf]
      %v10037 = vld [vmem:[%s3 + $0x1ac] sm:$0xf]
      %v10038 = vld [vmem:[%s3 + $0x1b0] sm:$0xf]
      %v10039 = vld [vmem:[%s3 + $0x1b4] sm:$0xf]
      %v10040 = vld [vmem:[%s3 + $0x1b8] sm:$0xf]
      %v10041 = vld [vmem:[%s3 + $0x1bc] sm:$0xf]
      %v10042 = vld [vmem:[%s3 + $0x1c0] sm:$0xf]
      %v10043 = vld [vmem:[%s3 + $0x1c4] sm:$0xf]
      %v10044 = vld [vmem:[%s3 + $0x1c8] sm:$0xf]
      %v10045 = vld [vmem:[%s3 + $0x1cc] sm:$0xf]
      %v10046 = vld [vmem:[%s3 + $0x1d0] sm:$0xf]
      %v10047 = vld [vmem:[%s3 + $0x1d4] sm:$0xf]
      %v10048 = vld [vmem:[%s3 + $0x1d8] sm:$0xf]
      %v10049 = vld [vmem:[%s3 + $0x1dc] sm:$0xf]
      %v10050 = vld [vmem:[%s3 + $0x1e0] sm:$0xf]
      %v10051 = vld [vmem:[%s3 + $0x1e4] sm:$0xf]
      %v10052 = vld [vmem:[%s3 + $0x1e8] sm:$0xf]
      %v10053 = vld [vmem:[%s3 + $0x1ec] sm:$0xf]
      %v10054 = vld [vmem:[%s3 + $0x1f0] sm:$0xf]
      %v10055 = vld [vmem:[%s3 + $0x1f4] sm:$0xf]
      %v10056 = vld [vmem:[%s3 + $0x1f8] sm:$0xf]
      %v10057 = vld [vmem:[%s3 + $0x1fc] sm:$0xf]
      %v10058 = vld [vmem:[%s3 + $0x200] sm:$0xf]
      %v10059 = vld [vmem:[%s3 + $0x204] sm:$0xf]
      %v10060 = vld [vmem:[%s3 + $0x208] sm:$0xf]
      %v10061 = vld [vmem:[%s3 + $0x20c] sm:$0xf]
      %v10062 = vld [vmem:[%s3 + $0x210] sm:$0xf]
      %v10063 = vld [vmem:[%s3 + $0x214] sm:$0xf]
      %v10064 = vld [vmem:[%s3 + $0x218] sm:$0xf]
      %v10065 = vld [vmem:[%s3 + $0x21c] sm:$0xf]
      %v10066 = vld [vmem:[%s3 + $0x220] sm:$0xf]
      %v10067 = vld [vmem:[%s3 + $0x224] sm:$0xf]
      %v10068 = vld [vmem:[%s3 + $0x228] sm:$0xf]
      %v10069 = vld [vmem:[%s3 + $0x22c] sm:$0xf]
      %v10070 = vld [vmem:[%s3 + $0x230] sm:$0xf]
      %v10071 = vld [vmem:[%s3 + $0x234] sm:$0xf]
      %v10072 = vld [vmem:[%s3 + $0x238] sm:$0xf]
      %v10073 = vld [vmem:[%s3 + $0x23c] sm:$0xf]
      %v10218 = vunpack.c.l.b16 %v9930
      %v10219 = vunpack.c.l.b16 %v9931
      %v10220 = vunpack.c.l.b16 %v9932
      %v10221 = vunpack.c.l.b16 %v9933
      %v10222 = vunpack.c.l.b16 %v9934
      %v10223 = vunpack.c.l.b16 %v9935
      %v10224 = vunpack.c.l.b16 %v9936
      %v10225 = vunpack.c.l.b16 %v9937
      %v10226 = vunpack.c.l.b16 %v9938
      %v10227 = vunpack.c.l.b16 %v9939
      %v10228 = vunpack.c.l.b16 %v9940
      %v10229 = vunpack.c.l.b16 %v9941
      %v10230 = vunpack.c.l.b16 %v9942
      %v10231 = vunpack.c.l.b16 %v9943
      %v10232 = vunpack.c.l.b16 %v9944
      %v10233 = vunpack.c.l.b16 %v9945
      %v10234 = vunpack.c.l.b16 %v9946
      %v10235 = vunpack.c.l.b16 %v9947
      %v10236 = vunpack.c.l.b16 %v9948
      %v10237 = vunpack.c.l.b16 %v9949
      %v10238 = vunpack.c.l.b16 %v9950
      %v10239 = vunpack.c.l.b16 %v9951
      %v10240 = vunpack.c.l.b16 %v9952
      %v10241 = vunpack.c.l.b16 %v9953
      %v10242 = vunpack.c.l.b16 %v9954
      %v10243 = vunpack.c.l.b16 %v9955
      %v10244 = vunpack.c.l.b16 %v9956
      %v10245 = vunpack.c.l.b16 %v9957
      %v10246 = vunpack.c.l.b16 %v9958
      %v10247 = vunpack.c.l.b16 %v9959
      %v10248 = vunpack.c.l.b16 %v9960
      %v10249 = vunpack.c.l.b16 %v9961
      %v10250 = vunpack.c.l.b16 %v9962
      %v10251 = vunpack.c.l.b16 %v9963
      %v10252 = vunpack.c.l.b16 %v9964
      %v10253 = vunpack.c.l.b16 %v9965
      %v10254 = vunpack.c.l.b16 %v9966
      %v10255 = vunpack.c.l.b16 %v9967
      %v10256 = vunpack.c.l.b16 %v9968
      %v10257 = vunpack.c.l.b16 %v9969
      %v10258 = vunpack.c.l.b16 %v9970
      %v10259 = vunpack.c.l.b16 %v9971
      %v10260 = vunpack.c.l.b16 %v9972
      %v10261 = vunpack.c.l.b16 %v9973
      %v10262 = vunpack.c.l.b16 %v9974
      %v10263 = vunpack.c.l.b16 %v9975
      %v10264 = vunpack.c.l.b16 %v9976
      %v10265 = vunpack.c.l.b16 %v9977
      %v10266 = vunpack.c.l.b16 %v9978
      %v10267 = vunpack.c.l.b16 %v9979
      %v10268 = vunpack.c.l.b16 %v9980
      %v10269 = vunpack.c.l.b16 %v9981
      %v10270 = vunpack.c.l.b16 %v9982
      %v10271 = vunpack.c.l.b16 %v9983
      %v10272 = vunpack.c.l.b16 %v9984
      %v10273 = vunpack.c.l.b16 %v9985
      %v10274 = vunpack.c.l.b16 %v9986
      %v10275 = vunpack.c.l.b16 %v9987
      %v10276 = vunpack.c.l.b16 %v9988
      %v10277 = vunpack.c.l.b16 %v9989
      %v10278 = vunpack.c.l.b16 %v9990
      %v10279 = vunpack.c.l.b16 %v9991
      %v10280 = vunpack.c.l.b16 %v9992
      %v10281 = vunpack.c.l.b16 %v9993
      %v10282 = vunpack.c.l.b16 %v9994
      %v10283 = vunpack.c.l.b16 %v9995
      %v10284 = vunpack.c.l.b16 %v9996
      %v10285 = vunpack.c.l.b16 %v9997
      %v10286 = vunpack.c.l.b16 %v9998
      %v10287 = vunpack.c.l.b16 %v9999
      %v10288 = vunpack.c.l.b16 %v10000
      %v10289 = vunpack.c.l.b16 %v10001
      %v10290 = vunpack.c.l.b16 %v10002
      %v10291 = vunpack.c.l.b16 %v10003
      %v10292 = vunpack.c.l.b16 %v10004
      %v10293 = vunpack.c.l.b16 %v10005
      %v10294 = vunpack.c.l.b16 %v10006
      %v10295 = vunpack.c.l.b16 %v10007
      %v10296 = vunpack.c.l.b16 %v10008
      %v10297 = vunpack.c.l.b16 %v10009
      %v10298 = vunpack.c.l.b16 %v10010
      %v10299 = vunpack.c.l.b16 %v10011
      %v10300 = vunpack.c.l.b16 %v10012
      %v10301 = vunpack.c.l.b16 %v10013
      %v10302 = vunpack.c.l.b16 %v10014
      %v10303 = vunpack.c.l.b16 %v10015
      %v10304 = vunpack.c.l.b16 %v10016
      %v10305 = vunpack.c.l.b16 %v10017
      %v10306 = vunpack.c.l.b16 %v10018
      %v10307 = vunpack.c.l.b16 %v10019
      %v10308 = vunpack.c.l.b16 %v10020
      %v10309 = vunpack.c.l.b16 %v10021
      %v10310 = vunpack.c.l.b16 %v10022
      %v10311 = vunpack.c.l.b16 %v10023
      %v10312 = vunpack.c.l.b16 %v10024
      %v10313 = vunpack.c.l.b16 %v10025
      %v10314 = vunpack.c.l.b16 %v10026
      %v10315 = vunpack.c.l.b16 %v10027
      %v10316 = vunpack.c.l.b16 %v10028
      %v10317 = vunpack.c.l.b16 %v10029
      %v10318 = vunpack.c.l.b16 %v10030
      %v10319 = vunpack.c.l.b16 %v10031
      %v10320 = vunpack.c.l.b16 %v10032
      %v10321 = vunpack.c.l.b16 %v10033
      %v10322 = vunpack.c.l.b16 %v10034
      %v10323 = vunpack.c.l.b16 %v10035
      %v10324 = vunpack.c.l.b16 %v10036
      %v10325 = vunpack.c.l.b16 %v10037
      %v10326 = vunpack.c.l.b16 %v10038
      %v10327 = vunpack.c.l.b16 %v10039
      %v10328 = vunpack.c.l.b16 %v10040
      %v10329 = vunpack.c.l.b16 %v10041
      %v10330 = vunpack.c.l.b16 %v10042
      %v10331 = vunpack.c.l.b16 %v10043
      %v10332 = vunpack.c.l.b16 %v10044
      %v10333 = vunpack.c.l.b16 %v10045
      %v10334 = vunpack.c.l.b16 %v10046
      %v10335 = vunpack.c.l.b16 %v10047
      %v10336 = vunpack.c.l.b16 %v10048
      %v10337 = vunpack.c.l.b16 %v10049
      %v10338 = vunpack.c.l.b16 %v10050
      %v10339 = vunpack.c.l.b16 %v10051
      %v10340 = vunpack.c.l.b16 %v10052
      %v10341 = vunpack.c.l.b16 %v10053
      %v10342 = vunpack.c.l.b16 %v10054
      %v10343 = vunpack.c.l.b16 %v10055
      %v10344 = vunpack.c.l.b16 %v10056
      %v10345 = vunpack.c.l.b16 %v10057
      %v10346 = vunpack.c.l.b16 %v10058
      %v10347 = vunpack.c.l.b16 %v10059
      %v10348 = vunpack.c.l.b16 %v10060
      %v10349 = vunpack.c.l.b16 %v10061
      %v10350 = vunpack.c.l.b16 %v10062
      %v10351 = vunpack.c.l.b16 %v10063
      %v10352 = vunpack.c.l.b16 %v10064
      %v10353 = vunpack.c.l.b16 %v10065
      %v10354 = vunpack.c.l.b16 %v10066
      %v10355 = vunpack.c.l.b16 %v10067
      %v10356 = vunpack.c.l.b16 %v10068
      %v10357 = vunpack.c.l.b16 %v10069
      %v10358 = vunpack.c.l.b16 %v10070
      %v10359 = vunpack.c.l.b16 %v10071
      %v10360 = vunpack.c.l.b16 %v10072
      %v10361 = vunpack.c.l.b16 %v10073
      %v10362 = vpack.c.b16 %v10219, %v10218
      %v10363 = vpack.c.b16 %v10221, %v10220
      %v10364 = vpack.c.b16 %v10223, %v10222
      %v10365 = vpack.c.b16 %v10225, %v10224
      %v10366 = vpack.c.b16 %v10227, %v10226
      %v10367 = vpack.c.b16 %v10229, %v10228
      %v10368 = vpack.c.b16 %v10231, %v10230
      %v10369 = vpack.c.b16 %v10233, %v10232
      %v10370 = vpack.c.b16 %v10235, %v10234
      %v10371 = vpack.c.b16 %v10237, %v10236
      %v10372 = vpack.c.b16 %v10239, %v10238
      %v10373 = vpack.c.b16 %v10241, %v10240
      %v10374 = vpack.c.b16 %v10243, %v10242
      %v10375 = vpack.c.b16 %v10245, %v10244
      %v10376 = vpack.c.b16 %v10247, %v10246
      %v10377 = vpack.c.b16 %v10249, %v10248
      %v10378 = vpack.c.b16 %v10251, %v10250
      %v10379 = vpack.c.b16 %v10253, %v10252
      %v10380 = vpack.c.b16 %v10255, %v10254
      %v10381 = vpack.c.b16 %v10257, %v10256
      %v10382 = vpack.c.b16 %v10259, %v10258
      %v10383 = vpack.c.b16 %v10261, %v10260
      %v10384 = vpack.c.b16 %v10263, %v10262
      %v10385 = vpack.c.b16 %v10265, %v10264
      %v10386 = vpack.c.b16 %v10267, %v10266
      %v10387 = vpack.c.b16 %v10269, %v10268
      %v10388 = vpack.c.b16 %v10271, %v10270
      %v10389 = vpack.c.b16 %v10273, %v10272
      %v10390 = vpack.c.b16 %v10275, %v10274
      %v10391 = vpack.c.b16 %v10277, %v10276
      %v10392 = vpack.c.b16 %v10279, %v10278
      %v10393 = vpack.c.b16 %v10281, %v10280
      %v10394 = vpack.c.b16 %v10283, %v10282
      %v10395 = vpack.c.b16 %v10285, %v10284
      %v10396 = vpack.c.b16 %v10287, %v10286
      %v10397 = vpack.c.b16 %v10289, %v10288
      %v10398 = vpack.c.b16 %v10291, %v10290
      %v10399 = vpack.c.b16 %v10293, %v10292
      %v10400 = vpack.c.b16 %v10295, %v10294
      %v10401 = vpack.c.b16 %v10297, %v10296
      %v10402 = vpack.c.b16 %v10299, %v10298
      %v10403 = vpack.c.b16 %v10301, %v10300
      %v10404 = vpack.c.b16 %v10303, %v10302
      %v10405 = vpack.c.b16 %v10305, %v10304
      %v10406 = vpack.c.b16 %v10307, %v10306
      %v10407 = vpack.c.b16 %v10309, %v10308
      %v10408 = vpack.c.b16 %v10311, %v10310
      %v10409 = vpack.c.b16 %v10313, %v10312
      %v10410 = vpack.c.b16 %v10315, %v10314
      %v10411 = vpack.c.b16 %v10317, %v10316
      %v10412 = vpack.c.b16 %v10319, %v10318
      %v10413 = vpack.c.b16 %v10321, %v10320
      %v10414 = vpack.c.b16 %v10323, %v10322
      %v10415 = vpack.c.b16 %v10325, %v10324
      %v10416 = vpack.c.b16 %v10327, %v10326
      %v10417 = vpack.c.b16 %v10329, %v10328
      %v10418 = vpack.c.b16 %v10331, %v10330
      %v10419 = vpack.c.b16 %v10333, %v10332
      %v10420 = vpack.c.b16 %v10335, %v10334
      %v10421 = vpack.c.b16 %v10337, %v10336
      %v10422 = vpack.c.b16 %v10339, %v10338
      %v10423 = vpack.c.b16 %v10341, %v10340
      %v10424 = vpack.c.b16 %v10343, %v10342
      %v10425 = vpack.c.b16 %v10345, %v10344
      %v10426 = vpack.c.b16 %v10347, %v10346
      %v10427 = vpack.c.b16 %v10349, %v10348
      %v10428 = vpack.c.b16 %v10351, %v10350
      %v10429 = vpack.c.b16 %v10353, %v10352
      %v10430 = vpack.c.b16 %v10355, %v10354
      %v10431 = vpack.c.b16 %v10357, %v10356
      %v10432 = vpack.c.b16 %v10359, %v10358
      %v10433 = vpack.c.b16 %v10361, %v10360
      %10506 = vmatprep.subr.bf16.mxu0 0
      %10507 = vmatpush1.bf16.msra.mxu0 %v10369
      %10508 = vmatprep.subr.bf16.mxu0 0
      %10509 = vmatpush1.bf16.msra.mxu0 %v10368
      %10510 = vmatprep.subr.bf16.mxu0 0
      %10511 = vmatpush1.bf16.msra.mxu0 %v10367
      %10512 = vmatprep.subr.bf16.mxu0 0
      %10513 = vmatpush1.bf16.msra.mxu0 %v10366
      %10514 = vmatprep.subr.bf16.mxu0 0
      %10515 = vmatpush1.bf16.msra.mxu0 %v10365
      %10516 = vmatprep.subr.bf16.mxu0 0
      %10517 = vmatpush1.bf16.msra.mxu0 %v10364
      %10518 = vmatprep.subr.bf16.mxu0 0
      %10519 = vmatpush1.bf16.msra.mxu0 %v10363
      %10520 = vmatprep.subr.bf16.mxu0 0
      %10521 = vmatpush1.bf16.msra.mxu0 %v10362
      %10522 = vmatprep.subr.bf16.mxu0 0
      %10523 = vmatpush2.bf16.msra.mxu0 %v10377
      %10524 = vmatprep.subr.bf16.mxu0 0
      %10525 = vmatpush2.bf16.msra.mxu0 %v10376
      %10526 = vmatprep.subr.bf16.mxu0 0
      %10527 = vmatpush2.bf16.msra.mxu0 %v10375
      %10528 = vmatprep.subr.bf16.mxu0 0
      %10529 = vmatpush2.bf16.msra.mxu0 %v10374
      %10530 = vmatprep.subr.bf16.mxu0 0
      %10531 = vmatpush2.bf16.msra.mxu0 %v10373
      %10532 = vmatprep.subr.bf16.mxu0 0
      %10533 = vmatpush2.bf16.msra.mxu0 %v10372
      %10534 = vmatprep.subr.bf16.mxu0 0
      %10535 = vmatpush2.bf16.msra.mxu0 %v10371
      %10536 = vmatprep.subr.bf16.mxu0 0
      %10537 = vmatpush2.bf16.msra.mxu0 %v10370
      %10538 = vmatprep.mubr.bf16.mxu0 %v8938
      %10539 = vmatmul.mubr.bf16.gmra.mxu0 %v8810
      %v10540 = vpop.f32.mrf.mxu0
      %v10541 = vadd.f32 0.0, %v10540
      %v10542 = vpop.f32.mrf.mxu0
      %v10543 = vpop.f32.mrf.mxu0
      %v10544 = vadd.f32 0.0, %v10543
      %v10545 = vpop.f32.mrf.mxu0
      %10546 = vmatprep.mubr.bf16.mxu0 %v8939
      %10547 = vmatmul.mubr.bf16.gmra.mxu0 %v8811
      %v10548 = vpop.f32.mrf.mxu0
      %v10549 = vadd.f32 0.0, %v10548
      %v10550 = vpop.f32.mrf.mxu0
      %v10551 = vpop.f32.mrf.mxu0
      %v10552 = vadd.f32 0.0, %v10551
      %v10553 = vpop.f32.mrf.mxu0
      %10554 = vmatprep.mubr.bf16.mxu0 %v8940
      %10555 = vmatmul.mubr.bf16.gmra.mxu0 %v8812
      %v10556 = vpop.f32.mrf.mxu0
      %v10557 = vadd.f32 0.0, %v10556
      %v10558 = vpop.f32.mrf.mxu0
      %v10559 = vpop.f32.mrf.mxu0
      %v10560 = vadd.f32 0.0, %v10559
      %v10561 = vpop.f32.mrf.mxu0
      %10562 = vmatprep.mubr.bf16.mxu0 %v8941
      %10563 = vmatmul.mubr.bf16.gmra.mxu0 %v8813
      %v10564 = vpop.f32.mrf.mxu0
      %v10565 = vadd.f32 0.0, %v10564
      %v10566 = vpop.f32.mrf.mxu0
      %v10567 = vpop.f32.mrf.mxu0
      %v10568 = vadd.f32 0.0, %v10567
      %v10569 = vpop.f32.mrf.mxu0
      %10570 = vmatprep.mubr.bf16.mxu0 %v8942
      %10571 = vmatmul.mubr.bf16.gmra.mxu0 %v8814
      %v10572 = vpop.f32.mrf.mxu0
      %v10573 = vadd.f32 0.0, %v10572
      %v10574 = vpop.f32.mrf.mxu0
      %v10575 = vpop.f32.mrf.mxu0
      %v10576 = vadd.f32 0.0, %v10575
      %v10577 = vpop.f32.mrf.mxu0
      %10578 = vmatprep.mubr.bf16.mxu0 %v8943
      %10579 = vmatmul.mubr.bf16.gmra.mxu0 %v8815
      %v10580 = vpop.f32.mrf.mxu0
      %v10581 = vadd.f32 0.0, %v10580
      %v10582 = vpop.f32.mrf.mxu0
      %v10583 = vpop.f32.mrf.mxu0
      %v10584 = vadd.f32 0.0, %v10583
      %v10585 = vpop.f32.mrf.mxu0
      %10586 = vmatprep.mubr.bf16.mxu0 %v8944
      %10587 = vmatmul.mubr.bf16.gmra.mxu0 %v8816
      %v10588 = vpop.f32.mrf.mxu0
      %v10589 = vadd.f32 0.0, %v10588
      %v10590 = vpop.f32.mrf.mxu0
      %v10591 = vpop.f32.mrf.mxu0
      %v10592 = vadd.f32 0.0, %v10591
      %v10593 = vpop.f32.mrf.mxu0
      %10594 = vmatprep.mubr.bf16.mxu0 %v8945
      %10595 = vmatmul.mubr.bf16.gmra.mxu0 %v8817
      %v10596 = vpop.f32.mrf.mxu0
      %v10597 = vadd.f32 0.0, %v10596
      %v10598 = vpop.f32.mrf.mxu0
      %v10599 = vpop.f32.mrf.mxu0
      %v10600 = vadd.f32 0.0, %v10599
      %v10601 = vpop.f32.mrf.mxu0
      %10602 = vmatprep.mubr.bf16.mxu0 %v8946
      %10603 = vmatmul.mubr.bf16.gmra.mxu0 %v8818
      %v10604 = vpop.f32.mrf.mxu0
      %v10605 = vadd.f32 0.0, %v10604
      %v10606 = vpop.f32.mrf.mxu0
      %v10607 = vpop.f32.mrf.mxu0
      %v10608 = vadd.f32 0.0, %v10607
      %v10609 = vpop.f32.mrf.mxu0
      %10610 = vmatprep.mubr.bf16.mxu0 %v8947
      %10611 = vmatmul.mubr.bf16.gmra.mxu0 %v8819
      %v10612 = vpop.f32.mrf.mxu0
      %v10613 = vadd.f32 0.0, %v10612
      %v10614 = vpop.f32.mrf.mxu0
      %v10615 = vpop.f32.mrf.mxu0
      %v10616 = vadd.f32 0.0, %v10615
      %v10617 = vpop.f32.mrf.mxu0
      %10618 = vmatprep.mubr.bf16.mxu0 %v8948
      %10619 = vmatmul.mubr.bf16.gmra.mxu0 %v8820
      %v10620 = vpop.f32.mrf.mxu0
      %v10621 = vadd.f32 0.0, %v10620
      %v10622 = vpop.f32.mrf.mxu0
      %v10623 = vpop.f32.mrf.mxu0
      %v10624 = vadd.f32 0.0, %v10623
      %v10625 = vpop.f32.mrf.mxu0
      %10626 = vmatprep.mubr.bf16.mxu0 %v8949
      %10627 = vmatmul.mubr.bf16.gmra.mxu0 %v8821
      %v10628 = vpop.f32.mrf.mxu0
      %v10629 = vadd.f32 0.0, %v10628
      %v10630 = vpop.f32.mrf.mxu0
      %v10631 = vpop.f32.mrf.mxu0
      %v10632 = vadd.f32 0.0, %v10631
      %v10633 = vpop.f32.mrf.mxu0
      %10634 = vmatprep.mubr.bf16.mxu0 %v8950
      %10635 = vmatmul.mubr.bf16.gmra.mxu0 %v8822
      %v10636 = vpop.f32.mrf.mxu0
      %v10637 = vadd.f32 0.0, %v10636
      %v10638 = vpop.f32.mrf.mxu0
      %v10639 = vpop.f32.mrf.mxu0
      %v10640 = vadd.f32 0.0, %v10639
      %v10641 = vpop.f32.mrf.mxu0
      %10642 = vmatprep.mubr.bf16.mxu0 %v8951
      %10643 = vmatmul.mubr.bf16.gmra.mxu0 %v8823
      %v10644 = vpop.f32.mrf.mxu0
      %v10645 = vadd.f32 0.0, %v10644
      %v10646 = vpop.f32.mrf.mxu0
      %v10647 = vpop.f32.mrf.mxu0
      %v10648 = vadd.f32 0.0, %v10647
      %v10649 = vpop.f32.mrf.mxu0
      %10650 = vmatprep.mubr.bf16.mxu0 %v8952
      %10651 = vmatmul.mubr.bf16.gmra.mxu0 %v8824
      %v10652 = vpop.f32.mrf.mxu0
      %v10653 = vadd.f32 0.0, %v10652
      %v10654 = vpop.f32.mrf.mxu0
      %v10655 = vpop.f32.mrf.mxu0
      %v10656 = vadd.f32 0.0, %v10655
      %v10657 = vpop.f32.mrf.mxu0
      %10658 = vmatprep.mubr.bf16.mxu0 %v8953
      %10659 = vmatmul.mubr.bf16.gmra.mxu0 %v8825
      %v10660 = vpop.f32.mrf.mxu0
      %v10661 = vadd.f32 0.0, %v10660
      %v10662 = vpop.f32.mrf.mxu0
      %v10663 = vpop.f32.mrf.mxu0
      %v10664 = vadd.f32 0.0, %v10663
      %v10665 = vpop.f32.mrf.mxu0
      %10666 = vmatprep.mubr.bf16.mxu0 %v8954
      %10667 = vmatmul.mubr.bf16.gmra.mxu0 %v8826
      %v10668 = vpop.f32.mrf.mxu0
      %v10669 = vadd.f32 0.0, %v10668
      %v10670 = vpop.f32.mrf.mxu0
      %v10671 = vpop.f32.mrf.mxu0
      %v10672 = vadd.f32 0.0, %v10671
      %v10673 = vpop.f32.mrf.mxu0
      %10674 = vmatprep.mubr.bf16.mxu0 %v8955
      %10675 = vmatmul.mubr.bf16.gmra.mxu0 %v8827
      %v10676 = vpop.f32.mrf.mxu0
      %v10677 = vadd.f32 0.0, %v10676
      %v10678 = vpop.f32.mrf.mxu0
      %v10679 = vpop.f32.mrf.mxu0
      %v10680 = vadd.f32 0.0, %v10679
      %v10681 = vpop.f32.mrf.mxu0
      %10682 = vmatprep.mubr.bf16.mxu0 %v8956
      %10683 = vmatmul.mubr.bf16.gmra.mxu0 %v8828
      %v10684 = vpop.f32.mrf.mxu0
      %v10685 = vadd.f32 0.0, %v10684
      %v10686 = vpop.f32.mrf.mxu0
      %v10687 = vpop.f32.mrf.mxu0
      %v10688 = vadd.f32 0.0, %v10687
      %v10689 = vpop.f32.mrf.mxu0
      %10690 = vmatprep.mubr.bf16.mxu0 %v8957
      %10691 = vmatmul.mubr.bf16.gmra.mxu0 %v8829
      %v10692 = vpop.f32.mrf.mxu0
      %v10693 = vadd.f32 0.0, %v10692
      %v10694 = vpop.f32.mrf.mxu0
      %v10695 = vpop.f32.mrf.mxu0
      %v10696 = vadd.f32 0.0, %v10695
      %v10697 = vpop.f32.mrf.mxu0
      %10698 = vmatprep.mubr.bf16.mxu0 %v8958
      %10699 = vmatmul.mubr.bf16.gmra.mxu0 %v8830
      %v10700 = vpop.f32.mrf.mxu0
      %v10701 = vadd.f32 0.0, %v10700
      %v10702 = vpop.f32.mrf.mxu0
      %v10703 = vpop.f32.mrf.mxu0
      %v10704 = vadd.f32 0.0, %v10703
      %v10705 = vpop.f32.mrf.mxu0
      %10706 = vmatprep.mubr.bf16.mxu0 %v8959
      %10707 = vmatmul.mubr.bf16.gmra.mxu0 %v8831
      %v10708 = vpop.f32.mrf.mxu0
      %v10709 = vadd.f32 0.0, %v10708
      %v10710 = vpop.f32.mrf.mxu0
      %v10711 = vpop.f32.mrf.mxu0
      %v10712 = vadd.f32 0.0, %v10711
      %v10713 = vpop.f32.mrf.mxu0
      %10714 = vmatprep.mubr.bf16.mxu0 %v8960
      %10715 = vmatmul.mubr.bf16.gmra.mxu0 %v8832
      %v10716 = vpop.f32.mrf.mxu0
      %v10717 = vadd.f32 0.0, %v10716
      %v10718 = vpop.f32.mrf.mxu0
      %v10719 = vpop.f32.mrf.mxu0
      %v10720 = vadd.f32 0.0, %v10719
      %v10721 = vpop.f32.mrf.mxu0
      %10722 = vmatprep.mubr.bf16.mxu0 %v8961
      %10723 = vmatmul.mubr.bf16.gmra.mxu0 %v8833
      %v10724 = vpop.f32.mrf.mxu0
      %v10725 = vadd.f32 0.0, %v10724
      %v10726 = vpop.f32.mrf.mxu0
      %v10727 = vpop.f32.mrf.mxu0
      %v10728 = vadd.f32 0.0, %v10727
      %v10729 = vpop.f32.mrf.mxu0
      %10730 = vmatprep.mubr.bf16.mxu0 %v8962
      %10731 = vmatmul.mubr.bf16.gmra.mxu0 %v8834
      %v10732 = vpop.f32.mrf.mxu0
      %v10733 = vadd.f32 0.0, %v10732
      %v10734 = vpop.f32.mrf.mxu0
      %v10735 = vpop.f32.mrf.mxu0
      %v10736 = vadd.f32 0.0, %v10735
      %v10737 = vpop.f32.mrf.mxu0
      %10738 = vmatprep.mubr.bf16.mxu0 %v8963
      %10739 = vmatmul.mubr.bf16.gmra.mxu0 %v8835
      %v10740 = vpop.f32.mrf.mxu0
      %v10741 = vadd.f32 0.0, %v10740
      %v10742 = vpop.f32.mrf.mxu0
      %v10743 = vpop.f32.mrf.mxu0
      %v10744 = vadd.f32 0.0, %v10743
      %v10745 = vpop.f32.mrf.mxu0
      %10746 = vmatprep.mubr.bf16.mxu0 %v8964
      %10747 = vmatmul.mubr.bf16.gmra.mxu0 %v8836
      %v10748 = vpop.f32.mrf.mxu0
      %v10749 = vadd.f32 0.0, %v10748
      %v10750 = vpop.f32.mrf.mxu0
      %v10751 = vpop.f32.mrf.mxu0
      %v10752 = vadd.f32 0.0, %v10751
      %v10753 = vpop.f32.mrf.mxu0
      %10754 = vmatprep.mubr.bf16.mxu0 %v8965
      %10755 = vmatmul.mubr.bf16.gmra.mxu0 %v8837
      %v10756 = vpop.f32.mrf.mxu0
      %v10757 = vadd.f32 0.0, %v10756
      %v10758 = vpop.f32.mrf.mxu0
      %v10759 = vpop.f32.mrf.mxu0
      %v10760 = vadd.f32 0.0, %v10759
      %v10761 = vpop.f32.mrf.mxu0
      %10762 = vmatprep.mubr.bf16.mxu0 %v8966
      %10763 = vmatmul.mubr.bf16.gmra.mxu0 %v8838
      %v10764 = vpop.f32.mrf.mxu0
      %v10765 = vadd.f32 0.0, %v10764
      %v10766 = vpop.f32.mrf.mxu0
      %v10767 = vpop.f32.mrf.mxu0
      %v10768 = vadd.f32 0.0, %v10767
      %v10769 = vpop.f32.mrf.mxu0
      %10770 = vmatprep.mubr.bf16.mxu0 %v8967
      %10771 = vmatmul.mubr.bf16.gmra.mxu0 %v8839
      %v10772 = vpop.f32.mrf.mxu0
      %v10773 = vadd.f32 0.0, %v10772
      %v10774 = vpop.f32.mrf.mxu0
      %v10775 = vpop.f32.mrf.mxu0
      %v10776 = vadd.f32 0.0, %v10775
      %v10777 = vpop.f32.mrf.mxu0
      %10778 = vmatprep.mubr.bf16.mxu0 %v8968
      %10779 = vmatmul.mubr.bf16.gmra.mxu0 %v8840
      %v10780 = vpop.f32.mrf.mxu0
      %v10781 = vadd.f32 0.0, %v10780
      %v10782 = vpop.f32.mrf.mxu0
      %v10783 = vpop.f32.mrf.mxu0
      %v10784 = vadd.f32 0.0, %v10783
      %v10785 = vpop.f32.mrf.mxu0
      %10786 = vmatprep.mubr.bf16.mxu0 %v8969
      %10787 = vmatmul.mubr.bf16.gmra.mxu0 %v8841
      %v10788 = vpop.f32.mrf.mxu0
      %v10789 = vadd.f32 0.0, %v10788
      %v10790 = vpop.f32.mrf.mxu0
      %v10791 = vpop.f32.mrf.mxu0
      %v10792 = vadd.f32 0.0, %v10791
      %v10793 = vpop.f32.mrf.mxu0
      %10794 = vdwg.mxu0
      %10795 = vmatprep.subr.bf16.mxu0 0
      %10796 = vmatpush1.bf16.msra.mxu0 %v10385
      %10797 = vmatprep.subr.bf16.mxu0 0
      %10798 = vmatpush1.bf16.msra.mxu0 %v10384
      %10799 = vmatprep.subr.bf16.mxu0 0
      %10800 = vmatpush1.bf16.msra.mxu0 %v10383
      %10801 = vmatprep.subr.bf16.mxu0 0
      %10802 = vmatpush1.bf16.msra.mxu0 %v10382
      %10803 = vmatprep.subr.bf16.mxu0 0
      %10804 = vmatpush1.bf16.msra.mxu0 %v10381
      %10805 = vmatprep.subr.bf16.mxu0 0
      %10806 = vmatpush1.bf16.msra.mxu0 %v10380
      %10807 = vmatprep.subr.bf16.mxu0 0
      %10808 = vmatpush1.bf16.msra.mxu0 %v10379
      %10809 = vmatprep.subr.bf16.mxu0 0
      %10810 = vmatpush1.bf16.msra.mxu0 %v10378
      %10811 = vmatprep.subr.bf16.mxu0 0
      %10812 = vmatpush2.bf16.msra.mxu0 %v10393
      %10813 = vmatprep.subr.bf16.mxu0 0
      %10814 = vmatpush2.bf16.msra.mxu0 %v10392
      %10815 = vmatprep.subr.bf16.mxu0 0
      %10816 = vmatpush2.bf16.msra.mxu0 %v10391
      %10817 = vmatprep.subr.bf16.mxu0 0
      %10818 = vmatpush2.bf16.msra.mxu0 %v10390
      %10819 = vmatprep.subr.bf16.mxu0 0
      %10820 = vmatpush2.bf16.msra.mxu0 %v10389
      %10821 = vmatprep.subr.bf16.mxu0 0
      %10822 = vmatpush2.bf16.msra.mxu0 %v10388
      %10823 = vmatprep.subr.bf16.mxu0 0
      %10824 = vmatpush2.bf16.msra.mxu0 %v10387
      %10825 = vmatprep.subr.bf16.mxu0 0
      %10826 = vmatpush2.bf16.msra.mxu0 %v10386
      %10827 = vmatprep.mubr.bf16.mxu0 %v9210
      %10828 = vmatmul.mubr.bf16.gmra.mxu0 %v9066
      %v10829 = vpop.f32.mrf.mxu0
      %v10830 = vadd.f32 %v10541, %v10829
      %v10831 = vpop.f32.mrf.mxu0
      %v10832 = vpop.f32.mrf.mxu0
      %v10833 = vadd.f32 %v10544, %v10832
      %v10834 = vpop.f32.mrf.mxu0
      %10835 = vmatprep.mubr.bf16.mxu0 %v9211
      %10836 = vmatmul.mubr.bf16.gmra.mxu0 %v9067
      %v10837 = vpop.f32.mrf.mxu0
      %v10838 = vadd.f32 %v10549, %v10837
      %v10839 = vpop.f32.mrf.mxu0
      %v10840 = vpop.f32.mrf.mxu0
      %v10841 = vadd.f32 %v10552, %v10840
      %v10842 = vpop.f32.mrf.mxu0
      %10843 = vmatprep.mubr.bf16.mxu0 %v9212
      %10844 = vmatmul.mubr.bf16.gmra.mxu0 %v9068
      %v10845 = vpop.f32.mrf.mxu0
      %v10846 = vadd.f32 %v10557, %v10845
      %v10847 = vpop.f32.mrf.mxu0
      %v10848 = vpop.f32.mrf.mxu0
      %v10849 = vadd.f32 %v10560, %v10848
      %v10850 = vpop.f32.mrf.mxu0
      %10851 = vmatprep.mubr.bf16.mxu0 %v9213
      %10852 = vmatmul.mubr.bf16.gmra.mxu0 %v9069
      %v10853 = vpop.f32.mrf.mxu0
      %v10854 = vadd.f32 %v10565, %v10853
      %v10855 = vpop.f32.mrf.mxu0
      %v10856 = vpop.f32.mrf.mxu0
      %v10857 = vadd.f32 %v10568, %v10856
      %v10858 = vpop.f32.mrf.mxu0
      %10859 = vmatprep.mubr.bf16.mxu0 %v9214
      %10860 = vmatmul.mubr.bf16.gmra.mxu0 %v9070
      %v10861 = vpop.f32.mrf.mxu0
      %v10862 = vadd.f32 %v10573, %v10861
      %v10863 = vpop.f32.mrf.mxu0
      %v10864 = vpop.f32.mrf.mxu0
      %v10865 = vadd.f32 %v10576, %v10864
      %v10866 = vpop.f32.mrf.mxu0
      %10867 = vmatprep.mubr.bf16.mxu0 %v9215
      %10868 = vmatmul.mubr.bf16.gmra.mxu0 %v9071
      %v10869 = vpop.f32.mrf.mxu0
      %v10870 = vadd.f32 %v10581, %v10869
      %v10871 = vpop.f32.mrf.mxu0
      %v10872 = vpop.f32.mrf.mxu0
      %v10873 = vadd.f32 %v10584, %v10872
      %v10874 = vpop.f32.mrf.mxu0
      %10875 = vmatprep.mubr.bf16.mxu0 %v9216
      %10876 = vmatmul.mubr.bf16.gmra.mxu0 %v9072
      %v10877 = vpop.f32.mrf.mxu0
      %v10878 = vadd.f32 %v10589, %v10877
      %v10879 = vpop.f32.mrf.mxu0
      %v10880 = vpop.f32.mrf.mxu0
      %v10881 = vadd.f32 %v10592, %v10880
      %v10882 = vpop.f32.mrf.mxu0
      %10883 = vmatprep.mubr.bf16.mxu0 %v9217
      %10884 = vmatmul.mubr.bf16.gmra.mxu0 %v9073
      %v10885 = vpop.f32.mrf.mxu0
      %v10886 = vadd.f32 %v10597, %v10885
      %v10887 = vpop.f32.mrf.mxu0
      %v10888 = vpop.f32.mrf.mxu0
      %v10889 = vadd.f32 %v10600, %v10888
      %v10890 = vpop.f32.mrf.mxu0
      %10891 = vmatprep.mubr.bf16.mxu0 %v9218
      %10892 = vmatmul.mubr.bf16.gmra.mxu0 %v9074
      %v10893 = vpop.f32.mrf.mxu0
      %v10894 = vadd.f32 %v10605, %v10893
      %v10895 = vpop.f32.mrf.mxu0
      %v10896 = vpop.f32.mrf.mxu0
      %v10897 = vadd.f32 %v10608, %v10896
      %v10898 = vpop.f32.mrf.mxu0
      %10899 = vmatprep.mubr.bf16.mxu0 %v9219
      %10900 = vmatmul.mubr.bf16.gmra.mxu0 %v9075
      %v10901 = vpop.f32.mrf.mxu0
      %v10902 = vadd.f32 %v10613, %v10901
      %v10903 = vpop.f32.mrf.mxu0
      %v10904 = vpop.f32.mrf.mxu0
      %v10905 = vadd.f32 %v10616, %v10904
      %v10906 = vpop.f32.mrf.mxu0
      %10907 = vmatprep.mubr.bf16.mxu0 %v9220
      %10908 = vmatmul.mubr.bf16.gmra.mxu0 %v9076
      %v10909 = vpop.f32.mrf.mxu0
      %v10910 = vadd.f32 %v10621, %v10909
      %v10911 = vpop.f32.mrf.mxu0
      %v10912 = vpop.f32.mrf.mxu0
      %v10913 = vadd.f32 %v10624, %v10912
      %v10914 = vpop.f32.mrf.mxu0
      %10915 = vmatprep.mubr.bf16.mxu0 %v9221
      %10916 = vmatmul.mubr.bf16.gmra.mxu0 %v9077
      %v10917 = vpop.f32.mrf.mxu0
      %v10918 = vadd.f32 %v10629, %v10917
      %v10919 = vpop.f32.mrf.mxu0
      %v10920 = vpop.f32.mrf.mxu0
      %v10921 = vadd.f32 %v10632, %v10920
      %v10922 = vpop.f32.mrf.mxu0
      %10923 = vmatprep.mubr.bf16.mxu0 %v9222
      %10924 = vmatmul.mubr.bf16.gmra.mxu0 %v9078
      %v10925 = vpop.f32.mrf.mxu0
      %v10926 = vadd.f32 %v10637, %v10925
      %v10927 = vpop.f32.mrf.mxu0
      %v10928 = vpop.f32.mrf.mxu0
      %v10929 = vadd.f32 %v10640, %v10928
      %v10930 = vpop.f32.mrf.mxu0
      %10931 = vmatprep.mubr.bf16.mxu0 %v9223
      %10932 = vmatmul.mubr.bf16.gmra.mxu0 %v9079
      %v10933 = vpop.f32.mrf.mxu0
      %v10934 = vadd.f32 %v10645, %v10933
      %v10935 = vpop.f32.mrf.mxu0
      %v10936 = vpop.f32.mrf.mxu0
      %v10937 = vadd.f32 %v10648, %v10936
      %v10938 = vpop.f32.mrf.mxu0
      %10939 = vmatprep.mubr.bf16.mxu0 %v9224
      %10940 = vmatmul.mubr.bf16.gmra.mxu0 %v9080
      %v10941 = vpop.f32.mrf.mxu0
      %v10942 = vadd.f32 %v10653, %v10941
      %v10943 = vpop.f32.mrf.mxu0
      %v10944 = vpop.f32.mrf.mxu0
      %v10945 = vadd.f32 %v10656, %v10944
      %v10946 = vpop.f32.mrf.mxu0
      %10947 = vmatprep.mubr.bf16.mxu0 %v9225
      %10948 = vmatmul.mubr.bf16.gmra.mxu0 %v9081
      %v10949 = vpop.f32.mrf.mxu0
      %v10950 = vadd.f32 %v10661, %v10949
      %v10951 = vpop.f32.mrf.mxu0
      %v10952 = vpop.f32.mrf.mxu0
      %v10953 = vadd.f32 %v10664, %v10952
      %v10954 = vpop.f32.mrf.mxu0
      %10955 = vmatprep.mubr.bf16.mxu0 %v9226
      %10956 = vmatmul.mubr.bf16.gmra.mxu0 %v9082
      %v10957 = vpop.f32.mrf.mxu0
      %v10958 = vadd.f32 %v10669, %v10957
      %v10959 = vpop.f32.mrf.mxu0
      %v10960 = vpop.f32.mrf.mxu0
      %v10961 = vadd.f32 %v10672, %v10960
      %v10962 = vpop.f32.mrf.mxu0
      %10963 = vmatprep.mubr.bf16.mxu0 %v9227
      %10964 = vmatmul.mubr.bf16.gmra.mxu0 %v9083
      %v10965 = vpop.f32.mrf.mxu0
      %v10966 = vadd.f32 %v10677, %v10965
      %v10967 = vpop.f32.mrf.mxu0
      %v10968 = vpop.f32.mrf.mxu0
      %v10969 = vadd.f32 %v10680, %v10968
      %v10970 = vpop.f32.mrf.mxu0
      %10971 = vmatprep.mubr.bf16.mxu0 %v9228
      %10972 = vmatmul.mubr.bf16.gmra.mxu0 %v9084
      %v10973 = vpop.f32.mrf.mxu0
      %v10974 = vadd.f32 %v10685, %v10973
      %v10975 = vpop.f32.mrf.mxu0
      %v10976 = vpop.f32.mrf.mxu0
      %v10977 = vadd.f32 %v10688, %v10976
      %v10978 = vpop.f32.mrf.mxu0
      %10979 = vmatprep.mubr.bf16.mxu0 %v9229
      %10980 = vmatmul.mubr.bf16.gmra.mxu0 %v9085
      %v10981 = vpop.f32.mrf.mxu0
      %v10982 = vadd.f32 %v10693, %v10981
      %v10983 = vpop.f32.mrf.mxu0
      %v10984 = vpop.f32.mrf.mxu0
      %v10985 = vadd.f32 %v10696, %v10984
      %v10986 = vpop.f32.mrf.mxu0
      %10987 = vmatprep.mubr.bf16.mxu0 %v9230
      %10988 = vmatmul.mubr.bf16.gmra.mxu0 %v9086
      %v10989 = vpop.f32.mrf.mxu0
      %v10990 = vadd.f32 %v10701, %v10989
      %v10991 = vpop.f32.mrf.mxu0
      %v10992 = vpop.f32.mrf.mxu0
      %v10993 = vadd.f32 %v10704, %v10992
      %v10994 = vpop.f32.mrf.mxu0
      %10995 = vmatprep.mubr.bf16.mxu0 %v9231
      %10996 = vmatmul.mubr.bf16.gmra.mxu0 %v9087
      %v10997 = vpop.f32.mrf.mxu0
      %v10998 = vadd.f32 %v10709, %v10997
      %v10999 = vpop.f32.mrf.mxu0
      %v11000 = vpop.f32.mrf.mxu0
      %v11001 = vadd.f32 %v10712, %v11000
      %v11002 = vpop.f32.mrf.mxu0
      %11003 = vmatprep.mubr.bf16.mxu0 %v9232
      %11004 = vmatmul.mubr.bf16.gmra.mxu0 %v9088
      %v11005 = vpop.f32.mrf.mxu0
      %v11006 = vadd.f32 %v10717, %v11005
      %v11007 = vpop.f32.mrf.mxu0
      %v11008 = vpop.f32.mrf.mxu0
      %v11009 = vadd.f32 %v10720, %v11008
      %v11010 = vpop.f32.mrf.mxu0
      %11011 = vmatprep.mubr.bf16.mxu0 %v9233
      %11012 = vmatmul.mubr.bf16.gmra.mxu0 %v9089
      %v11013 = vpop.f32.mrf.mxu0
      %v11014 = vadd.f32 %v10725, %v11013
      %v11015 = vpop.f32.mrf.mxu0
      %v11016 = vpop.f32.mrf.mxu0
      %v11017 = vadd.f32 %v10728, %v11016
      %v11018 = vpop.f32.mrf.mxu0
      %11019 = vmatprep.mubr.bf16.mxu0 %v9234
      %11020 = vmatmul.mubr.bf16.gmra.mxu0 %v9090
      %v11021 = vpop.f32.mrf.mxu0
      %v11022 = vadd.f32 %v10733, %v11021
      %v11023 = vpop.f32.mrf.mxu0
      %v11024 = vpop.f32.mrf.mxu0
      %v11025 = vadd.f32 %v10736, %v11024
      %v11026 = vpop.f32.mrf.mxu0
      %11027 = vmatprep.mubr.bf16.mxu0 %v9235
      %11028 = vmatmul.mubr.bf16.gmra.mxu0 %v9091
      %v11029 = vpop.f32.mrf.mxu0
      %v11030 = vadd.f32 %v10741, %v11029
      %v11031 = vpop.f32.mrf.mxu0
      %v11032 = vpop.f32.mrf.mxu0
      %v11033 = vadd.f32 %v10744, %v11032
      %v11034 = vpop.f32.mrf.mxu0
      %11035 = vmatprep.mubr.bf16.mxu0 %v9236
      %11036 = vmatmul.mubr.bf16.gmra.mxu0 %v9092
      %v11037 = vpop.f32.mrf.mxu0
      %v11038 = vadd.f32 %v10749, %v11037
      %v11039 = vpop.f32.mrf.mxu0
      %v11040 = vpop.f32.mrf.mxu0
      %v11041 = vadd.f32 %v10752, %v11040
      %v11042 = vpop.f32.mrf.mxu0
      %11043 = vmatprep.mubr.bf16.mxu0 %v9237
      %11044 = vmatmul.mubr.bf16.gmra.mxu0 %v9093
      %v11045 = vpop.f32.mrf.mxu0
      %v11046 = vadd.f32 %v10757, %v11045
      %v11047 = vpop.f32.mrf.mxu0
      %v11048 = vpop.f32.mrf.mxu0
      %v11049 = vadd.f32 %v10760, %v11048
      %v11050 = vpop.f32.mrf.mxu0
      %11051 = vmatprep.mubr.bf16.mxu0 %v9238
      %11052 = vmatmul.mubr.bf16.gmra.mxu0 %v9094
      %v11053 = vpop.f32.mrf.mxu0
      %v11054 = vadd.f32 %v10765, %v11053
      %v11055 = vpop.f32.mrf.mxu0
      %v11056 = vpop.f32.mrf.mxu0
      %v11057 = vadd.f32 %v10768, %v11056
      %v11058 = vpop.f32.mrf.mxu0
      %11059 = vmatprep.mubr.bf16.mxu0 %v9239
      %11060 = vmatmul.mubr.bf16.gmra.mxu0 %v9095
      %v11061 = vpop.f32.mrf.mxu0
      %v11062 = vadd.f32 %v10773, %v11061
      %v11063 = vpop.f32.mrf.mxu0
      %v11064 = vpop.f32.mrf.mxu0
      %v11065 = vadd.f32 %v10776, %v11064
      %v11066 = vpop.f32.mrf.mxu0
      %11067 = vmatprep.mubr.bf16.mxu0 %v9240
      %11068 = vmatmul.mubr.bf16.gmra.mxu0 %v9096
      %v11069 = vpop.f32.mrf.mxu0
      %v11070 = vadd.f32 %v10781, %v11069
      %v11071 = vpop.f32.mrf.mxu0
      %v11072 = vpop.f32.mrf.mxu0
      %v11073 = vadd.f32 %v10784, %v11072
      %v11074 = vpop.f32.mrf.mxu0
      %11075 = vmatprep.mubr.bf16.mxu0 %v9241
      %11076 = vmatmul.mubr.bf16.gmra.mxu0 %v9097
      %v11077 = vpop.f32.mrf.mxu0
      %v11078 = vadd.f32 %v10789, %v11077
      %v11079 = vpop.f32.mrf.mxu0
      %v11080 = vpop.f32.mrf.mxu0
      %v11081 = vadd.f32 %v10792, %v11080
      %v11082 = vpop.f32.mrf.mxu0
      %11083 = vdwg.mxu0
      %11084 = vmatprep.subr.bf16.mxu0 0
      %11085 = vmatpush1.bf16.msra.mxu0 %v10401
      %11086 = vmatprep.subr.bf16.mxu0 0
      %11087 = vmatpush1.bf16.msra.mxu0 %v10400
      %11088 = vmatprep.subr.bf16.mxu0 0
      %11089 = vmatpush1.bf16.msra.mxu0 %v10399
      %11090 = vmatprep.subr.bf16.mxu0 0
      %11091 = vmatpush1.bf16.msra.mxu0 %v10398
      %11092 = vmatprep.subr.bf16.mxu0 0
      %11093 = vmatpush1.bf16.msra.mxu0 %v10397
      %11094 = vmatprep.subr.bf16.mxu0 0
      %11095 = vmatpush1.bf16.msra.mxu0 %v10396
      %11096 = vmatprep.subr.bf16.mxu0 0
      %11097 = vmatpush1.bf16.msra.mxu0 %v10395
      %11098 = vmatprep.subr.bf16.mxu0 0
      %11099 = vmatpush1.bf16.msra.mxu0 %v10394
      %11100 = vmatprep.subr.bf16.mxu0 0
      %11101 = vmatpush2.bf16.msra.mxu0 %v10409
      %11102 = vmatprep.subr.bf16.mxu0 0
      %11103 = vmatpush2.bf16.msra.mxu0 %v10408
      %11104 = vmatprep.subr.bf16.mxu0 0
      %11105 = vmatpush2.bf16.msra.mxu0 %v10407
      %11106 = vmatprep.subr.bf16.mxu0 0
      %11107 = vmatpush2.bf16.msra.mxu0 %v10406
      %11108 = vmatprep.subr.bf16.mxu0 0
      %11109 = vmatpush2.bf16.msra.mxu0 %v10405
      %11110 = vmatprep.subr.bf16.mxu0 0
      %11111 = vmatpush2.bf16.msra.mxu0 %v10404
      %11112 = vmatprep.subr.bf16.mxu0 0
      %11113 = vmatpush2.bf16.msra.mxu0 %v10403
      %11114 = vmatprep.subr.bf16.mxu0 0
      %11115 = vmatpush2.bf16.msra.mxu0 %v10402
      %11116 = vmatprep.mubr.bf16.mxu0 %v9466
      %11117 = vmatmul.mubr.bf16.gmra.mxu0 %v9338
      %v11118 = vpop.f32.mrf.mxu0
      %v11119 = vadd.f32 %v10830, %v11118
      %v11120 = vpop.f32.mrf.mxu0
      %v11121 = vpop.f32.mrf.mxu0
      %v11122 = vadd.f32 %v10833, %v11121
      %v11123 = vpop.f32.mrf.mxu0
      %11124 = vmatprep.mubr.bf16.mxu0 %v9467
      %11125 = vmatmul.mubr.bf16.gmra.mxu0 %v9339
      %v11126 = vpop.f32.mrf.mxu0
      %v11127 = vadd.f32 %v10838, %v11126
      %v11128 = vpop.f32.mrf.mxu0
      %v11129 = vpop.f32.mrf.mxu0
      %v11130 = vadd.f32 %v10841, %v11129
      %v11131 = vpop.f32.mrf.mxu0
      %11132 = vmatprep.mubr.bf16.mxu0 %v9468
      %11133 = vmatmul.mubr.bf16.gmra.mxu0 %v9340
      %v11134 = vpop.f32.mrf.mxu0
      %v11135 = vadd.f32 %v10846, %v11134
      %v11136 = vpop.f32.mrf.mxu0
      %v11137 = vpop.f32.mrf.mxu0
      %v11138 = vadd.f32 %v10849, %v11137
      %v11139 = vpop.f32.mrf.mxu0
      %11140 = vmatprep.mubr.bf16.mxu0 %v9469
      %11141 = vmatmul.mubr.bf16.gmra.mxu0 %v9341
      %v11142 = vpop.f32.mrf.mxu0
      %v11143 = vadd.f32 %v10854, %v11142
      %v11144 = vpop.f32.mrf.mxu0
      %v11145 = vpop.f32.mrf.mxu0
      %v11146 = vadd.f32 %v10857, %v11145
      %v11147 = vpop.f32.mrf.mxu0
      %11148 = vmatprep.mubr.bf16.mxu0 %v9470
      %11149 = vmatmul.mubr.bf16.gmra.mxu0 %v9342
      %v11150 = vpop.f32.mrf.mxu0
      %v11151 = vadd.f32 %v10862, %v11150
      %v11152 = vpop.f32.mrf.mxu0
      %v11153 = vpop.f32.mrf.mxu0
      %v11154 = vadd.f32 %v10865, %v11153
      %v11155 = vpop.f32.mrf.mxu0
      %11156 = vmatprep.mubr.bf16.mxu0 %v9471
      %11157 = vmatmul.mubr.bf16.gmra.mxu0 %v9343
      %v11158 = vpop.f32.mrf.mxu0
      %v11159 = vadd.f32 %v10870, %v11158
      %v11160 = vpop.f32.mrf.mxu0
      %v11161 = vpop.f32.mrf.mxu0
      %v11162 = vadd.f32 %v10873, %v11161
      %v11163 = vpop.f32.mrf.mxu0
      %11164 = vmatprep.mubr.bf16.mxu0 %v9472
      %11165 = vmatmul.mubr.bf16.gmra.mxu0 %v9344
      %v11166 = vpop.f32.mrf.mxu0
      %v11167 = vadd.f32 %v10878, %v11166
      %v11168 = vpop.f32.mrf.mxu0
      %v11169 = vpop.f32.mrf.mxu0
      %v11170 = vadd.f32 %v10881, %v11169
      %v11171 = vpop.f32.mrf.mxu0
      %11172 = vmatprep.mubr.bf16.mxu0 %v9473
      %11173 = vmatmul.mubr.bf16.gmra.mxu0 %v9345
      %v11174 = vpop.f32.mrf.mxu0
      %v11175 = vadd.f32 %v10886, %v11174
      %v11176 = vpop.f32.mrf.mxu0
      %v11177 = vpop.f32.mrf.mxu0
      %v11178 = vadd.f32 %v10889, %v11177
      %v11179 = vpop.f32.mrf.mxu0
      %11180 = vmatprep.mubr.bf16.mxu0 %v9474
      %11181 = vmatmul.mubr.bf16.gmra.mxu0 %v9346
      %v11182 = vpop.f32.mrf.mxu0
      %v11183 = vadd.f32 %v10894, %v11182
      %v11184 = vpop.f32.mrf.mxu0
      %v11185 = vpop.f32.mrf.mxu0
      %v11186 = vadd.f32 %v10897, %v11185
      %v11187 = vpop.f32.mrf.mxu0
      %11188 = vmatprep.mubr.bf16.mxu0 %v9475
      %11189 = vmatmul.mubr.bf16.gmra.mxu0 %v9347
      %v11190 = vpop.f32.mrf.mxu0
      %v11191 = vadd.f32 %v10902, %v11190
      %v11192 = vpop.f32.mrf.mxu0
      %v11193 = vpop.f32.mrf.mxu0
      %v11194 = vadd.f32 %v10905, %v11193
      %v11195 = vpop.f32.mrf.mxu0
      %11196 = vmatprep.mubr.bf16.mxu0 %v9476
      %11197 = vmatmul.mubr.bf16.gmra.mxu0 %v9348
      %v11198 = vpop.f32.mrf.mxu0
      %v11199 = vadd.f32 %v10910, %v11198
      %v11200 = vpop.f32.mrf.mxu0
      %v11201 = vpop.f32.mrf.mxu0
      %v11202 = vadd.f32 %v10913, %v11201
      %v11203 = vpop.f32.mrf.mxu0
      %11204 = vmatprep.mubr.bf16.mxu0 %v9477
      %11205 = vmatmul.mubr.bf16.gmra.mxu0 %v9349
      %v11206 = vpop.f32.mrf.mxu0
      %v11207 = vadd.f32 %v10918, %v11206
      %v11208 = vpop.f32.mrf.mxu0
      %v11209 = vpop.f32.mrf.mxu0
      %v11210 = vadd.f32 %v10921, %v11209
      %v11211 = vpop.f32.mrf.mxu0
      %11212 = vmatprep.mubr.bf16.mxu0 %v9478
      %11213 = vmatmul.mubr.bf16.gmra.mxu0 %v9350
      %v11214 = vpop.f32.mrf.mxu0
      %v11215 = vadd.f32 %v10926, %v11214
      %v11216 = vpop.f32.mrf.mxu0
      %v11217 = vpop.f32.mrf.mxu0
      %v11218 = vadd.f32 %v10929, %v11217
      %v11219 = vpop.f32.mrf.mxu0
      %11220 = vmatprep.mubr.bf16.mxu0 %v9479
      %11221 = vmatmul.mubr.bf16.gmra.mxu0 %v9351
      %v11222 = vpop.f32.mrf.mxu0
      %v11223 = vadd.f32 %v10934, %v11222
      %v11224 = vpop.f32.mrf.mxu0
      %v11225 = vpop.f32.mrf.mxu0
      %v11226 = vadd.f32 %v10937, %v11225
      %v11227 = vpop.f32.mrf.mxu0
      %11228 = vmatprep.mubr.bf16.mxu0 %v9480
      %11229 = vmatmul.mubr.bf16.gmra.mxu0 %v9352
      %v11230 = vpop.f32.mrf.mxu0
      %v11231 = vadd.f32 %v10942, %v11230
      %v11232 = vpop.f32.mrf.mxu0
      %v11233 = vpop.f32.mrf.mxu0
      %v11234 = vadd.f32 %v10945, %v11233
      %v11235 = vpop.f32.mrf.mxu0
      %11236 = vmatprep.mubr.bf16.mxu0 %v9481
      %11237 = vmatmul.mubr.bf16.gmra.mxu0 %v9353
      %v11238 = vpop.f32.mrf.mxu0
      %v11239 = vadd.f32 %v10950, %v11238
      %v11240 = vpop.f32.mrf.mxu0
      %v11241 = vpop.f32.mrf.mxu0
      %v11242 = vadd.f32 %v10953, %v11241
      %v11243 = vpop.f32.mrf.mxu0
      %11244 = vmatprep.mubr.bf16.mxu0 %v9482
      %11245 = vmatmul.mubr.bf16.gmra.mxu0 %v9354
      %v11246 = vpop.f32.mrf.mxu0
      %v11247 = vadd.f32 %v10958, %v11246
      %v11248 = vpop.f32.mrf.mxu0
      %v11249 = vpop.f32.mrf.mxu0
      %v11250 = vadd.f32 %v10961, %v11249
      %v11251 = vpop.f32.mrf.mxu0
      %11252 = vmatprep.mubr.bf16.mxu0 %v9483
      %11253 = vmatmul.mubr.bf16.gmra.mxu0 %v9355
      %v11254 = vpop.f32.mrf.mxu0
      %v11255 = vadd.f32 %v10966, %v11254
      %v11256 = vpop.f32.mrf.mxu0
      %v11257 = vpop.f32.mrf.mxu0
      %v11258 = vadd.f32 %v10969, %v11257
      %v11259 = vpop.f32.mrf.mxu0
      %11260 = vmatprep.mubr.bf16.mxu0 %v9484
      %11261 = vmatmul.mubr.bf16.gmra.mxu0 %v9356
      %v11262 = vpop.f32.mrf.mxu0
      %v11263 = vadd.f32 %v10974, %v11262
      %v11264 = vpop.f32.mrf.mxu0
      %v11265 = vpop.f32.mrf.mxu0
      %v11266 = vadd.f32 %v10977, %v11265
      %v11267 = vpop.f32.mrf.mxu0
      %11268 = vmatprep.mubr.bf16.mxu0 %v9485
      %11269 = vmatmul.mubr.bf16.gmra.mxu0 %v9357
      %v11270 = vpop.f32.mrf.mxu0
      %v11271 = vadd.f32 %v10982, %v11270
      %v11272 = vpop.f32.mrf.mxu0
      %v11273 = vpop.f32.mrf.mxu0
      %v11274 = vadd.f32 %v10985, %v11273
      %v11275 = vpop.f32.mrf.mxu0
      %11276 = vmatprep.mubr.bf16.mxu0 %v9486
      %11277 = vmatmul.mubr.bf16.gmra.mxu0 %v9358
      %v11278 = vpop.f32.mrf.mxu0
      %v11279 = vadd.f32 %v10990, %v11278
      %v11280 = vpop.f32.mrf.mxu0
      %v11281 = vpop.f32.mrf.mxu0
      %v11282 = vadd.f32 %v10993, %v11281
      %v11283 = vpop.f32.mrf.mxu0
      %11284 = vmatprep.mubr.bf16.mxu0 %v9487
      %11285 = vmatmul.mubr.bf16.gmra.mxu0 %v9359
      %v11286 = vpop.f32.mrf.mxu0
      %v11287 = vadd.f32 %v10998, %v11286
      %v11288 = vpop.f32.mrf.mxu0
      %v11289 = vpop.f32.mrf.mxu0
      %v11290 = vadd.f32 %v11001, %v11289
      %v11291 = vpop.f32.mrf.mxu0
      %11292 = vmatprep.mubr.bf16.mxu0 %v9488
      %11293 = vmatmul.mubr.bf16.gmra.mxu0 %v9360
      %v11294 = vpop.f32.mrf.mxu0
      %v11295 = vadd.f32 %v11006, %v11294
      %v11296 = vpop.f32.mrf.mxu0
      %v11297 = vpop.f32.mrf.mxu0
      %v11298 = vadd.f32 %v11009, %v11297
      %v11299 = vpop.f32.mrf.mxu0
      %11300 = vmatprep.mubr.bf16.mxu0 %v9489
      %11301 = vmatmul.mubr.bf16.gmra.mxu0 %v9361
      %v11302 = vpop.f32.mrf.mxu0
      %v11303 = vadd.f32 %v11014, %v11302
      %v11304 = vpop.f32.mrf.mxu0
      %v11305 = vpop.f32.mrf.mxu0
      %v11306 = vadd.f32 %v11017, %v11305
      %v11307 = vpop.f32.mrf.mxu0
      %11308 = vmatprep.mubr.bf16.mxu0 %v9490
      %11309 = vmatmul.mubr.bf16.gmra.mxu0 %v9362
      %v11310 = vpop.f32.mrf.mxu0
      %v11311 = vadd.f32 %v11022, %v11310
      %v11312 = vpop.f32.mrf.mxu0
      %v11313 = vpop.f32.mrf.mxu0
      %v11314 = vadd.f32 %v11025, %v11313
      %v11315 = vpop.f32.mrf.mxu0
      %11316 = vmatprep.mubr.bf16.mxu0 %v9491
      %11317 = vmatmul.mubr.bf16.gmra.mxu0 %v9363
      %v11318 = vpop.f32.mrf.mxu0
      %v11319 = vadd.f32 %v11030, %v11318
      %v11320 = vpop.f32.mrf.mxu0
      %v11321 = vpop.f32.mrf.mxu0
      %v11322 = vadd.f32 %v11033, %v11321
      %v11323 = vpop.f32.mrf.mxu0
      %11324 = vmatprep.mubr.bf16.mxu0 %v9492
      %11325 = vmatmul.mubr.bf16.gmra.mxu0 %v9364
      %v11326 = vpop.f32.mrf.mxu0
      %v11327 = vadd.f32 %v11038, %v11326
      %v11328 = vpop.f32.mrf.mxu0
      %v11329 = vpop.f32.mrf.mxu0
      %v11330 = vadd.f32 %v11041, %v11329
      %v11331 = vpop.f32.mrf.mxu0
      %11332 = vmatprep.mubr.bf16.mxu0 %v9493
      %11333 = vmatmul.mubr.bf16.gmra.mxu0 %v9365
      %v11334 = vpop.f32.mrf.mxu0
      %v11335 = vadd.f32 %v11046, %v11334
      %v11336 = vpop.f32.mrf.mxu0
      %v11337 = vpop.f32.mrf.mxu0
      %v11338 = vadd.f32 %v11049, %v11337
      %v11339 = vpop.f32.mrf.mxu0
      %11340 = vmatprep.mubr.bf16.mxu0 %v9494
      %11341 = vmatmul.mubr.bf16.gmra.mxu0 %v9366
      %v11342 = vpop.f32.mrf.mxu0
      %v11343 = vadd.f32 %v11054, %v11342
      %v11344 = vpop.f32.mrf.mxu0
      %v11345 = vpop.f32.mrf.mxu0
      %v11346 = vadd.f32 %v11057, %v11345
      %v11347 = vpop.f32.mrf.mxu0
      %11348 = vmatprep.mubr.bf16.mxu0 %v9495
      %11349 = vmatmul.mubr.bf16.gmra.mxu0 %v9367
      %v11350 = vpop.f32.mrf.mxu0
      %v11351 = vadd.f32 %v11062, %v11350
      %v11352 = vpop.f32.mrf.mxu0
      %v11353 = vpop.f32.mrf.mxu0
      %v11354 = vadd.f32 %v11065, %v11353
      %v11355 = vpop.f32.mrf.mxu0
      %11356 = vmatprep.mubr.bf16.mxu0 %v9496
      %11357 = vmatmul.mubr.bf16.gmra.mxu0 %v9368
      %v11358 = vpop.f32.mrf.mxu0
      %v11359 = vadd.f32 %v11070, %v11358
      %v11360 = vpop.f32.mrf.mxu0
      %v11361 = vpop.f32.mrf.mxu0
      %v11362 = vadd.f32 %v11073, %v11361
      %v11363 = vpop.f32.mrf.mxu0
      %11364 = vmatprep.mubr.bf16.mxu0 %v9497
      %11365 = vmatmul.mubr.bf16.gmra.mxu0 %v9369
      %v11366 = vpop.f32.mrf.mxu0
      %v11367 = vadd.f32 %v11078, %v11366
      %v11368 = vpop.f32.mrf.mxu0
      %v11369 = vpop.f32.mrf.mxu0
      %v11370 = vadd.f32 %v11081, %v11369
      %v11371 = vpop.f32.mrf.mxu0
      %11372 = vdwg.mxu0
      %11373 = vmatprep.subr.bf16.mxu0 0
      %11374 = vmatpush1.bf16.msra.mxu0 %v10417
      %11375 = vmatprep.subr.bf16.mxu0 0
      %11376 = vmatpush1.bf16.msra.mxu0 %v10416
      %11377 = vmatprep.subr.bf16.mxu0 0
      %11378 = vmatpush1.bf16.msra.mxu0 %v10415
      %11379 = vmatprep.subr.bf16.mxu0 0
      %11380 = vmatpush1.bf16.msra.mxu0 %v10414
      %11381 = vmatprep.subr.bf16.mxu0 0
      %11382 = vmatpush1.bf16.msra.mxu0 %v10413
      %11383 = vmatprep.subr.bf16.mxu0 0
      %11384 = vmatpush1.bf16.msra.mxu0 %v10412
      %11385 = vmatprep.subr.bf16.mxu0 0
      %11386 = vmatpush1.bf16.msra.mxu0 %v10411
      %11387 = vmatprep.subr.bf16.mxu0 0
      %11388 = vmatpush1.bf16.msra.mxu0 %v10410
      %11389 = vmatprep.subr.bf16.mxu0 0
      %11390 = vmatpush2.bf16.msra.mxu0 %v10425
      %11391 = vmatprep.subr.bf16.mxu0 0
      %11392 = vmatpush2.bf16.msra.mxu0 %v10424
      %11393 = vmatprep.subr.bf16.mxu0 0
      %11394 = vmatpush2.bf16.msra.mxu0 %v10423
      %11395 = vmatprep.subr.bf16.mxu0 0
      %11396 = vmatpush2.bf16.msra.mxu0 %v10422
      %11397 = vmatprep.subr.bf16.mxu0 0
      %11398 = vmatpush2.bf16.msra.mxu0 %v10421
      %11399 = vmatprep.subr.bf16.mxu0 0
      %11400 = vmatpush2.bf16.msra.mxu0 %v10420
      %11401 = vmatprep.subr.bf16.mxu0 0
      %11402 = vmatpush2.bf16.msra.mxu0 %v10419
      %11403 = vmatprep.subr.bf16.mxu0 0
      %11404 = vmatpush2.bf16.msra.mxu0 %v10418
      %11405 = vmatprep.mubr.bf16.mxu0 %v9738
      %11406 = vmatmul.mubr.bf16.gmra.mxu0 %v9610
      %v11407 = vpop.f32.mrf.mxu0
      %v11408 = vadd.f32 %v11119, %v11407
      %v11409 = vpop.f32.mrf.mxu0
      %v11410 = vpop.f32.mrf.mxu0
      %v11411 = vadd.f32 %v11122, %v11410
      %v11412 = vpop.f32.mrf.mxu0
      %11413 = vmatprep.mubr.bf16.mxu0 %v9739
      %11414 = vmatmul.mubr.bf16.gmra.mxu0 %v9611
      %v11415 = vpop.f32.mrf.mxu0
      %v11416 = vadd.f32 %v11127, %v11415
      %v11417 = vpop.f32.mrf.mxu0
      %v11418 = vpop.f32.mrf.mxu0
      %v11419 = vadd.f32 %v11130, %v11418
      %v11420 = vpop.f32.mrf.mxu0
      %11421 = vmatprep.mubr.bf16.mxu0 %v9740
      %11422 = vmatmul.mubr.bf16.gmra.mxu0 %v9612
      %v11423 = vpop.f32.mrf.mxu0
      %v11424 = vadd.f32 %v11135, %v11423
      %v11425 = vpop.f32.mrf.mxu0
      %v11426 = vpop.f32.mrf.mxu0
      %v11427 = vadd.f32 %v11138, %v11426
      %v11428 = vpop.f32.mrf.mxu0
      %11429 = vmatprep.mubr.bf16.mxu0 %v9741
      %11430 = vmatmul.mubr.bf16.gmra.mxu0 %v9613
      %v11431 = vpop.f32.mrf.mxu0
      %v11432 = vadd.f32 %v11143, %v11431
      %v11433 = vpop.f32.mrf.mxu0
      %v11434 = vpop.f32.mrf.mxu0
      %v11435 = vadd.f32 %v11146, %v11434
      %v11436 = vpop.f32.mrf.mxu0
      %11437 = vmatprep.mubr.bf16.mxu0 %v9742
      %11438 = vmatmul.mubr.bf16.gmra.mxu0 %v9614
      %v11439 = vpop.f32.mrf.mxu0
      %v11440 = vadd.f32 %v11151, %v11439
      %v11441 = vpop.f32.mrf.mxu0
      %v11442 = vpop.f32.mrf.mxu0
      %v11443 = vadd.f32 %v11154, %v11442
      %v11444 = vpop.f32.mrf.mxu0
      %11445 = vmatprep.mubr.bf16.mxu0 %v9743
      %11446 = vmatmul.mubr.bf16.gmra.mxu0 %v9615
      %v11447 = vpop.f32.mrf.mxu0
      %v11448 = vadd.f32 %v11159, %v11447
      %v11449 = vpop.f32.mrf.mxu0
      %v11450 = vpop.f32.mrf.mxu0
      %v11451 = vadd.f32 %v11162, %v11450
      %v11452 = vpop.f32.mrf.mxu0
      %11453 = vmatprep.mubr.bf16.mxu0 %v9744
      %11454 = vmatmul.mubr.bf16.gmra.mxu0 %v9616
      %v11455 = vpop.f32.mrf.mxu0
      %v11456 = vadd.f32 %v11167, %v11455
      %v11457 = vpop.f32.mrf.mxu0
      %v11458 = vpop.f32.mrf.mxu0
      %v11459 = vadd.f32 %v11170, %v11458
      %v11460 = vpop.f32.mrf.mxu0
      %11461 = vmatprep.mubr.bf16.mxu0 %v9745
      %11462 = vmatmul.mubr.bf16.gmra.mxu0 %v9617
      %v11463 = vpop.f32.mrf.mxu0
      %v11464 = vadd.f32 %v11175, %v11463
      %v11465 = vpop.f32.mrf.mxu0
      %v11466 = vpop.f32.mrf.mxu0
      %v11467 = vadd.f32 %v11178, %v11466
      %v11468 = vpop.f32.mrf.mxu0
      %11469 = vmatprep.mubr.bf16.mxu0 %v9746
      %11470 = vmatmul.mubr.bf16.gmra.mxu0 %v9618
      %v11471 = vpop.f32.mrf.mxu0
      %v11472 = vadd.f32 %v11183, %v11471
      %v11473 = vpop.f32.mrf.mxu0
      %v11474 = vpop.f32.mrf.mxu0
      %v11475 = vadd.f32 %v11186, %v11474
      %v11476 = vpop.f32.mrf.mxu0
      %11477 = vmatprep.mubr.bf16.mxu0 %v9747
      %11478 = vmatmul.mubr.bf16.gmra.mxu0 %v9619
      %v11479 = vpop.f32.mrf.mxu0
      %v11480 = vadd.f32 %v11191, %v11479
      %v11481 = vpop.f32.mrf.mxu0
      %v11482 = vpop.f32.mrf.mxu0
      %v11483 = vadd.f32 %v11194, %v11482
      %v11484 = vpop.f32.mrf.mxu0
      %11485 = vmatprep.mubr.bf16.mxu0 %v9748
      %11486 = vmatmul.mubr.bf16.gmra.mxu0 %v9620
      %v11487 = vpop.f32.mrf.mxu0
      %v11488 = vadd.f32 %v11199, %v11487
      %v11489 = vpop.f32.mrf.mxu0
      %v11490 = vpop.f32.mrf.mxu0
      %v11491 = vadd.f32 %v11202, %v11490
      %v11492 = vpop.f32.mrf.mxu0
      %11493 = vmatprep.mubr.bf16.mxu0 %v9749
      %11494 = vmatmul.mubr.bf16.gmra.mxu0 %v9621
      %v11495 = vpop.f32.mrf.mxu0
      %v11496 = vadd.f32 %v11207, %v11495
      %v11497 = vpop.f32.mrf.mxu0
      %v11498 = vpop.f32.mrf.mxu0
      %v11499 = vadd.f32 %v11210, %v11498
      %v11500 = vpop.f32.mrf.mxu0
      %11501 = vmatprep.mubr.bf16.mxu0 %v9750
      %11502 = vmatmul.mubr.bf16.gmra.mxu0 %v9622
      %v11503 = vpop.f32.mrf.mxu0
      %v11504 = vadd.f32 %v11215, %v11503
      %v11505 = vpop.f32.mrf.mxu0
      %v11506 = vpop.f32.mrf.mxu0
      %v11507 = vadd.f32 %v11218, %v11506
      %v11508 = vpop.f32.mrf.mxu0
      %11509 = vmatprep.mubr.bf16.mxu0 %v9751
      %11510 = vmatmul.mubr.bf16.gmra.mxu0 %v9623
      %v11511 = vpop.f32.mrf.mxu0
      %v11512 = vadd.f32 %v11223, %v11511
      %v11513 = vpop.f32.mrf.mxu0
      %v11514 = vpop.f32.mrf.mxu0
      %v11515 = vadd.f32 %v11226, %v11514
      %v11516 = vpop.f32.mrf.mxu0
      %11517 = vmatprep.mubr.bf16.mxu0 %v9752
      %11518 = vmatmul.mubr.bf16.gmra.mxu0 %v9624
      %v11519 = vpop.f32.mrf.mxu0
      %v11520 = vadd.f32 %v11231, %v11519
      %v11521 = vpop.f32.mrf.mxu0
      %v11522 = vpop.f32.mrf.mxu0
      %v11523 = vadd.f32 %v11234, %v11522
      %v11524 = vpop.f32.mrf.mxu0
      %11525 = vmatprep.mubr.bf16.mxu0 %v9753
      %11526 = vmatmul.mubr.bf16.gmra.mxu0 %v9625
      %v11527 = vpop.f32.mrf.mxu0
      %v11528 = vadd.f32 %v11239, %v11527
      %v11529 = vpop.f32.mrf.mxu0
      %v11530 = vpop.f32.mrf.mxu0
      %v11531 = vadd.f32 %v11242, %v11530
      %v11532 = vpop.f32.mrf.mxu0
      %11533 = vmatprep.mubr.bf16.mxu0 %v9754
      %11534 = vmatmul.mubr.bf16.gmra.mxu0 %v9626
      %v11535 = vpop.f32.mrf.mxu0
      %v11536 = vadd.f32 %v11247, %v11535
      %v11537 = vpop.f32.mrf.mxu0
      %v11538 = vpop.f32.mrf.mxu0
      %v11539 = vadd.f32 %v11250, %v11538
      %v11540 = vpop.f32.mrf.mxu0
      %11541 = vmatprep.mubr.bf16.mxu0 %v9755
      %11542 = vmatmul.mubr.bf16.gmra.mxu0 %v9627
      %v11543 = vpop.f32.mrf.mxu0
      %v11544 = vadd.f32 %v11255, %v11543
      %v11545 = vpop.f32.mrf.mxu0
      %v11546 = vpop.f32.mrf.mxu0
      %v11547 = vadd.f32 %v11258, %v11546
      %v11548 = vpop.f32.mrf.mxu0
      %11549 = vmatprep.mubr.bf16.mxu0 %v9756
      %11550 = vmatmul.mubr.bf16.gmra.mxu0 %v9628
      %v11551 = vpop.f32.mrf.mxu0
      %v11552 = vadd.f32 %v11263, %v11551
      %v11553 = vpop.f32.mrf.mxu0
      %v11554 = vpop.f32.mrf.mxu0
      %v11555 = vadd.f32 %v11266, %v11554
      %v11556 = vpop.f32.mrf.mxu0
      %11557 = vmatprep.mubr.bf16.mxu0 %v9757
      %11558 = vmatmul.mubr.bf16.gmra.mxu0 %v9629
      %v11559 = vpop.f32.mrf.mxu0
      %v11560 = vadd.f32 %v11271, %v11559
      %v11561 = vpop.f32.mrf.mxu0
      %v11562 = vpop.f32.mrf.mxu0
      %v11563 = vadd.f32 %v11274, %v11562
      %v11564 = vpop.f32.mrf.mxu0
      %11565 = vmatprep.mubr.bf16.mxu0 %v9758
      %11566 = vmatmul.mubr.bf16.gmra.mxu0 %v9630
      %v11567 = vpop.f32.mrf.mxu0
      %v11568 = vadd.f32 %v11279, %v11567
      %v11569 = vpop.f32.mrf.mxu0
      %v11570 = vpop.f32.mrf.mxu0
      %v11571 = vadd.f32 %v11282, %v11570
      %v11572 = vpop.f32.mrf.mxu0
      %11573 = vmatprep.mubr.bf16.mxu0 %v9759
      %11574 = vmatmul.mubr.bf16.gmra.mxu0 %v9631
      %v11575 = vpop.f32.mrf.mxu0
      %v11576 = vadd.f32 %v11287, %v11575
      %v11577 = vpop.f32.mrf.mxu0
      %v11578 = vpop.f32.mrf.mxu0
      %v11579 = vadd.f32 %v11290, %v11578
      %v11580 = vpop.f32.mrf.mxu0
      %11581 = vmatprep.mubr.bf16.mxu0 %v9760
      %11582 = vmatmul.mubr.bf16.gmra.mxu0 %v9632
      %v11583 = vpop.f32.mrf.mxu0
      %v11584 = vadd.f32 %v11295, %v11583
      %v11585 = vpop.f32.mrf.mxu0
      %v11586 = vpop.f32.mrf.mxu0
      %v11587 = vadd.f32 %v11298, %v11586
      %v11588 = vpop.f32.mrf.mxu0
      %11589 = vmatprep.mubr.bf16.mxu0 %v9761
      %11590 = vmatmul.mubr.bf16.gmra.mxu0 %v9633
      %v11591 = vpop.f32.mrf.mxu0
      %v11592 = vadd.f32 %v11303, %v11591
      %v11593 = vpop.f32.mrf.mxu0
      %v11594 = vpop.f32.mrf.mxu0
      %v11595 = vadd.f32 %v11306, %v11594
      %v11596 = vpop.f32.mrf.mxu0
      %11597 = vmatprep.mubr.bf16.mxu0 %v9762
      %11598 = vmatmul.mubr.bf16.gmra.mxu0 %v9634
      %v11599 = vpop.f32.mrf.mxu0
      %v11600 = vadd.f32 %v11311, %v11599
      %v11601 = vpop.f32.mrf.mxu0
      %v11602 = vpop.f32.mrf.mxu0
      %v11603 = vadd.f32 %v11314, %v11602
      %v11604 = vpop.f32.mrf.mxu0
      %11605 = vmatprep.mubr.bf16.mxu0 %v9763
      %11606 = vmatmul.mubr.bf16.gmra.mxu0 %v9635
      %v11607 = vpop.f32.mrf.mxu0
      %v11608 = vadd.f32 %v11319, %v11607
      %v11609 = vpop.f32.mrf.mxu0
      %v11610 = vpop.f32.mrf.mxu0
      %v11611 = vadd.f32 %v11322, %v11610
      %v11612 = vpop.f32.mrf.mxu0
      %11613 = vmatprep.mubr.bf16.mxu0 %v9764
      %11614 = vmatmul.mubr.bf16.gmra.mxu0 %v9636
      %v11615 = vpop.f32.mrf.mxu0
      %v11616 = vadd.f32 %v11327, %v11615
      %v11617 = vpop.f32.mrf.mxu0
      %v11618 = vpop.f32.mrf.mxu0
      %v11619 = vadd.f32 %v11330, %v11618
      %v11620 = vpop.f32.mrf.mxu0
      %11621 = vmatprep.mubr.bf16.mxu0 %v9765
      %11622 = vmatmul.mubr.bf16.gmra.mxu0 %v9637
      %v11623 = vpop.f32.mrf.mxu0
      %v11624 = vadd.f32 %v11335, %v11623
      %v11625 = vpop.f32.mrf.mxu0
      %v11626 = vpop.f32.mrf.mxu0
      %v11627 = vadd.f32 %v11338, %v11626
      %v11628 = vpop.f32.mrf.mxu0
      %11629 = vmatprep.mubr.bf16.mxu0 %v9766
      %11630 = vmatmul.mubr.bf16.gmra.mxu0 %v9638
      %v11631 = vpop.f32.mrf.mxu0
      %v11632 = vadd.f32 %v11343, %v11631
      %v11633 = vpop.f32.mrf.mxu0
      %v11634 = vpop.f32.mrf.mxu0
      %v11635 = vadd.f32 %v11346, %v11634
      %v11636 = vpop.f32.mrf.mxu0
      %11637 = vmatprep.mubr.bf16.mxu0 %v9767
      %11638 = vmatmul.mubr.bf16.gmra.mxu0 %v9639
      %v11639 = vpop.f32.mrf.mxu0
      %v11640 = vadd.f32 %v11351, %v11639
      %v11641 = vpop.f32.mrf.mxu0
      %v11642 = vpop.f32.mrf.mxu0
      %v11643 = vadd.f32 %v11354, %v11642
      %v11644 = vpop.f32.mrf.mxu0
      %11645 = vmatprep.mubr.bf16.mxu0 %v9768
      %11646 = vmatmul.mubr.bf16.gmra.mxu0 %v9640
      %v11647 = vpop.f32.mrf.mxu0
      %v11648 = vadd.f32 %v11359, %v11647
      %v11649 = vpop.f32.mrf.mxu0
      %v11650 = vpop.f32.mrf.mxu0
      %v11651 = vadd.f32 %v11362, %v11650
      %v11652 = vpop.f32.mrf.mxu0
      %11653 = vmatprep.mubr.bf16.mxu0 %v9769
      %11654 = vmatmul.mubr.bf16.gmra.mxu0 %v9641
      %v11655 = vpop.f32.mrf.mxu0
      %v11656 = vadd.f32 %v11367, %v11655
      %v11657 = vpop.f32.mrf.mxu0
      %v11658 = vpop.f32.mrf.mxu0
      %v11659 = vadd.f32 %v11370, %v11658
      %v11660 = vpop.f32.mrf.mxu0
      %11661 = vdwg.mxu0
      %11662 = vmatprep.subr.bf16.mxu0 0
      %11663 = vmatpush1.bf16.msra.mxu0 %v10433
      %11664 = vmatprep.subr.bf16.mxu0 0
      %11665 = vmatpush1.bf16.msra.mxu0 %v10432
      %11666 = vmatprep.subr.bf16.mxu0 0
      %11667 = vmatpush1.bf16.msra.mxu0 %v10431
      %11668 = vmatprep.subr.bf16.mxu0 0
      %11669 = vmatpush1.bf16.msra.mxu0 %v10430
      %11670 = vmatprep.subr.bf16.mxu0 0
      %11671 = vmatpush1.bf16.msra.mxu0 %v10429
      %11672 = vmatprep.subr.bf16.mxu0 0
      %11673 = vmatpush1.bf16.msra.mxu0 %v10428
      %11674 = vmatprep.subr.bf16.mxu0 0
      %11675 = vmatpush1.bf16.msra.mxu0 %v10427
      %11676 = vmatprep.subr.bf16.mxu0 0
      %11677 = vmatpush1.bf16.msra.mxu0 %v10426
      %11678 = vmatprep.subr.bf16.mxu0 0
      %11679 = vmatpush2.bf16.msra.mxu0 0
      %11680 = vmatprep.subr.bf16.mxu0 0
      %11681 = vmatpush2.bf16.msra.mxu0 0
      %11682 = vmatprep.subr.bf16.mxu0 0
      %11683 = vmatpush2.bf16.msra.mxu0 0
      %11684 = vmatprep.subr.bf16.mxu0 0
      %11685 = vmatpush2.bf16.msra.mxu0 0
      %11686 = vmatprep.subr.bf16.mxu0 0
      %11687 = vmatpush2.bf16.msra.mxu0 0
      %11688 = vmatprep.subr.bf16.mxu0 0
      %11689 = vmatpush2.bf16.msra.mxu0 0
      %11690 = vmatprep.subr.bf16.mxu0 0
      %11691 = vmatpush2.bf16.msra.mxu0 0
      %11692 = vmatprep.subr.bf16.mxu0 0
      %11693 = vmatpush2.bf16.msra.mxu0 0
      %11694 = vmatprep.mubr.bf16.mxu0 0
      %11695 = vmatmul.mubr.bf16.gmra.mxu0 %v9866
      %v11696 = vpop.f32.mrf.mxu0
      %v11697 = vadd.f32 %v11408, %v11696
      %v11698 = vpop.f32.mrf.mxu0
      %v11699 = vpop.f32.mrf.mxu0
      %v11700 = vadd.f32 %v11411, %v11699
      %v11701 = vpop.f32.mrf.mxu0
      %11702 = vmatprep.mubr.bf16.mxu0 0
      %11703 = vmatmul.mubr.bf16.gmra.mxu0 %v9867
      %v11704 = vpop.f32.mrf.mxu0
      %v11705 = vadd.f32 %v11416, %v11704
      %v11706 = vpop.f32.mrf.mxu0
      %v11707 = vpop.f32.mrf.mxu0
      %v11708 = vadd.f32 %v11419, %v11707
      %v11709 = vpop.f32.mrf.mxu0
      %11710 = vmatprep.mubr.bf16.mxu0 0
      %11711 = vmatmul.mubr.bf16.gmra.mxu0 %v9868
      %v11712 = vpop.f32.mrf.mxu0
      %v11713 = vadd.f32 %v11424, %v11712
      %v11714 = vpop.f32.mrf.mxu0
      %v11715 = vpop.f32.mrf.mxu0
      %v11716 = vadd.f32 %v11427, %v11715
      %v11717 = vpop.f32.mrf.mxu0
      %11718 = vmatprep.mubr.bf16.mxu0 0
      %11719 = vmatmul.mubr.bf16.gmra.mxu0 %v9869
      %v11720 = vpop.f32.mrf.mxu0
      %v11721 = vadd.f32 %v11432, %v11720
      %v11722 = vpop.f32.mrf.mxu0
      %v11723 = vpop.f32.mrf.mxu0
      %v11724 = vadd.f32 %v11435, %v11723
      %v11725 = vpop.f32.mrf.mxu0
      %11726 = vmatprep.mubr.bf16.mxu0 0
      %11727 = vmatmul.mubr.bf16.gmra.mxu0 %v9870
      %v11728 = vpop.f32.mrf.mxu0
      %v11729 = vadd.f32 %v11440, %v11728
      %v11730 = vpop.f32.mrf.mxu0
      %v11731 = vpop.f32.mrf.mxu0
      %v11732 = vadd.f32 %v11443, %v11731
      %v11733 = vpop.f32.mrf.mxu0
      %11734 = vmatprep.mubr.bf16.mxu0 0
      %11735 = vmatmul.mubr.bf16.gmra.mxu0 %v9871
      %v11736 = vpop.f32.mrf.mxu0
      %v11737 = vadd.f32 %v11448, %v11736
      %v11738 = vpop.f32.mrf.mxu0
      %v11739 = vpop.f32.mrf.mxu0
      %v11740 = vadd.f32 %v11451, %v11739
      %v11741 = vpop.f32.mrf.mxu0
      %11742 = vmatprep.mubr.bf16.mxu0 0
      %11743 = vmatmul.mubr.bf16.gmra.mxu0 %v9872
      %v11744 = vpop.f32.mrf.mxu0
      %v11745 = vadd.f32 %v11456, %v11744
      %v11746 = vpop.f32.mrf.mxu0
      %v11747 = vpop.f32.mrf.mxu0
      %v11748 = vadd.f32 %v11459, %v11747
      %v11749 = vpop.f32.mrf.mxu0
      %11750 = vmatprep.mubr.bf16.mxu0 0
      %11751 = vmatmul.mubr.bf16.gmra.mxu0 %v9873
      %v11752 = vpop.f32.mrf.mxu0
      %v11753 = vadd.f32 %v11464, %v11752
      %v11754 = vpop.f32.mrf.mxu0
      %v11755 = vpop.f32.mrf.mxu0
      %v11756 = vadd.f32 %v11467, %v11755
      %v11757 = vpop.f32.mrf.mxu0
      %11758 = vmatprep.mubr.bf16.mxu0 0
      %11759 = vmatmul.mubr.bf16.gmra.mxu0 %v9874
      %v11760 = vpop.f32.mrf.mxu0
      %v11761 = vadd.f32 %v11472, %v11760
      %v11762 = vpop.f32.mrf.mxu0
      %v11763 = vpop.f32.mrf.mxu0
      %v11764 = vadd.f32 %v11475, %v11763
      %v11765 = vpop.f32.mrf.mxu0
      %11766 = vmatprep.mubr.bf16.mxu0 0
      %11767 = vmatmul.mubr.bf16.gmra.mxu0 %v9875
      %v11768 = vpop.f32.mrf.mxu0
      %v11769 = vadd.f32 %v11480, %v11768
      %v11770 = vpop.f32.mrf.mxu0
      %v11771 = vpop.f32.mrf.mxu0
      %v11772 = vadd.f32 %v11483, %v11771
      %v11773 = vpop.f32.mrf.mxu0
      %11774 = vmatprep.mubr.bf16.mxu0 0
      %11775 = vmatmul.mubr.bf16.gmra.mxu0 %v9876
      %v11776 = vpop.f32.mrf.mxu0
      %v11777 = vadd.f32 %v11488, %v11776
      %v11778 = vpop.f32.mrf.mxu0
      %v11779 = vpop.f32.mrf.mxu0
      %v11780 = vadd.f32 %v11491, %v11779
      %v11781 = vpop.f32.mrf.mxu0
      %11782 = vmatprep.mubr.bf16.mxu0 0
      %11783 = vmatmul.mubr.bf16.gmra.mxu0 %v9877
      %v11784 = vpop.f32.mrf.mxu0
      %v11785 = vadd.f32 %v11496, %v11784
      %v11786 = vpop.f32.mrf.mxu0
      %v11787 = vpop.f32.mrf.mxu0
      %v11788 = vadd.f32 %v11499, %v11787
      %v11789 = vpop.f32.mrf.mxu0
      %11790 = vmatprep.mubr.bf16.mxu0 0
      %11791 = vmatmul.mubr.bf16.gmra.mxu0 %v9878
      %v11792 = vpop.f32.mrf.mxu0
      %v11793 = vadd.f32 %v11504, %v11792
      %v11794 = vpop.f32.mrf.mxu0
      %v11795 = vpop.f32.mrf.mxu0
      %v11796 = vadd.f32 %v11507, %v11795
      %v11797 = vpop.f32.mrf.mxu0
      %11798 = vmatprep.mubr.bf16.mxu0 0
      %11799 = vmatmul.mubr.bf16.gmra.mxu0 %v9879
      %v11800 = vpop.f32.mrf.mxu0
      %v11801 = vadd.f32 %v11512, %v11800
      %v11802 = vpop.f32.mrf.mxu0
      %v11803 = vpop.f32.mrf.mxu0
      %v11804 = vadd.f32 %v11515, %v11803
      %v11805 = vpop.f32.mrf.mxu0
      %11806 = vmatprep.mubr.bf16.mxu0 0
      %11807 = vmatmul.mubr.bf16.gmra.mxu0 %v9880
      %v11808 = vpop.f32.mrf.mxu0
      %v11809 = vadd.f32 %v11520, %v11808
      %v11810 = vpop.f32.mrf.mxu0
      %v11811 = vpop.f32.mrf.mxu0
      %v11812 = vadd.f32 %v11523, %v11811
      %v11813 = vpop.f32.mrf.mxu0
      %11814 = vmatprep.mubr.bf16.mxu0 0
      %11815 = vmatmul.mubr.bf16.gmra.mxu0 %v9881
      %v11816 = vpop.f32.mrf.mxu0
      %v11817 = vadd.f32 %v11528, %v11816
      %v11818 = vpop.f32.mrf.mxu0
      %v11819 = vpop.f32.mrf.mxu0
      %v11820 = vadd.f32 %v11531, %v11819
      %v11821 = vpop.f32.mrf.mxu0
      %11822 = vmatprep.mubr.bf16.mxu0 0
      %11823 = vmatmul.mubr.bf16.gmra.mxu0 %v9882
      %v11824 = vpop.f32.mrf.mxu0
      %v11825 = vadd.f32 %v11536, %v11824
      %v11826 = vpop.f32.mrf.mxu0
      %v11827 = vpop.f32.mrf.mxu0
      %v11828 = vadd.f32 %v11539, %v11827
      %v11829 = vpop.f32.mrf.mxu0
      %11830 = vmatprep.mubr.bf16.mxu0 0
      %11831 = vmatmul.mubr.bf16.gmra.mxu0 %v9883
      %v11832 = vpop.f32.mrf.mxu0
      %v11833 = vadd.f32 %v11544, %v11832
      %v11834 = vpop.f32.mrf.mxu0
      %v11835 = vpop.f32.mrf.mxu0
      %v11836 = vadd.f32 %v11547, %v11835
      %v11837 = vpop.f32.mrf.mxu0
      %11838 = vmatprep.mubr.bf16.mxu0 0
      %11839 = vmatmul.mubr.bf16.gmra.mxu0 %v9884
      %v11840 = vpop.f32.mrf.mxu0
      %v11841 = vadd.f32 %v11552, %v11840
      %v11842 = vpop.f32.mrf.mxu0
      %v11843 = vpop.f32.mrf.mxu0
      %v11844 = vadd.f32 %v11555, %v11843
      %v11845 = vpop.f32.mrf.mxu0
      %11846 = vmatprep.mubr.bf16.mxu0 0
      %11847 = vmatmul.mubr.bf16.gmra.mxu0 %v9885
      %v11848 = vpop.f32.mrf.mxu0
      %v11849 = vadd.f32 %v11560, %v11848
      %v11850 = vpop.f32.mrf.mxu0
      %v11851 = vpop.f32.mrf.mxu0
      %v11852 = vadd.f32 %v11563, %v11851
      %v11853 = vpop.f32.mrf.mxu0
      %11854 = vmatprep.mubr.bf16.mxu0 0
      %11855 = vmatmul.mubr.bf16.gmra.mxu0 %v9886
      %v11856 = vpop.f32.mrf.mxu0
      %v11857 = vadd.f32 %v11568, %v11856
      %v11858 = vpop.f32.mrf.mxu0
      %v11859 = vpop.f32.mrf.mxu0
      %v11860 = vadd.f32 %v11571, %v11859
      %v11861 = vpop.f32.mrf.mxu0
      %11862 = vmatprep.mubr.bf16.mxu0 0
      %11863 = vmatmul.mubr.bf16.gmra.mxu0 %v9887
      %v11864 = vpop.f32.mrf.mxu0
      %v11865 = vadd.f32 %v11576, %v11864
      %v11866 = vpop.f32.mrf.mxu0
      %v11867 = vpop.f32.mrf.mxu0
      %v11868 = vadd.f32 %v11579, %v11867
      %v11869 = vpop.f32.mrf.mxu0
      %11870 = vmatprep.mubr.bf16.mxu0 0
      %11871 = vmatmul.mubr.bf16.gmra.mxu0 %v9888
      %v11872 = vpop.f32.mrf.mxu0
      %v11873 = vadd.f32 %v11584, %v11872
      %v11874 = vpop.f32.mrf.mxu0
      %v11875 = vpop.f32.mrf.mxu0
      %v11876 = vadd.f32 %v11587, %v11875
      %v11877 = vpop.f32.mrf.mxu0
      %11878 = vmatprep.mubr.bf16.mxu0 0
      %11879 = vmatmul.mubr.bf16.gmra.mxu0 %v9889
      %v11880 = vpop.f32.mrf.mxu0
      %v11881 = vadd.f32 %v11592, %v11880
      %v11882 = vpop.f32.mrf.mxu0
      %v11883 = vpop.f32.mrf.mxu0
      %v11884 = vadd.f32 %v11595, %v11883
      %v11885 = vpop.f32.mrf.mxu0
      %11886 = vmatprep.mubr.bf16.mxu0 0
      %11887 = vmatmul.mubr.bf16.gmra.mxu0 %v9890
      %v11888 = vpop.f32.mrf.mxu0
      %v11889 = vadd.f32 %v11600, %v11888
      %v11890 = vpop.f32.mrf.mxu0
      %v11891 = vpop.f32.mrf.mxu0
      %v11892 = vadd.f32 %v11603, %v11891
      %v11893 = vpop.f32.mrf.mxu0
      %11894 = vmatprep.mubr.bf16.mxu0 0
      %11895 = vmatmul.mubr.bf16.gmra.mxu0 %v9891
      %v11896 = vpop.f32.mrf.mxu0
      %v11897 = vadd.f32 %v11608, %v11896
      %v11898 = vpop.f32.mrf.mxu0
      %v11899 = vpop.f32.mrf.mxu0
      %v11900 = vadd.f32 %v11611, %v11899
      %v11901 = vpop.f32.mrf.mxu0
      %11902 = vmatprep.mubr.bf16.mxu0 0
      %11903 = vmatmul.mubr.bf16.gmra.mxu0 %v9892
      %v11904 = vpop.f32.mrf.mxu0
      %v11905 = vadd.f32 %v11616, %v11904
      %v11906 = vpop.f32.mrf.mxu0
      %v11907 = vpop.f32.mrf.mxu0
      %v11908 = vadd.f32 %v11619, %v11907
      %v11909 = vpop.f32.mrf.mxu0
      %11910 = vmatprep.mubr.bf16.mxu0 0
      %11911 = vmatmul.mubr.bf16.gmra.mxu0 %v9893
      %v11912 = vpop.f32.mrf.mxu0
      %v11913 = vadd.f32 %v11624, %v11912
      %v11914 = vpop.f32.mrf.mxu0
      %v11915 = vpop.f32.mrf.mxu0
      %v11916 = vadd.f32 %v11627, %v11915
      %v11917 = vpop.f32.mrf.mxu0
      %11918 = vmatprep.mubr.bf16.mxu0 0
      %11919 = vmatmul.mubr.bf16.gmra.mxu0 %v9894
      %v11920 = vpop.f32.mrf.mxu0
      %v11921 = vadd.f32 %v11632, %v11920
      %v11922 = vpop.f32.mrf.mxu0
      %v11923 = vpop.f32.mrf.mxu0
      %v11924 = vadd.f32 %v11635, %v11923
      %v11925 = vpop.f32.mrf.mxu0
      %11926 = vmatprep.mubr.bf16.mxu0 0
      %11927 = vmatmul.mubr.bf16.gmra.mxu0 %v9895
      %v11928 = vpop.f32.mrf.mxu0
      %v11929 = vadd.f32 %v11640, %v11928
      %v11930 = vpop.f32.mrf.mxu0
      %v11931 = vpop.f32.mrf.mxu0
      %v11932 = vadd.f32 %v11643, %v11931
      %v11933 = vpop.f32.mrf.mxu0
      %11934 = vmatprep.mubr.bf16.mxu0 0
      %11935 = vmatmul.mubr.bf16.gmra.mxu0 %v9896
      %v11936 = vpop.f32.mrf.mxu0
      %v11937 = vadd.f32 %v11648, %v11936
      %v11938 = vpop.f32.mrf.mxu0
      %v11939 = vpop.f32.mrf.mxu0
      %v11940 = vadd.f32 %v11651, %v11939
      %v11941 = vpop.f32.mrf.mxu0
      %11942 = vmatprep.mubr.bf16.mxu0 0
      %11943 = vmatmul.mubr.bf16.gmra.mxu0 %v9897
      %v11944 = vpop.f32.mrf.mxu0
      %v11945 = vadd.f32 %v11656, %v11944
      %v11946 = vpop.f32.mrf.mxu0
      %v11947 = vpop.f32.mrf.mxu0
      %v11948 = vadd.f32 %v11659, %v11947
      %v11949 = vpop.f32.mrf.mxu0
      %11950 = vdwg.mxu0
      %v11951 = vld [vmem:[%s4] sm:$0x1]
      %v11952 = vlaneseq
      %v11953 = vshrl.u32 %v11952, 7
      %v11954 = vsub.s32 0, %v11953
      %v11955 = vrot.slane %v11951, %v11954
      %v11956 = vmul.f32 %v11697, %v11955
      %v11957 = vmul.f32 %v11700, %v11955
      %v11958 = vmul.f32 %v11705, %v11955
      %v11959 = vmul.f32 %v11708, %v11955
      %v11960 = vmul.f32 %v11713, %v11955
      %v11961 = vmul.f32 %v11716, %v11955
      %v11962 = vmul.f32 %v11721, %v11955
      %v11963 = vmul.f32 %v11724, %v11955
      %v11964 = vmul.f32 %v11729, %v11955
      %v11965 = vmul.f32 %v11732, %v11955
      %v11966 = vmul.f32 %v11737, %v11955
      %v11967 = vmul.f32 %v11740, %v11955
      %v11968 = vmul.f32 %v11745, %v11955
      %v11969 = vmul.f32 %v11748, %v11955
      %v11970 = vmul.f32 %v11753, %v11955
      %v11971 = vmul.f32 %v11756, %v11955
      %v11972 = vmul.f32 %v11761, %v11955
      %v11973 = vmul.f32 %v11764, %v11955
      %v11974 = vmul.f32 %v11769, %v11955
      %v11975 = vmul.f32 %v11772, %v11955
      %v11976 = vmul.f32 %v11777, %v11955
      %v11977 = vmul.f32 %v11780, %v11955
      %v11978 = vmul.f32 %v11785, %v11955
      %v11979 = vmul.f32 %v11788, %v11955
      %v11980 = vmul.f32 %v11793, %v11955
      %v11981 = vmul.f32 %v11796, %v11955
      %v11982 = vmul.f32 %v11801, %v11955
      %v11983 = vmul.f32 %v11804, %v11955
      %v11984 = vmul.f32 %v11809, %v11955
      %v11985 = vmul.f32 %v11812, %v11955
      %v11986 = vmul.f32 %v11817, %v11955
      %v11987 = vmul.f32 %v11820, %v11955
      %v11988 = vmul.f32 %v11825, %v11955
      %v11989 = vmul.f32 %v11828, %v11955
      %v11990 = vmul.f32 %v11833, %v11955
      %v11991 = vmul.f32 %v11836, %v11955
      %v11992 = vmul.f32 %v11841, %v11955
      %v11993 = vmul.f32 %v11844, %v11955
      %v11994 = vmul.f32 %v11849, %v11955
      %v11995 = vmul.f32 %v11852, %v11955
      %v11996 = vmul.f32 %v11857, %v11955
      %v11997 = vmul.f32 %v11860, %v11955
      %v11998 = vmul.f32 %v11865, %v11955
      %v11999 = vmul.f32 %v11868, %v11955
      %v12000 = vmul.f32 %v11873, %v11955
      %v12001 = vmul.f32 %v11876, %v11955
      %v12002 = vmul.f32 %v11881, %v11955
      %v12003 = vmul.f32 %v11884, %v11955
      %v12004 = vmul.f32 %v11889, %v11955
      %v12005 = vmul.f32 %v11892, %v11955
      %v12006 = vmul.f32 %v11897, %v11955
      %v12007 = vmul.f32 %v11900, %v11955
      %v12008 = vmul.f32 %v11905, %v11955
      %v12009 = vmul.f32 %v11908, %v11955
      %v12010 = vmul.f32 %v11913, %v11955
      %v12011 = vmul.f32 %v11916, %v11955
      %v12012 = vmul.f32 %v11921, %v11955
      %v12013 = vmul.f32 %v11924, %v11955
      %v12014 = vmul.f32 %v11929, %v11955
      %v12015 = vmul.f32 %v11932, %v11955
      %v12016 = vmul.f32 %v11937, %v11955
      %v12017 = vmul.f32 %v11940, %v11955
      %v12018 = vmul.f32 %v11945, %v11955
      %v12019 = vmul.f32 %v11948, %v11955
      %v12020 = vld [vmem:[%s4 + $0x1] sm:$0x1]
      %v12021 = vlaneseq
      %v12022 = vshrl.u32 %v12021, 7
      %v12023 = vsub.s32 0, %v12022
      %v12024 = vrot.slane %v12020, %v12023
      %v12025 = vadd.f32 %v11956, %v12024
      %v12026 = vadd.f32 %v11957, %v12024
      %v12027 = vadd.f32 %v11958, %v12024
      %v12028 = vadd.f32 %v11959, %v12024
      %v12029 = vadd.f32 %v11960, %v12024
      %v12030 = vadd.f32 %v11961, %v12024
      %v12031 = vadd.f32 %v11962, %v12024
      %v12032 = vadd.f32 %v11963, %v12024
      %v12033 = vadd.f32 %v11964, %v12024
      %v12034 = vadd.f32 %v11965, %v12024
      %v12035 = vadd.f32 %v11966, %v12024
      %v12036 = vadd.f32 %v11967, %v12024
      %v12037 = vadd.f32 %v11968, %v12024
      %v12038 = vadd.f32 %v11969, %v12024
      %v12039 = vadd.f32 %v11970, %v12024
      %v12040 = vadd.f32 %v11971, %v12024
      %v12041 = vadd.f32 %v11972, %v12024
      %v12042 = vadd.f32 %v11973, %v12024
      %v12043 = vadd.f32 %v11974, %v12024
      %v12044 = vadd.f32 %v11975, %v12024
      %v12045 = vadd.f32 %v11976, %v12024
      %v12046 = vadd.f32 %v11977, %v12024
      %v12047 = vadd.f32 %v11978, %v12024
      %v12048 = vadd.f32 %v11979, %v12024
      %v12049 = vadd.f32 %v11980, %v12024
      %v12050 = vadd.f32 %v11981, %v12024
      %v12051 = vadd.f32 %v11982, %v12024
      %v12052 = vadd.f32 %v11983, %v12024
      %v12053 = vadd.f32 %v11984, %v12024
      %v12054 = vadd.f32 %v11985, %v12024
      %v12055 = vadd.f32 %v11986, %v12024
      %v12056 = vadd.f32 %v11987, %v12024
      %v12057 = vadd.f32 %v11988, %v12024
      %v12058 = vadd.f32 %v11989, %v12024
      %v12059 = vadd.f32 %v11990, %v12024
      %v12060 = vadd.f32 %v11991, %v12024
      %v12061 = vadd.f32 %v11992, %v12024
      %v12062 = vadd.f32 %v11993, %v12024
      %v12063 = vadd.f32 %v11994, %v12024
      %v12064 = vadd.f32 %v11995, %v12024
      %v12065 = vadd.f32 %v11996, %v12024
      %v12066 = vadd.f32 %v11997, %v12024
      %v12067 = vadd.f32 %v11998, %v12024
      %v12068 = vadd.f32 %v11999, %v12024
      %v12069 = vadd.f32 %v12000, %v12024
      %v12070 = vadd.f32 %v12001, %v12024
      %v12071 = vadd.f32 %v12002, %v12024
      %v12072 = vadd.f32 %v12003, %v12024
      %v12073 = vadd.f32 %v12004, %v12024
      %v12074 = vadd.f32 %v12005, %v12024
      %v12075 = vadd.f32 %v12006, %v12024
      %v12076 = vadd.f32 %v12007, %v12024
      %v12077 = vadd.f32 %v12008, %v12024
      %v12078 = vadd.f32 %v12009, %v12024
      %v12079 = vadd.f32 %v12010, %v12024
      %v12080 = vadd.f32 %v12011, %v12024
      %v12081 = vadd.f32 %v12012, %v12024
      %v12082 = vadd.f32 %v12013, %v12024
      %v12083 = vadd.f32 %v12014, %v12024
      %v12084 = vadd.f32 %v12015, %v12024
      %v12085 = vadd.f32 %v12016, %v12024
      %v12086 = vadd.f32 %v12017, %v12024
      %v12087 = vadd.f32 %v12018, %v12024
      %v12088 = vadd.f32 %v12019, %v12024
      %v12089 = vadd.f32 %v12025, %v3825
      %v12090 = vadd.f32 %v12026, %v3827
      %v12091 = vadd.f32 %v12027, %v3829
      %v12092 = vadd.f32 %v12028, %v3831
      %v12093 = vadd.f32 %v12029, %v3833
      %v12094 = vadd.f32 %v12030, %v3835
      %v12095 = vadd.f32 %v12031, %v3837
      %v12096 = vadd.f32 %v12032, %v3839
      %v12097 = vadd.f32 %v12033, %v3841
      %v12098 = vadd.f32 %v12034, %v3843
      %v12099 = vadd.f32 %v12035, %v3845
      %v12100 = vadd.f32 %v12036, %v3847
      %v12101 = vadd.f32 %v12037, %v3849
      %v12102 = vadd.f32 %v12038, %v3851
      %v12103 = vadd.f32 %v12039, %v3853
      %v12104 = vadd.f32 %v12040, %v3855
      %v12105 = vadd.f32 %v12041, %v3857
      %v12106 = vadd.f32 %v12042, %v3859
      %v12107 = vadd.f32 %v12043, %v3861
      %v12108 = vadd.f32 %v12044, %v3863
      %v12109 = vadd.f32 %v12045, %v3865
      %v12110 = vadd.f32 %v12046, %v3867
      %v12111 = vadd.f32 %v12047, %v3869
      %v12112 = vadd.f32 %v12048, %v3871
      %v12113 = vadd.f32 %v12049, %v3873
      %v12114 = vadd.f32 %v12050, %v3875
      %v12115 = vadd.f32 %v12051, %v3877
      %v12116 = vadd.f32 %v12052, %v3879
      %v12117 = vadd.f32 %v12053, %v3881
      %v12118 = vadd.f32 %v12054, %v3883
      %v12119 = vadd.f32 %v12055, %v3885
      %v12120 = vadd.f32 %v12056, %v3887
      %v12121 = vadd.f32 %v12057, %v3889
      %v12122 = vadd.f32 %v12058, %v3891
      %v12123 = vadd.f32 %v12059, %v3893
      %v12124 = vadd.f32 %v12060, %v3895
      %v12125 = vadd.f32 %v12061, %v3897
      %v12126 = vadd.f32 %v12062, %v3899
      %v12127 = vadd.f32 %v12063, %v3901
      %v12128 = vadd.f32 %v12064, %v3903
      %v12129 = vadd.f32 %v12065, %v3905
      %v12130 = vadd.f32 %v12066, %v3907
      %v12131 = vadd.f32 %v12067, %v3909
      %v12132 = vadd.f32 %v12068, %v3911
      %v12133 = vadd.f32 %v12069, %v3913
      %v12134 = vadd.f32 %v12070, %v3915
      %v12135 = vadd.f32 %v12071, %v3917
      %v12136 = vadd.f32 %v12072, %v3919
      %v12137 = vadd.f32 %v12073, %v3921
      %v12138 = vadd.f32 %v12074, %v3923
      %v12139 = vadd.f32 %v12075, %v3925
      %v12140 = vadd.f32 %v12076, %v3927
      %v12141 = vadd.f32 %v12077, %v3929
      %v12142 = vadd.f32 %v12078, %v3931
      %v12143 = vadd.f32 %v12079, %v3933
      %v12144 = vadd.f32 %v12080, %v3935
      %v12145 = vadd.f32 %v12081, %v3937
      %v12146 = vadd.f32 %v12082, %v3939
      %v12147 = vadd.f32 %v12083, %v3941
      %v12148 = vadd.f32 %v12084, %v3943
      %v12149 = vadd.f32 %v12085, %v3945
      %v12150 = vadd.f32 %v12086, %v3947
      %v12151 = vadd.f32 %v12087, %v3949
      %v12152 = vadd.f32 %v12088, %v3951
      %v12153 = vmax.f32 %v12089, 0.0
      %v12154 = vmax.f32 %v12090, 0.0
      %v12155 = vmax.f32 %v12091, 0.0
      %v12156 = vmax.f32 %v12092, 0.0
      %v12157 = vmax.f32 %v12093, 0.0
      %v12158 = vmax.f32 %v12094, 0.0
      %v12159 = vmax.f32 %v12095, 0.0
      %v12160 = vmax.f32 %v12096, 0.0
      %v12161 = vmax.f32 %v12097, 0.0
      %v12162 = vmax.f32 %v12098, 0.0
      %v12163 = vmax.f32 %v12099, 0.0
      %v12164 = vmax.f32 %v12100, 0.0
      %v12165 = vmax.f32 %v12101, 0.0
      %v12166 = vmax.f32 %v12102, 0.0
      %v12167 = vmax.f32 %v12103, 0.0
      %v12168 = vmax.f32 %v12104, 0.0
      %v12169 = vmax.f32 %v12105, 0.0
      %v12170 = vmax.f32 %v12106, 0.0
      %v12171 = vmax.f32 %v12107, 0.0
      %v12172 = vmax.f32 %v12108, 0.0
      %v12173 = vmax.f32 %v12109, 0.0
      %v12174 = vmax.f32 %v12110, 0.0
      %v12175 = vmax.f32 %v12111, 0.0
      %v12176 = vmax.f32 %v12112, 0.0
      %v12177 = vmax.f32 %v12113, 0.0
      %v12178 = vmax.f32 %v12114, 0.0
      %v12179 = vmax.f32 %v12115, 0.0
      %v12180 = vmax.f32 %v12116, 0.0
      %v12181 = vmax.f32 %v12117, 0.0
      %v12182 = vmax.f32 %v12118, 0.0
      %v12183 = vmax.f32 %v12119, 0.0
      %v12184 = vmax.f32 %v12120, 0.0
      %v12185 = vmax.f32 %v12121, 0.0
      %v12186 = vmax.f32 %v12122, 0.0
      %v12187 = vmax.f32 %v12123, 0.0
      %v12188 = vmax.f32 %v12124, 0.0
      %v12189 = vmax.f32 %v12125, 0.0
      %v12190 = vmax.f32 %v12126, 0.0
      %v12191 = vmax.f32 %v12127, 0.0
      %v12192 = vmax.f32 %v12128, 0.0
      %v12193 = vmax.f32 %v12129, 0.0
      %v12194 = vmax.f32 %v12130, 0.0
      %v12195 = vmax.f32 %v12131, 0.0
      %v12196 = vmax.f32 %v12132, 0.0
      %v12197 = vmax.f32 %v12133, 0.0
      %v12198 = vmax.f32 %v12134, 0.0
      %v12199 = vmax.f32 %v12135, 0.0
      %v12200 = vmax.f32 %v12136, 0.0
      %v12201 = vmax.f32 %v12137, 0.0
      %v12202 = vmax.f32 %v12138, 0.0
      %v12203 = vmax.f32 %v12139, 0.0
      %v12204 = vmax.f32 %v12140, 0.0
      %v12205 = vmax.f32 %v12141, 0.0
      %v12206 = vmax.f32 %v12142, 0.0
      %v12207 = vmax.f32 %v12143, 0.0
      %v12208 = vmax.f32 %v12144, 0.0
      %v12209 = vmax.f32 %v12145, 0.0
      %v12210 = vmax.f32 %v12146, 0.0
      %v12211 = vmax.f32 %v12147, 0.0
      %v12212 = vmax.f32 %v12148, 0.0
      %v12213 = vmax.f32 %v12149, 0.0
      %v12214 = vmax.f32 %v12150, 0.0
      %v12215 = vmax.f32 %v12151, 0.0
      %v12216 = vmax.f32 %v12152, 0.0
      %12217 = vxpose.xlu0.b32.start [1/16] %v12153, 128
      %12218 = vxpose.xlu0.b32.cont [2/16] %v12154, 128
      %12219 = vxpose.xlu0.b32.cont [3/16] %v12155, 128
      %12220 = vxpose.xlu0.b32.cont [4/16] %v12156, 128
      %12221 = vxpose.xlu0.b32.cont [5/16] %v12157, 128
      %12222 = vxpose.xlu0.b32.cont [6/16] %v12158, 128
      %12223 = vxpose.xlu0.b32.cont [7/16] %v12159, 128
      %12224 = vxpose.xlu0.b32.cont [8/16] %v12160, 128
      %12225 = vxpose.xlu0.b32.cont [9/16] %v12161, 128
      %12226 = vxpose.xlu0.b32.cont [10/16] %v12162, 128
      %12227 = vxpose.xlu0.b32.cont [11/16] %v12163, 128
      %12228 = vxpose.xlu0.b32.cont [12/16] %v12164, 128
      %12229 = vxpose.xlu0.b32.cont [13/16] %v12165, 128
      %12230 = vxpose.xlu0.b32.cont [14/16] %v12166, 128
      %12231 = vxpose.xlu0.b32.cont [15/16] %v12167, 128
      %12232 = vxpose.xlu0.b32.end [16/16] %v12168, 128
      %v12233 = vpop.trf.xlu0
      %v12234 = vpop.trf.xlu0
      %v12235 = vpop.trf.xlu0
      %v12236 = vpop.trf.xlu0
      %v12237 = vpop.trf.xlu0
      %v12238 = vpop.trf.xlu0
      %v12239 = vpop.trf.xlu0
      %v12240 = vpop.trf.xlu0
      %v12241 = vpop.trf.xlu0
      %v12242 = vpop.trf.xlu0
      %v12243 = vpop.trf.xlu0
      %v12244 = vpop.trf.xlu0
      %v12245 = vpop.trf.xlu0
      %v12246 = vpop.trf.xlu0
      %v12247 = vpop.trf.xlu0
      %v12248 = vpop.trf.xlu0
      %12249 = vxpose.xlu0.b32.start [1/16] %v12169, 128
      %12250 = vxpose.xlu0.b32.cont [2/16] %v12170, 128
      %12251 = vxpose.xlu0.b32.cont [3/16] %v12171, 128
      %12252 = vxpose.xlu0.b32.cont [4/16] %v12172, 128
      %12253 = vxpose.xlu0.b32.cont [5/16] %v12173, 128
      %12254 = vxpose.xlu0.b32.cont [6/16] %v12174, 128
      %12255 = vxpose.xlu0.b32.cont [7/16] %v12175, 128
      %12256 = vxpose.xlu0.b32.cont [8/16] %v12176, 128
      %12257 = vxpose.xlu0.b32.cont [9/16] %v12177, 128
      %12258 = vxpose.xlu0.b32.cont [10/16] %v12178, 128
      %12259 = vxpose.xlu0.b32.cont [11/16] %v12179, 128
      %12260 = vxpose.xlu0.b32.cont [12/16] %v12180, 128
      %12261 = vxpose.xlu0.b32.cont [13/16] %v12181, 128
      %12262 = vxpose.xlu0.b32.cont [14/16] %v12182, 128
      %12263 = vxpose.xlu0.b32.cont [15/16] %v12183, 128
      %12264 = vxpose.xlu0.b32.end [16/16] %v12184, 128
      %v12265 = vpop.trf.xlu0
      %v12266 = vpop.trf.xlu0
      %v12267 = vpop.trf.xlu0
      %v12268 = vpop.trf.xlu0
      %v12269 = vpop.trf.xlu0
      %v12270 = vpop.trf.xlu0
      %v12271 = vpop.trf.xlu0
      %v12272 = vpop.trf.xlu0
      %v12273 = vpop.trf.xlu0
      %v12274 = vpop.trf.xlu0
      %v12275 = vpop.trf.xlu0
      %v12276 = vpop.trf.xlu0
      %v12277 = vpop.trf.xlu0
      %v12278 = vpop.trf.xlu0
      %v12279 = vpop.trf.xlu0
      %v12280 = vpop.trf.xlu0
      %12281 = vxpose.xlu0.b32.start [1/16] %v12185, 128
      %12282 = vxpose.xlu0.b32.cont [2/16] %v12186, 128
      %12283 = vxpose.xlu0.b32.cont [3/16] %v12187, 128
      %12284 = vxpose.xlu0.b32.cont [4/16] %v12188, 128
      %12285 = vxpose.xlu0.b32.cont [5/16] %v12189, 128
      %12286 = vxpose.xlu0.b32.cont [6/16] %v12190, 128
      %12287 = vxpose.xlu0.b32.cont [7/16] %v12191, 128
      %12288 = vxpose.xlu0.b32.cont [8/16] %v12192, 128
      %12289 = vxpose.xlu0.b32.cont [9/16] %v12193, 128
      %12290 = vxpose.xlu0.b32.cont [10/16] %v12194, 128
      %12291 = vxpose.xlu0.b32.cont [11/16] %v12195, 128
      %12292 = vxpose.xlu0.b32.cont [12/16] %v12196, 128
      %12293 = vxpose.xlu0.b32.cont [13/16] %v12197, 128
      %12294 = vxpose.xlu0.b32.cont [14/16] %v12198, 128
      %12295 = vxpose.xlu0.b32.cont [15/16] %v12199, 128
      %12296 = vxpose.xlu0.b32.end [16/16] %v12200, 128
      %v12297 = vpop.trf.xlu0
      %v12298 = vpop.trf.xlu0
      %v12299 = vpop.trf.xlu0
      %v12300 = vpop.trf.xlu0
      %v12301 = vpop.trf.xlu0
      %v12302 = vpop.trf.xlu0
      %v12303 = vpop.trf.xlu0
      %v12304 = vpop.trf.xlu0
      %v12305 = vpop.trf.xlu0
      %v12306 = vpop.trf.xlu0
      %v12307 = vpop.trf.xlu0
      %v12308 = vpop.trf.xlu0
      %v12309 = vpop.trf.xlu0
      %v12310 = vpop.trf.xlu0
      %v12311 = vpop.trf.xlu0
      %v12312 = vpop.trf.xlu0
      %12313 = vxpose.xlu0.b32.start [1/16] %v12201, 128
      %12314 = vxpose.xlu0.b32.cont [2/16] %v12202, 128
      %12315 = vxpose.xlu0.b32.cont [3/16] %v12203, 128
      %12316 = vxpose.xlu0.b32.cont [4/16] %v12204, 128
      %12317 = vxpose.xlu0.b32.cont [5/16] %v12205, 128
      %12318 = vxpose.xlu0.b32.cont [6/16] %v12206, 128
      %12319 = vxpose.xlu0.b32.cont [7/16] %v12207, 128
      %12320 = vxpose.xlu0.b32.cont [8/16] %v12208, 128
      %12321 = vxpose.xlu0.b32.cont [9/16] %v12209, 128
      %12322 = vxpose.xlu0.b32.cont [10/16] %v12210, 128
      %12323 = vxpose.xlu0.b32.cont [11/16] %v12211, 128
      %12324 = vxpose.xlu0.b32.cont [12/16] %v12212, 128
      %12325 = vxpose.xlu0.b32.cont [13/16] %v12213, 128
      %12326 = vxpose.xlu0.b32.cont [14/16] %v12214, 128
      %12327 = vxpose.xlu0.b32.cont [15/16] %v12215, 128
      %12328 = vxpose.xlu0.b32.end [16/16] %v12216, 128
      %v12329 = vpop.trf.xlu0
      %v12330 = vpop.trf.xlu0
      %v12331 = vpop.trf.xlu0
      %v12332 = vpop.trf.xlu0
      %v12333 = vpop.trf.xlu0
      %v12334 = vpop.trf.xlu0
      %v12335 = vpop.trf.xlu0
      %v12336 = vpop.trf.xlu0
      %v12337 = vpop.trf.xlu0
      %v12338 = vpop.trf.xlu0
      %v12339 = vpop.trf.xlu0
      %v12340 = vpop.trf.xlu0
      %v12341 = vpop.trf.xlu0
      %v12342 = vpop.trf.xlu0
      %v12343 = vpop.trf.xlu0
      %v12344 = vpop.trf.xlu0
      %12345 = vst [vmem:[%s260] sm:$0xff] %v12233
      %12346 = vst [vmem:[%s260 + $0x8] sm:$0xff] %v12265
      %12347 = vst [vmem:[%s260 + $0x10] sm:$0xff] %v12297
      %12348 = vst [vmem:[%s260 + $0x18] sm:$0xff] %v12329
      %s12349 = smul.u32 4, %s21
      %p12350 = scmp.lt.s32.totalorder %s20, 1
      %s12351 = scalar_select %p12350, %s20, 1
      %p12352 = scmp.lt.s32.totalorder %s12349, 7
      %s12353 = scalar_select %p12352, %s12349, 7
      %s12354 = smul.addr %s12351, 8
      %s12355 = sadd.s32 %s12353, %s12354
      %s12356 = smul.addr %s12355, 8
      %s12357 = scalar_lea.vmem %s5, %s12356
      // Predicated region
      $region41: #{upconv2d_forward.1} parent=39 // pred_check
        %p12358 = pneg %p162
      $region42: #{upconv2d_forward.1} parent=39 // pred_check_branch
        %12360 = sbr.rel (%p12358) target = $region44
      $region43: #{upconv2d_forward.1} parent=39 // pred_region
        %s12361 = smul.u32 4, %s21
      $region44: #{upconv2d_forward.1} parent=39 // pred_fallthru
        _
    $region40: #{upconv2d_forward.1} parent=5 // pred_fallthru
      _
    %p12362 = scmp.le.s32.totalorder 2, %s11
    // Predicated region
    $region45: #{upconv2d_forward.1} parent=5 // pred_check
      %p12363 = pneg %p12362
    $region46: #{upconv2d_forward.1} parent=5 // pred_check_branch
      %12365 = sbr.rel (%p12363) target = $region48
    $region47: #{upconv2d_forward.1} parent=5 // pred_region
      %s12366 = ssub.s32 %s11, 2
      // Predicated region
      $region49: #{upconv2d_forward.1} parent=47 // pred_check
        %p12367 = pneg %p168
      $region50: #{upconv2d_forward.1} parent=47 // pred_check_branch
        %12369 = sbr.rel (%p12367) target = $region52
      $region51: #{upconv2d_forward.1} parent=47 // pred_region
        %s12370 = smul.u32 4, %s23
        %p12371 = scmp.lt.s32.totalorder %s22, 1
        %s12372 = scalar_select %p12371, %s22, 1
        %p12373 = scmp.lt.s32.totalorder %s12370, 7
        %s12374 = scalar_select %p12373, %s12370, 7
        %s12375 = smul.addr %s12372, 8
        %s12376 = sadd.s32 %s12374, %s12375
        %s12377 = smul.addr %s12376, 8
        %s12378 = scalar_lea.vmem %s5, %s12377
      $region52: #{upconv2d_forward.1} parent=47 // pred_fallthru
        _
    $region48: #{upconv2d_forward.1} parent=5 // pred_fallthru
      _
  $region6: #{upconv2d_forward.1} parent=0 // loop_footer
    %s15 = sadd.s32 1, %s11
  $region7: #{upconv2d_forward.1} parent=0 // loop_footer_branch
    %10 = sbr.rel target = $region3
  $region8: #{upconv2d_forward.1} parent=0 // loop_exit
    _

</llo_original>
